<compile_context>
chip_gen: v6e
topology: v6e:2x2x1
jax: 0.10.0
libtpu: 0.0.40
codegen_flags: <defaults>
</compile_context>

<pallas_src>
import functools

import jax
import jax.numpy as jnp
from jax import lax
from jax.experimental import pallas as pl
from jax.experimental.pallas import tpu as pltpu

_BN_EPS = 1e-5


def _vmem_limit_bytes():
    """Chip-dependent VMEM limit: ~55% of physical, capped at 64 MiB."""
    try:
        cap = int(pltpu.get_tpu_info().vmem_capacity_bytes)
    except Exception:
        return 48 * 1024 * 1024
    return min(64 * 1024 * 1024, int(cap * 0.55))


# ----------------------------------------------------------------------------
# BatchNorm folding (eval mode)
# ----------------------------------------------------------------------------
def _fold_bn(gamma, beta, mean, var, eps=_BN_EPS):
    scale = gamma / jnp.sqrt(var + eps)
    bias = beta - mean * scale
    return (scale.reshape(1, -1).astype(jnp.float32),
            bias.reshape(1, -1).astype(jnp.float32))


def _prepare_folded(params, need_ds):
    """Fold BN scale into bf16 conv weights; keep per-channel biases in f32."""
    s1, b1 = _fold_bn(*params["bn1"])
    s2, b2 = _fold_bn(*params["bn2"])
    s3, b3 = _fold_bn(*params["bn3"])
    fw = {
        "w1f": (params["w1"] * s1).astype(jnp.bfloat16), "b1": b1,
        "w2f": (params["w2"] * s2.reshape(1, 1, 1, -1)).astype(jnp.bfloat16),
        "b2": b2,
        "w3f": (params["w3"] * s3).astype(jnp.bfloat16), "b3": b3,
    }
    if need_ds:
        sd, bd = _fold_bn(*params["bn_ds"])
        fw["wdsf"] = (params["w_ds"] * sd).astype(jnp.bfloat16)
        fw["bds"] = bd
    return fw


# ----------------------------------------------------------------------------
# Tiling helpers
# ----------------------------------------------------------------------------
def _pick_tm(M, row_bytes, fixed_bytes, vmem_limit, target=1024):
    """Row tile for flat (M, C) kernels: <= target, multiple of 8, VMEM-aware.
    Works with a cdiv grid, so tm need not divide M."""
    budget = int(0.6 * vmem_limit) - 2 * fixed_bytes
    cap = budget // max(1, 2 * row_bytes)
    tm = min(target, max(8, cap))
    tm = max(8, (tm // 8) * 8)
    if M <= tm:
        return M
    return tm


def _pick_spatial_tile(Ho, Wo, max_rows):
    """Largest tho | Ho with (tho*Wo) % 8 == 0 and tho <= max_rows, else None."""
    best = None
    for t in range(1, Ho + 1):
        if Ho % t == 0 and (t * Wo) % 8 == 0 and t <= max_rows:
            best = t
    return best


def _largest_divisor(n, cap):
    best = 1
    for t in range(1, n + 1):
        if n % t == 0 and t <= cap:
            best = t
    return best


# ----------------------------------------------------------------------------
# 1x1-conv (bf16 matmul) + bias (+ residual) (+ relu) kernels, flat (M, C)
# ----------------------------------------------------------------------------
def _pw1_kernel(x_ref, w_ref, b_ref, o_ref):
    # conv1: relu(x @ w1_folded + b1)
    y = jnp.dot(x_ref[...], w_ref[...], preferred_element_type=jnp.float32)
    o_ref[...] = jnp.maximum(y + b_ref[...], 0.0).astype(o_ref.dtype)


def _pw3_id_kernel(h_ref, w3_ref, res_ref, b_ref, o_ref):
    # conv3 + identity residual: relu(h2 @ w3f + b3 + x)
    y = jnp.dot(h_ref[...], w3_ref[...], preferred_element_type=jnp.float32)
    y = y + b_ref[...] + res_ref[...].astype(jnp.float32)
    o_ref[...] = jnp.maximum(y, 0.0).astype(o_ref.dtype)


def _pw3_ds_flat_kernel(h_ref, w3_ref, x_ref, wd_ref, b_ref, o_ref):
    # conv3 + fused downsample residual (stride 1):
    #   relu(h2 @ w3f + x @ wdsf + (b3 + bds))
    y = jnp.dot(h_ref[...], w3_ref[...], preferred_element_type=jnp.float32)
    y = y + jnp.dot(x_ref[...], wd_ref[...],
                    preferred_element_type=jnp.float32)
    o_ref[...] = jnp.maximum(y + b_ref[...], 0.0).astype(o_ref.dtype)


def _pw_call(kernel, arrays, tiled, out_dtype, cout, vmem_limit):
    """Row-tiled flat pointwise pallas_call with a cdiv grid.

    arrays: 2-D operands.  tiled[i] == True -> tiled along M with block
    (tm, C); False -> full array resident (weights / biases).
    """
    M = arrays[0].shape[0]
    row_bytes = sum(a.shape[1] * a.dtype.itemsize
                    for a, t in zip(arrays, tiled) if t)
    row_bytes += cout * jnp.dtype(out_dtype).itemsize
    fixed_bytes = sum(a.size * a.dtype.itemsize
                      for a, t in zip(arrays, tiled) if not t)
    tm = _pick_tm(M, row_bytes, fixed_bytes, vmem_limit)

    in_specs = []
    for a, t in zip(arrays, tiled):
        if t:
            assert a.shape[0] == M
            in_specs.append(pl.BlockSpec((tm, a.shape[1]), lambda i: (i, 0)))
        else:
            # TODO(synk): pipeline_mode=pl.Buffered(1) here once verified.
            in_specs.append(pl.BlockSpec(a.shape, lambda i: (0, 0)))

    return pl.pallas_call(
        kernel,
        out_shape=jax.ShapeDtypeStruct((M, cout), out_dtype),
        grid=(pl.cdiv(M, tm),),
        in_specs=in_specs,
        out_specs=pl.BlockSpec((tm, cout), lambda i: (i, 0)),
        compiler_params=pltpu.CompilerParams(
            dimension_semantics=("parallel",),
            vmem_limit_bytes=vmem_limit),
    )(*arrays)


# ----------------------------------------------------------------------------
# 3x3 conv (pad=1, stride=s) + bias + relu
#   - halo built in a VMEM scratch (no HBM pad pass)
#   - 9 per-tap MXU dots, f32 accumulation
#   - flat (N*Ho*Wo, Cout) bf16 output
# ----------------------------------------------------------------------------
def _make_conv3x3_kernel(tho, wo, stride, H, W, flat_out):
    h_ext = (tho - 1) * stride + 1
    w_ext = (wo - 1) * stride + 1
    step_rows = tho * stride

    def kernel(x_ref, w_ref, b_ref, o_ref, xpad_ref):
        i = pl.program_id(1)
        cin = x_ref.shape[-1]
        cout = o_ref.shape[-1]

        @pl.when(i == 0)
        def _():
            # Build the zero-padded image once per batch item, entirely in
            # VMEM: the 1-pixel halo never touches HBM.
            xpad_ref[...] = jnp.zeros(xpad_ref.shape, xpad_ref.dtype)
            xpad_ref[pl.ds(1, H), pl.ds(1, W), :] = x_ref[0]

        r0 = i * step_rows
        if step_rows % 8 == 0:
            r0 = pl.multiple_of(r0, 8)

        acc = None
        for ky in range(3):
            for kx in range(3):
                blk = xpad_ref[pl.ds(r0 + ky, h_ext), pl.ds(kx, w_ext), :]
                if stride != 1:
                    # TODO(synk): v7x follow-up — pre-split even/odd columns
                    # once per ky instead of per-tap strided value slices.
                    blk = blk[::stride]
                    blk = blk[:, ::stride, :]
                part = jnp.dot(blk.reshape(tho * wo, cin), w_ref[ky, kx],
                               preferred_element_type=jnp.float32)
                acc = part if acc is None else acc + part

        y = jnp.maximum(acc + b_ref[...], 0.0)
        if flat_out:
            o_ref[...] = y.astype(o_ref.dtype)
        else:
            o_ref[...] = y.reshape(1, tho, wo, cout).astype(o_ref.dtype)

    return kernel


def conv3x3_bn_relu(h1, w2f, b2, stride, vmem_limit):
    """h1: (N, H, W, Cin) bf16.  w2f: (3, 3, Cin, Cout) bf16 (BN-folded).
    Returns (flat (N*Ho*Wo, Cout) bf16, Ho, Wo)."""
    N, H, W, Cin = h1.shape
    Cout = w2f.shape[-1]
    Ho = (H - 1) // stride + 1
    Wo = (W - 1) // stride + 1
    Hp, Wp = H + 2, W + 2

    # VMEM budget -> max output rows per tile.
    fixed = Hp * Wp * Cin * 2            # padded-image scratch (bf16)
    fixed += 2 * H * W * Cin * 2         # double-buffered resident image
    fixed += 2 * 9 * Cin * Cout * 2      # double-buffered folded weights
    per_row = Wo * (2 * 2 * Cout + 4 * Cout + 3 * 4 * Cin)
    max_rows = max(1, (int(0.6 * vmem_limit) - fixed) // max(1, per_row))

    tho = _pick_spatial_tile(Ho, Wo, max_rows)
    flat_out = tho is not None
    if not flat_out:
        # TODO(synk): no 8-aligned flat tiling exists (e.g. 7x7 / 14x14 maps);
        # fall back to the 4-D full-dim output layout (masked stores).
        tho = _largest_divisor(Ho, max_rows)
    n_t = Ho // tho

    kernel = _make_conv3x3_kernel(tho, Wo, stride, H, W, flat_out)
    common = dict(
        grid=(N, n_t),
        in_specs=[
            # Image stays resident per batch item (index ignores the row axis).
            pl.BlockSpec((1, H, W, Cin), lambda n, i: (n, 0, 0, 0)),
            pl.BlockSpec((3, 3, Cin, Cout), lambda n, i: (0, 0, 0, 0)),
            pl.BlockSpec((1, Cout), lambda n, i: (0, 0)),
        ],
        scratch_shapes=[pltpu.VMEM((Hp, Wp, Cin), jnp.bfloat16)],
        compiler_params=pltpu.CompilerParams(
            # TODO(synk): on v7x with N=1 the row axis should also be
            # "parallel"; kept "arbitrary" because the padded-image scratch is
            # built at row-tile 0 of each batch item.
            dimension_semantics=("parallel", "arbitrary"),
            vmem_limit_bytes=vmem_limit),
    )

    if flat_out:
        out = pl.pallas_call(
            kernel,
            out_shape=jax.ShapeDtypeStruct((N * Ho * Wo, Cout), jnp.bfloat16),
            out_specs=pl.BlockSpec((tho * Wo, Cout),
                                   lambda n, i: (n * n_t + i, 0)),
            **common)(h1, w2f, b2)
    else:
        out = pl.pallas_call(
            kernel,
            out_shape=jax.ShapeDtypeStruct((N, Ho, Wo, Cout), jnp.bfloat16),
            out_specs=pl.BlockSpec((1, tho, Wo, Cout),
                                   lambda n, i: (n, i, 0, 0)),
            **common)(h1, w2f, b2)
        out = out.reshape(N * Ho * Wo, Cout)
    return out, Ho, Wo


# ----------------------------------------------------------------------------
# conv3 + bn3 + strided downsample residual + relu (stride > 1):
# x is subsampled inside the kernel — no wrapper strided-slice HBM pass.
# ----------------------------------------------------------------------------
def _make_pw3_ds_spatial_kernel(tho, wo, stride):
    h_ext = (tho - 1) * stride + 1
    w_ext = (wo - 1) * stride + 1

    def kernel(h_ref, w3_ref, x_ref, wd_ref, b_ref, o_ref):
        cin = x_ref.shape[-1]
        y = jnp.dot(h_ref[...], w3_ref[...],
                    preferred_element_type=jnp.float32)
        xv = x_ref[0]                       # (tho*stride, W, Cin) bf16
        xv = xv[:h_ext:stride]
        xv = xv[:, :w_ext:stride, :]        # (tho, wo, Cin)
        y = y + jnp.dot(xv.reshape(tho * wo, cin), wd_ref[...],
                        preferred_element_type=jnp.float32)
        o_ref[...] = jnp.maximum(y + b_ref[...], 0.0).astype(o_ref.dtype)

    return kernel


def _pw3_ds_strided_call(h2_flat, w3f, xb, wdsf, bias, stride, Ho, Wo,
                         out_dtype, vmem_limit):
    N, H, W, Cin = xb.shape
    width, Cout = w3f.shape
    M2 = N * Ho * Wo

    fixed = 2 * (width * Cout * 2 + Cin * Cout * 2)
    per_row = (Wo * (2 * 2 * width + 4 * Cout
                     + 2 * Cout * jnp.dtype(out_dtype).itemsize + 4 * Cin)
               + 2 * stride * W * Cin * 2)
    max_rows = max(1, (int(0.6 * vmem_limit) - fixed) // max(1, per_row))
    tho = _pick_spatial_tile(Ho, Wo, max_rows)
    if tho is None:
        # TODO(synk): no 8-aligned spatial tile (e.g. 7x7 maps) — fall back to
        # a wrapper strided slice + the flat fused kernel.
        xs = xb[:, ::stride, ::stride, :].reshape(M2, Cin)
        return _pw_call(_pw3_ds_flat_kernel,
                        [h2_flat, w3f, xs, wdsf, bias],
                        [True, False, True, False, False],
                        out_dtype, Cout, vmem_limit)

    n_t = Ho // tho
    kernel = _make_pw3_ds_spatial_kernel(tho, Wo, stride)
    return pl.pallas_call(
        kernel,
        out_shape=jax.ShapeDtypeStruct((M2, Cout), out_dtype),
        grid=(N, n_t),
        in_specs=[
            pl.BlockSpec((tho * Wo, width), lambda n, j: (n * n_t + j, 0)),
            pl.BlockSpec((width, Cout), lambda n, j: (0, 0)),
            pl.BlockSpec((1, tho * stride, W, Cin),
                         lambda n, j: (n, j, 0, 0)),
            pl.BlockSpec((Cin, Cout), lambda n, j: (0, 0)),
            pl.BlockSpec((1, Cout), lambda n, j: (0, 0)),
        ],
        out_specs=pl.BlockSpec((tho * Wo, Cout),
                               lambda n, j: (n * n_t + j, 0)),
        compiler_params=pltpu.CompilerParams(
            dimension_semantics=("parallel", "parallel"),
            vmem_limit_bytes=vmem_limit),
    )(h2_flat, w3f, xb, wdsf, bias)


# ----------------------------------------------------------------------------
# Bottleneck glue
# ----------------------------------------------------------------------------
def bottleneck_forward_nhwc(x_nhwc, params, stride=1):
    N, H, W, Cin = x_nhwc.shape
    width = params["w1"].shape[1]
    Cout = params["w3"].shape[1]
    need_ds = (stride != 1) or (Cin != Cout)
    fw = _prepare_folded(params, need_ds)
    vmem = _vmem_limit_bytes()
    out_dtype = x_nhwc.dtype

    # x in bf16 once (fuses with the boundary transpose under jit); both the
    # conv1 read and the residual/downsample read of x are bf16.
    xb = x_nhwc.astype(jnp.bfloat16)

    # conv1 (1x1) + bn1 + relu -> bf16
    M = N * H * W
    h1 = _pw_call(_pw1_kernel,
                  [xb.reshape(M, Cin), fw["w1f"], fw["b1"]],
                  [True, False, False], jnp.bfloat16, width, vmem)

    # conv2 (3x3, pad=1, stride) + bn2 + relu -> flat bf16 (no HBM pad pass)
    h2_flat, Ho, Wo = conv3x3_bn_relu(h1.reshape(N, H, W, width),
                                      fw["w2f"], fw["b2"], stride, vmem)
    M2 = N * Ho * Wo

    # conv3 (1x1) + bn3 + residual + relu, downsample fused in-kernel.
    if not need_ds:
        out = _pw_call(_pw3_id_kernel,
                       [h2_flat, fw["w3f"], xb.reshape(M2, Cout), fw["b3"]],
                       [True, False, True, False], out_dtype, Cout, vmem)
    elif stride == 1:
        out = _pw_call(_pw3_ds_flat_kernel,
                       [h2_flat, fw["w3f"], xb.reshape(M2, Cin), fw["wdsf"],
                        fw["b3"] + fw["bds"]],
                       [True, False, True, False, False],
                       out_dtype, Cout, vmem)
    else:
        out = _pw3_ds_strided_call(h2_flat, fw["w3f"], xb, fw["wdsf"],
                                   fw["b3"] + fw["bds"], stride, Ho, Wo,
                                   out_dtype, vmem)
    return out.reshape(N, Ho, Wo, Cout)


def bottleneck_forward_nchw(x_nchw, params, stride=1):
    x_nhwc = jnp.transpose(x_nchw, (0, 2, 3, 1))
    y = bottleneck_forward_nhwc(x_nhwc, params, stride=stride)
    return jnp.transpose(y, (0, 3, 1, 2))


# ----------------------------------------------------------------------------
# Pure-JAX references (correctness checking only)
# ----------------------------------------------------------------------------
def _ref_forward_f32(x, params, stride=1, eps=_BN_EPS):
    """Faithful f32 reference of the PyTorch module (eval mode)."""
    def conv(a, w, s, pad):
        return lax.conv_general_dilated(
            a, w, (s, s), pad, dimension_numbers=("NHWC", "HWIO", "NHWC"))

    def bn(a, p):
        g, b, m, v = p
        return (a - m) / jnp.sqrt(v + eps) * g + b

    Cin = x.shape[-1]
    width = params["w1"].shape[1]
    Cout = params["w3"].shape[1]
    w1 = params["w1"].reshape(1, 1, Cin, width)
    w3 = params["w3"].reshape(1, 1, width, Cout)

    out = jax.nn.relu(bn(conv(x, w1, 1, ((0, 0), (0, 0))), params["bn1"]))
    out = jax.nn.relu(bn(conv(out, params["w2"], stride, ((1, 1), (1, 1))),
                         params["bn2"]))
    out = bn(conv(out, w3, 1, ((0, 0), (0, 0))), params["bn3"])
    if stride != 1 or Cin != Cout:
        w_ds = params["w_ds"].reshape(1, 1, Cin, Cout)
        sc = bn(conv(x, w_ds, stride, ((0, 0), (0, 0))), params["bn_ds"])
    else:
        sc = x
    return jax.nn.relu(out + sc)


def _ref_forward_folded(x, fw, stride=1):
    """Reference using the SAME folded bf16 weights / bf16 activations as the
    kernels (isolates structural bugs from bf16 quantization error)."""
    f32 = jnp.float32

    def conv(a, w, s, pad):
        return lax.conv_general_dilated(
            a.astype(f32), w.astype(f32), (s, s), pad,
            dimension_numbers=("NHWC", "HWIO", "NHWC"))

    Cin = x.shape[-1]
    width = fw["w1f"].shape[1]
    Cout = fw["w3f"].shape[1]
    xb = x.astype(jnp.bfloat16)
    h1 = jax.nn.relu(conv(xb, fw["w1f"].reshape(1, 1, Cin, width), 1,
                          ((0, 0), (0, 0))) + fw["b1"]).astype(jnp.bfloat16)
    h2 = jax.nn.relu(conv(h1, fw["w2f"], stride, ((1, 1), (1, 1)))
                     + fw["b2"]).astype(jnp.bfloat16)
    out = conv(h2, fw["w3f"].reshape(1, 1, width, Cout), 1,
               ((0, 0), (0, 0))) + fw["b3"]
    if "wdsf" in fw:
        res = conv(xb, fw["wdsf"].reshape(1, 1, Cin, Cout), stride,
                   ((0, 0), (0, 0))) + fw["bds"]
    else:
        res = xb.astype(f32)   # identity residual is added in bf16, like the kernel
    return jax.nn.relu(out + res)


# ----------------------------------------------------------------------------
# Deterministic parameter construction
# ----------------------------------------------------------------------------
def make_params(key, inplanes, planes, groups=1, base_width=64):
    # TODO(synk): groups > 1 (grouped 3x3 conv), training-mode BatchNorm and
    # Dropout2d (drop_conv > 0) are not implemented; eval-mode semantics with
    # drop_conv=0.0 (dropout == identity).
    width = int(planes * (base_width / 64.0)) * groups
    cout = planes * 4
    ks = jax.random.split(key, 16)

    def bn_params(k, c):
        k1, k2, k3, k4 = jax.random.split(k, 4)
        gamma = 1.0 + 0.1 * jax.random.normal(k1, (c,), jnp.float32)
        beta = 0.1 * jax.random.normal(k2, (c,), jnp.float32)
        mean = 0.1 * jax.random.normal(k3, (c,), jnp.float32)
        var = jnp.abs(jax.random.normal(k4, (c,), jnp.float32)) + 0.5
        return (gamma, beta, mean, var)

    return {
        "w1": 0.2 * jax.random.normal(ks[0], (inplanes, width), jnp.float32),
        "w2": 0.2 * jax.random.normal(ks[1], (3, 3, width, width), jnp.float32),
        "w3": 0.2 * jax.random.normal(ks[2], (width, cout), jnp.float32),
        "w_ds": 0.2 * jax.random.normal(ks[3], (inplanes, cout), jnp.float32),
        "bn1": bn_params(ks[4], width),
        "bn2": bn_params(ks[5], width),
        "bn3": bn_params(ks[6], cout),
        "bn_ds": bn_params(ks[7], cout),
    }


# ----------------------------------------------------------------------------
if __name__ == "__main__":
    key = jax.random.PRNGKey(0)
    k_x, k_p = jax.random.split(key)

    # Small shapes: batch=2, inplanes=16, planes=8 (-> width=8, out=32), 16x16.
    N, inplanes, H, W = 2, 16, 16, 16
    planes = 8

    x_nchw = jax.random.normal(k_x, (N, inplanes, H, W), jnp.float32)
    params = make_params(k_p, inplanes, planes)
    x_nhwc = jnp.transpose(x_nchw, (0, 2, 3, 1))

    for stride in (1, 2):
        fwd = functools.partial(bottleneck_forward_nchw, stride=stride)
        y = jax.block_until_ready(jax.jit(fwd)(x_nchw, params))

        Ho = (H - 1) // stride + 1
        assert y.shape == (N, planes * 4, Ho, Ho), (stride, y.shape)

        need_ds = (stride != 1) or (inplanes != planes * 4)
        fw = _prepare_folded(params, need_ds)

        # Tight check vs. a reference that uses the same folded bf16 weights
        # and bf16 intermediate activations as the kernels.
        y_bf = jnp.transpose(_ref_forward_folded(x_nhwc, fw, stride),
                             (0, 3, 1, 2))
        assert jnp.allclose(y, y_bf, rtol=1e-2, atol=1e-2), (
            stride, float(jnp.max(jnp.abs(y - y_bf))))

        # Loose sanity check vs. the full-f32 reference of the original module.
        y_f32 = jnp.transpose(_ref_forward_f32(x_nhwc, params, stride),
                              (0, 3, 1, 2))
        err = float(jnp.max(jnp.abs(y - y_f32)))
        scale = float(jnp.max(jnp.abs(y_f32)))
        assert err <= 0.05 * scale + 0.05, (stride, err, scale)

    print("KERNEL_OK")
</pallas_src>

<mosaic_0001>
module attributes {stable_mosaic.version = 11 : i64} {
  func.func @_pw1_kernel(%arg0: i32, %arg1: memref<512x16xbf16, #tpu.memory_space<vmem>>, %arg2: memref<16x8xbf16, #tpu.memory_space<vmem>>, %arg3: memref<1x8xf32, #tpu.memory_space<vmem>>, %arg4: memref<512x8xbf16, #tpu.memory_space<vmem>>) attributes {dimension_semantics = [#tpu.dimension_semantics<parallel>], iteration_bounds = array<i64: 1>, scalar_prefetch = 0 : i64, scratch_operands = 0 : i64, tpu.core_type = #tpu.core_type<tc>, window_params = [{transform_indices = @transform_0, window_bounds = array<i64: 512, 16>}, {pipeline_mode = #tpu.pipeline_mode<synchronous>, transform_indices = @transform_1, window_bounds = array<i64: 16, 8>}, {pipeline_mode = #tpu.pipeline_mode<synchronous>, transform_indices = @transform_2, window_bounds = array<i64: 1, 8>}, {transform_indices = @transform_3, window_bounds = array<i64: 512, 8>}]} {
    %c0 = arith.constant 0 : index
    %c0_0 = arith.constant 0 : index
    %0 = vector.load %arg1[%c0, %c0_0] : memref<512x16xbf16, #tpu.memory_space<vmem>>, vector<512x16xbf16>
    %c0_1 = arith.constant 0 : index
    %c0_2 = arith.constant 0 : index
    %1 = vector.load %arg2[%c0_1, %c0_2] : memref<16x8xbf16, #tpu.memory_space<vmem>>, vector<16x8xbf16>
    %cst = arith.constant dense<0.000000e+00> : vector<512x8xf32>
    %2 = tpu.matmul %0, %1, %cst {dimension_numbers = #tpu.dot_dimension_numbers<[1], [0], [0], [1], [0, 0, 1, 1], [], []>} : vector<512x16xbf16>, vector<16x8xbf16>, vector<512x8xf32> -> vector<512x8xf32>
    %c0_3 = arith.constant 0 : index
    %c0_4 = arith.constant 0 : index
    %3 = vector.load %arg3[%c0_3, %c0_4] : memref<1x8xf32, #tpu.memory_space<vmem>>, vector<1x8xf32>
    %4 = vector.broadcast %3 : vector<1x8xf32> to vector<512x8xf32>
    %5 = arith.addf %2, %4 : vector<512x8xf32>
    %cst_5 = arith.constant 0.000000e+00 : f32
    %6 = vector.broadcast %cst_5 : f32 to vector<512x8xf32>
    %7 = arith.maximumf %5, %6 : vector<512x8xf32>
    %8 = arith.truncf %7 : vector<512x8xf32> to vector<512x8xbf16>
    %c0_6 = arith.constant 0 : index
    %c0_7 = arith.constant 0 : index
    %9 = vector.load %arg4[%c0_6, %c0_7] : memref<512x8xbf16, #tpu.memory_space<vmem>>, vector<512x8xbf16>
    tpu.vector_store %arg4[%c0_6, %c0_7], %8 {strides = array<i32>} : memref<512x8xbf16, #tpu.memory_space<vmem>>, vector<512x8xbf16>,
    return
  }
  func.func @transform_0(%arg0: i32) -> (i32, i32) {
    %c0_i32 = arith.constant 0 : i32
    %c0_i32_0 = arith.constant 0 : i32
    return %arg0, %c0_i32 : i32, i32
  }
  func.func @transform_1(%arg0: i32) -> (i32, i32) {
    %c0_i32 = arith.constant 0 : i32
    %c0_i32_0 = arith.constant 0 : i32
    %c0_i32_1 = arith.constant 0 : i32
    return %c0_i32, %c0_i32_0 : i32, i32
  }
  func.func @transform_2(%arg0: i32) -> (i32, i32) {
    %c0_i32 = arith.constant 0 : i32
    %c0_i32_0 = arith.constant 0 : i32
    %c0_i32_1 = arith.constant 0 : i32
    return %c0_i32, %c0_i32_0 : i32, i32
  }
  func.func @transform_3(%arg0: i32) -> (i32, i32) {
    %c0_i32 = arith.constant 0 : i32
    %c0_i32_0 = arith.constant 0 : i32
    return %arg0, %c0_i32 : i32, i32
  }
}

module attributes {stable_mosaic.version = 11 : i64} {
  func.func @kernel(%arg0: i32, %arg1: i32, %arg2: memref<1x16x16x8xbf16, #tpu.memory_space<vmem>>, %arg3: memref<3x3x8x8xbf16, #tpu.memory_space<vmem>>, %arg4: memref<1x8xf32, #tpu.memory_space<vmem>>, %arg5: memref<256x8xbf16, #tpu.memory_space<vmem>>, %arg6: memref<18x18x8xbf16, #tpu.memory_space<vmem>>) attributes {dimension_semantics = [#tpu.dimension_semantics<parallel>, #tpu.dimension_semantics<arbitrary>], iteration_bounds = array<i64: 2, 1>, scalar_prefetch = 0 : i64, scratch_operands = 1 : i64, tpu.core_type = #tpu.core_type<tc>, window_params = [{transform_indices = @transform_0, window_bounds = array<i64: 1, 16, 16, 8>}, {pipeline_mode = #tpu.pipeline_mode<synchronous>, transform_indices = @transform_1, window_bounds = array<i64: 3, 3, 8, 8>}, {pipeline_mode = #tpu.pipeline_mode<synchronous>, transform_indices = @transform_2, window_bounds = array<i64: 1, 8>}, {transform_indices = @transform_3, window_bounds = array<i64: 256, 8>}]} {
    %c0_i32 = arith.constant 0 : i32
    %0 = arith.cmpi eq, %arg1, %c0_i32 : i32
    %1 = arith.extui %0 : i1 to i32
    %c0_i32_0 = arith.constant 0 : i32
    %2 = arith.cmpi ne, %1, %c0_i32_0 : i32
    scf.if %2 {
      %cst_72 = arith.constant 0.000000e+00 : bf16
      %83 = vector.broadcast %cst_72 : bf16 to vector<18x18x8xbf16>
      %c0_73 = arith.constant 0 : index
      %c0_74 = arith.constant 0 : index
      %c0_75 = arith.constant 0 : index
      %84 = vector.load %arg6[%c0_73, %c0_74, %c0_75] : memref<18x18x8xbf16, #tpu.memory_space<vmem>>, vector<18x18x8xbf16>
      tpu.vector_store %arg6[%c0_73, %c0_74, %c0_75], %83 {strides = array<i32>} : memref<18x18x8xbf16, #tpu.memory_space<vmem>>, vector<18x18x8xbf16>,
      %c0_76 = arith.constant 0 : index
      %c0_77 = arith.constant 0 : index
      %c0_78 = arith.constant 0 : index
      %c0_79 = arith.constant 0 : index
      %85 = vector.load %arg2[%c0_76, %c0_77, %c0_78, %c0_79] : memref<1x16x16x8xbf16, #tpu.memory_space<vmem>>, vector<1x16x16x8xbf16>
      %86 = vector.shape_cast %85 : vector<1x16x16x8xbf16> to vector<16x16x8xbf16>
      %c1_80 = arith.constant 1 : index
      %c1_81 = arith.constant 1 : index
      %c0_82 = arith.constant 0 : index
      %87 = vector.load %arg6[%c1_80, %c1_81, %c0_82] : memref<18x18x8xbf16, #tpu.memory_space<vmem>>, vector<16x16x8xbf16>
      tpu.vector_store %arg6[%c1_80, %c1_81, %c0_82], %86 {strides = array<i32>} : memref<18x18x8xbf16, #tpu.memory_space<vmem>>, vector<16x16x8xbf16>,
    } else {
    }
    %c16_i32 = arith.constant 16 : i32
    %3 = arith.muli %arg1, %c16_i32 : i32
    %4 = tpu.assume_multiple %3, 8 : i32
    %c0_i32_1 = arith.constant 0 : i32
    %5 = arith.addi %4, %c0_i32_1 : i32
    %6 = arith.index_cast %5 : i32 to index
    %c0 = arith.constant 0 : index
    %c0_2 = arith.constant 0 : index
    %7 = vector.load %arg6[%6, %c0, %c0_2] : memref<18x18x8xbf16, #tpu.memory_space<vmem>>, vector<16x16x8xbf16>
    %8 = vector.shape_cast %7 : vector<16x16x8xbf16> to vector<256x8xbf16>
    %c0_3 = arith.constant 0 : index
    %c0_4 = arith.constant 0 : index
    %c0_5 = arith.constant 0 : index
    %c0_6 = arith.constant 0 : index
    %9 = vector.load %arg3[%c0_3, %c0_4, %c0_5, %c0_6] : memref<3x3x8x8xbf16, #tpu.memory_space<vmem>>, vector<1x1x8x8xbf16>
    %10 = vector.shape_cast %9 : vector<1x1x8x8xbf16> to vector<8x8xbf16>
    %cst = arith.constant dense<0.000000e+00> : vector<256x8xf32>
    %11 = tpu.matmul %8, %10, %cst {dimension_numbers = #tpu.dot_dimension_numbers<[1], [0], [0], [1], [0, 0, 1, 1], [], []>} : vector<256x8xbf16>, vector<8x8xbf16>, vector<256x8xf32> -> vector<256x8xf32>
    %c0_i32_7 = arith.constant 0 : i32
    %12 = arith.addi %4, %c0_i32_7 : i32
    %13 = arith.index_cast %12 : i32 to index
    %c1 = arith.constant 1 : index
    %c0_8 = arith.constant 0 : index
    %14 = vector.load %arg6[%13, %c1, %c0_8] : memref<18x18x8xbf16, #tpu.memory_space<vmem>>, vector<16x16x8xbf16>
    %15 = vector.shape_cast %14 : vector<16x16x8xbf16> to vector<256x8xbf16>
    %c0_9 = arith.constant 0 : index
    %c1_10 = arith.constant 1 : index
    %c0_11 = arith.constant 0 : index
    %c0_12 = arith.constant 0 : index
    %16 = vector.load %arg3[%c0_9, %c1_10, %c0_11, %c0_12] : memref<3x3x8x8xbf16, #tpu.memory_space<vmem>>, vector<1x1x8x8xbf16>
    %17 = vector.shape_cast %16 : vector<1x1x8x8xbf16> to vector<8x8xbf16>
    %cst_13 = arith.constant dense<0.000000e+00> : vector<256x8xf32>
    %18 = tpu.matmul %15, %17, %cst_13 {dimension_numbers = #tpu.dot_dimension_numbers<[1], [0], [0], [1], [0, 0, 1, 1], [], []>} : vector<256x8xbf16>, vector<8x8xbf16>, vector<256x8xf32> -> vector<256x8xf32>
    %19 = arith.addf %11, %18 : vector<256x8xf32>
    %c0_i32_14 = arith.constant 0 : i32
    %20 = arith.addi %4, %c0_i32_14 : i32
    %21 = arith.index_cast %20 : i32 to index
    %c2 = arith.constant 2 : index
    %c0_15 = arith.constant 0 : index
    %22 = vector.load %arg6[%21, %c2, %c0_15] : memref<18x18x8xbf16, #tpu.memory_space<vmem>>, vector<16x16x8xbf16>
    %23 = vector.shape_cast %22 : vector<16x16x8xbf16> to vector<256x8xbf16>
    %c0_16 = arith.constant 0 : index
    %c2_17 = arith.constant 2 : index
    %c0_18 = arith.constant 0 : index
    %c0_19 = arith.constant 0 : index
    %24 = vector.load %arg3[%c0_16, %c2_17, %c0_18, %c0_19] : memref<3x3x8x8xbf16, #tpu.memory_space<vmem>>, vector<1x1x8x8xbf16>
    %25 = vector.shape_cast %24 : vector<1x1x8x8xbf16> to vector<8x8xbf16>
    %cst_20 = arith.constant dense<0.000000e+00> : vector<256x8xf32>
    %26 = tpu.matmul %23, %25, %cst_20 {dimension_numbers = #tpu.dot_dimension_numbers<[1], [0], [0], [1], [0, 0, 1, 1], [], []>} : vector<256x8xbf16>, vector<8x8xbf16>, vector<256x8xf32> -> vector<256x8xf32>
    %27 = arith.addf %19, %26 : vector<256x8xf32>
    %c1_i32 = arith.constant 1 : i32
    %28 = arith.addi %4, %c1_i32 : i32
    %29 = arith.index_cast %28 : i32 to index
    %c0_21 = arith.constant 0 : index
    %c0_22 = arith.constant 0 : index
    %30 = vector.load %arg6[%29, %c0_21, %c0_22] : memref<18x18x8xbf16, #tpu.memory_space<vmem>>, vector<16x16x8xbf16>
    %31 = vector.shape_cast %30 : vector<16x16x8xbf16> to vector<256x8xbf16>
    %c1_23 = arith.constant 1 : index
    %c0_24 = arith.constant 0 : index
    %c0_25 = arith.constant 0 : index
    %c0_26 = arith.constant 0 : index
    %32 = vector.load %arg3[%c1_23, %c0_24, %c0_25, %c0_26] : memref<3x3x8x8xbf16, #tpu.memory_space<vmem>>, vector<1x1x8x8xbf16>
    %33 = vector.shape_cast %32 : vector<1x1x8x8xbf16> to vector<8x8xbf16>
    %cst_27 = arith.constant dense<0.000000e+00> : vector<256x8xf32>
    %34 = tpu.matmul %31, %33, %cst_27 {dimension_numbers = #tpu.dot_dimension_numbers<[1], [0], [0], [1], [0, 0, 1, 1], [], []>} : vector<256x8xbf16>, vector<8x8xbf16>, vector<256x8xf32> -> vector<256x8xf32>
    %35 = arith.addf %27, %34 : vector<256x8xf32>
    %c1_i32_28 = arith.constant 1 : i32
    %36 = arith.addi %4, %c1_i32_28 : i32
    %37 = arith.index_cast %36 : i32 to index
    %c1_29 = arith.constant 1 : index
    %c0_30 = arith.constant 0 : index
    %38 = vector.load %arg6[%37, %c1_29, %c0_30] : memref<18x18x8xbf16, #tpu.memory_space<vmem>>, vector<16x16x8xbf16>
    %39 = vector.shape_cast %38 : vector<16x16x8xbf16> to vector<256x8xbf16>
    %c1_31 = arith.constant 1 : index
    %c1_32 = arith.constant 1 : index
    %c0_33 = arith.constant 0 : index
    %c0_34 = arith.constant 0 : index
    %40 = vector.load %arg3[%c1_31, %c1_32, %c0_33, %c0_34] : memref<3x3x8x8xbf16, #tpu.memory_space<vmem>>, vector<1x1x8x8xbf16>
    %41 = vector.shape_cast %40 : vector<1x1x8x8xbf16> to vector<8x8xbf16>
    %cst_35 = arith.constant dense<0.000000e+00> : vector<256x8xf32>
    %42 = tpu.matmul %39, %41, %cst_35 {dimension_numbers = #tpu.dot_dimension_numbers<[1], [0], [0], [1], [0, 0, 1, 1], [], []>} : vector<256x8xbf16>, vector<8x8xbf16>, vector<256x8xf32> -> vector<256x8xf32>
    %43 = arith.addf %35, %42 : vector<256x8xf32>
    %c1_i32_36 = arith.constant 1 : i32
    %44 = arith.addi %4, %c1_i32_36 : i32
    %45 = arith.index_cast %44 : i32 to index
    %c2_37 = arith.constant 2 : index
    %c0_38 = arith.constant 0 : index
    %46 = vector.load %arg6[%45, %c2_37, %c0_38] : memref<18x18x8xbf16, #tpu.memory_space<vmem>>, vector<16x16x8xbf16>
    %47 = vector.shape_cast %46 : vector<16x16x8xbf16> to vector<256x8xbf16>
    %c1_39 = arith.constant 1 : index
    %c2_40 = arith.constant 2 : index
    %c0_41 = arith.constant 0 : index
    %c0_42 = arith.constant 0 : index
    %48 = vector.load %arg3[%c1_39, %c2_40, %c0_41, %c0_42] : memref<3x3x8x8xbf16, #tpu.memory_space<vmem>>, vector<1x1x8x8xbf16>
    %49 = vector.shape_cast %48 : vector<1x1x8x8xbf16> to vector<8x8xbf16>
    %cst_43 = arith.constant dense<0.000000e+00> : vector<256x8xf32>
    %50 = tpu.matmul %47, %49, %cst_43 {dimension_numbers = #tpu.dot_dimension_numbers<[1], [0], [0], [1], [0, 0, 1, 1], [], []>} : vector<256x8xbf16>, vector<8x8xbf16>, vector<256x8xf32> -> vector<256x8xf32>
    %51 = arith.addf %43, %50 : vector<256x8xf32>
    %c2_i32 = arith.constant 2 : i32
    %52 = arith.addi %4, %c2_i32 : i32
    %53 = arith.index_cast %52 : i32 to index
    %c0_44 = arith.constant 0 : index
    %c0_45 = arith.constant 0 : index
    %54 = vector.load %arg6[%53, %c0_44, %c0_45] : memref<18x18x8xbf16, #tpu.memory_space<vmem>>, vector<16x16x8xbf16>
    %55 = vector.shape_cast %54 : vector<16x16x8xbf16> to vector<256x8xbf16>
    %c2_46 = arith.constant 2 : index
    %c0_47 = arith.constant 0 : index
    %c0_48 = arith.constant 0 : index
    %c0_49 = arith.constant 0 : index
    %56 = vector.load %arg3[%c2_46, %c0_47, %c0_48, %c0_49] : memref<3x3x8x8xbf16, #tpu.memory_space<vmem>>, vector<1x1x8x8xbf16>
    %57 = vector.shape_cast %56 : vector<1x1x8x8xbf16> to vector<8x8xbf16>
    %cst_50 = arith.constant dense<0.000000e+00> : vector<256x8xf32>
    %58 = tpu.matmul %55, %57, %cst_50 {dimension_numbers = #tpu.dot_dimension_numbers<[1], [0], [0], [1], [0, 0, 1, 1], [], []>} : vector<256x8xbf16>, vector<8x8xbf16>, vector<256x8xf32> -> vector<256x8xf32>
    %59 = arith.addf %51, %58 : vector<256x8xf32>
    %c2_i32_51 = arith.constant 2 : i32
    %60 = arith.addi %4, %c2_i32_51 : i32
    %61 = arith.index_cast %60 : i32 to index
    %c1_52 = arith.constant 1 : index
    %c0_53 = arith.constant 0 : index
    %62 = vector.load %arg6[%61, %c1_52, %c0_53] : memref<18x18x8xbf16, #tpu.memory_space<vmem>>, vector<16x16x8xbf16>
    %63 = vector.shape_cast %62 : vector<16x16x8xbf16> to vector<256x8xbf16>
    %c2_54 = arith.constant 2 : index
    %c1_55 = arith.constant 1 : index
    %c0_56 = arith.constant 0 : index
    %c0_57 = arith.constant 0 : index
    %64 = vector.load %arg3[%c2_54, %c1_55, %c0_56, %c0_57] : memref<3x3x8x8xbf16, #tpu.memory_space<vmem>>, vector<1x1x8x8xbf16>
    %65 = vector.shape_cast %64 : vector<1x1x8x8xbf16> to vector<8x8xbf16>
    %cst_58 = arith.constant dense<0.000000e+00> : vector<256x8xf32>
    %66 = tpu.matmul %63, %65, %cst_58 {dimension_numbers = #tpu.dot_dimension_numbers<[1], [0], [0], [1], [0, 0, 1, 1], [], []>} : vector<256x8xbf16>, vector<8x8xbf16>, vector<256x8xf32> -> vector<256x8xf32>
    %67 = arith.addf %59, %66 : vector<256x8xf32>
    %c2_i32_59 = arith.constant 2 : i32
    %68 = arith.addi %4, %c2_i32_59 : i32
    %69 = arith.index_cast %68 : i32 to index
    %c2_60 = arith.constant 2 : index
    %c0_61 = arith.constant 0 : index
    %70 = vector.load %arg6[%69, %c2_60, %c0_61] : memref<18x18x8xbf16, #tpu.memory_space<vmem>>, vector<16x16x8xbf16>
    %71 = vector.shape_cast %70 : vector<16x16x8xbf16> to vector<256x8xbf16>
    %c2_62 = arith.constant 2 : index
    %c2_63 = arith.constant 2 : index
    %c0_64 = arith.constant 0 : index
    %c0_65 = arith.constant 0 : index
    %72 = vector.load %arg3[%c2_62, %c2_63, %c0_64, %c0_65] : memref<3x3x8x8xbf16, #tpu.memory_space<vmem>>, vector<1x1x8x8xbf16>
    %73 = vector.shape_cast %72 : vector<1x1x8x8xbf16> to vector<8x8xbf16>
    %cst_66 = arith.constant dense<0.000000e+00> : vector<256x8xf32>
    %74 = tpu.matmul %71, %73, %cst_66 {dimension_numbers = #tpu.dot_dimension_numbers<[1], [0], [0], [1], [0, 0, 1, 1], [], []>} : vector<256x8xbf16>, vector<8x8xbf16>, vector<256x8xf32> -> vector<256x8xf32>
    %75 = arith.addf %67, %74 : vector<256x8xf32>
    %c0_67 = arith.constant 0 : index
    %c0_68 = arith.constant 0 : index
    %76 = vector.load %arg4[%c0_67, %c0_68] : memref<1x8xf32, #tpu.memory_space<vmem>>, vector<1x8xf32>
    %77 = vector.broadcast %76 : vector<1x8xf32> to vector<256x8xf32>
    %78 = arith.addf %75, %77 : vector<256x8xf32>
    %cst_69 = arith.constant 0.000000e+00 : f32
    %79 = vector.broadcast %cst_69 : f32 to vector<256x8xf32>
    %80 = arith.maximumf %78, %79 : vector<256x8xf32>
    %81 = arith.truncf %80 : vector<256x8xf32> to vector<256x8xbf16>
    %c0_70 = arith.constant 0 : index
    %c0_71 = arith.constant 0 : index
    %82 = vector.load %arg5[%c0_70, %c0_71] : memref<256x8xbf16, #tpu.memory_space<vmem>>, vector<256x8xbf16>
    tpu.vector_store %arg5[%c0_70, %c0_71], %81 {strides = array<i32>} : memref<256x8xbf16, #tpu.memory_space<vmem>>, vector<256x8xbf16>,
    return
  }
  func.func @transform_0(%arg0: i32, %arg1: i32) -> (i32, i32, i32, i32) {
    %c0_i32 = arith.constant 0 : i32
    %c0_i32_0 = arith.constant 0 : i32
    %c0_i32_1 = arith.constant 0 : i32
    %c0_i32_2 = arith.constant 0 : i32
    return %arg0, %c0_i32, %c0_i32_0, %c0_i32_1 : i32, i32, i32, i32
  }
  func.func @transform_1(%arg0: i32, %arg1: i32) -> (i32, i32, i32, i32) {
    %c0_i32 = arith.constant 0 : i32
    %c0_i32_0 = arith.constant 0 : i32
    %c0_i32_1 = arith.constant 0 : i32
    %c0_i32_2 = arith.constant 0 : i32
    %c0_i32_3 = arith.constant 0 : i32
    return %c0_i32, %c0_i32_0, %c0_i32_1, %c0_i32_2 : i32, i32, i32, i32
  }
  func.func @transform_2(%arg0: i32, %arg1: i32) -> (i32, i32) {
    %c0_i32 = arith.constant 0 : i32
    %c0_i32_0 = arith.constant 0 : i32
    %c0_i32_1 = arith.constant 0 : i32
    return %c0_i32, %c0_i32_0 : i32, i32
  }
  func.func @transform_3(%arg0: i32, %arg1: i32) -> (i32, i32) {
    %c1_i32 = arith.constant 1 : i32
    %0 = arith.muli %arg0, %c1_i32 : i32
    %1 = arith.addi %0, %arg1 : i32
    %c0_i32 = arith.constant 0 : i32
    %c0_i32_0 = arith.constant 0 : i32
    return %1, %c0_i32 : i32, i32
  }
}

module attributes {stable_mosaic.version = 11 : i64} {
  func.func @_pw3_ds_flat_kernel(%arg0: i32, %arg1: memref<512x8xbf16, #tpu.memory_space<vmem>>, %arg2: memref<8x32xbf16, #tpu.memory_space<vmem>>, %arg3: memref<512x16xbf16, #tpu.memory_space<vmem>>, %arg4: memref<16x32xbf16, #tpu.memory_space<vmem>>, %arg5: memref<1x32xf32, #tpu.memory_space<vmem>>, %arg6: memref<512x32xf32, #tpu.memory_space<vmem>>) attributes {dimension_semantics = [#tpu.dimension_semantics<parallel>], iteration_bounds = array<i64: 1>, scalar_prefetch = 0 : i64, scratch_operands = 0 : i64, tpu.core_type = #tpu.core_type<tc>, window_params = [{transform_indices = @transform_0, window_bounds = array<i64: 512, 8>}, {pipeline_mode = #tpu.pipeline_mode<synchronous>, transform_indices = @transform_1, window_bounds = array<i64: 8, 32>}, {transform_indices = @transform_2, window_bounds = array<i64: 512, 16>}, {pipeline_mode = #tpu.pipeline_mode<synchronous>, transform_indices = @transform_3, window_bounds = array<i64: 16, 32>}, {pipeline_mode = #tpu.pipeline_mode<synchronous>, transform_indices = @transform_4, window_bounds = array<i64: 1, 32>}, {transform_indices = @transform_5, window_bounds = array<i64: 512, 32>}]} {
    %c0 = arith.constant 0 : index
    %c0_0 = arith.constant 0 : index
    %0 = vector.load %arg1[%c0, %c0_0] : memref<512x8xbf16, #tpu.memory_space<vmem>>, vector<512x8xbf16>
    %c0_1 = arith.constant 0 : index
    %c0_2 = arith.constant 0 : index
    %1 = vector.load %arg2[%c0_1, %c0_2] : memref<8x32xbf16, #tpu.memory_space<vmem>>, vector<8x32xbf16>
    %cst = arith.constant dense<0.000000e+00> : vector<512x32xf32>
    %2 = tpu.matmul %0, %1, %cst {dimension_numbers = #tpu.dot_dimension_numbers<[1], [0], [0], [1], [0, 0, 1, 1], [], []>} : vector<512x8xbf16>, vector<8x32xbf16>, vector<512x32xf32> -> vector<512x32xf32>
    %c0_3 = arith.constant 0 : index
    %c0_4 = arith.constant 0 : index
    %3 = vector.load %arg3[%c0_3, %c0_4] : memref<512x16xbf16, #tpu.memory_space<vmem>>, vector<512x16xbf16>
    %c0_5 = arith.constant 0 : index
    %c0_6 = arith.constant 0 : index
    %4 = vector.load %arg4[%c0_5, %c0_6] : memref<16x32xbf16, #tpu.memory_space<vmem>>, vector<16x32xbf16>
    %cst_7 = arith.constant dense<0.000000e+00> : vector<512x32xf32>
    %5 = tpu.matmul %3, %4, %cst_7 {dimension_numbers = #tpu.dot_dimension_numbers<[1], [0], [0], [1], [0, 0, 1, 1], [], []>} : vector<512x16xbf16>, vector<16x32xbf16>, vector<512x32xf32> -> vector<512x32xf32>
    %6 = arith.addf %2, %5 : vector<512x32xf32>
    %c0_8 = arith.constant 0 : index
    %c0_9 = arith.constant 0 : index
    %7 = vector.load %arg5[%c0_8, %c0_9] : memref<1x32xf32, #tpu.memory_space<vmem>>, vector<1x32xf32>
    %8 = vector.broadcast %7 : vector<1x32xf32> to vector<512x32xf32>
    %9 = arith.addf %6, %8 : vector<512x32xf32>
    %cst_10 = arith.constant 0.000000e+00 : f32
    %10 = vector.broadcast %cst_10 : f32 to vector<512x32xf32>
    %11 = arith.maximumf %9, %10 : vector<512x32xf32>
    %c0_11 = arith.constant 0 : index
    %c0_12 = arith.constant 0 : index
    %12 = vector.load %arg6[%c0_11, %c0_12] : memref<512x32xf32, #tpu.memory_space<vmem>>, vector<512x32xf32>
    tpu.vector_store %arg6[%c0_11, %c0_12], %11 {strides = array<i32>} : memref<512x32xf32, #tpu.memory_space<vmem>>, vector<512x32xf32>,
    return
  }
  func.func @transform_0(%arg0: i32) -> (i32, i32) {
    %c0_i32 = arith.constant 0 : i32
    %c0_i32_0 = arith.constant 0 : i32
    return %arg0, %c0_i32 : i32, i32
  }
  func.func @transform_1(%arg0: i32) -> (i32, i32) {
    %c0_i32 = arith.constant 0 : i32
    %c0_i32_0 = arith.constant 0 : i32
    %c0_i32_1 = arith.constant 0 : i32
    return %c0_i32, %c0_i32_0 : i32, i32
  }
  func.func @transform_2(%arg0: i32) -> (i32, i32) {
    %c0_i32 = arith.constant 0 : i32
    %c0_i32_0 = arith.constant 0 : i32
    return %arg0, %c0_i32 : i32, i32
  }
  func.func @transform_3(%arg0: i32) -> (i32, i32) {
    %c0_i32 = arith.constant 0 : i32
    %c0_i32_0 = arith.constant 0 : i32
    %c0_i32_1 = arith.constant 0 : i32
    return %c0_i32, %c0_i32_0 : i32, i32
  }
  func.func @transform_4(%arg0: i32) -> (i32, i32) {
    %c0_i32 = arith.constant 0 : i32
    %c0_i32_0 = arith.constant 0 : i32
    %c0_i32_1 = arith.constant 0 : i32
    return %c0_i32, %c0_i32_0 : i32, i32
  }
  func.func @transform_5(%arg0: i32) -> (i32, i32) {
    %c0_i32 = arith.constant 0 : i32
    %c0_i32_0 = arith.constant 0 : i32
    return %arg0, %c0_i32 : i32, i32
  }
}

</mosaic_0001>

<llo_original>
// kernel: bottleneck_forward_nchw.3
$region0: #{bottleneck_forward_nchw.3}
  #allocation0 [shape = 'u32[]', space=smem, size = 0x4, offset = 0x4, fixed_abs, tag = 'smem constant byte address 0x4 - core index']
  #allocation1 [shape = 'u32[144,128]{1,0:T(1,128)}', space=vmem, size = 0x12000, scoped, tag = 'internal scratch']
  %s0 = inlined_call_operand.vmem [shape: bf16[512,16], index: 0, kind: input, shape index: {}]
  %s1 = inlined_call_operand.vmem [shape: bf16[16,8], index: 1, kind: input, shape index: {}]
  %s2 = inlined_call_operand.vmem [shape: f32[1,8], index: 2, kind: input, shape index: {}]
  %s3 = inlined_call_operand.vmem [shape: bf16[512,8], index: 3, kind: output, shape index: {}]
  %s4 = sld [smem:[#allocation0]]
  $region22: #{bottleneck_forward_nchw.3} parent=0
    _
  %s6 = ssub.s32 1, %s4
  %s7 = scalar_select 0, %s6, %s4
  // Predicated region
  $region2: #{bottleneck_forward_nchw.3} parent=0 // pred_check
    _
  $region3: #{bottleneck_forward_nchw.3} parent=0 // pred_check_branch
    %9 = sbr.rel (0) target = $region5
  $region4: #{bottleneck_forward_nchw.3} parent=0 // pred_region
    _
  $region5: #{bottleneck_forward_nchw.3} parent=0 // pred_fallthru
    _
  // Predicated region
  $region6: #{bottleneck_forward_nchw.3} parent=0 // pred_check
    _
  $region7: #{bottleneck_forward_nchw.3} parent=0 // pred_check_branch
    %11 = sbr.rel (0) target = $region9
  $region8: #{bottleneck_forward_nchw.3} parent=0 // pred_region
    _
  $region9: #{bottleneck_forward_nchw.3} parent=0 // pred_fallthru
    _
  // Predicated region
  $region10: #{bottleneck_forward_nchw.3} parent=0 // pred_check
    _
  $region11: #{bottleneck_forward_nchw.3} parent=0 // pred_check_branch
    %13 = sbr.rel (0) target = $region13
  $region12: #{bottleneck_forward_nchw.3} parent=0 // pred_region
    _
  $region13: #{bottleneck_forward_nchw.3} parent=0 // pred_fallthru
    _
  %v15 = vld [vmem:[%s0] sm:$0xf]
  %v16 = vld [vmem:[%s0 + $0x4] sm:$0xf]
  %v17 = vld [vmem:[%s0 + $0x8] sm:$0xf]
  %v18 = vld [vmem:[%s0 + $0xc] sm:$0xf]
  %v19 = vld [vmem:[%s0 + $0x10] sm:$0xf]
  %v20 = vld [vmem:[%s0 + $0x14] sm:$0xf]
  %v21 = vld [vmem:[%s0 + $0x18] sm:$0xf]
  %v22 = vld [vmem:[%s0 + $0x1c] sm:$0xf]
  %v23 = vld [vmem:[%s0 + $0x20] sm:$0xf]
  %v24 = vld [vmem:[%s0 + $0x24] sm:$0xf]
  %v25 = vld [vmem:[%s0 + $0x28] sm:$0xf]
  %v26 = vld [vmem:[%s0 + $0x2c] sm:$0xf]
  %v27 = vld [vmem:[%s0 + $0x30] sm:$0xf]
  %v28 = vld [vmem:[%s0 + $0x34] sm:$0xf]
  %v29 = vld [vmem:[%s0 + $0x38] sm:$0xf]
  %v30 = vld [vmem:[%s0 + $0x3c] sm:$0xf]
  %v31 = vld [vmem:[%s0 + $0x40] sm:$0xf]
  %v32 = vld [vmem:[%s0 + $0x44] sm:$0xf]
  %v33 = vld [vmem:[%s0 + $0x48] sm:$0xf]
  %v34 = vld [vmem:[%s0 + $0x4c] sm:$0xf]
  %v35 = vld [vmem:[%s0 + $0x50] sm:$0xf]
  %v36 = vld [vmem:[%s0 + $0x54] sm:$0xf]
  %v37 = vld [vmem:[%s0 + $0x58] sm:$0xf]
  %v38 = vld [vmem:[%s0 + $0x5c] sm:$0xf]
  %v39 = vld [vmem:[%s0 + $0x60] sm:$0xf]
  %v40 = vld [vmem:[%s0 + $0x64] sm:$0xf]
  %v41 = vld [vmem:[%s0 + $0x68] sm:$0xf]
  %v42 = vld [vmem:[%s0 + $0x6c] sm:$0xf]
  %v43 = vld [vmem:[%s0 + $0x70] sm:$0xf]
  %v44 = vld [vmem:[%s0 + $0x74] sm:$0xf]
  %v45 = vld [vmem:[%s0 + $0x78] sm:$0xf]
  %v46 = vld [vmem:[%s0 + $0x7c] sm:$0xf]
  %v47 = vld [vmem:[%s0 + $0x80] sm:$0xf]
  %v48 = vld [vmem:[%s0 + $0x84] sm:$0xf]
  %v49 = vld [vmem:[%s0 + $0x88] sm:$0xf]
  %v50 = vld [vmem:[%s0 + $0x8c] sm:$0xf]
  %v51 = vld [vmem:[%s0 + $0x90] sm:$0xf]
  %v52 = vld [vmem:[%s0 + $0x94] sm:$0xf]
  %v53 = vld [vmem:[%s0 + $0x98] sm:$0xf]
  %v54 = vld [vmem:[%s0 + $0x9c] sm:$0xf]
  %v55 = vld [vmem:[%s0 + $0xa0] sm:$0xf]
  %v56 = vld [vmem:[%s0 + $0xa4] sm:$0xf]
  %v57 = vld [vmem:[%s0 + $0xa8] sm:$0xf]
  %v58 = vld [vmem:[%s0 + $0xac] sm:$0xf]
  %v59 = vld [vmem:[%s0 + $0xb0] sm:$0xf]
  %v60 = vld [vmem:[%s0 + $0xb4] sm:$0xf]
  %v61 = vld [vmem:[%s0 + $0xb8] sm:$0xf]
  %v62 = vld [vmem:[%s0 + $0xbc] sm:$0xf]
  %v63 = vld [vmem:[%s0 + $0xc0] sm:$0xf]
  %v64 = vld [vmem:[%s0 + $0xc4] sm:$0xf]
  %v65 = vld [vmem:[%s0 + $0xc8] sm:$0xf]
  %v66 = vld [vmem:[%s0 + $0xcc] sm:$0xf]
  %v67 = vld [vmem:[%s0 + $0xd0] sm:$0xf]
  %v68 = vld [vmem:[%s0 + $0xd4] sm:$0xf]
  %v69 = vld [vmem:[%s0 + $0xd8] sm:$0xf]
  %v70 = vld [vmem:[%s0 + $0xdc] sm:$0xf]
  %v71 = vld [vmem:[%s0 + $0xe0] sm:$0xf]
  %v72 = vld [vmem:[%s0 + $0xe4] sm:$0xf]
  %v73 = vld [vmem:[%s0 + $0xe8] sm:$0xf]
  %v74 = vld [vmem:[%s0 + $0xec] sm:$0xf]
  %v75 = vld [vmem:[%s0 + $0xf0] sm:$0xf]
  %v76 = vld [vmem:[%s0 + $0xf4] sm:$0xf]
  %v77 = vld [vmem:[%s0 + $0xf8] sm:$0xf]
  %v78 = vld [vmem:[%s0 + $0xfc] sm:$0xf]
  %v79 = vld [vmem:[%s1] sm:$0xf]
  %v80 = vld [vmem:[%s1 + $0x4] sm:$0xf]
  %v81 = vld [vmem:[%s2] sm:$0x1]
  %v83 = vlaneseq
  %v84 = vshrl.u32 %v83, 7
  %v85 = vsub.s32 0, %v84
  %v86 = vrot.slane %v81, %v85
  %v152 = vunpack.c.l.b16 %v15
  %v153 = vunpack.c.l.b16 %v16
  %v154 = vunpack.c.l.b16 %v17
  %v155 = vunpack.c.l.b16 %v18
  %v156 = vunpack.c.l.b16 %v19
  %v157 = vunpack.c.l.b16 %v20
  %v158 = vunpack.c.l.b16 %v21
  %v159 = vunpack.c.l.b16 %v22
  %v160 = vunpack.c.l.b16 %v23
  %v161 = vunpack.c.l.b16 %v24
  %v162 = vunpack.c.l.b16 %v25
  %v163 = vunpack.c.l.b16 %v26
  %v164 = vunpack.c.l.b16 %v27
  %v165 = vunpack.c.l.b16 %v28
  %v166 = vunpack.c.l.b16 %v29
  %v167 = vunpack.c.l.b16 %v30
  %v168 = vunpack.c.l.b16 %v31
  %v169 = vunpack.c.l.b16 %v32
  %v170 = vunpack.c.l.b16 %v33
  %v171 = vunpack.c.l.b16 %v34
  %v172 = vunpack.c.l.b16 %v35
  %v173 = vunpack.c.l.b16 %v36
  %v174 = vunpack.c.l.b16 %v37
  %v175 = vunpack.c.l.b16 %v38
  %v176 = vunpack.c.l.b16 %v39
  %v177 = vunpack.c.l.b16 %v40
  %v178 = vunpack.c.l.b16 %v41
  %v179 = vunpack.c.l.b16 %v42
  %v180 = vunpack.c.l.b16 %v43
  %v181 = vunpack.c.l.b16 %v44
  %v182 = vunpack.c.l.b16 %v45
  %v183 = vunpack.c.l.b16 %v46
  %v184 = vunpack.c.l.b16 %v47
  %v185 = vunpack.c.l.b16 %v48
  %v186 = vunpack.c.l.b16 %v49
  %v187 = vunpack.c.l.b16 %v50
  %v188 = vunpack.c.l.b16 %v51
  %v189 = vunpack.c.l.b16 %v52
  %v190 = vunpack.c.l.b16 %v53
  %v191 = vunpack.c.l.b16 %v54
  %v192 = vunpack.c.l.b16 %v55
  %v193 = vunpack.c.l.b16 %v56
  %v194 = vunpack.c.l.b16 %v57
  %v195 = vunpack.c.l.b16 %v58
  %v196 = vunpack.c.l.b16 %v59
  %v197 = vunpack.c.l.b16 %v60
  %v198 = vunpack.c.l.b16 %v61
  %v199 = vunpack.c.l.b16 %v62
  %v200 = vunpack.c.l.b16 %v63
  %v201 = vunpack.c.l.b16 %v64
  %v202 = vunpack.c.l.b16 %v65
  %v203 = vunpack.c.l.b16 %v66
  %v204 = vunpack.c.l.b16 %v67
  %v205 = vunpack.c.l.b16 %v68
  %v206 = vunpack.c.l.b16 %v69
  %v207 = vunpack.c.l.b16 %v70
  %v208 = vunpack.c.l.b16 %v71
  %v209 = vunpack.c.l.b16 %v72
  %v210 = vunpack.c.l.b16 %v73
  %v211 = vunpack.c.l.b16 %v74
  %v212 = vunpack.c.l.b16 %v75
  %v213 = vunpack.c.l.b16 %v76
  %v214 = vunpack.c.l.b16 %v77
  %v215 = vunpack.c.l.b16 %v78
  %v216 = vpack.c.b16 %v153, %v152
  %v217 = vpack.c.b16 %v155, %v154
  %v218 = vpack.c.b16 %v157, %v156
  %v219 = vpack.c.b16 %v159, %v158
  %v220 = vpack.c.b16 %v161, %v160
  %v221 = vpack.c.b16 %v163, %v162
  %v222 = vpack.c.b16 %v165, %v164
  %v223 = vpack.c.b16 %v167, %v166
  %v224 = vpack.c.b16 %v169, %v168
  %v225 = vpack.c.b16 %v171, %v170
  %v226 = vpack.c.b16 %v173, %v172
  %v227 = vpack.c.b16 %v175, %v174
  %v228 = vpack.c.b16 %v177, %v176
  %v229 = vpack.c.b16 %v179, %v178
  %v230 = vpack.c.b16 %v181, %v180
  %v231 = vpack.c.b16 %v183, %v182
  %v232 = vpack.c.b16 %v185, %v184
  %v233 = vpack.c.b16 %v187, %v186
  %v234 = vpack.c.b16 %v189, %v188
  %v235 = vpack.c.b16 %v191, %v190
  %v236 = vpack.c.b16 %v193, %v192
  %v237 = vpack.c.b16 %v195, %v194
  %v238 = vpack.c.b16 %v197, %v196
  %v239 = vpack.c.b16 %v199, %v198
  %v240 = vpack.c.b16 %v201, %v200
  %v241 = vpack.c.b16 %v203, %v202
  %v242 = vpack.c.b16 %v205, %v204
  %v243 = vpack.c.b16 %v207, %v206
  %v244 = vpack.c.b16 %v209, %v208
  %v245 = vpack.c.b16 %v211, %v210
  %v246 = vpack.c.b16 %v213, %v212
  %v247 = vpack.c.b16 %v215, %v214
  %v250 = vunpack.c.l.b16 %v79
  %v251 = vunpack.c.l.b16 %v80
  %v252 = vpack.c.b16 %v251, %v250
  %vm254 = vcmask 130048
  %v256 = vsel %vm254, %v216, 0
  %v259 = vsel %vm254, %v217, 0
  %v262 = vsel %vm254, %v218, 0
  %v265 = vsel %vm254, %v219, 0
  %v268 = vsel %vm254, %v220, 0
  %v271 = vsel %vm254, %v221, 0
  %v274 = vsel %vm254, %v222, 0
  %v277 = vsel %vm254, %v223, 0
  %v280 = vsel %vm254, %v224, 0
  %v283 = vsel %vm254, %v225, 0
  %v286 = vsel %vm254, %v226, 0
  %v289 = vsel %vm254, %v227, 0
  %v292 = vsel %vm254, %v228, 0
  %v295 = vsel %vm254, %v229, 0
  %v298 = vsel %vm254, %v230, 0
  %v301 = vsel %vm254, %v231, 0
  %v304 = vsel %vm254, %v232, 0
  %v307 = vsel %vm254, %v233, 0
  %v310 = vsel %vm254, %v234, 0
  %v313 = vsel %vm254, %v235, 0
  %v316 = vsel %vm254, %v236, 0
  %v319 = vsel %vm254, %v237, 0
  %v322 = vsel %vm254, %v238, 0
  %v325 = vsel %vm254, %v239, 0
  %v328 = vsel %vm254, %v240, 0
  %v331 = vsel %vm254, %v241, 0
  %v334 = vsel %vm254, %v242, 0
  %v337 = vsel %vm254, %v243, 0
  %v340 = vsel %vm254, %v244, 0
  %v343 = vsel %vm254, %v245, 0
  %v346 = vsel %vm254, %v246, 0
  %v349 = vsel %vm254, %v247, 0
  %351 = vmatprep.subr.bf16.mxu0 0
  %352 = vmatpush1.bf16.msra.mxu0 0
  %353 = vmatprep.subr.bf16.mxu0 0
  %354 = vmatpush1.bf16.msra.mxu0 0
  %355 = vmatprep.subr.bf16.mxu0 0
  %356 = vmatpush1.bf16.msra.mxu0 0
  %357 = vmatprep.subr.bf16.mxu0 0
  %358 = vmatpush1.bf16.msra.mxu0 0
  %359 = vmatprep.subr.bf16.mxu0 0
  %360 = vmatpush1.bf16.msra.mxu0 0
  %361 = vmatprep.subr.bf16.mxu0 0
  %362 = vmatpush1.bf16.msra.mxu0 0
  %363 = vmatprep.subr.bf16.mxu0 0
  %364 = vmatpush1.bf16.msra.mxu0 0
  %365 = vmatprep.subr.bf16.mxu0 0
  %366 = vmatpush1.bf16.msra.mxu0 %v252
  %367 = vmatprep.subr.bf16.mxu0 0
  %368 = vmatpush2.bf16.msra.mxu0 0
  %369 = vmatprep.subr.bf16.mxu0 0
  %370 = vmatpush2.bf16.msra.mxu0 0
  %371 = vmatprep.subr.bf16.mxu0 0
  %372 = vmatpush2.bf16.msra.mxu0 0
  %373 = vmatprep.subr.bf16.mxu0 0
  %374 = vmatpush2.bf16.msra.mxu0 0
  %375 = vmatprep.subr.bf16.mxu0 0
  %376 = vmatpush2.bf16.msra.mxu0 0
  %377 = vmatprep.subr.bf16.mxu0 0
  %378 = vmatpush2.bf16.msra.mxu0 0
  %379 = vmatprep.subr.bf16.mxu0 0
  %380 = vmatpush2.bf16.msra.mxu0 0
  %381 = vmatprep.subr.bf16.mxu0 0
  %382 = vmatpush2.bf16.msra.mxu0 0
  %383 = vmatprep.mubr.bf16.mxu0 0
  %384 = vmatmul.mubr.bf16.gmra.mxu0 %v256
  %v385 = vpop.f32.mrf.mxu0
  %v386 = vadd.f32 %v86, %v385
  %v387 = vpop.f32.mrf.mxu0
  %v388 = vpop.f32.mrf.mxu0
  %v389 = vadd.f32 %v86, %v388
  %v390 = vpop.f32.mrf.mxu0
  %391 = vmatprep.mubr.bf16.mxu0 0
  %392 = vmatmul.mubr.bf16.gmra.mxu0 %v259
  %v393 = vpop.f32.mrf.mxu0
  %v394 = vadd.f32 %v86, %v393
  %v395 = vpop.f32.mrf.mxu0
  %v396 = vpop.f32.mrf.mxu0
  %v397 = vadd.f32 %v86, %v396
  %v398 = vpop.f32.mrf.mxu0
  %399 = vmatprep.mubr.bf16.mxu0 0
  %400 = vmatmul.mubr.bf16.gmra.mxu0 %v262
  %v401 = vpop.f32.mrf.mxu0
  %v402 = vadd.f32 %v86, %v401
  %v403 = vpop.f32.mrf.mxu0
  %v404 = vpop.f32.mrf.mxu0
  %v405 = vadd.f32 %v86, %v404
  %v406 = vpop.f32.mrf.mxu0
  %407 = vmatprep.mubr.bf16.mxu0 0
  %408 = vmatmul.mubr.bf16.gmra.mxu0 %v265
  %v409 = vpop.f32.mrf.mxu0
  %v410 = vadd.f32 %v86, %v409
  %v411 = vpop.f32.mrf.mxu0
  %v412 = vpop.f32.mrf.mxu0
  %v413 = vadd.f32 %v86, %v412
  %v414 = vpop.f32.mrf.mxu0
  %415 = vmatprep.mubr.bf16.mxu0 0
  %416 = vmatmul.mubr.bf16.gmra.mxu0 %v268
  %v417 = vpop.f32.mrf.mxu0
  %v418 = vadd.f32 %v86, %v417
  %v419 = vpop.f32.mrf.mxu0
  %v420 = vpop.f32.mrf.mxu0
  %v421 = vadd.f32 %v86, %v420
  %v422 = vpop.f32.mrf.mxu0
  %423 = vmatprep.mubr.bf16.mxu0 0
  %424 = vmatmul.mubr.bf16.gmra.mxu0 %v271
  %v425 = vpop.f32.mrf.mxu0
  %v426 = vadd.f32 %v86, %v425
  %v427 = vpop.f32.mrf.mxu0
  %v428 = vpop.f32.mrf.mxu0
  %v429 = vadd.f32 %v86, %v428
  %v430 = vpop.f32.mrf.mxu0
  %431 = vmatprep.mubr.bf16.mxu0 0
  %432 = vmatmul.mubr.bf16.gmra.mxu0 %v274
  %v433 = vpop.f32.mrf.mxu0
  %v434 = vadd.f32 %v86, %v433
  %v435 = vpop.f32.mrf.mxu0
  %v436 = vpop.f32.mrf.mxu0
  %v437 = vadd.f32 %v86, %v436
  %v438 = vpop.f32.mrf.mxu0
  %439 = vmatprep.mubr.bf16.mxu0 0
  %440 = vmatmul.mubr.bf16.gmra.mxu0 %v277
  %v441 = vpop.f32.mrf.mxu0
  %v442 = vadd.f32 %v86, %v441
  %v443 = vpop.f32.mrf.mxu0
  %v444 = vpop.f32.mrf.mxu0
  %v445 = vadd.f32 %v86, %v444
  %v446 = vpop.f32.mrf.mxu0
  %447 = vmatprep.mubr.bf16.mxu0 0
  %448 = vmatmul.mubr.bf16.gmra.mxu0 %v280
  %v449 = vpop.f32.mrf.mxu0
  %v450 = vadd.f32 %v86, %v449
  %v451 = vpop.f32.mrf.mxu0
  %v452 = vpop.f32.mrf.mxu0
  %v453 = vadd.f32 %v86, %v452
  %v454 = vpop.f32.mrf.mxu0
  %455 = vmatprep.mubr.bf16.mxu0 0
  %456 = vmatmul.mubr.bf16.gmra.mxu0 %v283
  %v457 = vpop.f32.mrf.mxu0
  %v458 = vadd.f32 %v86, %v457
  %v459 = vpop.f32.mrf.mxu0
  %v460 = vpop.f32.mrf.mxu0
  %v461 = vadd.f32 %v86, %v460
  %v462 = vpop.f32.mrf.mxu0
  %463 = vmatprep.mubr.bf16.mxu0 0
  %464 = vmatmul.mubr.bf16.gmra.mxu0 %v286
  %v465 = vpop.f32.mrf.mxu0
  %v466 = vadd.f32 %v86, %v465
  %v467 = vpop.f32.mrf.mxu0
  %v468 = vpop.f32.mrf.mxu0
  %v469 = vadd.f32 %v86, %v468
  %v470 = vpop.f32.mrf.mxu0
  %471 = vmatprep.mubr.bf16.mxu0 0
  %472 = vmatmul.mubr.bf16.gmra.mxu0 %v289
  %v473 = vpop.f32.mrf.mxu0
  %v474 = vadd.f32 %v86, %v473
  %v475 = vpop.f32.mrf.mxu0
  %v476 = vpop.f32.mrf.mxu0
  %v477 = vadd.f32 %v86, %v476
  %v478 = vpop.f32.mrf.mxu0
  %479 = vmatprep.mubr.bf16.mxu0 0
  %480 = vmatmul.mubr.bf16.gmra.mxu0 %v292
  %v481 = vpop.f32.mrf.mxu0
  %v482 = vadd.f32 %v86, %v481
  %v483 = vpop.f32.mrf.mxu0
  %v484 = vpop.f32.mrf.mxu0
  %v485 = vadd.f32 %v86, %v484
  %v486 = vpop.f32.mrf.mxu0
  %487 = vmatprep.mubr.bf16.mxu0 0
  %488 = vmatmul.mubr.bf16.gmra.mxu0 %v295
  %v489 = vpop.f32.mrf.mxu0
  %v490 = vadd.f32 %v86, %v489
  %v491 = vpop.f32.mrf.mxu0
  %v492 = vpop.f32.mrf.mxu0
  %v493 = vadd.f32 %v86, %v492
  %v494 = vpop.f32.mrf.mxu0
  %495 = vmatprep.mubr.bf16.mxu0 0
  %496 = vmatmul.mubr.bf16.gmra.mxu0 %v298
  %v497 = vpop.f32.mrf.mxu0
  %v498 = vadd.f32 %v86, %v497
  %v499 = vpop.f32.mrf.mxu0
  %v500 = vpop.f32.mrf.mxu0
  %v501 = vadd.f32 %v86, %v500
  %v502 = vpop.f32.mrf.mxu0
  %503 = vmatprep.mubr.bf16.mxu0 0
  %504 = vmatmul.mubr.bf16.gmra.mxu0 %v301
  %v505 = vpop.f32.mrf.mxu0
  %v506 = vadd.f32 %v86, %v505
  %v507 = vpop.f32.mrf.mxu0
  %v508 = vpop.f32.mrf.mxu0
  %v509 = vadd.f32 %v86, %v508
  %v510 = vpop.f32.mrf.mxu0
  %511 = vmatprep.mubr.bf16.mxu0 0
  %512 = vmatmul.mubr.bf16.gmra.mxu0 %v304
  %v513 = vpop.f32.mrf.mxu0
  %v514 = vadd.f32 %v86, %v513
  %v515 = vpop.f32.mrf.mxu0
  %v516 = vpop.f32.mrf.mxu0
  %v517 = vadd.f32 %v86, %v516
  %v518 = vpop.f32.mrf.mxu0
  %519 = vmatprep.mubr.bf16.mxu0 0
  %520 = vmatmul.mubr.bf16.gmra.mxu0 %v307
  %v521 = vpop.f32.mrf.mxu0
  %v522 = vadd.f32 %v86, %v521
  %v523 = vpop.f32.mrf.mxu0
  %v524 = vpop.f32.mrf.mxu0
  %v525 = vadd.f32 %v86, %v524
  %v526 = vpop.f32.mrf.mxu0
  %527 = vmatprep.mubr.bf16.mxu0 0
  %528 = vmatmul.mubr.bf16.gmra.mxu0 %v310
  %v529 = vpop.f32.mrf.mxu0
  %v530 = vadd.f32 %v86, %v529
  %v531 = vpop.f32.mrf.mxu0
  %v532 = vpop.f32.mrf.mxu0
  %v533 = vadd.f32 %v86, %v532
  %v534 = vpop.f32.mrf.mxu0
  %535 = vmatprep.mubr.bf16.mxu0 0
  %536 = vmatmul.mubr.bf16.gmra.mxu0 %v313
  %v537 = vpop.f32.mrf.mxu0
  %v538 = vadd.f32 %v86, %v537
  %v539 = vpop.f32.mrf.mxu0
  %v540 = vpop.f32.mrf.mxu0
  %v541 = vadd.f32 %v86, %v540
  %v542 = vpop.f32.mrf.mxu0
  %543 = vmatprep.mubr.bf16.mxu0 0
  %544 = vmatmul.mubr.bf16.gmra.mxu0 %v316
  %v545 = vpop.f32.mrf.mxu0
  %v546 = vadd.f32 %v86, %v545
  %v547 = vpop.f32.mrf.mxu0
  %v548 = vpop.f32.mrf.mxu0
  %v549 = vadd.f32 %v86, %v548
  %v550 = vpop.f32.mrf.mxu0
  %551 = vmatprep.mubr.bf16.mxu0 0
  %552 = vmatmul.mubr.bf16.gmra.mxu0 %v319
  %v553 = vpop.f32.mrf.mxu0
  %v554 = vadd.f32 %v86, %v553
  %v555 = vpop.f32.mrf.mxu0
  %v556 = vpop.f32.mrf.mxu0
  %v557 = vadd.f32 %v86, %v556
  %v558 = vpop.f32.mrf.mxu0
  %559 = vmatprep.mubr.bf16.mxu0 0
  %560 = vmatmul.mubr.bf16.gmra.mxu0 %v322
  %v561 = vpop.f32.mrf.mxu0
  %v562 = vadd.f32 %v86, %v561
  %v563 = vpop.f32.mrf.mxu0
  %v564 = vpop.f32.mrf.mxu0
  %v565 = vadd.f32 %v86, %v564
  %v566 = vpop.f32.mrf.mxu0
  %567 = vmatprep.mubr.bf16.mxu0 0
  %568 = vmatmul.mubr.bf16.gmra.mxu0 %v325
  %v569 = vpop.f32.mrf.mxu0
  %v570 = vadd.f32 %v86, %v569
  %v571 = vpop.f32.mrf.mxu0
  %v572 = vpop.f32.mrf.mxu0
  %v573 = vadd.f32 %v86, %v572
  %v574 = vpop.f32.mrf.mxu0
  %575 = vmatprep.mubr.bf16.mxu0 0
  %576 = vmatmul.mubr.bf16.gmra.mxu0 %v328
  %v577 = vpop.f32.mrf.mxu0
  %v578 = vadd.f32 %v86, %v577
  %v579 = vpop.f32.mrf.mxu0
  %v580 = vpop.f32.mrf.mxu0
  %v581 = vadd.f32 %v86, %v580
  %v582 = vpop.f32.mrf.mxu0
  %583 = vmatprep.mubr.bf16.mxu0 0
  %584 = vmatmul.mubr.bf16.gmra.mxu0 %v331
  %v585 = vpop.f32.mrf.mxu0
  %v586 = vadd.f32 %v86, %v585
  %v587 = vpop.f32.mrf.mxu0
  %v588 = vpop.f32.mrf.mxu0
  %v589 = vadd.f32 %v86, %v588
  %v590 = vpop.f32.mrf.mxu0
  %591 = vmatprep.mubr.bf16.mxu0 0
  %592 = vmatmul.mubr.bf16.gmra.mxu0 %v334
  %v593 = vpop.f32.mrf.mxu0
  %v594 = vadd.f32 %v86, %v593
  %v595 = vpop.f32.mrf.mxu0
  %v596 = vpop.f32.mrf.mxu0
  %v597 = vadd.f32 %v86, %v596
  %v598 = vpop.f32.mrf.mxu0
  %599 = vmatprep.mubr.bf16.mxu0 0
  %600 = vmatmul.mubr.bf16.gmra.mxu0 %v337
  %v601 = vpop.f32.mrf.mxu0
  %v602 = vadd.f32 %v86, %v601
  %v603 = vpop.f32.mrf.mxu0
  %v604 = vpop.f32.mrf.mxu0
  %v605 = vadd.f32 %v86, %v604
  %v606 = vpop.f32.mrf.mxu0
  %607 = vmatprep.mubr.bf16.mxu0 0
  %608 = vmatmul.mubr.bf16.gmra.mxu0 %v340
  %v609 = vpop.f32.mrf.mxu0
  %v610 = vadd.f32 %v86, %v609
  %v611 = vpop.f32.mrf.mxu0
  %v612 = vpop.f32.mrf.mxu0
  %v613 = vadd.f32 %v86, %v612
  %v614 = vpop.f32.mrf.mxu0
  %615 = vmatprep.mubr.bf16.mxu0 0
  %616 = vmatmul.mubr.bf16.gmra.mxu0 %v343
  %v617 = vpop.f32.mrf.mxu0
  %v618 = vadd.f32 %v86, %v617
  %v619 = vpop.f32.mrf.mxu0
  %v620 = vpop.f32.mrf.mxu0
  %v621 = vadd.f32 %v86, %v620
  %v622 = vpop.f32.mrf.mxu0
  %623 = vmatprep.mubr.bf16.mxu0 0
  %624 = vmatmul.mubr.bf16.gmra.mxu0 %v346
  %v625 = vpop.f32.mrf.mxu0
  %v626 = vadd.f32 %v86, %v625
  %v627 = vpop.f32.mrf.mxu0
  %v628 = vpop.f32.mrf.mxu0
  %v629 = vadd.f32 %v86, %v628
  %v630 = vpop.f32.mrf.mxu0
  %631 = vmatprep.mubr.bf16.mxu0 0
  %632 = vmatmul.mubr.bf16.gmra.mxu0 %v349
  %v633 = vpop.f32.mrf.mxu0
  %v634 = vadd.f32 %v86, %v633
  %v635 = vpop.f32.mrf.mxu0
  %v636 = vpop.f32.mrf.mxu0
  %v637 = vadd.f32 %v86, %v636
  %v638 = vpop.f32.mrf.mxu0
  %639 = vdwg.mxu0
  %v640 = vmax.f32 %v386, 0.0
  %v641 = vmax.f32 %v389, 0.0
  %v642 = vmax.f32 %v394, 0.0
  %v643 = vmax.f32 %v397, 0.0
  %v644 = vmax.f32 %v402, 0.0
  %v645 = vmax.f32 %v405, 0.0
  %v646 = vmax.f32 %v410, 0.0
  %v647 = vmax.f32 %v413, 0.0
  %v648 = vmax.f32 %v418, 0.0
  %v649 = vmax.f32 %v421, 0.0
  %v650 = vmax.f32 %v426, 0.0
  %v651 = vmax.f32 %v429, 0.0
  %v652 = vmax.f32 %v434, 0.0
  %v653 = vmax.f32 %v437, 0.0
  %v654 = vmax.f32 %v442, 0.0
  %v655 = vmax.f32 %v445, 0.0
  %v656 = vmax.f32 %v450, 0.0
  %v657 = vmax.f32 %v453, 0.0
  %v658 = vmax.f32 %v458, 0.0
  %v659 = vmax.f32 %v461, 0.0
  %v660 = vmax.f32 %v466, 0.0
  %v661 = vmax.f32 %v469, 0.0
  %v662 = vmax.f32 %v474, 0.0
  %v663 = vmax.f32 %v477, 0.0
  %v664 = vmax.f32 %v482, 0.0
  %v665 = vmax.f32 %v485, 0.0
  %v666 = vmax.f32 %v490, 0.0
  %v667 = vmax.f32 %v493, 0.0
  %v668 = vmax.f32 %v498, 0.0
  %v669 = vmax.f32 %v501, 0.0
  %v670 = vmax.f32 %v506, 0.0
  %v671 = vmax.f32 %v509, 0.0
  %v672 = vmax.f32 %v514, 0.0
  %v673 = vmax.f32 %v517, 0.0
  %v674 = vmax.f32 %v522, 0.0
  %v675 = vmax.f32 %v525, 0.0
  %v676 = vmax.f32 %v530, 0.0
  %v677 = vmax.f32 %v533, 0.0
  %v678 = vmax.f32 %v538, 0.0
  %v679 = vmax.f32 %v541, 0.0
  %v680 = vmax.f32 %v546, 0.0
  %v681 = vmax.f32 %v549, 0.0
  %v682 = vmax.f32 %v554, 0.0
  %v683 = vmax.f32 %v557, 0.0
  %v684 = vmax.f32 %v562, 0.0
  %v685 = vmax.f32 %v565, 0.0
  %v686 = vmax.f32 %v570, 0.0
  %v687 = vmax.f32 %v573, 0.0
  %v688 = vmax.f32 %v578, 0.0
  %v689 = vmax.f32 %v581, 0.0
  %v690 = vmax.f32 %v586, 0.0
  %v691 = vmax.f32 %v589, 0.0
  %v692 = vmax.f32 %v594, 0.0
  %v693 = vmax.f32 %v597, 0.0
  %v694 = vmax.f32 %v602, 0.0
  %v695 = vmax.f32 %v605, 0.0
  %v696 = vmax.f32 %v610, 0.0
  %v697 = vmax.f32 %v613, 0.0
  %v698 = vmax.f32 %v618, 0.0
  %v699 = vmax.f32 %v621, 0.0
  %v700 = vmax.f32 %v626, 0.0
  %v701 = vmax.f32 %v629, 0.0
  %v702 = vmax.f32 %v634, 0.0
  %v703 = vmax.f32 %v637, 0.0
  %v704 = vpack.c.bf16 %v641, %v640
  %v705 = vpack.c.bf16 %v643, %v642
  %v706 = vpack.c.bf16 %v645, %v644
  %v707 = vpack.c.bf16 %v647, %v646
  %v708 = vpack.c.bf16 %v649, %v648
  %v709 = vpack.c.bf16 %v651, %v650
  %v710 = vpack.c.bf16 %v653, %v652
  %v711 = vpack.c.bf16 %v655, %v654
  %v712 = vpack.c.bf16 %v657, %v656
  %v713 = vpack.c.bf16 %v659, %v658
  %v714 = vpack.c.bf16 %v661, %v660
  %v715 = vpack.c.bf16 %v663, %v662
  %v716 = vpack.c.bf16 %v665, %v664
  %v717 = vpack.c.bf16 %v667, %v666
  %v718 = vpack.c.bf16 %v669, %v668
  %v719 = vpack.c.bf16 %v671, %v670
  %v720 = vpack.c.bf16 %v673, %v672
  %v721 = vpack.c.bf16 %v675, %v674
  %v722 = vpack.c.bf16 %v677, %v676
  %v723 = vpack.c.bf16 %v679, %v678
  %v724 = vpack.c.bf16 %v681, %v680
  %v725 = vpack.c.bf16 %v683, %v682
  %v726 = vpack.c.bf16 %v685, %v684
  %v727 = vpack.c.bf16 %v687, %v686
  %v728 = vpack.c.bf16 %v689, %v688
  %v729 = vpack.c.bf16 %v691, %v690
  %v730 = vpack.c.bf16 %v693, %v692
  %v731 = vpack.c.bf16 %v695, %v694
  %v732 = vpack.c.bf16 %v697, %v696
  %v733 = vpack.c.bf16 %v699, %v698
  %v734 = vpack.c.bf16 %v701, %v700
  %v735 = vpack.c.bf16 %v703, %v702
  %v768 = vunpack.c.l.b16 %v704
  %v769 = vunpack.c.h.b16 %v704
  %v770 = vunpack.c.l.b16 %v705
  %v771 = vunpack.c.h.b16 %v705
  %v772 = vunpack.c.l.b16 %v706
  %v773 = vunpack.c.h.b16 %v706
  %v774 = vunpack.c.l.b16 %v707
  %v775 = vunpack.c.h.b16 %v707
  %v776 = vunpack.c.l.b16 %v708
  %v777 = vunpack.c.h.b16 %v708
  %v778 = vunpack.c.l.b16 %v709
  %v779 = vunpack.c.h.b16 %v709
  %v780 = vunpack.c.l.b16 %v710
  %v781 = vunpack.c.h.b16 %v710
  %v782 = vunpack.c.l.b16 %v711
  %v783 = vunpack.c.h.b16 %v711
  %v784 = vunpack.c.l.b16 %v712
  %v785 = vunpack.c.h.b16 %v712
  %v786 = vunpack.c.l.b16 %v713
  %v787 = vunpack.c.h.b16 %v713
  %v788 = vunpack.c.l.b16 %v714
  %v789 = vunpack.c.h.b16 %v714
  %v790 = vunpack.c.l.b16 %v715
  %v791 = vunpack.c.h.b16 %v715
  %v792 = vunpack.c.l.b16 %v716
  %v793 = vunpack.c.h.b16 %v716
  %v794 = vunpack.c.l.b16 %v717
  %v795 = vunpack.c.h.b16 %v717
  %v796 = vunpack.c.l.b16 %v718
  %v797 = vunpack.c.h.b16 %v718
  %v798 = vunpack.c.l.b16 %v719
  %v799 = vunpack.c.h.b16 %v719
  %v800 = vunpack.c.l.b16 %v720
  %v801 = vunpack.c.h.b16 %v720
  %v802 = vunpack.c.l.b16 %v721
  %v803 = vunpack.c.h.b16 %v721
  %v804 = vunpack.c.l.b16 %v722
  %v805 = vunpack.c.h.b16 %v722
  %v806 = vunpack.c.l.b16 %v723
  %v807 = vunpack.c.h.b16 %v723
  %v808 = vunpack.c.l.b16 %v724
  %v809 = vunpack.c.h.b16 %v724
  %v810 = vunpack.c.l.b16 %v725
  %v811 = vunpack.c.h.b16 %v725
  %v812 = vunpack.c.l.b16 %v726
  %v813 = vunpack.c.h.b16 %v726
  %v814 = vunpack.c.l.b16 %v727
  %v815 = vunpack.c.h.b16 %v727
  %v816 = vunpack.c.l.b16 %v728
  %v817 = vunpack.c.h.b16 %v728
  %v818 = vunpack.c.l.b16 %v729
  %v819 = vunpack.c.h.b16 %v729
  %v820 = vunpack.c.l.b16 %v730
  %v821 = vunpack.c.h.b16 %v730
  %v822 = vunpack.c.l.b16 %v731
  %v823 = vunpack.c.h.b16 %v731
  %v824 = vunpack.c.l.b16 %v732
  %v825 = vunpack.c.h.b16 %v732
  %v826 = vunpack.c.l.b16 %v733
  %v827 = vunpack.c.h.b16 %v733
  %v828 = vunpack.c.l.b16 %v734
  %v829 = vunpack.c.h.b16 %v734
  %v830 = vunpack.c.l.b16 %v735
  %v831 = vunpack.c.h.b16 %v735
  %v832 = vpack.c.b16 %v768, %v768
  %v833 = vpack.c.b16 %v769, %v769
  %v834 = vpack.c.b16 %v770, %v770
  %v835 = vpack.c.b16 %v771, %v771
  %v836 = vpack.c.b16 %v772, %v772
  %v837 = vpack.c.b16 %v773, %v773
  %v838 = vpack.c.b16 %v774, %v774
  %v839 = vpack.c.b16 %v775, %v775
  %v840 = vpack.c.b16 %v776, %v776
  %v841 = vpack.c.b16 %v777, %v777
  %v842 = vpack.c.b16 %v778, %v778
  %v843 = vpack.c.b16 %v779, %v779
  %v844 = vpack.c.b16 %v780, %v780
  %v845 = vpack.c.b16 %v781, %v781
  %v846 = vpack.c.b16 %v782, %v782
  %v847 = vpack.c.b16 %v783, %v783
  %v848 = vpack.c.b16 %v784, %v784
  %v849 = vpack.c.b16 %v785, %v785
  %v850 = vpack.c.b16 %v786, %v786
  %v851 = vpack.c.b16 %v787, %v787
  %v852 = vpack.c.b16 %v788, %v788
  %v853 = vpack.c.b16 %v789, %v789
  %v854 = vpack.c.b16 %v790, %v790
  %v855 = vpack.c.b16 %v791, %v791
  %v856 = vpack.c.b16 %v792, %v792
  %v857 = vpack.c.b16 %v793, %v793
  %v858 = vpack.c.b16 %v794, %v794
  %v859 = vpack.c.b16 %v795, %v795
  %v860 = vpack.c.b16 %v796, %v796
  %v861 = vpack.c.b16 %v797, %v797
  %v862 = vpack.c.b16 %v798, %v798
  %v863 = vpack.c.b16 %v799, %v799
  %v864 = vpack.c.b16 %v800, %v800
  %v865 = vpack.c.b16 %v801, %v801
  %v866 = vpack.c.b16 %v802, %v802
  %v867 = vpack.c.b16 %v803, %v803
  %v868 = vpack.c.b16 %v804, %v804
  %v869 = vpack.c.b16 %v805, %v805
  %v870 = vpack.c.b16 %v806, %v806
  %v871 = vpack.c.b16 %v807, %v807
  %v872 = vpack.c.b16 %v808, %v808
  %v873 = vpack.c.b16 %v809, %v809
  %v874 = vpack.c.b16 %v810, %v810
  %v875 = vpack.c.b16 %v811, %v811
  %v876 = vpack.c.b16 %v812, %v812
  %v877 = vpack.c.b16 %v813, %v813
  %v878 = vpack.c.b16 %v814, %v814
  %v879 = vpack.c.b16 %v815, %v815
  %v880 = vpack.c.b16 %v816, %v816
  %v881 = vpack.c.b16 %v817, %v817
  %v882 = vpack.c.b16 %v818, %v818
  %v883 = vpack.c.b16 %v819, %v819
  %v884 = vpack.c.b16 %v820, %v820
  %v885 = vpack.c.b16 %v821, %v821
  %v886 = vpack.c.b16 %v822, %v822
  %v887 = vpack.c.b16 %v823, %v823
  %v888 = vpack.c.b16 %v824, %v824
  %v889 = vpack.c.b16 %v825, %v825
  %v890 = vpack.c.b16 %v826, %v826
  %v891 = vpack.c.b16 %v827, %v827
  %v892 = vpack.c.b16 %v828, %v828
  %v893 = vpack.c.b16 %v829, %v829
  %v894 = vpack.c.b16 %v830, %v830
  %v895 = vpack.c.b16 %v831, %v831
  %vm960 = vcmask 60416
  %961 = vst.msk [vmem:[%s3] sm:$0xf] %vm960, %v832
  %962 = vst.msk [vmem:[%s3 + $0x4] sm:$0xf] %vm960, %v833
  %963 = vst.msk [vmem:[%s3 + $0x8] sm:$0xf] %vm960, %v834
  %964 = vst.msk [vmem:[%s3 + $0xc] sm:$0xf] %vm960, %v835
  %965 = vst.msk [vmem:[%s3 + $0x10] sm:$0xf] %vm960, %v836
  %966 = vst.msk [vmem:[%s3 + $0x14] sm:$0xf] %vm960, %v837
  %967 = vst.msk [vmem:[%s3 + $0x18] sm:$0xf] %vm960, %v838
  %968 = vst.msk [vmem:[%s3 + $0x1c] sm:$0xf] %vm960, %v839
  %969 = vst.msk [vmem:[%s3 + $0x20] sm:$0xf] %vm960, %v840
  %970 = vst.msk [vmem:[%s3 + $0x24] sm:$0xf] %vm960, %v841
  %971 = vst.msk [vmem:[%s3 + $0x28] sm:$0xf] %vm960, %v842
  %972 = vst.msk [vmem:[%s3 + $0x2c] sm:$0xf] %vm960, %v843
  %973 = vst.msk [vmem:[%s3 + $0x30] sm:$0xf] %vm960, %v844
  %974 = vst.msk [vmem:[%s3 + $0x34] sm:$0xf] %vm960, %v845
  %975 = vst.msk [vmem:[%s3 + $0x38] sm:$0xf] %vm960, %v846
  %976 = vst.msk [vmem:[%s3 + $0x3c] sm:$0xf] %vm960, %v847
  %977 = vst.msk [vmem:[%s3 + $0x40] sm:$0xf] %vm960, %v848
  %978 = vst.msk [vmem:[%s3 + $0x44] sm:$0xf] %vm960, %v849
  %979 = vst.msk [vmem:[%s3 + $0x48] sm:$0xf] %vm960, %v850
  %980 = vst.msk [vmem:[%s3 + $0x4c] sm:$0xf] %vm960, %v851
  %981 = vst.msk [vmem:[%s3 + $0x50] sm:$0xf] %vm960, %v852
  %982 = vst.msk [vmem:[%s3 + $0x54] sm:$0xf] %vm960, %v853
  %983 = vst.msk [vmem:[%s3 + $0x58] sm:$0xf] %vm960, %v854
  %984 = vst.msk [vmem:[%s3 + $0x5c] sm:$0xf] %vm960, %v855
  %985 = vst.msk [vmem:[%s3 + $0x60] sm:$0xf] %vm960, %v856
  %986 = vst.msk [vmem:[%s3 + $0x64] sm:$0xf] %vm960, %v857
  %987 = vst.msk [vmem:[%s3 + $0x68] sm:$0xf] %vm960, %v858
  %988 = vst.msk [vmem:[%s3 + $0x6c] sm:$0xf] %vm960, %v859
  %989 = vst.msk [vmem:[%s3 + $0x70] sm:$0xf] %vm960, %v860
  %990 = vst.msk [vmem:[%s3 + $0x74] sm:$0xf] %vm960, %v861
  %991 = vst.msk [vmem:[%s3 + $0x78] sm:$0xf] %vm960, %v862
  %992 = vst.msk [vmem:[%s3 + $0x7c] sm:$0xf] %vm960, %v863
  %993 = vst.msk [vmem:[%s3 + $0x80] sm:$0xf] %vm960, %v864
  %994 = vst.msk [vmem:[%s3 + $0x84] sm:$0xf] %vm960, %v865
  %995 = vst.msk [vmem:[%s3 + $0x88] sm:$0xf] %vm960, %v866
  %996 = vst.msk [vmem:[%s3 + $0x8c] sm:$0xf] %vm960, %v867
  %997 = vst.msk [vmem:[%s3 + $0x90] sm:$0xf] %vm960, %v868
  %998 = vst.msk [vmem:[%s3 + $0x94] sm:$0xf] %vm960, %v869
  %999 = vst.msk [vmem:[%s3 + $0x98] sm:$0xf] %vm960, %v870
  %1000 = vst.msk [vmem:[%s3 + $0x9c] sm:$0xf] %vm960, %v871
  %1001 = vst.msk [vmem:[%s3 + $0xa0] sm:$0xf] %vm960, %v872
  %1002 = vst.msk [vmem:[%s3 + $0xa4] sm:$0xf] %vm960, %v873
  %1003 = vst.msk [vmem:[%s3 + $0xa8] sm:$0xf] %vm960, %v874
  %1004 = vst.msk [vmem:[%s3 + $0xac] sm:$0xf] %vm960, %v875
  %1005 = vst.msk [vmem:[%s3 + $0xb0] sm:$0xf] %vm960, %v876
  %1006 = vst.msk [vmem:[%s3 + $0xb4] sm:$0xf] %vm960, %v877
  %1007 = vst.msk [vmem:[%s3 + $0xb8] sm:$0xf] %vm960, %v878
  %1008 = vst.msk [vmem:[%s3 + $0xbc] sm:$0xf] %vm960, %v879
  %1009 = vst.msk [vmem:[%s3 + $0xc0] sm:$0xf] %vm960, %v880
  %1010 = vst.msk [vmem:[%s3 + $0xc4] sm:$0xf] %vm960, %v881
  %1011 = vst.msk [vmem:[%s3 + $0xc8] sm:$0xf] %vm960, %v882
  %1012 = vst.msk [vmem:[%s3 + $0xcc] sm:$0xf] %vm960, %v883
  %1013 = vst.msk [vmem:[%s3 + $0xd0] sm:$0xf] %vm960, %v884
  %1014 = vst.msk [vmem:[%s3 + $0xd4] sm:$0xf] %vm960, %v885
  %1015 = vst.msk [vmem:[%s3 + $0xd8] sm:$0xf] %vm960, %v886
  %1016 = vst.msk [vmem:[%s3 + $0xdc] sm:$0xf] %vm960, %v887
  %1017 = vst.msk [vmem:[%s3 + $0xe0] sm:$0xf] %vm960, %v888
  %1018 = vst.msk [vmem:[%s3 + $0xe4] sm:$0xf] %vm960, %v889
  %1019 = vst.msk [vmem:[%s3 + $0xe8] sm:$0xf] %vm960, %v890
  %1020 = vst.msk [vmem:[%s3 + $0xec] sm:$0xf] %vm960, %v891
  %1021 = vst.msk [vmem:[%s3 + $0xf0] sm:$0xf] %vm960, %v892
  %1022 = vst.msk [vmem:[%s3 + $0xf4] sm:$0xf] %vm960, %v893
  %1023 = vst.msk [vmem:[%s3 + $0xf8] sm:$0xf] %vm960, %v894
  %1024 = vst.msk [vmem:[%s3 + $0xfc] sm:$0xf] %vm960, %v895
  // Predicated region
  $region14: #{bottleneck_forward_nchw.3} parent=0 // pred_check
    _
  $region15: #{bottleneck_forward_nchw.3} parent=0 // pred_check_branch
    %1026 = sbr.rel (0) target = $region17
  $region16: #{bottleneck_forward_nchw.3} parent=0 // pred_region
    _
  $region17: #{bottleneck_forward_nchw.3} parent=0 // pred_fallthru
    _
  // Predicated region
  $region18: #{bottleneck_forward_nchw.3} parent=0 // pred_check
    _
  $region19: #{bottleneck_forward_nchw.3} parent=0 // pred_check_branch
    %1028 = sbr.rel (0) target = $region21
  $region20: #{bottleneck_forward_nchw.3} parent=0 // pred_region
    _
  $region21: #{bottleneck_forward_nchw.3} parent=0 // pred_fallthru
    _

// kernel: bottleneck_forward_nchw.5
$region0: #{bottleneck_forward_nchw.5}
  #allocation0 [shape = 'u32[]', space=smem, size = 0x4, offset = 0x4, fixed_abs, tag = 'smem constant byte address 0x4 - core index']
  #allocation1 [shape = 'u32[144,128]{1,0:T(1,128)}', space=vmem, size = 0x12000, scoped, tag = 'internal scratch']
  %s0 = inlined_call_operand.vmem [shape: bf16[512,8], index: 0, kind: input, shape index: {}]
  %s1 = inlined_call_operand.vmem [shape: bf16[8,32], index: 1, kind: input, shape index: {}]
  %s2 = inlined_call_operand.vmem [shape: bf16[512,16], index: 2, kind: input, shape index: {}]
  %s3 = inlined_call_operand.vmem [shape: bf16[16,32], index: 3, kind: input, shape index: {}]
  %s4 = inlined_call_operand.vmem [shape: f32[1,32], index: 4, kind: input, shape index: {}]
  %s5 = inlined_call_operand.hbm [shape: f32[512,32], index: 5, kind: output, shape index: {}]
  %s6 = sld [smem:[#allocation0]]
  $region30: #{bottleneck_forward_nchw.5} parent=0
    _
  %s8 = ssub.s32 1, %s6
  %s9 = scalar_select 0, %s8, %s6
  $region1: #{bottleneck_forward_nchw.5} parent=0
    #allocation2 [shape = 'u8[262144]{0}', space=vmem, size = 0x40000, scoped, tag = 'output window, operand 0, single buffered']
    #allocation3 [shape = 's32[1]{0}', space=sflag, size = 0x4, scoped, tag = 'scoped memory for bottleneck_forward_nchw.5']
    %10 = vsyncpa [#allocation3], 0
    // Predicated region
    $region2: #{bottleneck_forward_nchw.5} parent=1 // pred_check
      _
    $region3: #{bottleneck_forward_nchw.5} parent=1 // pred_check_branch
      %12 = sbr.rel (0) target = $region5
    $region4: #{bottleneck_forward_nchw.5} parent=1 // pred_region
      _
    $region5: #{bottleneck_forward_nchw.5} parent=1 // pred_fallthru
      _
    // Predicated region
    $region6: #{bottleneck_forward_nchw.5} parent=1 // pred_check
      _
    $region7: #{bottleneck_forward_nchw.5} parent=1 // pred_check_branch
      %14 = sbr.rel (0) target = $region9
    $region8: #{bottleneck_forward_nchw.5} parent=1 // pred_region
      _
    $region9: #{bottleneck_forward_nchw.5} parent=1 // pred_fallthru
      _
    // Predicated region
    $region10: #{bottleneck_forward_nchw.5} parent=1 // pred_check
      _
    $region11: #{bottleneck_forward_nchw.5} parent=1 // pred_check_branch
      %16 = sbr.rel (0) target = $region13
    $region12: #{bottleneck_forward_nchw.5} parent=1 // pred_region
      _
    $region13: #{bottleneck_forward_nchw.5} parent=1 // pred_fallthru
      _
    // Predicated region
    $region14: #{bottleneck_forward_nchw.5} parent=1 // pred_check
      _
    $region15: #{bottleneck_forward_nchw.5} parent=1 // pred_check_branch
      %18 = sbr.rel (0) target = $region17
    $region16: #{bottleneck_forward_nchw.5} parent=1 // pred_region
      _
    $region17: #{bottleneck_forward_nchw.5} parent=1 // pred_fallthru
      _
    // Predicated region
    $region18: #{bottleneck_forward_nchw.5} parent=1 // pred_check
      _
    $region19: #{bottleneck_forward_nchw.5} parent=1 // pred_check_branch
      %20 = sbr.rel (0) target = $region21
    $region20: #{bottleneck_forward_nchw.5} parent=1 // pred_region
      _
    $region21: #{bottleneck_forward_nchw.5} parent=1 // pred_fallthru
      _
    %v22 = vld [vmem:[%s0] sm:$0xf]
    %v23 = vld [vmem:[%s0 + $0x4] sm:$0xf]
    %v24 = vld [vmem:[%s0 + $0x8] sm:$0xf]
    %v25 = vld [vmem:[%s0 + $0xc] sm:$0xf]
    %v26 = vld [vmem:[%s0 + $0x10] sm:$0xf]
    %v27 = vld [vmem:[%s0 + $0x14] sm:$0xf]
    %v28 = vld [vmem:[%s0 + $0x18] sm:$0xf]
    %v29 = vld [vmem:[%s0 + $0x1c] sm:$0xf]
    %v30 = vld [vmem:[%s0 + $0x20] sm:$0xf]
    %v31 = vld [vmem:[%s0 + $0x24] sm:$0xf]
    %v32 = vld [vmem:[%s0 + $0x28] sm:$0xf]
    %v33 = vld [vmem:[%s0 + $0x2c] sm:$0xf]
    %v34 = vld [vmem:[%s0 + $0x30] sm:$0xf]
    %v35 = vld [vmem:[%s0 + $0x34] sm:$0xf]
    %v36 = vld [vmem:[%s0 + $0x38] sm:$0xf]
    %v37 = vld [vmem:[%s0 + $0x3c] sm:$0xf]
    %v38 = vld [vmem:[%s0 + $0x40] sm:$0xf]
    %v39 = vld [vmem:[%s0 + $0x44] sm:$0xf]
    %v40 = vld [vmem:[%s0 + $0x48] sm:$0xf]
    %v41 = vld [vmem:[%s0 + $0x4c] sm:$0xf]
    %v42 = vld [vmem:[%s0 + $0x50] sm:$0xf]
    %v43 = vld [vmem:[%s0 + $0x54] sm:$0xf]
    %v44 = vld [vmem:[%s0 + $0x58] sm:$0xf]
    %v45 = vld [vmem:[%s0 + $0x5c] sm:$0xf]
    %v46 = vld [vmem:[%s0 + $0x60] sm:$0xf]
    %v47 = vld [vmem:[%s0 + $0x64] sm:$0xf]
    %v48 = vld [vmem:[%s0 + $0x68] sm:$0xf]
    %v49 = vld [vmem:[%s0 + $0x6c] sm:$0xf]
    %v50 = vld [vmem:[%s0 + $0x70] sm:$0xf]
    %v51 = vld [vmem:[%s0 + $0x74] sm:$0xf]
    %v52 = vld [vmem:[%s0 + $0x78] sm:$0xf]
    %v53 = vld [vmem:[%s0 + $0x7c] sm:$0xf]
    %v54 = vld [vmem:[%s0 + $0x80] sm:$0xf]
    %v55 = vld [vmem:[%s0 + $0x84] sm:$0xf]
    %v56 = vld [vmem:[%s0 + $0x88] sm:$0xf]
    %v57 = vld [vmem:[%s0 + $0x8c] sm:$0xf]
    %v58 = vld [vmem:[%s0 + $0x90] sm:$0xf]
    %v59 = vld [vmem:[%s0 + $0x94] sm:$0xf]
    %v60 = vld [vmem:[%s0 + $0x98] sm:$0xf]
    %v61 = vld [vmem:[%s0 + $0x9c] sm:$0xf]
    %v62 = vld [vmem:[%s0 + $0xa0] sm:$0xf]
    %v63 = vld [vmem:[%s0 + $0xa4] sm:$0xf]
    %v64 = vld [vmem:[%s0 + $0xa8] sm:$0xf]
    %v65 = vld [vmem:[%s0 + $0xac] sm:$0xf]
    %v66 = vld [vmem:[%s0 + $0xb0] sm:$0xf]
    %v67 = vld [vmem:[%s0 + $0xb4] sm:$0xf]
    %v68 = vld [vmem:[%s0 + $0xb8] sm:$0xf]
    %v69 = vld [vmem:[%s0 + $0xbc] sm:$0xf]
    %v70 = vld [vmem:[%s0 + $0xc0] sm:$0xf]
    %v71 = vld [vmem:[%s0 + $0xc4] sm:$0xf]
    %v72 = vld [vmem:[%s0 + $0xc8] sm:$0xf]
    %v73 = vld [vmem:[%s0 + $0xcc] sm:$0xf]
    %v74 = vld [vmem:[%s0 + $0xd0] sm:$0xf]
    %v75 = vld [vmem:[%s0 + $0xd4] sm:$0xf]
    %v76 = vld [vmem:[%s0 + $0xd8] sm:$0xf]
    %v77 = vld [vmem:[%s0 + $0xdc] sm:$0xf]
    %v78 = vld [vmem:[%s0 + $0xe0] sm:$0xf]
    %v79 = vld [vmem:[%s0 + $0xe4] sm:$0xf]
    %v80 = vld [vmem:[%s0 + $0xe8] sm:$0xf]
    %v81 = vld [vmem:[%s0 + $0xec] sm:$0xf]
    %v82 = vld [vmem:[%s0 + $0xf0] sm:$0xf]
    %v83 = vld [vmem:[%s0 + $0xf4] sm:$0xf]
    %v84 = vld [vmem:[%s0 + $0xf8] sm:$0xf]
    %v85 = vld [vmem:[%s0 + $0xfc] sm:$0xf]
    %v86 = vld [vmem:[%s1] sm:$0xf]
    %v87 = vld [vmem:[%s2] sm:$0xf]
    %v88 = vld [vmem:[%s2 + $0x4] sm:$0xf]
    %v89 = vld [vmem:[%s2 + $0x8] sm:$0xf]
    %v90 = vld [vmem:[%s2 + $0xc] sm:$0xf]
    %v91 = vld [vmem:[%s2 + $0x10] sm:$0xf]
    %v92 = vld [vmem:[%s2 + $0x14] sm:$0xf]
    %v93 = vld [vmem:[%s2 + $0x18] sm:$0xf]
    %v94 = vld [vmem:[%s2 + $0x1c] sm:$0xf]
    %v95 = vld [vmem:[%s2 + $0x20] sm:$0xf]
    %v96 = vld [vmem:[%s2 + $0x24] sm:$0xf]
    %v97 = vld [vmem:[%s2 + $0x28] sm:$0xf]
    %v98 = vld [vmem:[%s2 + $0x2c] sm:$0xf]
    %v99 = vld [vmem:[%s2 + $0x30] sm:$0xf]
    %v100 = vld [vmem:[%s2 + $0x34] sm:$0xf]
    %v101 = vld [vmem:[%s2 + $0x38] sm:$0xf]
    %v102 = vld [vmem:[%s2 + $0x3c] sm:$0xf]
    %v103 = vld [vmem:[%s2 + $0x40] sm:$0xf]
    %v104 = vld [vmem:[%s2 + $0x44] sm:$0xf]
    %v105 = vld [vmem:[%s2 + $0x48] sm:$0xf]
    %v106 = vld [vmem:[%s2 + $0x4c] sm:$0xf]
    %v107 = vld [vmem:[%s2 + $0x50] sm:$0xf]
    %v108 = vld [vmem:[%s2 + $0x54] sm:$0xf]
    %v109 = vld [vmem:[%s2 + $0x58] sm:$0xf]
    %v110 = vld [vmem:[%s2 + $0x5c] sm:$0xf]
    %v111 = vld [vmem:[%s2 + $0x60] sm:$0xf]
    %v112 = vld [vmem:[%s2 + $0x64] sm:$0xf]
    %v113 = vld [vmem:[%s2 + $0x68] sm:$0xf]
    %v114 = vld [vmem:[%s2 + $0x6c] sm:$0xf]
    %v115 = vld [vmem:[%s2 + $0x70] sm:$0xf]
    %v116 = vld [vmem:[%s2 + $0x74] sm:$0xf]
    %v117 = vld [vmem:[%s2 + $0x78] sm:$0xf]
    %v118 = vld [vmem:[%s2 + $0x7c] sm:$0xf]
    %v119 = vld [vmem:[%s2 + $0x80] sm:$0xf]
    %v120 = vld [vmem:[%s2 + $0x84] sm:$0xf]
    %v121 = vld [vmem:[%s2 + $0x88] sm:$0xf]
    %v122 = vld [vmem:[%s2 + $0x8c] sm:$0xf]
    %v123 = vld [vmem:[%s2 + $0x90] sm:$0xf]
    %v124 = vld [vmem:[%s2 + $0x94] sm:$0xf]
    %v125 = vld [vmem:[%s2 + $0x98] sm:$0xf]
    %v126 = vld [vmem:[%s2 + $0x9c] sm:$0xf]
    %v127 = vld [vmem:[%s2 + $0xa0] sm:$0xf]
    %v128 = vld [vmem:[%s2 + $0xa4] sm:$0xf]
    %v129 = vld [vmem:[%s2 + $0xa8] sm:$0xf]
    %v130 = vld [vmem:[%s2 + $0xac] sm:$0xf]
    %v131 = vld [vmem:[%s2 + $0xb0] sm:$0xf]
    %v132 = vld [vmem:[%s2 + $0xb4] sm:$0xf]
    %v133 = vld [vmem:[%s2 + $0xb8] sm:$0xf]
    %v134 = vld [vmem:[%s2 + $0xbc] sm:$0xf]
    %v135 = vld [vmem:[%s2 + $0xc0] sm:$0xf]
    %v136 = vld [vmem:[%s2 + $0xc4] sm:$0xf]
    %v137 = vld [vmem:[%s2 + $0xc8] sm:$0xf]
    %v138 = vld [vmem:[%s2 + $0xcc] sm:$0xf]
    %v139 = vld [vmem:[%s2 + $0xd0] sm:$0xf]
    %v140 = vld [vmem:[%s2 + $0xd4] sm:$0xf]
    %v141 = vld [vmem:[%s2 + $0xd8] sm:$0xf]
    %v142 = vld [vmem:[%s2 + $0xdc] sm:$0xf]
    %v143 = vld [vmem:[%s2 + $0xe0] sm:$0xf]
    %v144 = vld [vmem:[%s2 + $0xe4] sm:$0xf]
    %v145 = vld [vmem:[%s2 + $0xe8] sm:$0xf]
    %v146 = vld [vmem:[%s2 + $0xec] sm:$0xf]
    %v147 = vld [vmem:[%s2 + $0xf0] sm:$0xf]
    %v148 = vld [vmem:[%s2 + $0xf4] sm:$0xf]
    %v149 = vld [vmem:[%s2 + $0xf8] sm:$0xf]
    %v150 = vld [vmem:[%s2 + $0xfc] sm:$0xf]
    %v151 = vld [vmem:[%s3] sm:$0xf]
    %v152 = vld [vmem:[%s3 + $0x4] sm:$0xf]
    %v217 = vunpack.c.l.b16 %v87
    %v218 = vunpack.c.l.b16 %v88
    %v219 = vunpack.c.l.b16 %v89
    %v220 = vunpack.c.l.b16 %v90
    %v221 = vunpack.c.l.b16 %v91
    %v222 = vunpack.c.l.b16 %v92
    %v223 = vunpack.c.l.b16 %v93
    %v224 = vunpack.c.l.b16 %v94
    %v225 = vunpack.c.l.b16 %v95
    %v226 = vunpack.c.l.b16 %v96
    %v227 = vunpack.c.l.b16 %v97
    %v228 = vunpack.c.l.b16 %v98
    %v229 = vunpack.c.l.b16 %v99
    %v230 = vunpack.c.l.b16 %v100
    %v231 = vunpack.c.l.b16 %v101
    %v232 = vunpack.c.l.b16 %v102
    %v233 = vunpack.c.l.b16 %v103
    %v234 = vunpack.c.l.b16 %v104
    %v235 = vunpack.c.l.b16 %v105
    %v236 = vunpack.c.l.b16 %v106
    %v237 = vunpack.c.l.b16 %v107
    %v238 = vunpack.c.l.b16 %v108
    %v239 = vunpack.c.l.b16 %v109
    %v240 = vunpack.c.l.b16 %v110
    %v241 = vunpack.c.l.b16 %v111
    %v242 = vunpack.c.l.b16 %v112
    %v243 = vunpack.c.l.b16 %v113
    %v244 = vunpack.c.l.b16 %v114
    %v245 = vunpack.c.l.b16 %v115
    %v246 = vunpack.c.l.b16 %v116
    %v247 = vunpack.c.l.b16 %v117
    %v248 = vunpack.c.l.b16 %v118
    %v249 = vunpack.c.l.b16 %v119
    %v250 = vunpack.c.l.b16 %v120
    %v251 = vunpack.c.l.b16 %v121
    %v252 = vunpack.c.l.b16 %v122
    %v253 = vunpack.c.l.b16 %v123
    %v254 = vunpack.c.l.b16 %v124
    %v255 = vunpack.c.l.b16 %v125
    %v256 = vunpack.c.l.b16 %v126
    %v257 = vunpack.c.l.b16 %v127
    %v258 = vunpack.c.l.b16 %v128
    %v259 = vunpack.c.l.b16 %v129
    %v260 = vunpack.c.l.b16 %v130
    %v261 = vunpack.c.l.b16 %v131
    %v262 = vunpack.c.l.b16 %v132
    %v263 = vunpack.c.l.b16 %v133
    %v264 = vunpack.c.l.b16 %v134
    %v265 = vunpack.c.l.b16 %v135
    %v266 = vunpack.c.l.b16 %v136
    %v267 = vunpack.c.l.b16 %v137
    %v268 = vunpack.c.l.b16 %v138
    %v269 = vunpack.c.l.b16 %v139
    %v270 = vunpack.c.l.b16 %v140
    %v271 = vunpack.c.l.b16 %v141
    %v272 = vunpack.c.l.b16 %v142
    %v273 = vunpack.c.l.b16 %v143
    %v274 = vunpack.c.l.b16 %v144
    %v275 = vunpack.c.l.b16 %v145
    %v276 = vunpack.c.l.b16 %v146
    %v277 = vunpack.c.l.b16 %v147
    %v278 = vunpack.c.l.b16 %v148
    %v279 = vunpack.c.l.b16 %v149
    %v280 = vunpack.c.l.b16 %v150
    %v281 = vpack.c.b16 %v218, %v217
    %v282 = vpack.c.b16 %v220, %v219
    %v283 = vpack.c.b16 %v222, %v221
    %v284 = vpack.c.b16 %v224, %v223
    %v285 = vpack.c.b16 %v226, %v225
    %v286 = vpack.c.b16 %v228, %v227
    %v287 = vpack.c.b16 %v230, %v229
    %v288 = vpack.c.b16 %v232, %v231
    %v289 = vpack.c.b16 %v234, %v233
    %v290 = vpack.c.b16 %v236, %v235
    %v291 = vpack.c.b16 %v238, %v237
    %v292 = vpack.c.b16 %v240, %v239
    %v293 = vpack.c.b16 %v242, %v241
    %v294 = vpack.c.b16 %v244, %v243
    %v295 = vpack.c.b16 %v246, %v245
    %v296 = vpack.c.b16 %v248, %v247
    %v297 = vpack.c.b16 %v250, %v249
    %v298 = vpack.c.b16 %v252, %v251
    %v299 = vpack.c.b16 %v254, %v253
    %v300 = vpack.c.b16 %v256, %v255
    %v301 = vpack.c.b16 %v258, %v257
    %v302 = vpack.c.b16 %v260, %v259
    %v303 = vpack.c.b16 %v262, %v261
    %v304 = vpack.c.b16 %v264, %v263
    %v305 = vpack.c.b16 %v266, %v265
    %v306 = vpack.c.b16 %v268, %v267
    %v307 = vpack.c.b16 %v270, %v269
    %v308 = vpack.c.b16 %v272, %v271
    %v309 = vpack.c.b16 %v274, %v273
    %v310 = vpack.c.b16 %v276, %v275
    %v311 = vpack.c.b16 %v278, %v277
    %v312 = vpack.c.b16 %v280, %v279
    %v315 = vunpack.c.l.b16 %v151
    %v316 = vunpack.c.l.b16 %v152
    %v317 = vpack.c.b16 %v316, %v315
    %vm319 = vcmask 130048
    %v321 = vsel %vm319, %v281, 0
    %v324 = vsel %vm319, %v282, 0
    %v327 = vsel %vm319, %v283, 0
    %v330 = vsel %vm319, %v284, 0
    %v333 = vsel %vm319, %v285, 0
    %v336 = vsel %vm319, %v286, 0
    %v339 = vsel %vm319, %v287, 0
    %v342 = vsel %vm319, %v288, 0
    %v345 = vsel %vm319, %v289, 0
    %v348 = vsel %vm319, %v290, 0
    %v351 = vsel %vm319, %v291, 0
    %v354 = vsel %vm319, %v292, 0
    %v357 = vsel %vm319, %v293, 0
    %v360 = vsel %vm319, %v294, 0
    %v363 = vsel %vm319, %v295, 0
    %v366 = vsel %vm319, %v296, 0
    %v369 = vsel %vm319, %v297, 0
    %v372 = vsel %vm319, %v298, 0
    %v375 = vsel %vm319, %v299, 0
    %v378 = vsel %vm319, %v300, 0
    %v381 = vsel %vm319, %v301, 0
    %v384 = vsel %vm319, %v302, 0
    %v387 = vsel %vm319, %v303, 0
    %v390 = vsel %vm319, %v304, 0
    %v393 = vsel %vm319, %v305, 0
    %v396 = vsel %vm319, %v306, 0
    %v399 = vsel %vm319, %v307, 0
    %v402 = vsel %vm319, %v308, 0
    %v405 = vsel %vm319, %v309, 0
    %v408 = vsel %vm319, %v310, 0
    %v411 = vsel %vm319, %v311, 0
    %v414 = vsel %vm319, %v312, 0
    %416 = vmatprep.subr.bf16.mxu0 0
    %417 = vmatpush1.bf16.msra.mxu0 0
    %418 = vmatprep.subr.bf16.mxu0 0
    %419 = vmatpush1.bf16.msra.mxu0 0
    %420 = vmatprep.subr.bf16.mxu0 0
    %421 = vmatpush1.bf16.msra.mxu0 0
    %422 = vmatprep.subr.bf16.mxu0 0
    %423 = vmatpush1.bf16.msra.mxu0 0
    %424 = vmatprep.subr.bf16.mxu0 0
    %425 = vmatpush1.bf16.msra.mxu0 0
    %426 = vmatprep.subr.bf16.mxu0 0
    %427 = vmatpush1.bf16.msra.mxu0 0
    %428 = vmatprep.subr.bf16.mxu0 0
    %429 = vmatpush1.bf16.msra.mxu0 0
    %430 = vmatprep.subr.bf16.mxu0 0
    %431 = vmatpush1.bf16.msra.mxu0 %v317
    %432 = vmatprep.subr.bf16.mxu0 0
    %433 = vmatpush2.bf16.msra.mxu0 0
    %434 = vmatprep.subr.bf16.mxu0 0
    %435 = vmatpush2.bf16.msra.mxu0 0
    %436 = vmatprep.subr.bf16.mxu0 0
    %437 = vmatpush2.bf16.msra.mxu0 0
    %438 = vmatprep.subr.bf16.mxu0 0
    %439 = vmatpush2.bf16.msra.mxu0 0
    %440 = vmatprep.subr.bf16.mxu0 0
    %441 = vmatpush2.bf16.msra.mxu0 0
    %442 = vmatprep.subr.bf16.mxu0 0
    %443 = vmatpush2.bf16.msra.mxu0 0
    %444 = vmatprep.subr.bf16.mxu0 0
    %445 = vmatpush2.bf16.msra.mxu0 0
    %446 = vmatprep.subr.bf16.mxu0 0
    %447 = vmatpush2.bf16.msra.mxu0 0
    %448 = vmatprep.mubr.bf16.mxu0 0
    %449 = vmatmul.mubr.bf16.gmra.mxu0 %v321
    %v450 = vpop.f32.mrf.mxu0
    %v451 = vadd.f32 0.0, %v450
    %v452 = vpop.f32.mrf.mxu0
    %v453 = vpop.f32.mrf.mxu0
    %v454 = vadd.f32 0.0, %v453
    %v455 = vpop.f32.mrf.mxu0
    %456 = vmatprep.mubr.bf16.mxu0 0
    %457 = vmatmul.mubr.bf16.gmra.mxu0 %v324
    %v458 = vpop.f32.mrf.mxu0
    %v459 = vadd.f32 0.0, %v458
    %v460 = vpop.f32.mrf.mxu0
    %v461 = vpop.f32.mrf.mxu0
    %v462 = vadd.f32 0.0, %v461
    %v463 = vpop.f32.mrf.mxu0
    %464 = vmatprep.mubr.bf16.mxu0 0
    %465 = vmatmul.mubr.bf16.gmra.mxu0 %v327
    %v466 = vpop.f32.mrf.mxu0
    %v467 = vadd.f32 0.0, %v466
    %v468 = vpop.f32.mrf.mxu0
    %v469 = vpop.f32.mrf.mxu0
    %v470 = vadd.f32 0.0, %v469
    %v471 = vpop.f32.mrf.mxu0
    %472 = vmatprep.mubr.bf16.mxu0 0
    %473 = vmatmul.mubr.bf16.gmra.mxu0 %v330
    %v474 = vpop.f32.mrf.mxu0
    %v475 = vadd.f32 0.0, %v474
    %v476 = vpop.f32.mrf.mxu0
    %v477 = vpop.f32.mrf.mxu0
    %v478 = vadd.f32 0.0, %v477
    %v479 = vpop.f32.mrf.mxu0
    %480 = vmatprep.mubr.bf16.mxu0 0
    %481 = vmatmul.mubr.bf16.gmra.mxu0 %v333
    %v482 = vpop.f32.mrf.mxu0
    %v483 = vadd.f32 0.0, %v482
    %v484 = vpop.f32.mrf.mxu0
    %v485 = vpop.f32.mrf.mxu0
    %v486 = vadd.f32 0.0, %v485
    %v487 = vpop.f32.mrf.mxu0
    %488 = vmatprep.mubr.bf16.mxu0 0
    %489 = vmatmul.mubr.bf16.gmra.mxu0 %v336
    %v490 = vpop.f32.mrf.mxu0
    %v491 = vadd.f32 0.0, %v490
    %v492 = vpop.f32.mrf.mxu0
    %v493 = vpop.f32.mrf.mxu0
    %v494 = vadd.f32 0.0, %v493
    %v495 = vpop.f32.mrf.mxu0
    %496 = vmatprep.mubr.bf16.mxu0 0
    %497 = vmatmul.mubr.bf16.gmra.mxu0 %v339
    %v498 = vpop.f32.mrf.mxu0
    %v499 = vadd.f32 0.0, %v498
    %v500 = vpop.f32.mrf.mxu0
    %v501 = vpop.f32.mrf.mxu0
    %v502 = vadd.f32 0.0, %v501
    %v503 = vpop.f32.mrf.mxu0
    %504 = vmatprep.mubr.bf16.mxu0 0
    %505 = vmatmul.mubr.bf16.gmra.mxu0 %v342
    %v506 = vpop.f32.mrf.mxu0
    %v507 = vadd.f32 0.0, %v506
    %v508 = vpop.f32.mrf.mxu0
    %v509 = vpop.f32.mrf.mxu0
    %v510 = vadd.f32 0.0, %v509
    %v511 = vpop.f32.mrf.mxu0
    %512 = vmatprep.mubr.bf16.mxu0 0
    %513 = vmatmul.mubr.bf16.gmra.mxu0 %v345
    %v514 = vpop.f32.mrf.mxu0
    %v515 = vadd.f32 0.0, %v514
    %v516 = vpop.f32.mrf.mxu0
    %v517 = vpop.f32.mrf.mxu0
    %v518 = vadd.f32 0.0, %v517
    %v519 = vpop.f32.mrf.mxu0
    %520 = vmatprep.mubr.bf16.mxu0 0
    %521 = vmatmul.mubr.bf16.gmra.mxu0 %v348
    %v522 = vpop.f32.mrf.mxu0
    %v523 = vadd.f32 0.0, %v522
    %v524 = vpop.f32.mrf.mxu0
    %v525 = vpop.f32.mrf.mxu0
    %v526 = vadd.f32 0.0, %v525
    %v527 = vpop.f32.mrf.mxu0
    %528 = vmatprep.mubr.bf16.mxu0 0
    %529 = vmatmul.mubr.bf16.gmra.mxu0 %v351
    %v530 = vpop.f32.mrf.mxu0
    %v531 = vadd.f32 0.0, %v530
    %v532 = vpop.f32.mrf.mxu0
    %v533 = vpop.f32.mrf.mxu0
    %v534 = vadd.f32 0.0, %v533
    %v535 = vpop.f32.mrf.mxu0
    %536 = vmatprep.mubr.bf16.mxu0 0
    %537 = vmatmul.mubr.bf16.gmra.mxu0 %v354
    %v538 = vpop.f32.mrf.mxu0
    %v539 = vadd.f32 0.0, %v538
    %v540 = vpop.f32.mrf.mxu0
    %v541 = vpop.f32.mrf.mxu0
    %v542 = vadd.f32 0.0, %v541
    %v543 = vpop.f32.mrf.mxu0
    %544 = vmatprep.mubr.bf16.mxu0 0
    %545 = vmatmul.mubr.bf16.gmra.mxu0 %v357
    %v546 = vpop.f32.mrf.mxu0
    %v547 = vadd.f32 0.0, %v546
    %v548 = vpop.f32.mrf.mxu0
    %v549 = vpop.f32.mrf.mxu0
    %v550 = vadd.f32 0.0, %v549
    %v551 = vpop.f32.mrf.mxu0
    %552 = vmatprep.mubr.bf16.mxu0 0
    %553 = vmatmul.mubr.bf16.gmra.mxu0 %v360
    %v554 = vpop.f32.mrf.mxu0
    %v555 = vadd.f32 0.0, %v554
    %v556 = vpop.f32.mrf.mxu0
    %v557 = vpop.f32.mrf.mxu0
    %v558 = vadd.f32 0.0, %v557
    %v559 = vpop.f32.mrf.mxu0
    %560 = vmatprep.mubr.bf16.mxu0 0
    %561 = vmatmul.mubr.bf16.gmra.mxu0 %v363
    %v562 = vpop.f32.mrf.mxu0
    %v563 = vadd.f32 0.0, %v562
    %v564 = vpop.f32.mrf.mxu0
    %v565 = vpop.f32.mrf.mxu0
    %v566 = vadd.f32 0.0, %v565
    %v567 = vpop.f32.mrf.mxu0
    %568 = vmatprep.mubr.bf16.mxu0 0
    %569 = vmatmul.mubr.bf16.gmra.mxu0 %v366
    %v570 = vpop.f32.mrf.mxu0
    %v571 = vadd.f32 0.0, %v570
    %v572 = vpop.f32.mrf.mxu0
    %v573 = vpop.f32.mrf.mxu0
    %v574 = vadd.f32 0.0, %v573
    %v575 = vpop.f32.mrf.mxu0
    %576 = vmatprep.mubr.bf16.mxu0 0
    %577 = vmatmul.mubr.bf16.gmra.mxu0 %v369
    %v578 = vpop.f32.mrf.mxu0
    %v579 = vadd.f32 0.0, %v578
    %v580 = vpop.f32.mrf.mxu0
    %v581 = vpop.f32.mrf.mxu0
    %v582 = vadd.f32 0.0, %v581
    %v583 = vpop.f32.mrf.mxu0
    %584 = vmatprep.mubr.bf16.mxu0 0
    %585 = vmatmul.mubr.bf16.gmra.mxu0 %v372
    %v586 = vpop.f32.mrf.mxu0
    %v587 = vadd.f32 0.0, %v586
    %v588 = vpop.f32.mrf.mxu0
    %v589 = vpop.f32.mrf.mxu0
    %v590 = vadd.f32 0.0, %v589
    %v591 = vpop.f32.mrf.mxu0
    %592 = vmatprep.mubr.bf16.mxu0 0
    %593 = vmatmul.mubr.bf16.gmra.mxu0 %v375
    %v594 = vpop.f32.mrf.mxu0
    %v595 = vadd.f32 0.0, %v594
    %v596 = vpop.f32.mrf.mxu0
    %v597 = vpop.f32.mrf.mxu0
    %v598 = vadd.f32 0.0, %v597
    %v599 = vpop.f32.mrf.mxu0
    %600 = vmatprep.mubr.bf16.mxu0 0
    %601 = vmatmul.mubr.bf16.gmra.mxu0 %v378
    %v602 = vpop.f32.mrf.mxu0
    %v603 = vadd.f32 0.0, %v602
    %v604 = vpop.f32.mrf.mxu0
    %v605 = vpop.f32.mrf.mxu0
    %v606 = vadd.f32 0.0, %v605
    %v607 = vpop.f32.mrf.mxu0
    %608 = vmatprep.mubr.bf16.mxu0 0
    %609 = vmatmul.mubr.bf16.gmra.mxu0 %v381
    %v610 = vpop.f32.mrf.mxu0
    %v611 = vadd.f32 0.0, %v610
    %v612 = vpop.f32.mrf.mxu0
    %v613 = vpop.f32.mrf.mxu0
    %v614 = vadd.f32 0.0, %v613
    %v615 = vpop.f32.mrf.mxu0
    %616 = vmatprep.mubr.bf16.mxu0 0
    %617 = vmatmul.mubr.bf16.gmra.mxu0 %v384
    %v618 = vpop.f32.mrf.mxu0
    %v619 = vadd.f32 0.0, %v618
    %v620 = vpop.f32.mrf.mxu0
    %v621 = vpop.f32.mrf.mxu0
    %v622 = vadd.f32 0.0, %v621
    %v623 = vpop.f32.mrf.mxu0
    %624 = vmatprep.mubr.bf16.mxu0 0
    %625 = vmatmul.mubr.bf16.gmra.mxu0 %v387
    %v626 = vpop.f32.mrf.mxu0
    %v627 = vadd.f32 0.0, %v626
    %v628 = vpop.f32.mrf.mxu0
    %v629 = vpop.f32.mrf.mxu0
    %v630 = vadd.f32 0.0, %v629
    %v631 = vpop.f32.mrf.mxu0
    %632 = vmatprep.mubr.bf16.mxu0 0
    %633 = vmatmul.mubr.bf16.gmra.mxu0 %v390
    %v634 = vpop.f32.mrf.mxu0
    %v635 = vadd.f32 0.0, %v634
    %v636 = vpop.f32.mrf.mxu0
    %v637 = vpop.f32.mrf.mxu0
    %v638 = vadd.f32 0.0, %v637
    %v639 = vpop.f32.mrf.mxu0
    %640 = vmatprep.mubr.bf16.mxu0 0
    %641 = vmatmul.mubr.bf16.gmra.mxu0 %v393
    %v642 = vpop.f32.mrf.mxu0
    %v643 = vadd.f32 0.0, %v642
    %v644 = vpop.f32.mrf.mxu0
    %v645 = vpop.f32.mrf.mxu0
    %v646 = vadd.f32 0.0, %v645
    %v647 = vpop.f32.mrf.mxu0
    %648 = vmatprep.mubr.bf16.mxu0 0
    %649 = vmatmul.mubr.bf16.gmra.mxu0 %v396
    %v650 = vpop.f32.mrf.mxu0
    %v651 = vadd.f32 0.0, %v650
    %v652 = vpop.f32.mrf.mxu0
    %v653 = vpop.f32.mrf.mxu0
    %v654 = vadd.f32 0.0, %v653
    %v655 = vpop.f32.mrf.mxu0
    %656 = vmatprep.mubr.bf16.mxu0 0
    %657 = vmatmul.mubr.bf16.gmra.mxu0 %v399
    %v658 = vpop.f32.mrf.mxu0
    %v659 = vadd.f32 0.0, %v658
    %v660 = vpop.f32.mrf.mxu0
    %v661 = vpop.f32.mrf.mxu0
    %v662 = vadd.f32 0.0, %v661
    %v663 = vpop.f32.mrf.mxu0
    %664 = vmatprep.mubr.bf16.mxu0 0
    %665 = vmatmul.mubr.bf16.gmra.mxu0 %v402
    %v666 = vpop.f32.mrf.mxu0
    %v667 = vadd.f32 0.0, %v666
    %v668 = vpop.f32.mrf.mxu0
    %v669 = vpop.f32.mrf.mxu0
    %v670 = vadd.f32 0.0, %v669
    %v671 = vpop.f32.mrf.mxu0
    %672 = vmatprep.mubr.bf16.mxu0 0
    %673 = vmatmul.mubr.bf16.gmra.mxu0 %v405
    %v674 = vpop.f32.mrf.mxu0
    %v675 = vadd.f32 0.0, %v674
    %v676 = vpop.f32.mrf.mxu0
    %v677 = vpop.f32.mrf.mxu0
    %v678 = vadd.f32 0.0, %v677
    %v679 = vpop.f32.mrf.mxu0
    %680 = vmatprep.mubr.bf16.mxu0 0
    %681 = vmatmul.mubr.bf16.gmra.mxu0 %v408
    %v682 = vpop.f32.mrf.mxu0
    %v683 = vadd.f32 0.0, %v682
    %v684 = vpop.f32.mrf.mxu0
    %v685 = vpop.f32.mrf.mxu0
    %v686 = vadd.f32 0.0, %v685
    %v687 = vpop.f32.mrf.mxu0
    %688 = vmatprep.mubr.bf16.mxu0 0
    %689 = vmatmul.mubr.bf16.gmra.mxu0 %v411
    %v690 = vpop.f32.mrf.mxu0
    %v691 = vadd.f32 0.0, %v690
    %v692 = vpop.f32.mrf.mxu0
    %v693 = vpop.f32.mrf.mxu0
    %v694 = vadd.f32 0.0, %v693
    %v695 = vpop.f32.mrf.mxu0
    %696 = vmatprep.mubr.bf16.mxu0 0
    %697 = vmatmul.mubr.bf16.gmra.mxu0 %v414
    %v698 = vpop.f32.mrf.mxu0
    %v699 = vadd.f32 0.0, %v698
    %v700 = vpop.f32.mrf.mxu0
    %v701 = vpop.f32.mrf.mxu0
    %v702 = vadd.f32 0.0, %v701
    %v703 = vpop.f32.mrf.mxu0
    %704 = vdwg.mxu0
    %v769 = vunpack.c.l.b16 %v22
    %v770 = vunpack.c.l.b16 %v23
    %v771 = vunpack.c.l.b16 %v24
    %v772 = vunpack.c.l.b16 %v25
    %v773 = vunpack.c.l.b16 %v26
    %v774 = vunpack.c.l.b16 %v27
    %v775 = vunpack.c.l.b16 %v28
    %v776 = vunpack.c.l.b16 %v29
    %v777 = vunpack.c.l.b16 %v30
    %v778 = vunpack.c.l.b16 %v31
    %v779 = vunpack.c.l.b16 %v32
    %v780 = vunpack.c.l.b16 %v33
    %v781 = vunpack.c.l.b16 %v34
    %v782 = vunpack.c.l.b16 %v35
    %v783 = vunpack.c.l.b16 %v36
    %v784 = vunpack.c.l.b16 %v37
    %v785 = vunpack.c.l.b16 %v38
    %v786 = vunpack.c.l.b16 %v39
    %v787 = vunpack.c.l.b16 %v40
    %v788 = vunpack.c.l.b16 %v41
    %v789 = vunpack.c.l.b16 %v42
    %v790 = vunpack.c.l.b16 %v43
    %v791 = vunpack.c.l.b16 %v44
    %v792 = vunpack.c.l.b16 %v45
    %v793 = vunpack.c.l.b16 %v46
    %v794 = vunpack.c.l.b16 %v47
    %v795 = vunpack.c.l.b16 %v48
    %v796 = vunpack.c.l.b16 %v49
    %v797 = vunpack.c.l.b16 %v50
    %v798 = vunpack.c.l.b16 %v51
    %v799 = vunpack.c.l.b16 %v52
    %v800 = vunpack.c.l.b16 %v53
    %v801 = vunpack.c.l.b16 %v54
    %v802 = vunpack.c.l.b16 %v55
    %v803 = vunpack.c.l.b16 %v56
    %v804 = vunpack.c.l.b16 %v57
    %v805 = vunpack.c.l.b16 %v58
    %v806 = vunpack.c.l.b16 %v59
    %v807 = vunpack.c.l.b16 %v60
    %v808 = vunpack.c.l.b16 %v61
    %v809 = vunpack.c.l.b16 %v62
    %v810 = vunpack.c.l.b16 %v63
    %v811 = vunpack.c.l.b16 %v64
    %v812 = vunpack.c.l.b16 %v65
    %v813 = vunpack.c.l.b16 %v66
    %v814 = vunpack.c.l.b16 %v67
    %v815 = vunpack.c.l.b16 %v68
    %v816 = vunpack.c.l.b16 %v69
    %v817 = vunpack.c.l.b16 %v70
    %v818 = vunpack.c.l.b16 %v71
    %v819 = vunpack.c.l.b16 %v72
    %v820 = vunpack.c.l.b16 %v73
    %v821 = vunpack.c.l.b16 %v74
    %v822 = vunpack.c.l.b16 %v75
    %v823 = vunpack.c.l.b16 %v76
    %v824 = vunpack.c.l.b16 %v77
    %v825 = vunpack.c.l.b16 %v78
    %v826 = vunpack.c.l.b16 %v79
    %v827 = vunpack.c.l.b16 %v80
    %v828 = vunpack.c.l.b16 %v81
    %v829 = vunpack.c.l.b16 %v82
    %v830 = vunpack.c.l.b16 %v83
    %v831 = vunpack.c.l.b16 %v84
    %v832 = vunpack.c.l.b16 %v85
    %v833 = vpack.c.b16 %v770, %v769
    %v834 = vpack.c.b16 %v772, %v771
    %v835 = vpack.c.b16 %v774, %v773
    %v836 = vpack.c.b16 %v776, %v775
    %v837 = vpack.c.b16 %v778, %v777
    %v838 = vpack.c.b16 %v780, %v779
    %v839 = vpack.c.b16 %v782, %v781
    %v840 = vpack.c.b16 %v784, %v783
    %v841 = vpack.c.b16 %v786, %v785
    %v842 = vpack.c.b16 %v788, %v787
    %v843 = vpack.c.b16 %v790, %v789
    %v844 = vpack.c.b16 %v792, %v791
    %v845 = vpack.c.b16 %v794, %v793
    %v846 = vpack.c.b16 %v796, %v795
    %v847 = vpack.c.b16 %v798, %v797
    %v848 = vpack.c.b16 %v800, %v799
    %v849 = vpack.c.b16 %v802, %v801
    %v850 = vpack.c.b16 %v804, %v803
    %v851 = vpack.c.b16 %v806, %v805
    %v852 = vpack.c.b16 %v808, %v807
    %v853 = vpack.c.b16 %v810, %v809
    %v854 = vpack.c.b16 %v812, %v811
    %v855 = vpack.c.b16 %v814, %v813
    %v856 = vpack.c.b16 %v816, %v815
    %v857 = vpack.c.b16 %v818, %v817
    %v858 = vpack.c.b16 %v820, %v819
    %v859 = vpack.c.b16 %v822, %v821
    %v860 = vpack.c.b16 %v824, %v823
    %v861 = vpack.c.b16 %v826, %v825
    %v862 = vpack.c.b16 %v828, %v827
    %v863 = vpack.c.b16 %v830, %v829
    %v864 = vpack.c.b16 %v832, %v831
    %vm865 = vcmask 64512
    %v867 = vsel %vm865, %v833, 0
    %v870 = vsel %vm865, %v834, 0
    %v873 = vsel %vm865, %v835, 0
    %v876 = vsel %vm865, %v836, 0
    %v879 = vsel %vm865, %v837, 0
    %v882 = vsel %vm865, %v838, 0
    %v885 = vsel %vm865, %v839, 0
    %v888 = vsel %vm865, %v840, 0
    %v891 = vsel %vm865, %v841, 0
    %v894 = vsel %vm865, %v842, 0
    %v897 = vsel %vm865, %v843, 0
    %v900 = vsel %vm865, %v844, 0
    %v903 = vsel %vm865, %v845, 0
    %v906 = vsel %vm865, %v846, 0
    %v909 = vsel %vm865, %v847, 0
    %v912 = vsel %vm865, %v848, 0
    %v915 = vsel %vm865, %v849, 0
    %v918 = vsel %vm865, %v850, 0
    %v921 = vsel %vm865, %v851, 0
    %v924 = vsel %vm865, %v852, 0
    %v927 = vsel %vm865, %v853, 0
    %v930 = vsel %vm865, %v854, 0
    %v933 = vsel %vm865, %v855, 0
    %v936 = vsel %vm865, %v856, 0
    %v939 = vsel %vm865, %v857, 0
    %v942 = vsel %vm865, %v858, 0
    %v945 = vsel %vm865, %v859, 0
    %v948 = vsel %vm865, %v860, 0
    %v951 = vsel %vm865, %v861, 0
    %v954 = vsel %vm865, %v862, 0
    %v957 = vsel %vm865, %v863, 0
    %v960 = vsel %vm865, %v864, 0
    %vm962 = vcmask 1043456
    %v964 = vsel %vm962, %v86, 0
    %966 = vmatprep.subr.bf16.mxu0 0
    %967 = vmatpush1.bf16.msra.mxu0 0
    %968 = vmatprep.subr.bf16.mxu0 0
    %969 = vmatpush1.bf16.msra.mxu0 0
    %970 = vmatprep.subr.bf16.mxu0 0
    %971 = vmatpush1.bf16.msra.mxu0 0
    %972 = vmatprep.subr.bf16.mxu0 0
    %973 = vmatpush1.bf16.msra.mxu0 0
    %974 = vmatprep.subr.bf16.mxu0 0
    %975 = vmatpush1.bf16.msra.mxu0 0
    %976 = vmatprep.subr.bf16.mxu0 0
    %977 = vmatpush1.bf16.msra.mxu0 0
    %978 = vmatprep.subr.bf16.mxu0 0
    %979 = vmatpush1.bf16.msra.mxu0 0
    %980 = vmatprep.subr.bf16.mxu0 0
    %981 = vmatpush1.bf16.msra.mxu0 %v964
    %982 = vmatprep.subr.bf16.mxu0 0
    %983 = vmatpush2.bf16.msra.mxu0 0
    %984 = vmatprep.subr.bf16.mxu0 0
    %985 = vmatpush2.bf16.msra.mxu0 0
    %986 = vmatprep.subr.bf16.mxu0 0
    %987 = vmatpush2.bf16.msra.mxu0 0
    %988 = vmatprep.subr.bf16.mxu0 0
    %989 = vmatpush2.bf16.msra.mxu0 0
    %990 = vmatprep.subr.bf16.mxu0 0
    %991 = vmatpush2.bf16.msra.mxu0 0
    %992 = vmatprep.subr.bf16.mxu0 0
    %993 = vmatpush2.bf16.msra.mxu0 0
    %994 = vmatprep.subr.bf16.mxu0 0
    %995 = vmatpush2.bf16.msra.mxu0 0
    %996 = vmatprep.subr.bf16.mxu0 0
    %997 = vmatpush2.bf16.msra.mxu0 0
    %998 = vmatprep.mubr.bf16.mxu0 0
    %999 = vmatmul.mubr.bf16.gmra.mxu0 %v867
    %v1000 = vpop.f32.mrf.mxu0
    %v1001 = vadd.f32 %v451, %v1000
    %v1002 = vpop.f32.mrf.mxu0
    %v1003 = vpop.f32.mrf.mxu0
    %v1004 = vadd.f32 %v454, %v1003
    %v1005 = vpop.f32.mrf.mxu0
    %1006 = vmatprep.mubr.bf16.mxu0 0
    %1007 = vmatmul.mubr.bf16.gmra.mxu0 %v870
    %v1008 = vpop.f32.mrf.mxu0
    %v1009 = vadd.f32 %v459, %v1008
    %v1010 = vpop.f32.mrf.mxu0
    %v1011 = vpop.f32.mrf.mxu0
    %v1012 = vadd.f32 %v462, %v1011
    %v1013 = vpop.f32.mrf.mxu0
    %1014 = vmatprep.mubr.bf16.mxu0 0
    %1015 = vmatmul.mubr.bf16.gmra.mxu0 %v873
    %v1016 = vpop.f32.mrf.mxu0
    %v1017 = vadd.f32 %v467, %v1016
    %v1018 = vpop.f32.mrf.mxu0
    %v1019 = vpop.f32.mrf.mxu0
    %v1020 = vadd.f32 %v470, %v1019
    %v1021 = vpop.f32.mrf.mxu0
    %1022 = vmatprep.mubr.bf16.mxu0 0
    %1023 = vmatmul.mubr.bf16.gmra.mxu0 %v876
    %v1024 = vpop.f32.mrf.mxu0
    %v1025 = vadd.f32 %v475, %v1024
    %v1026 = vpop.f32.mrf.mxu0
    %v1027 = vpop.f32.mrf.mxu0
    %v1028 = vadd.f32 %v478, %v1027
    %v1029 = vpop.f32.mrf.mxu0
    %1030 = vmatprep.mubr.bf16.mxu0 0
    %1031 = vmatmul.mubr.bf16.gmra.mxu0 %v879
    %v1032 = vpop.f32.mrf.mxu0
    %v1033 = vadd.f32 %v483, %v1032
    %v1034 = vpop.f32.mrf.mxu0
    %v1035 = vpop.f32.mrf.mxu0
    %v1036 = vadd.f32 %v486, %v1035
    %v1037 = vpop.f32.mrf.mxu0
    %1038 = vmatprep.mubr.bf16.mxu0 0
    %1039 = vmatmul.mubr.bf16.gmra.mxu0 %v882
    %v1040 = vpop.f32.mrf.mxu0
    %v1041 = vadd.f32 %v491, %v1040
    %v1042 = vpop.f32.mrf.mxu0
    %v1043 = vpop.f32.mrf.mxu0
    %v1044 = vadd.f32 %v494, %v1043
    %v1045 = vpop.f32.mrf.mxu0
    %1046 = vmatprep.mubr.bf16.mxu0 0
    %1047 = vmatmul.mubr.bf16.gmra.mxu0 %v885
    %v1048 = vpop.f32.mrf.mxu0
    %v1049 = vadd.f32 %v499, %v1048
    %v1050 = vpop.f32.mrf.mxu0
    %v1051 = vpop.f32.mrf.mxu0
    %v1052 = vadd.f32 %v502, %v1051
    %v1053 = vpop.f32.mrf.mxu0
    %1054 = vmatprep.mubr.bf16.mxu0 0
    %1055 = vmatmul.mubr.bf16.gmra.mxu0 %v888
    %v1056 = vpop.f32.mrf.mxu0
    %v1057 = vadd.f32 %v507, %v1056
    %v1058 = vpop.f32.mrf.mxu0
    %v1059 = vpop.f32.mrf.mxu0
    %v1060 = vadd.f32 %v510, %v1059
    %v1061 = vpop.f32.mrf.mxu0
    %1062 = vmatprep.mubr.bf16.mxu0 0
    %1063 = vmatmul.mubr.bf16.gmra.mxu0 %v891
    %v1064 = vpop.f32.mrf.mxu0
    %v1065 = vadd.f32 %v515, %v1064
    %v1066 = vpop.f32.mrf.mxu0
    %v1067 = vpop.f32.mrf.mxu0
    %v1068 = vadd.f32 %v518, %v1067
    %v1069 = vpop.f32.mrf.mxu0
    %1070 = vmatprep.mubr.bf16.mxu0 0
    %1071 = vmatmul.mubr.bf16.gmra.mxu0 %v894
    %v1072 = vpop.f32.mrf.mxu0
    %v1073 = vadd.f32 %v523, %v1072
    %v1074 = vpop.f32.mrf.mxu0
    %v1075 = vpop.f32.mrf.mxu0
    %v1076 = vadd.f32 %v526, %v1075
    %v1077 = vpop.f32.mrf.mxu0
    %1078 = vmatprep.mubr.bf16.mxu0 0
    %1079 = vmatmul.mubr.bf16.gmra.mxu0 %v897
    %v1080 = vpop.f32.mrf.mxu0
    %v1081 = vadd.f32 %v531, %v1080
    %v1082 = vpop.f32.mrf.mxu0
    %v1083 = vpop.f32.mrf.mxu0
    %v1084 = vadd.f32 %v534, %v1083
    %v1085 = vpop.f32.mrf.mxu0
    %1086 = vmatprep.mubr.bf16.mxu0 0
    %1087 = vmatmul.mubr.bf16.gmra.mxu0 %v900
    %v1088 = vpop.f32.mrf.mxu0
    %v1089 = vadd.f32 %v539, %v1088
    %v1090 = vpop.f32.mrf.mxu0
    %v1091 = vpop.f32.mrf.mxu0
    %v1092 = vadd.f32 %v542, %v1091
    %v1093 = vpop.f32.mrf.mxu0
    %1094 = vmatprep.mubr.bf16.mxu0 0
    %1095 = vmatmul.mubr.bf16.gmra.mxu0 %v903
    %v1096 = vpop.f32.mrf.mxu0
    %v1097 = vadd.f32 %v547, %v1096
    %v1098 = vpop.f32.mrf.mxu0
    %v1099 = vpop.f32.mrf.mxu0
    %v1100 = vadd.f32 %v550, %v1099
    %v1101 = vpop.f32.mrf.mxu0
    %1102 = vmatprep.mubr.bf16.mxu0 0
    %1103 = vmatmul.mubr.bf16.gmra.mxu0 %v906
    %v1104 = vpop.f32.mrf.mxu0
    %v1105 = vadd.f32 %v555, %v1104
    %v1106 = vpop.f32.mrf.mxu0
    %v1107 = vpop.f32.mrf.mxu0
    %v1108 = vadd.f32 %v558, %v1107
    %v1109 = vpop.f32.mrf.mxu0
    %1110 = vmatprep.mubr.bf16.mxu0 0
    %1111 = vmatmul.mubr.bf16.gmra.mxu0 %v909
    %v1112 = vpop.f32.mrf.mxu0
    %v1113 = vadd.f32 %v563, %v1112
    %v1114 = vpop.f32.mrf.mxu0
    %v1115 = vpop.f32.mrf.mxu0
    %v1116 = vadd.f32 %v566, %v1115
    %v1117 = vpop.f32.mrf.mxu0
    %1118 = vmatprep.mubr.bf16.mxu0 0
    %1119 = vmatmul.mubr.bf16.gmra.mxu0 %v912
    %v1120 = vpop.f32.mrf.mxu0
    %v1121 = vadd.f32 %v571, %v1120
    %v1122 = vpop.f32.mrf.mxu0
    %v1123 = vpop.f32.mrf.mxu0
    %v1124 = vadd.f32 %v574, %v1123
    %v1125 = vpop.f32.mrf.mxu0
    %1126 = vmatprep.mubr.bf16.mxu0 0
    %1127 = vmatmul.mubr.bf16.gmra.mxu0 %v915
    %v1128 = vpop.f32.mrf.mxu0
    %v1129 = vadd.f32 %v579, %v1128
    %v1130 = vpop.f32.mrf.mxu0
    %v1131 = vpop.f32.mrf.mxu0
    %v1132 = vadd.f32 %v582, %v1131
    %v1133 = vpop.f32.mrf.mxu0
    %1134 = vmatprep.mubr.bf16.mxu0 0
    %1135 = vmatmul.mubr.bf16.gmra.mxu0 %v918
    %v1136 = vpop.f32.mrf.mxu0
    %v1137 = vadd.f32 %v587, %v1136
    %v1138 = vpop.f32.mrf.mxu0
    %v1139 = vpop.f32.mrf.mxu0
    %v1140 = vadd.f32 %v590, %v1139
    %v1141 = vpop.f32.mrf.mxu0
    %1142 = vmatprep.mubr.bf16.mxu0 0
    %1143 = vmatmul.mubr.bf16.gmra.mxu0 %v921
    %v1144 = vpop.f32.mrf.mxu0
    %v1145 = vadd.f32 %v595, %v1144
    %v1146 = vpop.f32.mrf.mxu0
    %v1147 = vpop.f32.mrf.mxu0
    %v1148 = vadd.f32 %v598, %v1147
    %v1149 = vpop.f32.mrf.mxu0
    %1150 = vmatprep.mubr.bf16.mxu0 0
    %1151 = vmatmul.mubr.bf16.gmra.mxu0 %v924
    %v1152 = vpop.f32.mrf.mxu0
    %v1153 = vadd.f32 %v603, %v1152
    %v1154 = vpop.f32.mrf.mxu0
    %v1155 = vpop.f32.mrf.mxu0
    %v1156 = vadd.f32 %v606, %v1155
    %v1157 = vpop.f32.mrf.mxu0
    %1158 = vmatprep.mubr.bf16.mxu0 0
    %1159 = vmatmul.mubr.bf16.gmra.mxu0 %v927
    %v1160 = vpop.f32.mrf.mxu0
    %v1161 = vadd.f32 %v611, %v1160
    %v1162 = vpop.f32.mrf.mxu0
    %v1163 = vpop.f32.mrf.mxu0
    %v1164 = vadd.f32 %v614, %v1163
    %v1165 = vpop.f32.mrf.mxu0
    %1166 = vmatprep.mubr.bf16.mxu0 0
    %1167 = vmatmul.mubr.bf16.gmra.mxu0 %v930
    %v1168 = vpop.f32.mrf.mxu0
    %v1169 = vadd.f32 %v619, %v1168
    %v1170 = vpop.f32.mrf.mxu0
    %v1171 = vpop.f32.mrf.mxu0
    %v1172 = vadd.f32 %v622, %v1171
    %v1173 = vpop.f32.mrf.mxu0
    %1174 = vmatprep.mubr.bf16.mxu0 0
    %1175 = vmatmul.mubr.bf16.gmra.mxu0 %v933
    %v1176 = vpop.f32.mrf.mxu0
    %v1177 = vadd.f32 %v627, %v1176
    %v1178 = vpop.f32.mrf.mxu0
    %v1179 = vpop.f32.mrf.mxu0
    %v1180 = vadd.f32 %v630, %v1179
    %v1181 = vpop.f32.mrf.mxu0
    %1182 = vmatprep.mubr.bf16.mxu0 0
    %1183 = vmatmul.mubr.bf16.gmra.mxu0 %v936
    %v1184 = vpop.f32.mrf.mxu0
    %v1185 = vadd.f32 %v635, %v1184
    %v1186 = vpop.f32.mrf.mxu0
    %v1187 = vpop.f32.mrf.mxu0
    %v1188 = vadd.f32 %v638, %v1187
    %v1189 = vpop.f32.mrf.mxu0
    %1190 = vmatprep.mubr.bf16.mxu0 0
    %1191 = vmatmul.mubr.bf16.gmra.mxu0 %v939
    %v1192 = vpop.f32.mrf.mxu0
    %v1193 = vadd.f32 %v643, %v1192
    %v1194 = vpop.f32.mrf.mxu0
    %v1195 = vpop.f32.mrf.mxu0
    %v1196 = vadd.f32 %v646, %v1195
    %v1197 = vpop.f32.mrf.mxu0
    %1198 = vmatprep.mubr.bf16.mxu0 0
    %1199 = vmatmul.mubr.bf16.gmra.mxu0 %v942
    %v1200 = vpop.f32.mrf.mxu0
    %v1201 = vadd.f32 %v651, %v1200
    %v1202 = vpop.f32.mrf.mxu0
    %v1203 = vpop.f32.mrf.mxu0
    %v1204 = vadd.f32 %v654, %v1203
    %v1205 = vpop.f32.mrf.mxu0
    %1206 = vmatprep.mubr.bf16.mxu0 0
    %1207 = vmatmul.mubr.bf16.gmra.mxu0 %v945
    %v1208 = vpop.f32.mrf.mxu0
    %v1209 = vadd.f32 %v659, %v1208
    %v1210 = vpop.f32.mrf.mxu0
    %v1211 = vpop.f32.mrf.mxu0
    %v1212 = vadd.f32 %v662, %v1211
    %v1213 = vpop.f32.mrf.mxu0
    %1214 = vmatprep.mubr.bf16.mxu0 0
    %1215 = vmatmul.mubr.bf16.gmra.mxu0 %v948
    %v1216 = vpop.f32.mrf.mxu0
    %v1217 = vadd.f32 %v667, %v1216
    %v1218 = vpop.f32.mrf.mxu0
    %v1219 = vpop.f32.mrf.mxu0
    %v1220 = vadd.f32 %v670, %v1219
    %v1221 = vpop.f32.mrf.mxu0
    %1222 = vmatprep.mubr.bf16.mxu0 0
    %1223 = vmatmul.mubr.bf16.gmra.mxu0 %v951
    %v1224 = vpop.f32.mrf.mxu0
    %v1225 = vadd.f32 %v675, %v1224
    %v1226 = vpop.f32.mrf.mxu0
    %v1227 = vpop.f32.mrf.mxu0
    %v1228 = vadd.f32 %v678, %v1227
    %v1229 = vpop.f32.mrf.mxu0
    %1230 = vmatprep.mubr.bf16.mxu0 0
    %1231 = vmatmul.mubr.bf16.gmra.mxu0 %v954
    %v1232 = vpop.f32.mrf.mxu0
    %v1233 = vadd.f32 %v683, %v1232
    %v1234 = vpop.f32.mrf.mxu0
    %v1235 = vpop.f32.mrf.mxu0
    %v1236 = vadd.f32 %v686, %v1235
    %v1237 = vpop.f32.mrf.mxu0
    %1238 = vmatprep.mubr.bf16.mxu0 0
    %1239 = vmatmul.mubr.bf16.gmra.mxu0 %v957
    %v1240 = vpop.f32.mrf.mxu0
    %v1241 = vadd.f32 %v691, %v1240
    %v1242 = vpop.f32.mrf.mxu0
    %v1243 = vpop.f32.mrf.mxu0
    %v1244 = vadd.f32 %v694, %v1243
    %v1245 = vpop.f32.mrf.mxu0
    %1246 = vmatprep.mubr.bf16.mxu0 0
    %1247 = vmatmul.mubr.bf16.gmra.mxu0 %v960
    %v1248 = vpop.f32.mrf.mxu0
    %v1249 = vadd.f32 %v699, %v1248
    %v1250 = vpop.f32.mrf.mxu0
    %v1251 = vpop.f32.mrf.mxu0
    %v1252 = vadd.f32 %v702, %v1251
    %v1253 = vpop.f32.mrf.mxu0
    %1254 = vdwg.mxu0
    %v1255 = vld [vmem:[%s4] sm:$0x1]
    %v1257 = vlaneseq
    %v1258 = vshrl.u32 %v1257, 7
    %v1259 = vsub.s32 0, %v1258
    %v1260 = vrot.slane %v1255, %v1259
    %v1262 = vadd.f32 %v1001, %v1260
    %v1263 = vadd.f32 %v1004, %v1260
    %v1264 = vadd.f32 %v1009, %v1260
    %v1265 = vadd.f32 %v1012, %v1260
    %v1266 = vadd.f32 %v1017, %v1260
    %v1267 = vadd.f32 %v1020, %v1260
    %v1268 = vadd.f32 %v1025, %v1260
    %v1269 = vadd.f32 %v1028, %v1260
    %v1270 = vadd.f32 %v1033, %v1260
    %v1271 = vadd.f32 %v1036, %v1260
    %v1272 = vadd.f32 %v1041, %v1260
    %v1273 = vadd.f32 %v1044, %v1260
    %v1274 = vadd.f32 %v1049, %v1260
    %v1275 = vadd.f32 %v1052, %v1260
    %v1276 = vadd.f32 %v1057, %v1260
    %v1277 = vadd.f32 %v1060, %v1260
    %v1278 = vadd.f32 %v1065, %v1260
    %v1279 = vadd.f32 %v1068, %v1260
    %v1280 = vadd.f32 %v1073, %v1260
    %v1281 = vadd.f32 %v1076, %v1260
    %v1282 = vadd.f32 %v1081, %v1260
    %v1283 = vadd.f32 %v1084, %v1260
    %v1284 = vadd.f32 %v1089, %v1260
    %v1285 = vadd.f32 %v1092, %v1260
    %v1286 = vadd.f32 %v1097, %v1260
    %v1287 = vadd.f32 %v1100, %v1260
    %v1288 = vadd.f32 %v1105, %v1260
    %v1289 = vadd.f32 %v1108, %v1260
    %v1290 = vadd.f32 %v1113, %v1260
    %v1291 = vadd.f32 %v1116, %v1260
    %v1292 = vadd.f32 %v1121, %v1260
    %v1293 = vadd.f32 %v1124, %v1260
    %v1294 = vadd.f32 %v1129, %v1260
    %v1295 = vadd.f32 %v1132, %v1260
    %v1296 = vadd.f32 %v1137, %v1260
    %v1297 = vadd.f32 %v1140, %v1260
    %v1298 = vadd.f32 %v1145, %v1260
    %v1299 = vadd.f32 %v1148, %v1260
    %v1300 = vadd.f32 %v1153, %v1260
    %v1301 = vadd.f32 %v1156, %v1260
    %v1302 = vadd.f32 %v1161, %v1260
    %v1303 = vadd.f32 %v1164, %v1260
    %v1304 = vadd.f32 %v1169, %v1260
    %v1305 = vadd.f32 %v1172, %v1260
    %v1306 = vadd.f32 %v1177, %v1260
    %v1307 = vadd.f32 %v1180, %v1260
    %v1308 = vadd.f32 %v1185, %v1260
    %v1309 = vadd.f32 %v1188, %v1260
    %v1310 = vadd.f32 %v1193, %v1260
    %v1311 = vadd.f32 %v1196, %v1260
    %v1312 = vadd.f32 %v1201, %v1260
    %v1313 = vadd.f32 %v1204, %v1260
    %v1314 = vadd.f32 %v1209, %v1260
    %v1315 = vadd.f32 %v1212, %v1260
    %v1316 = vadd.f32 %v1217, %v1260
    %v1317 = vadd.f32 %v1220, %v1260
    %v1318 = vadd.f32 %v1225, %v1260
    %v1319 = vadd.f32 %v1228, %v1260
    %v1320 = vadd.f32 %v1233, %v1260
    %v1321 = vadd.f32 %v1236, %v1260
    %v1322 = vadd.f32 %v1241, %v1260
    %v1323 = vadd.f32 %v1244, %v1260
    %v1324 = vadd.f32 %v1249, %v1260
    %v1325 = vadd.f32 %v1252, %v1260
    %v1326 = vmax.f32 %v1262, 0.0
    %v1327 = vmax.f32 %v1263, 0.0
    %v1328 = vmax.f32 %v1264, 0.0
    %v1329 = vmax.f32 %v1265, 0.0
    %v1330 = vmax.f32 %v1266, 0.0
    %v1331 = vmax.f32 %v1267, 0.0
    %v1332 = vmax.f32 %v1268, 0.0
    %v1333 = vmax.f32 %v1269, 0.0
    %v1334 = vmax.f32 %v1270, 0.0
    %v1335 = vmax.f32 %v1271, 0.0
    %v1336 = vmax.f32 %v1272, 0.0
    %v1337 = vmax.f32 %v1273, 0.0
    %v1338 = vmax.f32 %v1274, 0.0
    %v1339 = vmax.f32 %v1275, 0.0
    %v1340 = vmax.f32 %v1276, 0.0
    %v1341 = vmax.f32 %v1277, 0.0
    %v1342 = vmax.f32 %v1278, 0.0
    %v1343 = vmax.f32 %v1279, 0.0
    %v1344 = vmax.f32 %v1280, 0.0
    %v1345 = vmax.f32 %v1281, 0.0
    %v1346 = vmax.f32 %v1282, 0.0
    %v1347 = vmax.f32 %v1283, 0.0
    %v1348 = vmax.f32 %v1284, 0.0
    %v1349 = vmax.f32 %v1285, 0.0
    %v1350 = vmax.f32 %v1286, 0.0
    %v1351 = vmax.f32 %v1287, 0.0
    %v1352 = vmax.f32 %v1288, 0.0
    %v1353 = vmax.f32 %v1289, 0.0
    %v1354 = vmax.f32 %v1290, 0.0
    %v1355 = vmax.f32 %v1291, 0.0
    %v1356 = vmax.f32 %v1292, 0.0
    %v1357 = vmax.f32 %v1293, 0.0
    %v1358 = vmax.f32 %v1294, 0.0
    %v1359 = vmax.f32 %v1295, 0.0
    %v1360 = vmax.f32 %v1296, 0.0
    %v1361 = vmax.f32 %v1297, 0.0
    %v1362 = vmax.f32 %v1298, 0.0
    %v1363 = vmax.f32 %v1299, 0.0
    %v1364 = vmax.f32 %v1300, 0.0
    %v1365 = vmax.f32 %v1301, 0.0
    %v1366 = vmax.f32 %v1302, 0.0
    %v1367 = vmax.f32 %v1303, 0.0
    %v1368 = vmax.f32 %v1304, 0.0
    %v1369 = vmax.f32 %v1305, 0.0
    %v1370 = vmax.f32 %v1306, 0.0
    %v1371 = vmax.f32 %v1307, 0.0
    %v1372 = vmax.f32 %v1308, 0.0
    %v1373 = vmax.f32 %v1309, 0.0
    %v1374 = vmax.f32 %v1310, 0.0
    %v1375 = vmax.f32 %v1311, 0.0
    %v1376 = vmax.f32 %v1312, 0.0
    %v1377 = vmax.f32 %v1313, 0.0
    %v1378 = vmax.f32 %v1314, 0.0
    %v1379 = vmax.f32 %v1315, 0.0
    %v1380 = vmax.f32 %v1316, 0.0
    %v1381 = vmax.f32 %v1317, 0.0
    %v1382 = vmax.f32 %v1318, 0.0
    %v1383 = vmax.f32 %v1319, 0.0
    %v1384 = vmax.f32 %v1320, 0.0
    %v1385 = vmax.f32 %v1321, 0.0
    %v1386 = vmax.f32 %v1322, 0.0
    %v1387 = vmax.f32 %v1323, 0.0
    %v1388 = vmax.f32 %v1324, 0.0
    %v1389 = vmax.f32 %v1325, 0.0
    %vm1390 = vcmask 261120
    %1391 = vst.msk [vmem:[#allocation2] sm:$0xff] %vm1390, %v1326
    %1392 = vst.msk [vmem:[#allocation2 + $0x8] sm:$0xff] %vm1390, %v1327
    %1393 = vst.msk [vmem:[#allocation2 + $0x10] sm:$0xff] %vm1390, %v1328
    %1394 = vst.msk [vmem:[#allocation2 + $0x18] sm:$0xff] %vm1390, %v1329
    %1395 = vst.msk [vmem:[#allocation2 + $0x20] sm:$0xff] %vm1390, %v1330
    %1396 = vst.msk [vmem:[#allocation2 + $0x28] sm:$0xff] %vm1390, %v1331
    %1397 = vst.msk [vmem:[#allocation2 + $0x30] sm:$0xff] %vm1390, %v1332
    %1398 = vst.msk [vmem:[#allocation2 + $0x38] sm:$0xff] %vm1390, %v1333
    %1399 = vst.msk [vmem:[#allocation2 + $0x40] sm:$0xff] %vm1390, %v1334
    %1400 = vst.msk [vmem:[#allocation2 + $0x48] sm:$0xff] %vm1390, %v1335
    %1401 = vst.msk [vmem:[#allocation2 + $0x50] sm:$0xff] %vm1390, %v1336
    %1402 = vst.msk [vmem:[#allocation2 + $0x58] sm:$0xff] %vm1390, %v1337
    %1403 = vst.msk [vmem:[#allocation2 + $0x60] sm:$0xff] %vm1390, %v1338
    %1404 = vst.msk [vmem:[#allocation2 + $0x68] sm:$0xff] %vm1390, %v1339
    %1405 = vst.msk [vmem:[#allocation2 + $0x70] sm:$0xff] %vm1390, %v1340
    %1406 = vst.msk [vmem:[#allocation2 + $0x78] sm:$0xff] %vm1390, %v1341
    %1407 = vst.msk [vmem:[#allocation2 + $0x80] sm:$0xff] %vm1390, %v1342
    %1408 = vst.msk [vmem:[#allocation2 + $0x88] sm:$0xff] %vm1390, %v1343
    %1409 = vst.msk [vmem:[#allocation2 + $0x90] sm:$0xff] %vm1390, %v1344
    %1410 = vst.msk [vmem:[#allocation2 + $0x98] sm:$0xff] %vm1390, %v1345
    %1411 = vst.msk [vmem:[#allocation2 + $0xa0] sm:$0xff] %vm1390, %v1346
    %1412 = vst.msk [vmem:[#allocation2 + $0xa8] sm:$0xff] %vm1390, %v1347
    %1413 = vst.msk [vmem:[#allocation2 + $0xb0] sm:$0xff] %vm1390, %v1348
    %1414 = vst.msk [vmem:[#allocation2 + $0xb8] sm:$0xff] %vm1390, %v1349
    %1415 = vst.msk [vmem:[#allocation2 + $0xc0] sm:$0xff] %vm1390, %v1350
    %1416 = vst.msk [vmem:[#allocation2 + $0xc8] sm:$0xff] %vm1390, %v1351
    %1417 = vst.msk [vmem:[#allocation2 + $0xd0] sm:$0xff] %vm1390, %v1352
    %1418 = vst.msk [vmem:[#allocation2 + $0xd8] sm:$0xff] %vm1390, %v1353
    %1419 = vst.msk [vmem:[#allocation2 + $0xe0] sm:$0xff] %vm1390, %v1354
    %1420 = vst.msk [vmem:[#allocation2 + $0xe8] sm:$0xff] %vm1390, %v1355
    %1421 = vst.msk [vmem:[#allocation2 + $0xf0] sm:$0xff] %vm1390, %v1356
    %1422 = vst.msk [vmem:[#allocation2 + $0xf8] sm:$0xff] %vm1390, %v1357
    %1423 = vst.msk [vmem:[#allocation2 + $0x100] sm:$0xff] %vm1390, %v1358
    %1424 = vst.msk [vmem:[#allocation2 + $0x108] sm:$0xff] %vm1390, %v1359
    %1425 = vst.msk [vmem:[#allocation2 + $0x110] sm:$0xff] %vm1390, %v1360
    %1426 = vst.msk [vmem:[#allocation2 + $0x118] sm:$0xff] %vm1390, %v1361
    %1427 = vst.msk [vmem:[#allocation2 + $0x120] sm:$0xff] %vm1390, %v1362
    %1428 = vst.msk [vmem:[#allocation2 + $0x128] sm:$0xff] %vm1390, %v1363
    %1429 = vst.msk [vmem:[#allocation2 + $0x130] sm:$0xff] %vm1390, %v1364
    %1430 = vst.msk [vmem:[#allocation2 + $0x138] sm:$0xff] %vm1390, %v1365
    %1431 = vst.msk [vmem:[#allocation2 + $0x140] sm:$0xff] %vm1390, %v1366
    %1432 = vst.msk [vmem:[#allocation2 + $0x148] sm:$0xff] %vm1390, %v1367
    %1433 = vst.msk [vmem:[#allocation2 + $0x150] sm:$0xff] %vm1390, %v1368
    %1434 = vst.msk [vmem:[#allocation2 + $0x158] sm:$0xff] %vm1390, %v1369
    %1435 = vst.msk [vmem:[#allocation2 + $0x160] sm:$0xff] %vm1390, %v1370
    %1436 = vst.msk [vmem:[#allocation2 + $0x168] sm:$0xff] %vm1390, %v1371
    %1437 = vst.msk [vmem:[#allocation2 + $0x170] sm:$0xff] %vm1390, %v1372
    %1438 = vst.msk [vmem:[#allocation2 + $0x178] sm:$0xff] %vm1390, %v1373
    %1439 = vst.msk [vmem:[#allocation2 + $0x180] sm:$0xff] %vm1390, %v1374
    %1440 = vst.msk [vmem:[#allocation2 + $0x188] sm:$0xff] %vm1390, %v1375
    %1441 = vst.msk [vmem:[#allocation2 + $0x190] sm:$0xff] %vm1390, %v1376
    %1442 = vst.msk [vmem:[#allocation2 + $0x198] sm:$0xff] %vm1390, %v1377
    %1443 = vst.msk [vmem:[#allocation2 + $0x1a0] sm:$0xff] %vm1390, %v1378
    %1444 = vst.msk [vmem:[#allocation2 + $0x1a8] sm:$0xff] %vm1390, %v1379
    %1445 = vst.msk [vmem:[#allocation2 + $0x1b0] sm:$0xff] %vm1390, %v1380
    %1446 = vst.msk [vmem:[#allocation2 + $0x1b8] sm:$0xff] %vm1390, %v1381
    %1447 = vst.msk [vmem:[#allocation2 + $0x1c0] sm:$0xff] %vm1390, %v1382
    %1448 = vst.msk [vmem:[#allocation2 + $0x1c8] sm:$0xff] %vm1390, %v1383
    %1449 = vst.msk [vmem:[#allocation2 + $0x1d0] sm:$0xff] %vm1390, %v1384
    %1450 = vst.msk [vmem:[#allocation2 + $0x1d8] sm:$0xff] %vm1390, %v1385
    %1451 = vst.msk [vmem:[#allocation2 + $0x1e0] sm:$0xff] %vm1390, %v1386
    %1452 = vst.msk [vmem:[#allocation2 + $0x1e8] sm:$0xff] %vm1390, %v1387
    %1453 = vst.msk [vmem:[#allocation2 + $0x1f0] sm:$0xff] %vm1390, %v1388
    %1454 = vst.msk [vmem:[#allocation2 + $0x1f8] sm:$0xff] %vm1390, %v1389
    // Predicated region
    $region22: #{bottleneck_forward_nchw.5} parent=1 // pred_check
      _
    $region23: #{bottleneck_forward_nchw.5} parent=1 // pred_check_branch
      %1456 = sbr.rel (0) target = $region25
    $region24: #{bottleneck_forward_nchw.5} parent=1 // pred_region
      %s1458 = ssub.s32 8192, 8192
      %1459 = vsyncadd [#allocation3], %s1458
      %s1460 = sshll.u32 [#allocation2], 4
      %s1461 = int_to_ptr.vmem [resolvable:$true] %s1460
      %1466 = dma.vmem_to_hbm [thread:$0]  %s1461, 8192, %s5, [#allocation3], 128, 128, 8
    $region25: #{bottleneck_forward_nchw.5} parent=1 // pred_fallthru
      _
    // Predicated region
    $region26: #{bottleneck_forward_nchw.5} parent=1 // pred_check
      _
    $region27: #{bottleneck_forward_nchw.5} parent=1 // pred_check_branch
      %1468 = sbr.rel (0) target = $region29
    $region28: #{bottleneck_forward_nchw.5} parent=1 // pred_region
      %1469 = dma.done [#allocation3], 8192
    $region29: #{bottleneck_forward_nchw.5} parent=1 // pred_fallthru
      _
    %1470 = vsyncpa [#allocation3], 1

// kernel: bottleneck_forward_nchw.4
$region0: #{bottleneck_forward_nchw.4}
  #allocation0 [shape = 'u32[]', space=smem, size = 0x4, offset = 0x4, fixed_abs, tag = 'smem constant byte address 0x4 - core index']
  #allocation1 [shape = 'u32[144,128]{1,0:T(1,128)}', space=vmem, size = 0x12000, scoped, tag = 'internal scratch']
  #allocation2 [shape = 'bf16[18,18,8]{2,1,0:T(8,128)(2,1)}', space=vmem, size = 0x1b000, scoped, tag = 'scratch operand']
  %s0 = inlined_call_operand.vmem [shape: bf16[2,16,16,8], index: 0, kind: input, shape index: {}]
  %s1 = inlined_call_operand.vmem [shape: bf16[3,3,8,8], index: 1, kind: input, shape index: {}]
  %s2 = inlined_call_operand.vmem [shape: f32[1,8], index: 2, kind: input, shape index: {}]
  %s3 = inlined_call_operand.vmem [shape: bf16[512,8], index: 3, kind: output, shape index: {}]
  %s4 = sld [smem:[#allocation0]]
  $region49: #{bottleneck_forward_nchw.4} parent=0
    _
  %s6 = ssub.s32 1, %s4
  %s7 = scalar_select 0, %s6, %s4
  loop: start=0, step=1, limit=4
  $region2: #{bottleneck_forward_nchw.4} parent=0 // loop_pre_header
    _
  $region3: #{bottleneck_forward_nchw.4} parent=0 // loop_header
    %s9 = sphi 0, %s13
    %p10 = scmp.ge.s32.totalorder %s9, 4
    %s16 = sphi 0, %s28
    %s17 = sphi 0, %s24
    %s18 = sphi 0, %s16
    %s19 = sphi 0, %s17
    %s20 = sphi 0, %s18
    %s21 = sphi 0, %s19
    %s31 = sphi 0, %s33
    %s34 = sphi 0, %s31
    %s35 = sphi 0, %s34
    %s51 = sphi 0, %s35
    %s55 = sphi 0, %s55
    %s57 = sphi 0, %s55
    %s58 = sphi 0, %s57
    %s72 = sphi 0, %s58
    %s76 = sphi 0, %s76
    %s78 = sphi 0, %s76
    %s79 = sphi 0, %s78
    %s93 = sphi 0, %s79
    %s101 = sphi 0, %s103
    %s104 = sphi 0, %s101
    %s105 = sphi 0, %s104
    %s121 = sphi 0, %s105
  $region4: #{bottleneck_forward_nchw.4} parent=0 // loop_header_branch
    %12 = sbr.rel (%p10) target = $region8
  $region5: #{bottleneck_forward_nchw.4} parent=0 // loop_body
    %s14 = ssub.s32 %s9, 1
    %s15 = ssub.s32 %s9, 2
    %s22 = sadd.s32 1, %s17
    %p23 = scmp.ge.s32.totalorder %s22, 1
    %s24 = scalar_select %p23, 0, %s22
    %s25 = sadd.s32 1, %s16
    %s26 = scalar_select %p23, %s25, %s16
    %p27 = scmp.ge.s32.totalorder %s26, 2
    %s28 = scalar_select %p27, 0, %s26
    %s29 = ssub.s32 %s16, %s28
    %p30 = scmp.eq.s32.totalorder %s29, 0
    %s32 = sadd.s32 %s31, 1
    %s33 = scalar_select %p30, %s31, %s32
    %p36 = pneg %p30
    %p37 = scmp.eq.s32.totalorder %s9, 1
    %p38 = por %p36, %p37
    %p39 = scmp.ne.s32.totalorder %s31, %s34
    %p40 = scmp.eq.s32.totalorder %s9, 0
    %p41 = por %p39, %p40
    %p42 = scmp.ne.s32.totalorder %s31, %s34
    %p43 = scmp.eq.s32.totalorder %s14, 1
    %p44 = por %p42, %p43
    %p45 = scmp.ne.s32.totalorder %s34, %s35
    %p46 = scmp.eq.s32.totalorder %s14, 0
    %p47 = por %p45, %p46
    %p48 = scmp.ne.s32.totalorder %s34, %s35
    %p49 = scmp.eq.s32.totalorder %s15, 1
    %p50 = por %p48, %p49
    %p52 = scmp.ne.s32.totalorder %s35, %s51
    %p53 = scmp.eq.s32.totalorder %s15, 0
    %p54 = por %p52, %p53
    %s56 = sadd.s32 %s55, 1
    %p59 = scmp.eq.s32.totalorder %s9, 1
    %p60 = scmp.ne.s32.totalorder %s55, %s57
    %p61 = scmp.eq.s32.totalorder %s9, 0
    %p62 = por %p60, %p61
    %p63 = scmp.ne.s32.totalorder %s55, %s57
    %p64 = scmp.eq.s32.totalorder %s14, 1
    %p65 = por %p63, %p64
    %p66 = scmp.ne.s32.totalorder %s57, %s58
    %p67 = scmp.eq.s32.totalorder %s14, 0
    %p68 = por %p66, %p67
    %p69 = scmp.ne.s32.totalorder %s57, %s58
    %p70 = scmp.eq.s32.totalorder %s15, 1
    %p71 = por %p69, %p70
    %p73 = scmp.ne.s32.totalorder %s58, %s72
    %p74 = scmp.eq.s32.totalorder %s15, 0
    %p75 = por %p73, %p74
    %s77 = sadd.s32 %s76, 1
    %p80 = scmp.eq.s32.totalorder %s9, 1
    %p81 = scmp.ne.s32.totalorder %s76, %s78
    %p82 = scmp.eq.s32.totalorder %s9, 0
    %p83 = por %p81, %p82
    %p84 = scmp.ne.s32.totalorder %s76, %s78
    %p85 = scmp.eq.s32.totalorder %s14, 1
    %p86 = por %p84, %p85
    %p87 = scmp.ne.s32.totalorder %s78, %s79
    %p88 = scmp.eq.s32.totalorder %s14, 0
    %p89 = por %p87, %p88
    %p90 = scmp.ne.s32.totalorder %s78, %s79
    %p91 = scmp.eq.s32.totalorder %s15, 1
    %p92 = por %p90, %p91
    %p94 = scmp.ne.s32.totalorder %s79, %s93
    %p95 = scmp.eq.s32.totalorder %s15, 0
    %p96 = por %p94, %p95
    %s97 = sadd.s32 %s16, %s17
    %s98 = sadd.s32 %s28, %s24
    %s99 = ssub.s32 %s97, %s98
    %p100 = scmp.eq.s32.totalorder %s99, 0
    %s102 = sadd.s32 %s101, 1
    %s103 = scalar_select %p100, %s101, %s102
    %p106 = pneg %p100
    %p107 = scmp.eq.s32.totalorder %s9, 1
    %p108 = por %p106, %p107
    %p109 = scmp.ne.s32.totalorder %s101, %s104
    %p110 = scmp.eq.s32.totalorder %s9, 0
    %p111 = por %p109, %p110
    %p112 = scmp.ne.s32.totalorder %s101, %s104
    %p113 = scmp.eq.s32.totalorder %s14, 1
    %p114 = por %p112, %p113
    %p115 = scmp.ne.s32.totalorder %s104, %s105
    %p116 = scmp.eq.s32.totalorder %s14, 0
    %p117 = por %p115, %p116
    %p118 = scmp.ne.s32.totalorder %s104, %s105
    %p119 = scmp.eq.s32.totalorder %s15, 1
    %p120 = por %p118, %p119
    %p122 = scmp.ne.s32.totalorder %s105, %s121
    %p123 = scmp.eq.s32.totalorder %s15, 0
    %p124 = por %p122, %p123
    %p125 = scmp.le.s32.totalorder 1, %s9
    %p126 = scmp.lt.s32.totalorder %s9, 3
    %p127 = pnand %p125, %p126
    %p128 = pneg %p127
    // Predicated region
    $region9: #{bottleneck_forward_nchw.4} parent=5 // pred_check
      _
    $region10: #{bottleneck_forward_nchw.4} parent=5 // pred_check_branch
      %130 = sbr.rel (%p127) target = $region12
    $region11: #{bottleneck_forward_nchw.4} parent=5 // pred_region
      %s131 = ssub.s32 %s9, 1
      // Predicated region
      $region13: #{bottleneck_forward_nchw.4} parent=11 // pred_check
        %p132 = pneg %p68
      $region14: #{bottleneck_forward_nchw.4} parent=11 // pred_check_branch
        %134 = sbr.rel (%p132) target = $region16
      $region15: #{bottleneck_forward_nchw.4} parent=11 // pred_region
        _
      $region16: #{bottleneck_forward_nchw.4} parent=11 // pred_fallthru
        _
      // Predicated region
      $region17: #{bottleneck_forward_nchw.4} parent=11 // pred_check
        %p135 = pneg %p89
      $region18: #{bottleneck_forward_nchw.4} parent=11 // pred_check_branch
        %137 = sbr.rel (%p135) target = $region20
      $region19: #{bottleneck_forward_nchw.4} parent=11 // pred_region
        _
      $region20: #{bottleneck_forward_nchw.4} parent=11 // pred_fallthru
        _
    $region12: #{bottleneck_forward_nchw.4} parent=5 // pred_fallthru
      _
    %p138 = scmp.lt.s32.totalorder %s9, 2
    // Predicated region
    $region21: #{bottleneck_forward_nchw.4} parent=5 // pred_check
      %p139 = pneg %p138
    $region22: #{bottleneck_forward_nchw.4} parent=5 // pred_check_branch
      %141 = sbr.rel (%p139) target = $region24
    $region23: #{bottleneck_forward_nchw.4} parent=5 // pred_region
      // Predicated region
      $region25: #{bottleneck_forward_nchw.4} parent=23 // pred_check
        %p142 = pneg %p41
      $region26: #{bottleneck_forward_nchw.4} parent=23 // pred_check_branch
        %144 = sbr.rel (%p142) target = $region28
      $region27: #{bottleneck_forward_nchw.4} parent=23 // pred_region
        %p145 = scmp.lt.s32.totalorder %s16, 1
        %s146 = scalar_select %p145, %s16, 1
        %s147 = smul.addr %s146, 32
        %s148 = smul.addr %s147, 4
        %s149 = scalar_lea.vmem %s0, %s148
      $region28: #{bottleneck_forward_nchw.4} parent=23 // pred_fallthru
        _
    $region24: #{bottleneck_forward_nchw.4} parent=5 // pred_fallthru
      _
    %p150 = scmp.le.s32.totalorder 1, %s9
    %p151 = scmp.lt.s32.totalorder %s9, 3
    %p152 = pnand %p150, %p151
    %p153 = pneg %p152
    // Predicated region
    $region29: #{bottleneck_forward_nchw.4} parent=5 // pred_check
      _
    $region30: #{bottleneck_forward_nchw.4} parent=5 // pred_check_branch
      %155 = sbr.rel (%p152) target = $region32
    $region31: #{bottleneck_forward_nchw.4} parent=5 // pred_region
      %s156 = ssub.s32 %s9, 1
      %p157 = scmp.lt.s32.totalorder %s18, 1
      %s158 = scalar_select %p157, %s18, 1
      %s159 = smul.addr %s158, 32
      %s160 = smul.addr %s159, 4
      %s161 = scalar_lea.vmem %s0, %s160
      %p162 = pneg %p47
      %p163 = pneg %p44
      %p164 = pneg %p68
      %p165 = pneg %p65
      %p166 = pneg %p89
      %p167 = pneg %p86
      %p168 = pneg %p117
      %p169 = pneg %p114
      %s170 = sadd.s32 %s18, %s19
      %s171 = smul.u32 32, %s170
      %p172 = scmp.lt.s32.totalorder %s171, 63
      %s173 = scalar_select %p172, %s171, 63
      %s174 = smul.addr %s173, 4
      %s175 = scalar_lea.vmem %s3, %s174
      %p176 = scmp.lt.s32.totalorder %s18, 1
      %s177 = scalar_select %p176, %s18, 1
      %s178 = smul.addr %s177, 32
      %s179 = smul.addr %s178, 4
      %s180 = scalar_lea.vmem %s0, %s179
      %s181 = sadd.s32 %s18, %s19
      %s182 = smul.u32 32, %s181
      %p183 = scmp.lt.s32.totalorder %s182, 63
      %s184 = scalar_select %p183, %s182, 63
      %s185 = smul.addr %s184, 4
      %s186 = scalar_lea.vmem %s3, %s185
      %s187 = sadd.s32 %s18, %s19
      %s188 = smul.u32 32, %s187
      %p190 = scmp.eq.s32.totalorder %s19, 0
      // Predicated region
      $region33: #{bottleneck_forward_nchw.4} parent=31 // pred_check
        %p191 = pneg %p190
      $region34: #{bottleneck_forward_nchw.4} parent=31 // pred_check_branch
        %193 = sbr.rel (%p191) target = $region36
      $region35: #{bottleneck_forward_nchw.4} parent=31 // pred_region
        %vm194 = vcmask 60416
        %195 = vst.msk [vmem:[#allocation2] sm:$0xf] %vm194, 0
        %196 = vst.msk [vmem:[#allocation2 + $0x4] sm:$0xf] %vm194, 0
        %vm197 = vcmask 57344
        %198 = vst.msk [vmem:[#allocation2 + $0x8] sm:$0x1] %vm197, 0
        %199 = vst.msk [vmem:[#allocation2 + $0xc] sm:$0xf] %vm194, 0
        %200 = vst.msk [vmem:[#allocation2 + $0x10] sm:$0xf] %vm194, 0
        %201 = vst.msk [vmem:[#allocation2 + $0x14] sm:$0x1] %vm197, 0
        %202 = vst.msk [vmem:[#allocation2 + $0x18] sm:$0xf] %vm194, 0
        %203 = vst.msk [vmem:[#allocation2 + $0x1c] sm:$0xf] %vm194, 0
        %204 = vst.msk [vmem:[#allocation2 + $0x20] sm:$0x1] %vm197, 0
        %205 = vst.msk [vmem:[#allocation2 + $0x24] sm:$0xf] %vm194, 0
        %206 = vst.msk [vmem:[#allocation2 + $0x28] sm:$0xf] %vm194, 0
        %207 = vst.msk [vmem:[#allocation2 + $0x2c] sm:$0x1] %vm197, 0
        %208 = vst.msk [vmem:[#allocation2 + $0x30] sm:$0xf] %vm194, 0
        %209 = vst.msk [vmem:[#allocation2 + $0x34] sm:$0xf] %vm194, 0
        %210 = vst.msk [vmem:[#allocation2 + $0x38] sm:$0x1] %vm197, 0
        %211 = vst.msk [vmem:[#allocation2 + $0x3c] sm:$0xf] %vm194, 0
        %212 = vst.msk [vmem:[#allocation2 + $0x40] sm:$0xf] %vm194, 0
        %213 = vst.msk [vmem:[#allocation2 + $0x44] sm:$0x1] %vm197, 0
        %214 = vst.msk [vmem:[#allocation2 + $0x48] sm:$0xf] %vm194, 0
        %215 = vst.msk [vmem:[#allocation2 + $0x4c] sm:$0xf] %vm194, 0
        %216 = vst.msk [vmem:[#allocation2 + $0x50] sm:$0x1] %vm197, 0
        %217 = vst.msk [vmem:[#allocation2 + $0x54] sm:$0xf] %vm194, 0
        %218 = vst.msk [vmem:[#allocation2 + $0x58] sm:$0xf] %vm194, 0
        %219 = vst.msk [vmem:[#allocation2 + $0x5c] sm:$0x1] %vm197, 0
        %220 = vst.msk [vmem:[#allocation2 + $0x60] sm:$0xf] %vm194, 0
        %221 = vst.msk [vmem:[#allocation2 + $0x64] sm:$0xf] %vm194, 0
        %222 = vst.msk [vmem:[#allocation2 + $0x68] sm:$0x1] %vm197, 0
        %223 = vst.msk [vmem:[#allocation2 + $0x6c] sm:$0xf] %vm194, 0
        %224 = vst.msk [vmem:[#allocation2 + $0x70] sm:$0xf] %vm194, 0
        %225 = vst.msk [vmem:[#allocation2 + $0x74] sm:$0x1] %vm197, 0
        %226 = vst.msk [vmem:[#allocation2 + $0x78] sm:$0xf] %vm194, 0
        %227 = vst.msk [vmem:[#allocation2 + $0x7c] sm:$0xf] %vm194, 0
        %228 = vst.msk [vmem:[#allocation2 + $0x80] sm:$0x1] %vm197, 0
        %229 = vst.msk [vmem:[#allocation2 + $0x84] sm:$0xf] %vm194, 0
        %230 = vst.msk [vmem:[#allocation2 + $0x88] sm:$0xf] %vm194, 0
        %231 = vst.msk [vmem:[#allocation2 + $0x8c] sm:$0x1] %vm197, 0
        %232 = vst.msk [vmem:[#allocation2 + $0x90] sm:$0xf] %vm194, 0
        %233 = vst.msk [vmem:[#allocation2 + $0x94] sm:$0xf] %vm194, 0
        %234 = vst.msk [vmem:[#allocation2 + $0x98] sm:$0x1] %vm197, 0
        %235 = vst.msk [vmem:[#allocation2 + $0x9c] sm:$0xf] %vm194, 0
        %236 = vst.msk [vmem:[#allocation2 + $0xa0] sm:$0xf] %vm194, 0
        %237 = vst.msk [vmem:[#allocation2 + $0xa4] sm:$0x1] %vm197, 0
        %238 = vst.msk [vmem:[#allocation2 + $0xa8] sm:$0xf] %vm194, 0
        %239 = vst.msk [vmem:[#allocation2 + $0xac] sm:$0xf] %vm194, 0
        %240 = vst.msk [vmem:[#allocation2 + $0xb0] sm:$0x1] %vm197, 0
        %241 = vst.msk [vmem:[#allocation2 + $0xb4] sm:$0xf] %vm194, 0
        %242 = vst.msk [vmem:[#allocation2 + $0xb8] sm:$0xf] %vm194, 0
        %243 = vst.msk [vmem:[#allocation2 + $0xbc] sm:$0x1] %vm197, 0
        %244 = vst.msk [vmem:[#allocation2 + $0xc0] sm:$0xf] %vm194, 0
        %245 = vst.msk [vmem:[#allocation2 + $0xc4] sm:$0xf] %vm194, 0
        %246 = vst.msk [vmem:[#allocation2 + $0xc8] sm:$0x1] %vm197, 0
        %247 = vst.msk [vmem:[#allocation2 + $0xcc] sm:$0xf] %vm194, 0
        %248 = vst.msk [vmem:[#allocation2 + $0xd0] sm:$0xf] %vm194, 0
        %249 = vst.msk [vmem:[#allocation2 + $0xd4] sm:$0x1] %vm197, 0
        %v250 = vld [vmem:[%s180] sm:$0xf]
        %v251 = vld [vmem:[%s180 + $0x4] sm:$0xf]
        %v252 = vld [vmem:[%s180 + $0x8] sm:$0xf]
        %v253 = vld [vmem:[%s180 + $0xc] sm:$0xf]
        %v254 = vld [vmem:[%s180 + $0x10] sm:$0xf]
        %v255 = vld [vmem:[%s180 + $0x14] sm:$0xf]
        %v256 = vld [vmem:[%s180 + $0x18] sm:$0xf]
        %v257 = vld [vmem:[%s180 + $0x1c] sm:$0xf]
        %v258 = vld [vmem:[%s180 + $0x20] sm:$0xf]
        %v259 = vld [vmem:[%s180 + $0x24] sm:$0xf]
        %v260 = vld [vmem:[%s180 + $0x28] sm:$0xf]
        %v261 = vld [vmem:[%s180 + $0x2c] sm:$0xf]
        %v262 = vld [vmem:[%s180 + $0x30] sm:$0xf]
        %v263 = vld [vmem:[%s180 + $0x34] sm:$0xf]
        %v264 = vld [vmem:[%s180 + $0x38] sm:$0xf]
        %v265 = vld [vmem:[%s180 + $0x3c] sm:$0xf]
        %v266 = vld [vmem:[%s180 + $0x40] sm:$0xf]
        %v267 = vld [vmem:[%s180 + $0x44] sm:$0xf]
        %v268 = vld [vmem:[%s180 + $0x48] sm:$0xf]
        %v269 = vld [vmem:[%s180 + $0x4c] sm:$0xf]
        %v270 = vld [vmem:[%s180 + $0x50] sm:$0xf]
        %v271 = vld [vmem:[%s180 + $0x54] sm:$0xf]
        %v272 = vld [vmem:[%s180 + $0x58] sm:$0xf]
        %v273 = vld [vmem:[%s180 + $0x5c] sm:$0xf]
        %v274 = vld [vmem:[%s180 + $0x60] sm:$0xf]
        %v275 = vld [vmem:[%s180 + $0x64] sm:$0xf]
        %v276 = vld [vmem:[%s180 + $0x68] sm:$0xf]
        %v277 = vld [vmem:[%s180 + $0x6c] sm:$0xf]
        %v278 = vld [vmem:[%s180 + $0x70] sm:$0xf]
        %v279 = vld [vmem:[%s180 + $0x74] sm:$0xf]
        %v280 = vld [vmem:[%s180 + $0x78] sm:$0xf]
        %v281 = vld [vmem:[%s180 + $0x7c] sm:$0xf]
        %vm282 = vsmask.f32 256
        %vm283 = vsmask.f32 4368
        %vm284 = vmor %vm282, %vm283
        %v286 = vshrl.u32 %v250, 16
        %v288 = vrot.slane %v286, 7
        %v289 = vshll.u32 %v250, 16
        %v291 = vor.u32 %v288, %v289
        %v292 = vrot.slane %v288, 4
        %v294 = vshrl.u32 %v251, 16
        %v296 = vrot.slane %v294, 7
        %v297 = vshll.u32 %v251, 16
        %v299 = vor.u32 %v296, %v297
        %v300 = vsel %vm284, %v292, %v299
        %v301 = vrot.slane %v296, 4
        %v303 = vshrl.u32 %v252, 16
        %v305 = vrot.slane %v303, 7
        %v306 = vshll.u32 %v252, 16
        %v308 = vor.u32 %v305, %v306
        %v309 = vrot.slane %v305, 4
        %v311 = vshrl.u32 %v253, 16
        %v313 = vrot.slane %v311, 7
        %v314 = vshll.u32 %v253, 16
        %v316 = vor.u32 %v313, %v314
        %v317 = vsel %vm284, %v309, %v316
        %v318 = vrot.slane %v313, 4
        %v320 = vshrl.u32 %v254, 16
        %v322 = vrot.slane %v320, 7
        %v323 = vshll.u32 %v254, 16
        %v325 = vor.u32 %v322, %v323
        %v326 = vrot.slane %v322, 4
        %v328 = vshrl.u32 %v255, 16
        %v330 = vrot.slane %v328, 7
        %v331 = vshll.u32 %v255, 16
        %v333 = vor.u32 %v330, %v331
        %v334 = vsel %vm284, %v326, %v333
        %v335 = vrot.slane %v330, 4
        %v337 = vshrl.u32 %v256, 16
        %v339 = vrot.slane %v337, 7
        %v340 = vshll.u32 %v256, 16
        %v342 = vor.u32 %v339, %v340
        %v343 = vrot.slane %v339, 4
        %v345 = vshrl.u32 %v257, 16
        %v347 = vrot.slane %v345, 7
        %v348 = vshll.u32 %v257, 16
        %v350 = vor.u32 %v347, %v348
        %v351 = vsel %vm284, %v343, %v350
        %v352 = vrot.slane %v347, 4
        %v354 = vshrl.u32 %v258, 16
        %v356 = vrot.slane %v354, 7
        %v357 = vshll.u32 %v258, 16
        %v359 = vor.u32 %v356, %v357
        %v360 = vrot.slane %v356, 4
        %v362 = vshrl.u32 %v259, 16
        %v364 = vrot.slane %v362, 7
        %v365 = vshll.u32 %v259, 16
        %v367 = vor.u32 %v364, %v365
        %v368 = vsel %vm284, %v360, %v367
        %v369 = vrot.slane %v364, 4
        %v371 = vshrl.u32 %v260, 16
        %v373 = vrot.slane %v371, 7
        %v374 = vshll.u32 %v260, 16
        %v376 = vor.u32 %v373, %v374
        %v377 = vrot.slane %v373, 4
        %v379 = vshrl.u32 %v261, 16
        %v381 = vrot.slane %v379, 7
        %v382 = vshll.u32 %v261, 16
        %v384 = vor.u32 %v381, %v382
        %v385 = vsel %vm284, %v377, %v384
        %v386 = vrot.slane %v381, 4
        %v388 = vshrl.u32 %v262, 16
        %v390 = vrot.slane %v388, 7
        %v391 = vshll.u32 %v262, 16
        %v393 = vor.u32 %v390, %v391
        %v394 = vrot.slane %v390, 4
        %v396 = vshrl.u32 %v263, 16
        %v398 = vrot.slane %v396, 7
        %v399 = vshll.u32 %v263, 16
        %v401 = vor.u32 %v398, %v399
        %v402 = vsel %vm284, %v394, %v401
        %v403 = vrot.slane %v398, 4
        %v405 = vshrl.u32 %v264, 16
        %v407 = vrot.slane %v405, 7
        %v408 = vshll.u32 %v264, 16
        %v410 = vor.u32 %v407, %v408
        %v411 = vrot.slane %v407, 4
        %v413 = vshrl.u32 %v265, 16
        %v415 = vrot.slane %v413, 7
        %v416 = vshll.u32 %v265, 16
        %v418 = vor.u32 %v415, %v416
        %v419 = vsel %vm284, %v411, %v418
        %v420 = vrot.slane %v415, 4
        %v422 = vshrl.u32 %v266, 16
        %v424 = vrot.slane %v422, 7
        %v425 = vshll.u32 %v266, 16
        %v427 = vor.u32 %v424, %v425
        %v428 = vrot.slane %v424, 4
        %v430 = vshrl.u32 %v267, 16
        %v432 = vrot.slane %v430, 7
        %v433 = vshll.u32 %v267, 16
        %v435 = vor.u32 %v432, %v433
        %v436 = vsel %vm284, %v428, %v435
        %v437 = vrot.slane %v432, 4
        %v439 = vshrl.u32 %v268, 16
        %v441 = vrot.slane %v439, 7
        %v442 = vshll.u32 %v268, 16
        %v444 = vor.u32 %v441, %v442
        %v445 = vrot.slane %v441, 4
        %v447 = vshrl.u32 %v269, 16
        %v449 = vrot.slane %v447, 7
        %v450 = vshll.u32 %v269, 16
        %v452 = vor.u32 %v449, %v450
        %v453 = vsel %vm284, %v445, %v452
        %v454 = vrot.slane %v449, 4
        %v456 = vshrl.u32 %v270, 16
        %v458 = vrot.slane %v456, 7
        %v459 = vshll.u32 %v270, 16
        %v461 = vor.u32 %v458, %v459
        %v462 = vrot.slane %v458, 4
        %v464 = vshrl.u32 %v271, 16
        %v466 = vrot.slane %v464, 7
        %v467 = vshll.u32 %v271, 16
        %v469 = vor.u32 %v466, %v467
        %v470 = vsel %vm284, %v462, %v469
        %v471 = vrot.slane %v466, 4
        %v473 = vshrl.u32 %v272, 16
        %v475 = vrot.slane %v473, 7
        %v476 = vshll.u32 %v272, 16
        %v478 = vor.u32 %v475, %v476
        %v479 = vrot.slane %v475, 4
        %v481 = vshrl.u32 %v273, 16
        %v483 = vrot.slane %v481, 7
        %v484 = vshll.u32 %v273, 16
        %v486 = vor.u32 %v483, %v484
        %v487 = vsel %vm284, %v479, %v486
        %v488 = vrot.slane %v483, 4
        %v490 = vshrl.u32 %v274, 16
        %v492 = vrot.slane %v490, 7
        %v493 = vshll.u32 %v274, 16
        %v495 = vor.u32 %v492, %v493
        %v496 = vrot.slane %v492, 4
        %v498 = vshrl.u32 %v275, 16
        %v500 = vrot.slane %v498, 7
        %v501 = vshll.u32 %v275, 16
        %v503 = vor.u32 %v500, %v501
        %v504 = vsel %vm284, %v496, %v503
        %v505 = vrot.slane %v500, 4
        %v507 = vshrl.u32 %v276, 16
        %v509 = vrot.slane %v507, 7
        %v510 = vshll.u32 %v276, 16
        %v512 = vor.u32 %v509, %v510
        %v513 = vrot.slane %v509, 4
        %v515 = vshrl.u32 %v277, 16
        %v517 = vrot.slane %v515, 7
        %v518 = vshll.u32 %v277, 16
        %v520 = vor.u32 %v517, %v518
        %v521 = vsel %vm284, %v513, %v520
        %v522 = vrot.slane %v517, 4
        %v524 = vshrl.u32 %v278, 16
        %v526 = vrot.slane %v524, 7
        %v527 = vshll.u32 %v278, 16
        %v529 = vor.u32 %v526, %v527
        %v530 = vrot.slane %v526, 4
        %v532 = vshrl.u32 %v279, 16
        %v534 = vrot.slane %v532, 7
        %v535 = vshll.u32 %v279, 16
        %v537 = vor.u32 %v534, %v535
        %v538 = vsel %vm284, %v530, %v537
        %v539 = vrot.slane %v534, 4
        %v541 = vshrl.u32 %v280, 16
        %v543 = vrot.slane %v541, 7
        %v544 = vshll.u32 %v280, 16
        %v546 = vor.u32 %v543, %v544
        %v547 = vrot.slane %v543, 4
        %v549 = vshrl.u32 %v281, 16
        %v551 = vrot.slane %v549, 7
        %v552 = vshll.u32 %v281, 16
        %v554 = vor.u32 %v551, %v552
        %v555 = vsel %vm284, %v547, %v554
        %v556 = vrot.slane %v551, 4
        %s605 = scalar_lea.vmem [#allocation2], 12
        %vm606 = vcmask 60416
        %vm607 = vsmask.f32 7938
        %vm608 = vmand %vm606, %vm607
        %v609 = vld [vmem:[%s605] sm:$0xf]
        %v610 = vsel %vm608, %v291, %v609
        %611 = vst [vmem:[%s605] sm:$0xf] %v610
        %612 = vst.msk [vmem:[%s605 + $0x4] sm:$0xf] %vm194, %v300
        %vm613 = vcmask 57344
        %vm614 = vmand %vm613, %vm282
        %v615 = vld [vmem:[%s605 + $0x8] sm:$0x1]
        %v616 = vsel %vm614, %v301, %v615
        %617 = vst [vmem:[%s605 + $0x8] sm:$0x1] %v616
        %v618 = vld [vmem:[%s605 + $0xc] sm:$0xf]
        %v619 = vsel %vm608, %v308, %v618
        %620 = vst [vmem:[%s605 + $0xc] sm:$0xf] %v619
        %621 = vst.msk [vmem:[%s605 + $0x10] sm:$0xf] %vm194, %v317
        %v622 = vld [vmem:[%s605 + $0x14] sm:$0x1]
        %v623 = vsel %vm614, %v318, %v622
        %624 = vst [vmem:[%s605 + $0x14] sm:$0x1] %v623
        %v625 = vld [vmem:[%s605 + $0x18] sm:$0xf]
        %v626 = vsel %vm608, %v325, %v625
        %627 = vst [vmem:[%s605 + $0x18] sm:$0xf] %v626
        %628 = vst.msk [vmem:[%s605 + $0x1c] sm:$0xf] %vm194, %v334
        %v629 = vld [vmem:[%s605 + $0x20] sm:$0x1]
        %v630 = vsel %vm614, %v335, %v629
        %631 = vst [vmem:[%s605 + $0x20] sm:$0x1] %v630
        %v632 = vld [vmem:[%s605 + $0x24] sm:$0xf]
        %v633 = vsel %vm608, %v342, %v632
        %634 = vst [vmem:[%s605 + $0x24] sm:$0xf] %v633
        %635 = vst.msk [vmem:[%s605 + $0x28] sm:$0xf] %vm194, %v351
        %v636 = vld [vmem:[%s605 + $0x2c] sm:$0x1]
        %v637 = vsel %vm614, %v352, %v636
        %638 = vst [vmem:[%s605 + $0x2c] sm:$0x1] %v637
        %v639 = vld [vmem:[%s605 + $0x30] sm:$0xf]
        %v640 = vsel %vm608, %v359, %v639
        %641 = vst [vmem:[%s605 + $0x30] sm:$0xf] %v640
        %642 = vst.msk [vmem:[%s605 + $0x34] sm:$0xf] %vm194, %v368
        %v643 = vld [vmem:[%s605 + $0x38] sm:$0x1]
        %v644 = vsel %vm614, %v369, %v643
        %645 = vst [vmem:[%s605 + $0x38] sm:$0x1] %v644
        %v646 = vld [vmem:[%s605 + $0x3c] sm:$0xf]
        %v647 = vsel %vm608, %v376, %v646
        %648 = vst [vmem:[%s605 + $0x3c] sm:$0xf] %v647
        %649 = vst.msk [vmem:[%s605 + $0x40] sm:$0xf] %vm194, %v385
        %v650 = vld [vmem:[%s605 + $0x44] sm:$0x1]
        %v651 = vsel %vm614, %v386, %v650
        %652 = vst [vmem:[%s605 + $0x44] sm:$0x1] %v651
        %v653 = vld [vmem:[%s605 + $0x48] sm:$0xf]
        %v654 = vsel %vm608, %v393, %v653
        %655 = vst [vmem:[%s605 + $0x48] sm:$0xf] %v654
        %656 = vst.msk [vmem:[%s605 + $0x4c] sm:$0xf] %vm194, %v402
        %v657 = vld [vmem:[%s605 + $0x50] sm:$0x1]
        %v658 = vsel %vm614, %v403, %v657
        %659 = vst [vmem:[%s605 + $0x50] sm:$0x1] %v658
        %v660 = vld [vmem:[%s605 + $0x54] sm:$0xf]
        %v661 = vsel %vm608, %v410, %v660
        %662 = vst [vmem:[%s605 + $0x54] sm:$0xf] %v661
        %663 = vst.msk [vmem:[%s605 + $0x58] sm:$0xf] %vm194, %v419
        %v664 = vld [vmem:[%s605 + $0x5c] sm:$0x1]
        %v665 = vsel %vm614, %v420, %v664
        %666 = vst [vmem:[%s605 + $0x5c] sm:$0x1] %v665
        %v667 = vld [vmem:[%s605 + $0x60] sm:$0xf]
        %v668 = vsel %vm608, %v427, %v667
        %669 = vst [vmem:[%s605 + $0x60] sm:$0xf] %v668
        %670 = vst.msk [vmem:[%s605 + $0x64] sm:$0xf] %vm194, %v436
        %v671 = vld [vmem:[%s605 + $0x68] sm:$0x1]
        %v672 = vsel %vm614, %v437, %v671
        %673 = vst [vmem:[%s605 + $0x68] sm:$0x1] %v672
        %v674 = vld [vmem:[%s605 + $0x6c] sm:$0xf]
        %v675 = vsel %vm608, %v444, %v674
        %676 = vst [vmem:[%s605 + $0x6c] sm:$0xf] %v675
        %677 = vst.msk [vmem:[%s605 + $0x70] sm:$0xf] %vm194, %v453
        %v678 = vld [vmem:[%s605 + $0x74] sm:$0x1]
        %v679 = vsel %vm614, %v454, %v678
        %680 = vst [vmem:[%s605 + $0x74] sm:$0x1] %v679
        %v681 = vld [vmem:[%s605 + $0x78] sm:$0xf]
        %v682 = vsel %vm608, %v461, %v681
        %683 = vst [vmem:[%s605 + $0x78] sm:$0xf] %v682
        %684 = vst.msk [vmem:[%s605 + $0x7c] sm:$0xf] %vm194, %v470
        %v685 = vld [vmem:[%s605 + $0x80] sm:$0x1]
        %v686 = vsel %vm614, %v471, %v685
        %687 = vst [vmem:[%s605 + $0x80] sm:$0x1] %v686
        %v688 = vld [vmem:[%s605 + $0x84] sm:$0xf]
        %v689 = vsel %vm608, %v478, %v688
        %690 = vst [vmem:[%s605 + $0x84] sm:$0xf] %v689
        %691 = vst.msk [vmem:[%s605 + $0x88] sm:$0xf] %vm194, %v487
        %v692 = vld [vmem:[%s605 + $0x8c] sm:$0x1]
        %v693 = vsel %vm614, %v488, %v692
        %694 = vst [vmem:[%s605 + $0x8c] sm:$0x1] %v693
        %v695 = vld [vmem:[%s605 + $0x90] sm:$0xf]
        %v696 = vsel %vm608, %v495, %v695
        %697 = vst [vmem:[%s605 + $0x90] sm:$0xf] %v696
        %698 = vst.msk [vmem:[%s605 + $0x94] sm:$0xf] %vm194, %v504
        %v699 = vld [vmem:[%s605 + $0x98] sm:$0x1]
        %v700 = vsel %vm614, %v505, %v699
        %701 = vst [vmem:[%s605 + $0x98] sm:$0x1] %v700
        %v702 = vld [vmem:[%s605 + $0x9c] sm:$0xf]
        %v703 = vsel %vm608, %v512, %v702
        %704 = vst [vmem:[%s605 + $0x9c] sm:$0xf] %v703
        %705 = vst.msk [vmem:[%s605 + $0xa0] sm:$0xf] %vm194, %v521
        %v706 = vld [vmem:[%s605 + $0xa4] sm:$0x1]
        %v707 = vsel %vm614, %v522, %v706
        %708 = vst [vmem:[%s605 + $0xa4] sm:$0x1] %v707
        %v709 = vld [vmem:[%s605 + $0xa8] sm:$0xf]
        %v710 = vsel %vm608, %v529, %v709
        %711 = vst [vmem:[%s605 + $0xa8] sm:$0xf] %v710
        %712 = vst.msk [vmem:[%s605 + $0xac] sm:$0xf] %vm194, %v538
        %v713 = vld [vmem:[%s605 + $0xb0] sm:$0x1]
        %v714 = vsel %vm614, %v539, %v713
        %715 = vst [vmem:[%s605 + $0xb0] sm:$0x1] %v714
        %v716 = vld [vmem:[%s605 + $0xb4] sm:$0xf]
        %v717 = vsel %vm608, %v546, %v716
        %718 = vst [vmem:[%s605 + $0xb4] sm:$0xf] %v717
        %719 = vst.msk [vmem:[%s605 + $0xb8] sm:$0xf] %vm194, %v555
        %v720 = vld [vmem:[%s605 + $0xbc] sm:$0x1]
        %v721 = vsel %vm614, %v556, %v720
        %722 = vst [vmem:[%s605 + $0xbc] sm:$0x1] %v721
      $region36: #{bottleneck_forward_nchw.4} parent=31 // pred_fallthru
        _
      %s723 = smul.u32 %s19, 16
      %s724 = smul.u32 %s723, 3
      %s725 = smul.addr %s724, 4
      %s726 = scalar_lea.vmem [#allocation2], %s725
      %v727 = vld [vmem:[%s726] sm:$0xf]
      %v728 = vld [vmem:[%s726 + $0x4] sm:$0xf]
      %v729 = vld [vmem:[%s726 + $0xc] sm:$0xf]
      %v730 = vld [vmem:[%s726 + $0x10] sm:$0xf]
      %v731 = vld [vmem:[%s726 + $0x18] sm:$0xf]
      %v732 = vld [vmem:[%s726 + $0x1c] sm:$0xf]
      %v733 = vld [vmem:[%s726 + $0x24] sm:$0xf]
      %v734 = vld [vmem:[%s726 + $0x28] sm:$0xf]
      %v735 = vld [vmem:[%s726 + $0x30] sm:$0xf]
      %v736 = vld [vmem:[%s726 + $0x34] sm:$0xf]
      %v737 = vld [vmem:[%s726 + $0x3c] sm:$0xf]
      %v738 = vld [vmem:[%s726 + $0x40] sm:$0xf]
      %v739 = vld [vmem:[%s726 + $0x48] sm:$0xf]
      %v740 = vld [vmem:[%s726 + $0x4c] sm:$0xf]
      %v741 = vld [vmem:[%s726 + $0x54] sm:$0xf]
      %v742 = vld [vmem:[%s726 + $0x58] sm:$0xf]
      %v743 = vld [vmem:[%s726 + $0x60] sm:$0xf]
      %v744 = vld [vmem:[%s726 + $0x64] sm:$0xf]
      %v745 = vld [vmem:[%s726 + $0x6c] sm:$0xf]
      %v746 = vld [vmem:[%s726 + $0x70] sm:$0xf]
      %v747 = vld [vmem:[%s726 + $0x78] sm:$0xf]
      %v748 = vld [vmem:[%s726 + $0x7c] sm:$0xf]
      %v749 = vld [vmem:[%s726 + $0x84] sm:$0xf]
      %v750 = vld [vmem:[%s726 + $0x88] sm:$0xf]
      %v751 = vld [vmem:[%s726 + $0x90] sm:$0xf]
      %v752 = vld [vmem:[%s726 + $0x94] sm:$0xf]
      %v753 = vld [vmem:[%s726 + $0x9c] sm:$0xf]
      %v754 = vld [vmem:[%s726 + $0xa0] sm:$0xf]
      %v755 = vld [vmem:[%s726 + $0xa8] sm:$0xf]
      %v756 = vld [vmem:[%s726 + $0xac] sm:$0xf]
      %v757 = vld [vmem:[%s726 + $0xb4] sm:$0xf]
      %v758 = vld [vmem:[%s726 + $0xb8] sm:$0xf]
      %v759 = vld [vmem:[%s1] sm:$0xf]
      %v760 = vld [vmem:[%s726 + $0x8] sm:$0x1]
      %v761 = vld [vmem:[%s726 + $0x14] sm:$0x1]
      %v762 = vld [vmem:[%s726 + $0x20] sm:$0x1]
      %v763 = vld [vmem:[%s726 + $0x2c] sm:$0x1]
      %v764 = vld [vmem:[%s726 + $0x38] sm:$0x1]
      %v765 = vld [vmem:[%s726 + $0x44] sm:$0x1]
      %v766 = vld [vmem:[%s726 + $0x50] sm:$0x1]
      %v767 = vld [vmem:[%s726 + $0x5c] sm:$0x1]
      %v768 = vld [vmem:[%s726 + $0x68] sm:$0x1]
      %v769 = vld [vmem:[%s726 + $0x74] sm:$0x1]
      %v770 = vld [vmem:[%s726 + $0x80] sm:$0x1]
      %v771 = vld [vmem:[%s726 + $0x8c] sm:$0x1]
      %v772 = vld [vmem:[%s726 + $0x98] sm:$0x1]
      %v773 = vld [vmem:[%s726 + $0xa4] sm:$0x1]
      %v774 = vld [vmem:[%s726 + $0xb0] sm:$0x1]
      %v775 = vld [vmem:[%s726 + $0xbc] sm:$0x1]
      %vm776 = vsmask.f32 3328
      %vm777 = vsmask.f32 7440
      %vm778 = vmor %vm776, %vm777
      %v780 = vshrl.u32 %v727, 16
      %v782 = vrot.slane %v780, 4
      %v783 = vshll.u32 %v727, 16
      %v785 = vrot.slane %v783, 5
      %v786 = vor.u32 %v782, %v785
      %v787 = vrot.slane %v786, 4
      %v789 = vshll.u32 %v728, 16
      %v791 = vrot.slane %v789, 5
      %v792 = vsel %vm778, %v787, %v791
      %v793 = vshrl.u32 %v728, 16
      %v795 = vrot.slane %v793, 4
      %v796 = vor.u32 %v795, %v791
      %v797 = vrot.slane %v796, 4
      %v799 = vshll.u32 %v760, 16
      %v801 = vrot.slane %v799, 5
      %v802 = vsel %vm778, %v797, %v801
      %v804 = vshrl.u32 %v729, 16
      %v806 = vrot.slane %v804, 4
      %v807 = vshll.u32 %v729, 16
      %v809 = vrot.slane %v807, 5
      %v810 = vor.u32 %v806, %v809
      %v811 = vrot.slane %v810, 4
      %v813 = vshll.u32 %v730, 16
      %v815 = vrot.slane %v813, 5
      %v816 = vsel %vm778, %v811, %v815
      %v817 = vshrl.u32 %v730, 16
      %v819 = vrot.slane %v817, 4
      %v820 = vor.u32 %v819, %v815
      %v821 = vrot.slane %v820, 4
      %v823 = vshll.u32 %v761, 16
      %v825 = vrot.slane %v823, 5
      %v826 = vsel %vm778, %v821, %v825
      %v828 = vshrl.u32 %v731, 16
      %v830 = vrot.slane %v828, 4
      %v831 = vshll.u32 %v731, 16
      %v833 = vrot.slane %v831, 5
      %v834 = vor.u32 %v830, %v833
      %v835 = vrot.slane %v834, 4
      %v837 = vshll.u32 %v732, 16
      %v839 = vrot.slane %v837, 5
      %v840 = vsel %vm778, %v835, %v839
      %v841 = vshrl.u32 %v732, 16
      %v843 = vrot.slane %v841, 4
      %v844 = vor.u32 %v843, %v839
      %v845 = vrot.slane %v844, 4
      %v847 = vshll.u32 %v762, 16
      %v849 = vrot.slane %v847, 5
      %v850 = vsel %vm778, %v845, %v849
      %v852 = vshrl.u32 %v733, 16
      %v854 = vrot.slane %v852, 4
      %v855 = vshll.u32 %v733, 16
      %v857 = vrot.slane %v855, 5
      %v858 = vor.u32 %v854, %v857
      %v859 = vrot.slane %v858, 4
      %v861 = vshll.u32 %v734, 16
      %v863 = vrot.slane %v861, 5
      %v864 = vsel %vm778, %v859, %v863
      %v865 = vshrl.u32 %v734, 16
      %v867 = vrot.slane %v865, 4
      %v868 = vor.u32 %v867, %v863
      %v869 = vrot.slane %v868, 4
      %v871 = vshll.u32 %v763, 16
      %v873 = vrot.slane %v871, 5
      %v874 = vsel %vm778, %v869, %v873
      %v876 = vshrl.u32 %v735, 16
      %v878 = vrot.slane %v876, 4
      %v879 = vshll.u32 %v735, 16
      %v881 = vrot.slane %v879, 5
      %v882 = vor.u32 %v878, %v881
      %v883 = vrot.slane %v882, 4
      %v885 = vshll.u32 %v736, 16
      %v887 = vrot.slane %v885, 5
      %v888 = vsel %vm778, %v883, %v887
      %v889 = vshrl.u32 %v736, 16
      %v891 = vrot.slane %v889, 4
      %v892 = vor.u32 %v891, %v887
      %v893 = vrot.slane %v892, 4
      %v895 = vshll.u32 %v764, 16
      %v897 = vrot.slane %v895, 5
      %v898 = vsel %vm778, %v893, %v897
      %v900 = vshrl.u32 %v737, 16
      %v902 = vrot.slane %v900, 4
      %v903 = vshll.u32 %v737, 16
      %v905 = vrot.slane %v903, 5
      %v906 = vor.u32 %v902, %v905
      %v907 = vrot.slane %v906, 4
      %v909 = vshll.u32 %v738, 16
      %v911 = vrot.slane %v909, 5
      %v912 = vsel %vm778, %v907, %v911
      %v913 = vshrl.u32 %v738, 16
      %v915 = vrot.slane %v913, 4
      %v916 = vor.u32 %v915, %v911
      %v917 = vrot.slane %v916, 4
      %v919 = vshll.u32 %v765, 16
      %v921 = vrot.slane %v919, 5
      %v922 = vsel %vm778, %v917, %v921
      %v924 = vshrl.u32 %v739, 16
      %v926 = vrot.slane %v924, 4
      %v927 = vshll.u32 %v739, 16
      %v929 = vrot.slane %v927, 5
      %v930 = vor.u32 %v926, %v929
      %v931 = vrot.slane %v930, 4
      %v933 = vshll.u32 %v740, 16
      %v935 = vrot.slane %v933, 5
      %v936 = vsel %vm778, %v931, %v935
      %v937 = vshrl.u32 %v740, 16
      %v939 = vrot.slane %v937, 4
      %v940 = vor.u32 %v939, %v935
      %v941 = vrot.slane %v940, 4
      %v943 = vshll.u32 %v766, 16
      %v945 = vrot.slane %v943, 5
      %v946 = vsel %vm778, %v941, %v945
      %v948 = vshrl.u32 %v741, 16
      %v950 = vrot.slane %v948, 4
      %v951 = vshll.u32 %v741, 16
      %v953 = vrot.slane %v951, 5
      %v954 = vor.u32 %v950, %v953
      %v955 = vrot.slane %v954, 4
      %v957 = vshll.u32 %v742, 16
      %v959 = vrot.slane %v957, 5
      %v960 = vsel %vm778, %v955, %v959
      %v961 = vshrl.u32 %v742, 16
      %v963 = vrot.slane %v961, 4
      %v964 = vor.u32 %v963, %v959
      %v965 = vrot.slane %v964, 4
      %v967 = vshll.u32 %v767, 16
      %v969 = vrot.slane %v967, 5
      %v970 = vsel %vm778, %v965, %v969
      %v972 = vshrl.u32 %v743, 16
      %v974 = vrot.slane %v972, 4
      %v975 = vshll.u32 %v743, 16
      %v977 = vrot.slane %v975, 5
      %v978 = vor.u32 %v974, %v977
      %v979 = vrot.slane %v978, 4
      %v981 = vshll.u32 %v744, 16
      %v983 = vrot.slane %v981, 5
      %v984 = vsel %vm778, %v979, %v983
      %v985 = vshrl.u32 %v744, 16
      %v987 = vrot.slane %v985, 4
      %v988 = vor.u32 %v987, %v983
      %v989 = vrot.slane %v988, 4
      %v991 = vshll.u32 %v768, 16
      %v993 = vrot.slane %v991, 5
      %v994 = vsel %vm778, %v989, %v993
      %v996 = vshrl.u32 %v745, 16
      %v998 = vrot.slane %v996, 4
      %v999 = vshll.u32 %v745, 16
      %v1001 = vrot.slane %v999, 5
      %v1002 = vor.u32 %v998, %v1001
      %v1003 = vrot.slane %v1002, 4
      %v1005 = vshll.u32 %v746, 16
      %v1007 = vrot.slane %v1005, 5
      %v1008 = vsel %vm778, %v1003, %v1007
      %v1009 = vshrl.u32 %v746, 16
      %v1011 = vrot.slane %v1009, 4
      %v1012 = vor.u32 %v1011, %v1007
      %v1013 = vrot.slane %v1012, 4
      %v1015 = vshll.u32 %v769, 16
      %v1017 = vrot.slane %v1015, 5
      %v1018 = vsel %vm778, %v1013, %v1017
      %v1020 = vshrl.u32 %v747, 16
      %v1022 = vrot.slane %v1020, 4
      %v1023 = vshll.u32 %v747, 16
      %v1025 = vrot.slane %v1023, 5
      %v1026 = vor.u32 %v1022, %v1025
      %v1027 = vrot.slane %v1026, 4
      %v1029 = vshll.u32 %v748, 16
      %v1031 = vrot.slane %v1029, 5
      %v1032 = vsel %vm778, %v1027, %v1031
      %v1033 = vshrl.u32 %v748, 16
      %v1035 = vrot.slane %v1033, 4
      %v1036 = vor.u32 %v1035, %v1031
      %v1037 = vrot.slane %v1036, 4
      %v1039 = vshll.u32 %v770, 16
      %v1041 = vrot.slane %v1039, 5
      %v1042 = vsel %vm778, %v1037, %v1041
      %v1044 = vshrl.u32 %v749, 16
      %v1046 = vrot.slane %v1044, 4
      %v1047 = vshll.u32 %v749, 16
      %v1049 = vrot.slane %v1047, 5
      %v1050 = vor.u32 %v1046, %v1049
      %v1051 = vrot.slane %v1050, 4
      %v1053 = vshll.u32 %v750, 16
      %v1055 = vrot.slane %v1053, 5
      %v1056 = vsel %vm778, %v1051, %v1055
      %v1057 = vshrl.u32 %v750, 16
      %v1059 = vrot.slane %v1057, 4
      %v1060 = vor.u32 %v1059, %v1055
      %v1061 = vrot.slane %v1060, 4
      %v1063 = vshll.u32 %v771, 16
      %v1065 = vrot.slane %v1063, 5
      %v1066 = vsel %vm778, %v1061, %v1065
      %v1068 = vshrl.u32 %v751, 16
      %v1070 = vrot.slane %v1068, 4
      %v1071 = vshll.u32 %v751, 16
      %v1073 = vrot.slane %v1071, 5
      %v1074 = vor.u32 %v1070, %v1073
      %v1075 = vrot.slane %v1074, 4
      %v1077 = vshll.u32 %v752, 16
      %v1079 = vrot.slane %v1077, 5
      %v1080 = vsel %vm778, %v1075, %v1079
      %v1081 = vshrl.u32 %v752, 16
      %v1083 = vrot.slane %v1081, 4
      %v1084 = vor.u32 %v1083, %v1079
      %v1085 = vrot.slane %v1084, 4
      %v1087 = vshll.u32 %v772, 16
      %v1089 = vrot.slane %v1087, 5
      %v1090 = vsel %vm778, %v1085, %v1089
      %v1092 = vshrl.u32 %v753, 16
      %v1094 = vrot.slane %v1092, 4
      %v1095 = vshll.u32 %v753, 16
      %v1097 = vrot.slane %v1095, 5
      %v1098 = vor.u32 %v1094, %v1097
      %v1099 = vrot.slane %v1098, 4
      %v1101 = vshll.u32 %v754, 16
      %v1103 = vrot.slane %v1101, 5
      %v1104 = vsel %vm778, %v1099, %v1103
      %v1105 = vshrl.u32 %v754, 16
      %v1107 = vrot.slane %v1105, 4
      %v1108 = vor.u32 %v1107, %v1103
      %v1109 = vrot.slane %v1108, 4
      %v1111 = vshll.u32 %v773, 16
      %v1113 = vrot.slane %v1111, 5
      %v1114 = vsel %vm778, %v1109, %v1113
      %v1116 = vshrl.u32 %v755, 16
      %v1118 = vrot.slane %v1116, 4
      %v1119 = vshll.u32 %v755, 16
      %v1121 = vrot.slane %v1119, 5
      %v1122 = vor.u32 %v1118, %v1121
      %v1123 = vrot.slane %v1122, 4
      %v1125 = vshll.u32 %v756, 16
      %v1127 = vrot.slane %v1125, 5
      %v1128 = vsel %vm778, %v1123, %v1127
      %v1129 = vshrl.u32 %v756, 16
      %v1131 = vrot.slane %v1129, 4
      %v1132 = vor.u32 %v1131, %v1127
      %v1133 = vrot.slane %v1132, 4
      %v1135 = vshll.u32 %v774, 16
      %v1137 = vrot.slane %v1135, 5
      %v1138 = vsel %vm778, %v1133, %v1137
      %v1140 = vshrl.u32 %v757, 16
      %v1142 = vrot.slane %v1140, 4
      %v1143 = vshll.u32 %v757, 16
      %v1145 = vrot.slane %v1143, 5
      %v1146 = vor.u32 %v1142, %v1145
      %v1147 = vrot.slane %v1146, 4
      %v1149 = vshll.u32 %v758, 16
      %v1151 = vrot.slane %v1149, 5
      %v1152 = vsel %vm778, %v1147, %v1151
      %v1153 = vshrl.u32 %v758, 16
      %v1155 = vrot.slane %v1153, 4
      %v1156 = vor.u32 %v1155, %v1151
      %v1157 = vrot.slane %v1156, 4
      %v1159 = vshll.u32 %v775, 16
      %v1161 = vrot.slane %v1159, 5
      %v1162 = vsel %vm778, %v1157, %v1161
      %s1163 = scalar_lea.vmem %s1, 4
      %v1164 = vld [vmem:[%s1163] sm:$0xf]
      %v1165 = vunpack.c.l.b16 %v792
      %v1166 = vunpack.c.l.b16 %v802
      %v1167 = vunpack.c.l.b16 %v816
      %v1168 = vunpack.c.l.b16 %v826
      %v1169 = vunpack.c.l.b16 %v840
      %v1170 = vunpack.c.l.b16 %v850
      %v1171 = vunpack.c.l.b16 %v864
      %v1172 = vunpack.c.l.b16 %v874
      %v1173 = vunpack.c.l.b16 %v888
      %v1174 = vunpack.c.l.b16 %v898
      %v1175 = vunpack.c.l.b16 %v912
      %v1176 = vunpack.c.l.b16 %v922
      %v1177 = vunpack.c.l.b16 %v936
      %v1178 = vunpack.c.l.b16 %v946
      %v1179 = vunpack.c.l.b16 %v960
      %v1180 = vunpack.c.l.b16 %v970
      %v1181 = vunpack.c.l.b16 %v984
      %v1182 = vunpack.c.l.b16 %v994
      %v1183 = vunpack.c.l.b16 %v1008
      %v1184 = vunpack.c.l.b16 %v1018
      %v1185 = vunpack.c.l.b16 %v1032
      %v1186 = vunpack.c.l.b16 %v1042
      %v1187 = vunpack.c.l.b16 %v1056
      %v1188 = vunpack.c.l.b16 %v1066
      %v1189 = vunpack.c.l.b16 %v1080
      %v1190 = vunpack.c.l.b16 %v1090
      %v1191 = vunpack.c.l.b16 %v1104
      %v1192 = vunpack.c.l.b16 %v1114
      %v1193 = vunpack.c.l.b16 %v1128
      %v1194 = vunpack.c.l.b16 %v1138
      %v1195 = vunpack.c.l.b16 %v1152
      %v1196 = vunpack.c.l.b16 %v1162
      %v1197 = vpack.c.b16 %v1166, %v1165
      %v1198 = vpack.c.b16 %v1168, %v1167
      %v1199 = vpack.c.b16 %v1170, %v1169
      %v1200 = vpack.c.b16 %v1172, %v1171
      %v1201 = vpack.c.b16 %v1174, %v1173
      %v1202 = vpack.c.b16 %v1176, %v1175
      %v1203 = vpack.c.b16 %v1178, %v1177
      %v1204 = vpack.c.b16 %v1180, %v1179
      %v1205 = vpack.c.b16 %v1182, %v1181
      %v1206 = vpack.c.b16 %v1184, %v1183
      %v1207 = vpack.c.b16 %v1186, %v1185
      %v1208 = vpack.c.b16 %v1188, %v1187
      %v1209 = vpack.c.b16 %v1190, %v1189
      %v1210 = vpack.c.b16 %v1192, %v1191
      %v1211 = vpack.c.b16 %v1194, %v1193
      %v1212 = vpack.c.b16 %v1196, %v1195
      %vm1213 = vcmask 64512
      %v1215 = vsel %vm1213, %v1197, 0
      %v1218 = vsel %vm1213, %v1198, 0
      %v1221 = vsel %vm1213, %v1199, 0
      %v1224 = vsel %vm1213, %v1200, 0
      %v1227 = vsel %vm1213, %v1201, 0
      %v1230 = vsel %vm1213, %v1202, 0
      %v1233 = vsel %vm1213, %v1203, 0
      %v1236 = vsel %vm1213, %v1204, 0
      %v1239 = vsel %vm1213, %v1205, 0
      %v1242 = vsel %vm1213, %v1206, 0
      %v1245 = vsel %vm1213, %v1207, 0
      %v1248 = vsel %vm1213, %v1208, 0
      %v1251 = vsel %vm1213, %v1209, 0
      %v1254 = vsel %vm1213, %v1210, 0
      %v1257 = vsel %vm1213, %v1211, 0
      %v1260 = vsel %vm1213, %v1212, 0
      %vm1262 = vcmask 1043456
      %v1264 = vsel %vm1262, %v1164, 0
      %1266 = vmatprep.subr.bf16.mxu0 0
      %1267 = vmatpush1.bf16.msra.mxu0 0
      %1268 = vmatprep.subr.bf16.mxu0 0
      %1269 = vmatpush1.bf16.msra.mxu0 0
      %1270 = vmatprep.subr.bf16.mxu0 0
      %1271 = vmatpush1.bf16.msra.mxu0 0
      %1272 = vmatprep.subr.bf16.mxu0 0
      %1273 = vmatpush1.bf16.msra.mxu0 0
      %1274 = vmatprep.subr.bf16.mxu0 0
      %1275 = vmatpush1.bf16.msra.mxu0 0
      %1276 = vmatprep.subr.bf16.mxu0 0
      %1277 = vmatpush1.bf16.msra.mxu0 0
      %1278 = vmatprep.subr.bf16.mxu0 0
      %1279 = vmatpush1.bf16.msra.mxu0 0
      %1280 = vmatprep.subr.bf16.mxu0 0
      %1281 = vmatpush1.bf16.msra.mxu0 %v1264
      %1282 = vmatprep.subr.bf16.mxu0 0
      %1283 = vmatpush2.bf16.msra.mxu0 0
      %1284 = vmatprep.subr.bf16.mxu0 0
      %1285 = vmatpush2.bf16.msra.mxu0 0
      %1286 = vmatprep.subr.bf16.mxu0 0
      %1287 = vmatpush2.bf16.msra.mxu0 0
      %1288 = vmatprep.subr.bf16.mxu0 0
      %1289 = vmatpush2.bf16.msra.mxu0 0
      %1290 = vmatprep.subr.bf16.mxu0 0
      %1291 = vmatpush2.bf16.msra.mxu0 0
      %1292 = vmatprep.subr.bf16.mxu0 0
      %1293 = vmatpush2.bf16.msra.mxu0 0
      %1294 = vmatprep.subr.bf16.mxu0 0
      %1295 = vmatpush2.bf16.msra.mxu0 0
      %1296 = vmatprep.subr.bf16.mxu0 0
      %1297 = vmatpush2.bf16.msra.mxu0 0
      %1298 = vmatprep.mubr.bf16.mxu0 0
      %1299 = vmatmul.mubr.bf16.gmra.mxu0 %v1215
      %v1300 = vpop.f32.mrf.mxu0
      %v1301 = vadd.f32 0.0, %v1300
      %v1302 = vpop.f32.mrf.mxu0
      %v1303 = vpop.f32.mrf.mxu0
      %v1304 = vadd.f32 0.0, %v1303
      %v1305 = vpop.f32.mrf.mxu0
      %1306 = vmatprep.mubr.bf16.mxu0 0
      %1307 = vmatmul.mubr.bf16.gmra.mxu0 %v1218
      %v1308 = vpop.f32.mrf.mxu0
      %v1309 = vadd.f32 0.0, %v1308
      %v1310 = vpop.f32.mrf.mxu0
      %v1311 = vpop.f32.mrf.mxu0
      %v1312 = vadd.f32 0.0, %v1311
      %v1313 = vpop.f32.mrf.mxu0
      %1314 = vmatprep.mubr.bf16.mxu0 0
      %1315 = vmatmul.mubr.bf16.gmra.mxu0 %v1221
      %v1316 = vpop.f32.mrf.mxu0
      %v1317 = vadd.f32 0.0, %v1316
      %v1318 = vpop.f32.mrf.mxu0
      %v1319 = vpop.f32.mrf.mxu0
      %v1320 = vadd.f32 0.0, %v1319
      %v1321 = vpop.f32.mrf.mxu0
      %1322 = vmatprep.mubr.bf16.mxu0 0
      %1323 = vmatmul.mubr.bf16.gmra.mxu0 %v1224
      %v1324 = vpop.f32.mrf.mxu0
      %v1325 = vadd.f32 0.0, %v1324
      %v1326 = vpop.f32.mrf.mxu0
      %v1327 = vpop.f32.mrf.mxu0
      %v1328 = vadd.f32 0.0, %v1327
      %v1329 = vpop.f32.mrf.mxu0
      %1330 = vmatprep.mubr.bf16.mxu0 0
      %1331 = vmatmul.mubr.bf16.gmra.mxu0 %v1227
      %v1332 = vpop.f32.mrf.mxu0
      %v1333 = vadd.f32 0.0, %v1332
      %v1334 = vpop.f32.mrf.mxu0
      %v1335 = vpop.f32.mrf.mxu0
      %v1336 = vadd.f32 0.0, %v1335
      %v1337 = vpop.f32.mrf.mxu0
      %1338 = vmatprep.mubr.bf16.mxu0 0
      %1339 = vmatmul.mubr.bf16.gmra.mxu0 %v1230
      %v1340 = vpop.f32.mrf.mxu0
      %v1341 = vadd.f32 0.0, %v1340
      %v1342 = vpop.f32.mrf.mxu0
      %v1343 = vpop.f32.mrf.mxu0
      %v1344 = vadd.f32 0.0, %v1343
      %v1345 = vpop.f32.mrf.mxu0
      %1346 = vmatprep.mubr.bf16.mxu0 0
      %1347 = vmatmul.mubr.bf16.gmra.mxu0 %v1233
      %v1348 = vpop.f32.mrf.mxu0
      %v1349 = vadd.f32 0.0, %v1348
      %v1350 = vpop.f32.mrf.mxu0
      %v1351 = vpop.f32.mrf.mxu0
      %v1352 = vadd.f32 0.0, %v1351
      %v1353 = vpop.f32.mrf.mxu0
      %1354 = vmatprep.mubr.bf16.mxu0 0
      %1355 = vmatmul.mubr.bf16.gmra.mxu0 %v1236
      %v1356 = vpop.f32.mrf.mxu0
      %v1357 = vadd.f32 0.0, %v1356
      %v1358 = vpop.f32.mrf.mxu0
      %v1359 = vpop.f32.mrf.mxu0
      %v1360 = vadd.f32 0.0, %v1359
      %v1361 = vpop.f32.mrf.mxu0
      %1362 = vmatprep.mubr.bf16.mxu0 0
      %1363 = vmatmul.mubr.bf16.gmra.mxu0 %v1239
      %v1364 = vpop.f32.mrf.mxu0
      %v1365 = vadd.f32 0.0, %v1364
      %v1366 = vpop.f32.mrf.mxu0
      %v1367 = vpop.f32.mrf.mxu0
      %v1368 = vadd.f32 0.0, %v1367
      %v1369 = vpop.f32.mrf.mxu0
      %1370 = vmatprep.mubr.bf16.mxu0 0
      %1371 = vmatmul.mubr.bf16.gmra.mxu0 %v1242
      %v1372 = vpop.f32.mrf.mxu0
      %v1373 = vadd.f32 0.0, %v1372
      %v1374 = vpop.f32.mrf.mxu0
      %v1375 = vpop.f32.mrf.mxu0
      %v1376 = vadd.f32 0.0, %v1375
      %v1377 = vpop.f32.mrf.mxu0
      %1378 = vmatprep.mubr.bf16.mxu0 0
      %1379 = vmatmul.mubr.bf16.gmra.mxu0 %v1245
      %v1380 = vpop.f32.mrf.mxu0
      %v1381 = vadd.f32 0.0, %v1380
      %v1382 = vpop.f32.mrf.mxu0
      %v1383 = vpop.f32.mrf.mxu0
      %v1384 = vadd.f32 0.0, %v1383
      %v1385 = vpop.f32.mrf.mxu0
      %1386 = vmatprep.mubr.bf16.mxu0 0
      %1387 = vmatmul.mubr.bf16.gmra.mxu0 %v1248
      %v1388 = vpop.f32.mrf.mxu0
      %v1389 = vadd.f32 0.0, %v1388
      %v1390 = vpop.f32.mrf.mxu0
      %v1391 = vpop.f32.mrf.mxu0
      %v1392 = vadd.f32 0.0, %v1391
      %v1393 = vpop.f32.mrf.mxu0
      %1394 = vmatprep.mubr.bf16.mxu0 0
      %1395 = vmatmul.mubr.bf16.gmra.mxu0 %v1251
      %v1396 = vpop.f32.mrf.mxu0
      %v1397 = vadd.f32 0.0, %v1396
      %v1398 = vpop.f32.mrf.mxu0
      %v1399 = vpop.f32.mrf.mxu0
      %v1400 = vadd.f32 0.0, %v1399
      %v1401 = vpop.f32.mrf.mxu0
      %1402 = vmatprep.mubr.bf16.mxu0 0
      %1403 = vmatmul.mubr.bf16.gmra.mxu0 %v1254
      %v1404 = vpop.f32.mrf.mxu0
      %v1405 = vadd.f32 0.0, %v1404
      %v1406 = vpop.f32.mrf.mxu0
      %v1407 = vpop.f32.mrf.mxu0
      %v1408 = vadd.f32 0.0, %v1407
      %v1409 = vpop.f32.mrf.mxu0
      %1410 = vmatprep.mubr.bf16.mxu0 0
      %1411 = vmatmul.mubr.bf16.gmra.mxu0 %v1257
      %v1412 = vpop.f32.mrf.mxu0
      %v1413 = vadd.f32 0.0, %v1412
      %v1414 = vpop.f32.mrf.mxu0
      %v1415 = vpop.f32.mrf.mxu0
      %v1416 = vadd.f32 0.0, %v1415
      %v1417 = vpop.f32.mrf.mxu0
      %1418 = vmatprep.mubr.bf16.mxu0 0
      %1419 = vmatmul.mubr.bf16.gmra.mxu0 %v1260
      %v1420 = vpop.f32.mrf.mxu0
      %v1421 = vadd.f32 0.0, %v1420
      %v1422 = vpop.f32.mrf.mxu0
      %v1423 = vpop.f32.mrf.mxu0
      %v1424 = vadd.f32 0.0, %v1423
      %v1425 = vpop.f32.mrf.mxu0
      %1426 = vdwg.mxu0
      %v1459 = vunpack.c.l.b16 %v727
      %v1460 = vunpack.c.l.b16 %v728
      %v1461 = vunpack.c.l.b16 %v729
      %v1462 = vunpack.c.l.b16 %v730
      %v1463 = vunpack.c.l.b16 %v731
      %v1464 = vunpack.c.l.b16 %v732
      %v1465 = vunpack.c.l.b16 %v733
      %v1466 = vunpack.c.l.b16 %v734
      %v1467 = vunpack.c.l.b16 %v735
      %v1468 = vunpack.c.l.b16 %v736
      %v1469 = vunpack.c.l.b16 %v737
      %v1470 = vunpack.c.l.b16 %v738
      %v1471 = vunpack.c.l.b16 %v739
      %v1472 = vunpack.c.l.b16 %v740
      %v1473 = vunpack.c.l.b16 %v741
      %v1474 = vunpack.c.l.b16 %v742
      %v1475 = vunpack.c.l.b16 %v743
      %v1476 = vunpack.c.l.b16 %v744
      %v1477 = vunpack.c.l.b16 %v745
      %v1478 = vunpack.c.l.b16 %v746
      %v1479 = vunpack.c.l.b16 %v747
      %v1480 = vunpack.c.l.b16 %v748
      %v1481 = vunpack.c.l.b16 %v749
      %v1482 = vunpack.c.l.b16 %v750
      %v1483 = vunpack.c.l.b16 %v751
      %v1484 = vunpack.c.l.b16 %v752
      %v1485 = vunpack.c.l.b16 %v753
      %v1486 = vunpack.c.l.b16 %v754
      %v1487 = vunpack.c.l.b16 %v755
      %v1488 = vunpack.c.l.b16 %v756
      %v1489 = vunpack.c.l.b16 %v757
      %v1490 = vunpack.c.l.b16 %v758
      %v1491 = vpack.c.b16 %v1460, %v1459
      %v1492 = vpack.c.b16 %v1462, %v1461
      %v1493 = vpack.c.b16 %v1464, %v1463
      %v1494 = vpack.c.b16 %v1466, %v1465
      %v1495 = vpack.c.b16 %v1468, %v1467
      %v1496 = vpack.c.b16 %v1470, %v1469
      %v1497 = vpack.c.b16 %v1472, %v1471
      %v1498 = vpack.c.b16 %v1474, %v1473
      %v1499 = vpack.c.b16 %v1476, %v1475
      %v1500 = vpack.c.b16 %v1478, %v1477
      %v1501 = vpack.c.b16 %v1480, %v1479
      %v1502 = vpack.c.b16 %v1482, %v1481
      %v1503 = vpack.c.b16 %v1484, %v1483
      %v1504 = vpack.c.b16 %v1486, %v1485
      %v1505 = vpack.c.b16 %v1488, %v1487
      %v1506 = vpack.c.b16 %v1490, %v1489
      %v1508 = vsel %vm1213, %v1491, 0
      %v1511 = vsel %vm1213, %v1492, 0
      %v1514 = vsel %vm1213, %v1493, 0
      %v1517 = vsel %vm1213, %v1494, 0
      %v1520 = vsel %vm1213, %v1495, 0
      %v1523 = vsel %vm1213, %v1496, 0
      %v1526 = vsel %vm1213, %v1497, 0
      %v1529 = vsel %vm1213, %v1498, 0
      %v1532 = vsel %vm1213, %v1499, 0
      %v1535 = vsel %vm1213, %v1500, 0
      %v1538 = vsel %vm1213, %v1501, 0
      %v1541 = vsel %vm1213, %v1502, 0
      %v1544 = vsel %vm1213, %v1503, 0
      %v1547 = vsel %vm1213, %v1504, 0
      %v1550 = vsel %vm1213, %v1505, 0
      %v1553 = vsel %vm1213, %v1506, 0
      %v1556 = vsel %vm1262, %v759, 0
      %1558 = vmatprep.subr.bf16.mxu0 0
      %1559 = vmatpush1.bf16.msra.mxu0 0
      %1560 = vmatprep.subr.bf16.mxu0 0
      %1561 = vmatpush1.bf16.msra.mxu0 0
      %1562 = vmatprep.subr.bf16.mxu0 0
      %1563 = vmatpush1.bf16.msra.mxu0 0
      %1564 = vmatprep.subr.bf16.mxu0 0
      %1565 = vmatpush1.bf16.msra.mxu0 0
      %1566 = vmatprep.subr.bf16.mxu0 0
      %1567 = vmatpush1.bf16.msra.mxu0 0
      %1568 = vmatprep.subr.bf16.mxu0 0
      %1569 = vmatpush1.bf16.msra.mxu0 0
      %1570 = vmatprep.subr.bf16.mxu0 0
      %1571 = vmatpush1.bf16.msra.mxu0 0
      %1572 = vmatprep.subr.bf16.mxu0 0
      %1573 = vmatpush1.bf16.msra.mxu0 %v1556
      %1574 = vmatprep.subr.bf16.mxu0 0
      %1575 = vmatpush2.bf16.msra.mxu0 0
      %1576 = vmatprep.subr.bf16.mxu0 0
      %1577 = vmatpush2.bf16.msra.mxu0 0
      %1578 = vmatprep.subr.bf16.mxu0 0
      %1579 = vmatpush2.bf16.msra.mxu0 0
      %1580 = vmatprep.subr.bf16.mxu0 0
      %1581 = vmatpush2.bf16.msra.mxu0 0
      %1582 = vmatprep.subr.bf16.mxu0 0
      %1583 = vmatpush2.bf16.msra.mxu0 0
      %1584 = vmatprep.subr.bf16.mxu0 0
      %1585 = vmatpush2.bf16.msra.mxu0 0
      %1586 = vmatprep.subr.bf16.mxu0 0
      %1587 = vmatpush2.bf16.msra.mxu0 0
      %1588 = vmatprep.subr.bf16.mxu0 0
      %1589 = vmatpush2.bf16.msra.mxu0 0
      %1590 = vmatprep.mubr.bf16.mxu0 0
      %1591 = vmatmul.mubr.bf16.gmra.mxu0 %v1508
      %v1592 = vpop.f32.mrf.mxu0
      %v1593 = vadd.f32 %v1301, %v1592
      %v1594 = vpop.f32.mrf.mxu0
      %v1595 = vpop.f32.mrf.mxu0
      %v1596 = vadd.f32 %v1304, %v1595
      %v1597 = vpop.f32.mrf.mxu0
      %1598 = vmatprep.mubr.bf16.mxu0 0
      %1599 = vmatmul.mubr.bf16.gmra.mxu0 %v1511
      %v1600 = vpop.f32.mrf.mxu0
      %v1601 = vadd.f32 %v1309, %v1600
      %v1602 = vpop.f32.mrf.mxu0
      %v1603 = vpop.f32.mrf.mxu0
      %v1604 = vadd.f32 %v1312, %v1603
      %v1605 = vpop.f32.mrf.mxu0
      %1606 = vmatprep.mubr.bf16.mxu0 0
      %1607 = vmatmul.mubr.bf16.gmra.mxu0 %v1514
      %v1608 = vpop.f32.mrf.mxu0
      %v1609 = vadd.f32 %v1317, %v1608
      %v1610 = vpop.f32.mrf.mxu0
      %v1611 = vpop.f32.mrf.mxu0
      %v1612 = vadd.f32 %v1320, %v1611
      %v1613 = vpop.f32.mrf.mxu0
      %1614 = vmatprep.mubr.bf16.mxu0 0
      %1615 = vmatmul.mubr.bf16.gmra.mxu0 %v1517
      %v1616 = vpop.f32.mrf.mxu0
      %v1617 = vadd.f32 %v1325, %v1616
      %v1618 = vpop.f32.mrf.mxu0
      %v1619 = vpop.f32.mrf.mxu0
      %v1620 = vadd.f32 %v1328, %v1619
      %v1621 = vpop.f32.mrf.mxu0
      %1622 = vmatprep.mubr.bf16.mxu0 0
      %1623 = vmatmul.mubr.bf16.gmra.mxu0 %v1520
      %v1624 = vpop.f32.mrf.mxu0
      %v1625 = vadd.f32 %v1333, %v1624
      %v1626 = vpop.f32.mrf.mxu0
      %v1627 = vpop.f32.mrf.mxu0
      %v1628 = vadd.f32 %v1336, %v1627
      %v1629 = vpop.f32.mrf.mxu0
      %1630 = vmatprep.mubr.bf16.mxu0 0
      %1631 = vmatmul.mubr.bf16.gmra.mxu0 %v1523
      %v1632 = vpop.f32.mrf.mxu0
      %v1633 = vadd.f32 %v1341, %v1632
      %v1634 = vpop.f32.mrf.mxu0
      %v1635 = vpop.f32.mrf.mxu0
      %v1636 = vadd.f32 %v1344, %v1635
      %v1637 = vpop.f32.mrf.mxu0
      %1638 = vmatprep.mubr.bf16.mxu0 0
      %1639 = vmatmul.mubr.bf16.gmra.mxu0 %v1526
      %v1640 = vpop.f32.mrf.mxu0
      %v1641 = vadd.f32 %v1349, %v1640
      %v1642 = vpop.f32.mrf.mxu0
      %v1643 = vpop.f32.mrf.mxu0
      %v1644 = vadd.f32 %v1352, %v1643
      %v1645 = vpop.f32.mrf.mxu0
      %1646 = vmatprep.mubr.bf16.mxu0 0
      %1647 = vmatmul.mubr.bf16.gmra.mxu0 %v1529
      %v1648 = vpop.f32.mrf.mxu0
      %v1649 = vadd.f32 %v1357, %v1648
      %v1650 = vpop.f32.mrf.mxu0
      %v1651 = vpop.f32.mrf.mxu0
      %v1652 = vadd.f32 %v1360, %v1651
      %v1653 = vpop.f32.mrf.mxu0
      %1654 = vmatprep.mubr.bf16.mxu0 0
      %1655 = vmatmul.mubr.bf16.gmra.mxu0 %v1532
      %v1656 = vpop.f32.mrf.mxu0
      %v1657 = vadd.f32 %v1365, %v1656
      %v1658 = vpop.f32.mrf.mxu0
      %v1659 = vpop.f32.mrf.mxu0
      %v1660 = vadd.f32 %v1368, %v1659
      %v1661 = vpop.f32.mrf.mxu0
      %1662 = vmatprep.mubr.bf16.mxu0 0
      %1663 = vmatmul.mubr.bf16.gmra.mxu0 %v1535
      %v1664 = vpop.f32.mrf.mxu0
      %v1665 = vadd.f32 %v1373, %v1664
      %v1666 = vpop.f32.mrf.mxu0
      %v1667 = vpop.f32.mrf.mxu0
      %v1668 = vadd.f32 %v1376, %v1667
      %v1669 = vpop.f32.mrf.mxu0
      %1670 = vmatprep.mubr.bf16.mxu0 0
      %1671 = vmatmul.mubr.bf16.gmra.mxu0 %v1538
      %v1672 = vpop.f32.mrf.mxu0
      %v1673 = vadd.f32 %v1381, %v1672
      %v1674 = vpop.f32.mrf.mxu0
      %v1675 = vpop.f32.mrf.mxu0
      %v1676 = vadd.f32 %v1384, %v1675
      %v1677 = vpop.f32.mrf.mxu0
      %1678 = vmatprep.mubr.bf16.mxu0 0
      %1679 = vmatmul.mubr.bf16.gmra.mxu0 %v1541
      %v1680 = vpop.f32.mrf.mxu0
      %v1681 = vadd.f32 %v1389, %v1680
      %v1682 = vpop.f32.mrf.mxu0
      %v1683 = vpop.f32.mrf.mxu0
      %v1684 = vadd.f32 %v1392, %v1683
      %v1685 = vpop.f32.mrf.mxu0
      %1686 = vmatprep.mubr.bf16.mxu0 0
      %1687 = vmatmul.mubr.bf16.gmra.mxu0 %v1544
      %v1688 = vpop.f32.mrf.mxu0
      %v1689 = vadd.f32 %v1397, %v1688
      %v1690 = vpop.f32.mrf.mxu0
      %v1691 = vpop.f32.mrf.mxu0
      %v1692 = vadd.f32 %v1400, %v1691
      %v1693 = vpop.f32.mrf.mxu0
      %1694 = vmatprep.mubr.bf16.mxu0 0
      %1695 = vmatmul.mubr.bf16.gmra.mxu0 %v1547
      %v1696 = vpop.f32.mrf.mxu0
      %v1697 = vadd.f32 %v1405, %v1696
      %v1698 = vpop.f32.mrf.mxu0
      %v1699 = vpop.f32.mrf.mxu0
      %v1700 = vadd.f32 %v1408, %v1699
      %v1701 = vpop.f32.mrf.mxu0
      %1702 = vmatprep.mubr.bf16.mxu0 0
      %1703 = vmatmul.mubr.bf16.gmra.mxu0 %v1550
      %v1704 = vpop.f32.mrf.mxu0
      %v1705 = vadd.f32 %v1413, %v1704
      %v1706 = vpop.f32.mrf.mxu0
      %v1707 = vpop.f32.mrf.mxu0
      %v1708 = vadd.f32 %v1416, %v1707
      %v1709 = vpop.f32.mrf.mxu0
      %1710 = vmatprep.mubr.bf16.mxu0 0
      %1711 = vmatmul.mubr.bf16.gmra.mxu0 %v1553
      %v1712 = vpop.f32.mrf.mxu0
      %v1713 = vadd.f32 %v1421, %v1712
      %v1714 = vpop.f32.mrf.mxu0
      %v1715 = vpop.f32.mrf.mxu0
      %v1716 = vadd.f32 %v1424, %v1715
      %v1717 = vpop.f32.mrf.mxu0
      %1718 = vdwg.mxu0
      %v1719 = vld [vmem:[%s726] sm:$0xe]
      %v1720 = vld [vmem:[%s726 + $0xc] sm:$0xe]
      %v1721 = vld [vmem:[%s726 + $0x18] sm:$0xe]
      %v1722 = vld [vmem:[%s726 + $0x24] sm:$0xe]
      %v1723 = vld [vmem:[%s726 + $0x30] sm:$0xe]
      %v1724 = vld [vmem:[%s726 + $0x3c] sm:$0xe]
      %v1725 = vld [vmem:[%s726 + $0x48] sm:$0xe]
      %v1726 = vld [vmem:[%s726 + $0x54] sm:$0xe]
      %v1727 = vld [vmem:[%s726 + $0x60] sm:$0xe]
      %v1728 = vld [vmem:[%s726 + $0x6c] sm:$0xe]
      %v1729 = vld [vmem:[%s726 + $0x78] sm:$0xe]
      %v1730 = vld [vmem:[%s726 + $0x84] sm:$0xe]
      %v1731 = vld [vmem:[%s726 + $0x90] sm:$0xe]
      %v1732 = vld [vmem:[%s726 + $0x9c] sm:$0xe]
      %v1733 = vld [vmem:[%s726 + $0xa8] sm:$0xe]
      %v1734 = vld [vmem:[%s726 + $0xb4] sm:$0xe]
      %vm1767 = vcmask 1042432
      %vm1768 = vcmask 1046532
      %vm1769 = vmor %vm1767, %vm1768
      %v1770 = vrot.slane %v1719, 5
      %v1771 = vrot.slane %v1770, 4
      %v1772 = vrot.slane %v728, 5
      %v1773 = vsel %vm1769, %v1771, %v1772
      %v1774 = vrot.slane %v1772, 4
      %v1775 = vrot.slane %v760, 5
      %v1776 = vsel %vm1769, %v1774, %v1775
      %v1777 = vrot.slane %v1720, 5
      %v1778 = vrot.slane %v1777, 4
      %v1779 = vrot.slane %v730, 5
      %v1780 = vsel %vm1769, %v1778, %v1779
      %v1781 = vrot.slane %v1779, 4
      %v1782 = vrot.slane %v761, 5
      %v1783 = vsel %vm1769, %v1781, %v1782
      %v1784 = vrot.slane %v1721, 5
      %v1785 = vrot.slane %v1784, 4
      %v1786 = vrot.slane %v732, 5
      %v1787 = vsel %vm1769, %v1785, %v1786
      %v1788 = vrot.slane %v1786, 4
      %v1789 = vrot.slane %v762, 5
      %v1790 = vsel %vm1769, %v1788, %v1789
      %v1791 = vrot.slane %v1722, 5
      %v1792 = vrot.slane %v1791, 4
      %v1793 = vrot.slane %v734, 5
      %v1794 = vsel %vm1769, %v1792, %v1793
      %v1795 = vrot.slane %v1793, 4
      %v1796 = vrot.slane %v763, 5
      %v1797 = vsel %vm1769, %v1795, %v1796
      %v1798 = vrot.slane %v1723, 5
      %v1799 = vrot.slane %v1798, 4
      %v1800 = vrot.slane %v736, 5
      %v1801 = vsel %vm1769, %v1799, %v1800
      %v1802 = vrot.slane %v1800, 4
      %v1803 = vrot.slane %v764, 5
      %v1804 = vsel %vm1769, %v1802, %v1803
      %v1805 = vrot.slane %v1724, 5
      %v1806 = vrot.slane %v1805, 4
      %v1807 = vrot.slane %v738, 5
      %v1808 = vsel %vm1769, %v1806, %v1807
      %v1809 = vrot.slane %v1807, 4
      %v1810 = vrot.slane %v765, 5
      %v1811 = vsel %vm1769, %v1809, %v1810
      %v1812 = vrot.slane %v1725, 5
      %v1813 = vrot.slane %v1812, 4
      %v1814 = vrot.slane %v740, 5
      %v1815 = vsel %vm1769, %v1813, %v1814
      %v1816 = vrot.slane %v1814, 4
      %v1817 = vrot.slane %v766, 5
      %v1818 = vsel %vm1769, %v1816, %v1817
      %v1819 = vrot.slane %v1726, 5
      %v1820 = vrot.slane %v1819, 4
      %v1821 = vrot.slane %v742, 5
      %v1822 = vsel %vm1769, %v1820, %v1821
      %v1823 = vrot.slane %v1821, 4
      %v1824 = vrot.slane %v767, 5
      %v1825 = vsel %vm1769, %v1823, %v1824
      %v1826 = vrot.slane %v1727, 5
      %v1827 = vrot.slane %v1826, 4
      %v1828 = vrot.slane %v744, 5
      %v1829 = vsel %vm1769, %v1827, %v1828
      %v1830 = vrot.slane %v1828, 4
      %v1831 = vrot.slane %v768, 5
      %v1832 = vsel %vm1769, %v1830, %v1831
      %v1833 = vrot.slane %v1728, 5
      %v1834 = vrot.slane %v1833, 4
      %v1835 = vrot.slane %v746, 5
      %v1836 = vsel %vm1769, %v1834, %v1835
      %v1837 = vrot.slane %v1835, 4
      %v1838 = vrot.slane %v769, 5
      %v1839 = vsel %vm1769, %v1837, %v1838
      %v1840 = vrot.slane %v1729, 5
      %v1841 = vrot.slane %v1840, 4
      %v1842 = vrot.slane %v748, 5
      %v1843 = vsel %vm1769, %v1841, %v1842
      %v1844 = vrot.slane %v1842, 4
      %v1845 = vrot.slane %v770, 5
      %v1846 = vsel %vm1769, %v1844, %v1845
      %v1847 = vrot.slane %v1730, 5
      %v1848 = vrot.slane %v1847, 4
      %v1849 = vrot.slane %v750, 5
      %v1850 = vsel %vm1769, %v1848, %v1849
      %v1851 = vrot.slane %v1849, 4
      %v1852 = vrot.slane %v771, 5
      %v1853 = vsel %vm1769, %v1851, %v1852
      %v1854 = vrot.slane %v1731, 5
      %v1855 = vrot.slane %v1854, 4
      %v1856 = vrot.slane %v752, 5
      %v1857 = vsel %vm1769, %v1855, %v1856
      %v1858 = vrot.slane %v1856, 4
      %v1859 = vrot.slane %v772, 5
      %v1860 = vsel %vm1769, %v1858, %v1859
      %v1861 = vrot.slane %v1732, 5
      %v1862 = vrot.slane %v1861, 4
      %v1863 = vrot.slane %v754, 5
      %v1864 = vsel %vm1769, %v1862, %v1863
      %v1865 = vrot.slane %v1863, 4
      %v1866 = vrot.slane %v773, 5
      %v1867 = vsel %vm1769, %v1865, %v1866
      %v1868 = vrot.slane %v1733, 5
      %v1869 = vrot.slane %v1868, 4
      %v1870 = vrot.slane %v756, 5
      %v1871 = vsel %vm1769, %v1869, %v1870
      %v1872 = vrot.slane %v1870, 4
      %v1873 = vrot.slane %v774, 5
      %v1874 = vsel %vm1769, %v1872, %v1873
      %v1875 = vrot.slane %v1734, 5
      %v1876 = vrot.slane %v1875, 4
      %v1877 = vrot.slane %v758, 5
      %v1878 = vsel %vm1769, %v1876, %v1877
      %v1879 = vrot.slane %v1877, 4
      %v1880 = vrot.slane %v775, 5
      %v1881 = vsel %vm1769, %v1879, %v1880
      %s1882 = scalar_lea.vmem %s1, 8
      %v1883 = vld [vmem:[%s1882] sm:$0xf]
      %v1884 = vunpack.c.l.b16 %v1773
      %v1885 = vunpack.c.l.b16 %v1776
      %v1886 = vunpack.c.l.b16 %v1780
      %v1887 = vunpack.c.l.b16 %v1783
      %v1888 = vunpack.c.l.b16 %v1787
      %v1889 = vunpack.c.l.b16 %v1790
      %v1890 = vunpack.c.l.b16 %v1794
      %v1891 = vunpack.c.l.b16 %v1797
      %v1892 = vunpack.c.l.b16 %v1801
      %v1893 = vunpack.c.l.b16 %v1804
      %v1894 = vunpack.c.l.b16 %v1808
      %v1895 = vunpack.c.l.b16 %v1811
      %v1896 = vunpack.c.l.b16 %v1815
      %v1897 = vunpack.c.l.b16 %v1818
      %v1898 = vunpack.c.l.b16 %v1822
      %v1899 = vunpack.c.l.b16 %v1825
      %v1900 = vunpack.c.l.b16 %v1829
      %v1901 = vunpack.c.l.b16 %v1832
      %v1902 = vunpack.c.l.b16 %v1836
      %v1903 = vunpack.c.l.b16 %v1839
      %v1904 = vunpack.c.l.b16 %v1843
      %v1905 = vunpack.c.l.b16 %v1846
      %v1906 = vunpack.c.l.b16 %v1850
      %v1907 = vunpack.c.l.b16 %v1853
      %v1908 = vunpack.c.l.b16 %v1857
      %v1909 = vunpack.c.l.b16 %v1860
      %v1910 = vunpack.c.l.b16 %v1864
      %v1911 = vunpack.c.l.b16 %v1867
      %v1912 = vunpack.c.l.b16 %v1871
      %v1913 = vunpack.c.l.b16 %v1874
      %v1914 = vunpack.c.l.b16 %v1878
      %v1915 = vunpack.c.l.b16 %v1881
      %v1916 = vpack.c.b16 %v1885, %v1884
      %v1917 = vpack.c.b16 %v1887, %v1886
      %v1918 = vpack.c.b16 %v1889, %v1888
      %v1919 = vpack.c.b16 %v1891, %v1890
      %v1920 = vpack.c.b16 %v1893, %v1892
      %v1921 = vpack.c.b16 %v1895, %v1894
      %v1922 = vpack.c.b16 %v1897, %v1896
      %v1923 = vpack.c.b16 %v1899, %v1898
      %v1924 = vpack.c.b16 %v1901, %v1900
      %v1925 = vpack.c.b16 %v1903, %v1902
      %v1926 = vpack.c.b16 %v1905, %v1904
      %v1927 = vpack.c.b16 %v1907, %v1906
      %v1928 = vpack.c.b16 %v1909, %v1908
      %v1929 = vpack.c.b16 %v1911, %v1910
      %v1930 = vpack.c.b16 %v1913, %v1912
      %v1931 = vpack.c.b16 %v1915, %v1914
      %v1933 = vsel %vm1213, %v1916, 0
      %v1936 = vsel %vm1213, %v1917, 0
      %v1939 = vsel %vm1213, %v1918, 0
      %v1942 = vsel %vm1213, %v1919, 0
      %v1945 = vsel %vm1213, %v1920, 0
      %v1948 = vsel %vm1213, %v1921, 0
      %v1951 = vsel %vm1213, %v1922, 0
      %v1954 = vsel %vm1213, %v1923, 0
      %v1957 = vsel %vm1213, %v1924, 0
      %v1960 = vsel %vm1213, %v1925, 0
      %v1963 = vsel %vm1213, %v1926, 0
      %v1966 = vsel %vm1213, %v1927, 0
      %v1969 = vsel %vm1213, %v1928, 0
      %v1972 = vsel %vm1213, %v1929, 0
      %v1975 = vsel %vm1213, %v1930, 0
      %v1978 = vsel %vm1213, %v1931, 0
      %v1981 = vsel %vm1262, %v1883, 0
      %1983 = vmatprep.subr.bf16.mxu0 0
      %1984 = vmatpush1.bf16.msra.mxu0 0
      %1985 = vmatprep.subr.bf16.mxu0 0
      %1986 = vmatpush1.bf16.msra.mxu0 0
      %1987 = vmatprep.subr.bf16.mxu0 0
      %1988 = vmatpush1.bf16.msra.mxu0 0
      %1989 = vmatprep.subr.bf16.mxu0 0
      %1990 = vmatpush1.bf16.msra.mxu0 0
      %1991 = vmatprep.subr.bf16.mxu0 0
      %1992 = vmatpush1.bf16.msra.mxu0 0
      %1993 = vmatprep.subr.bf16.mxu0 0
      %1994 = vmatpush1.bf16.msra.mxu0 0
      %1995 = vmatprep.subr.bf16.mxu0 0
      %1996 = vmatpush1.bf16.msra.mxu0 0
      %1997 = vmatprep.subr.bf16.mxu0 0
      %1998 = vmatpush1.bf16.msra.mxu0 %v1981
      %1999 = vmatprep.subr.bf16.mxu0 0
      %2000 = vmatpush2.bf16.msra.mxu0 0
      %2001 = vmatprep.subr.bf16.mxu0 0
      %2002 = vmatpush2.bf16.msra.mxu0 0
      %2003 = vmatprep.subr.bf16.mxu0 0
      %2004 = vmatpush2.bf16.msra.mxu0 0
      %2005 = vmatprep.subr.bf16.mxu0 0
      %2006 = vmatpush2.bf16.msra.mxu0 0
      %2007 = vmatprep.subr.bf16.mxu0 0
      %2008 = vmatpush2.bf16.msra.mxu0 0
      %2009 = vmatprep.subr.bf16.mxu0 0
      %2010 = vmatpush2.bf16.msra.mxu0 0
      %2011 = vmatprep.subr.bf16.mxu0 0
      %2012 = vmatpush2.bf16.msra.mxu0 0
      %2013 = vmatprep.subr.bf16.mxu0 0
      %2014 = vmatpush2.bf16.msra.mxu0 0
      %2015 = vmatprep.mubr.bf16.mxu0 0
      %2016 = vmatmul.mubr.bf16.gmra.mxu0 %v1933
      %v2017 = vpop.f32.mrf.mxu0
      %v2018 = vadd.f32 0.0, %v2017
      %v2019 = vpop.f32.mrf.mxu0
      %v2020 = vpop.f32.mrf.mxu0
      %v2021 = vadd.f32 0.0, %v2020
      %v2022 = vpop.f32.mrf.mxu0
      %2023 = vmatprep.mubr.bf16.mxu0 0
      %2024 = vmatmul.mubr.bf16.gmra.mxu0 %v1936
      %v2025 = vpop.f32.mrf.mxu0
      %v2026 = vadd.f32 0.0, %v2025
      %v2027 = vpop.f32.mrf.mxu0
      %v2028 = vpop.f32.mrf.mxu0
      %v2029 = vadd.f32 0.0, %v2028
      %v2030 = vpop.f32.mrf.mxu0
      %2031 = vmatprep.mubr.bf16.mxu0 0
      %2032 = vmatmul.mubr.bf16.gmra.mxu0 %v1939
      %v2033 = vpop.f32.mrf.mxu0
      %v2034 = vadd.f32 0.0, %v2033
      %v2035 = vpop.f32.mrf.mxu0
      %v2036 = vpop.f32.mrf.mxu0
      %v2037 = vadd.f32 0.0, %v2036
      %v2038 = vpop.f32.mrf.mxu0
      %2039 = vmatprep.mubr.bf16.mxu0 0
      %2040 = vmatmul.mubr.bf16.gmra.mxu0 %v1942
      %v2041 = vpop.f32.mrf.mxu0
      %v2042 = vadd.f32 0.0, %v2041
      %v2043 = vpop.f32.mrf.mxu0
      %v2044 = vpop.f32.mrf.mxu0
      %v2045 = vadd.f32 0.0, %v2044
      %v2046 = vpop.f32.mrf.mxu0
      %2047 = vmatprep.mubr.bf16.mxu0 0
      %2048 = vmatmul.mubr.bf16.gmra.mxu0 %v1945
      %v2049 = vpop.f32.mrf.mxu0
      %v2050 = vadd.f32 0.0, %v2049
      %v2051 = vpop.f32.mrf.mxu0
      %v2052 = vpop.f32.mrf.mxu0
      %v2053 = vadd.f32 0.0, %v2052
      %v2054 = vpop.f32.mrf.mxu0
      %2055 = vmatprep.mubr.bf16.mxu0 0
      %2056 = vmatmul.mubr.bf16.gmra.mxu0 %v1948
      %v2057 = vpop.f32.mrf.mxu0
      %v2058 = vadd.f32 0.0, %v2057
      %v2059 = vpop.f32.mrf.mxu0
      %v2060 = vpop.f32.mrf.mxu0
      %v2061 = vadd.f32 0.0, %v2060
      %v2062 = vpop.f32.mrf.mxu0
      %2063 = vmatprep.mubr.bf16.mxu0 0
      %2064 = vmatmul.mubr.bf16.gmra.mxu0 %v1951
      %v2065 = vpop.f32.mrf.mxu0
      %v2066 = vadd.f32 0.0, %v2065
      %v2067 = vpop.f32.mrf.mxu0
      %v2068 = vpop.f32.mrf.mxu0
      %v2069 = vadd.f32 0.0, %v2068
      %v2070 = vpop.f32.mrf.mxu0
      %2071 = vmatprep.mubr.bf16.mxu0 0
      %2072 = vmatmul.mubr.bf16.gmra.mxu0 %v1954
      %v2073 = vpop.f32.mrf.mxu0
      %v2074 = vadd.f32 0.0, %v2073
      %v2075 = vpop.f32.mrf.mxu0
      %v2076 = vpop.f32.mrf.mxu0
      %v2077 = vadd.f32 0.0, %v2076
      %v2078 = vpop.f32.mrf.mxu0
      %2079 = vmatprep.mubr.bf16.mxu0 0
      %2080 = vmatmul.mubr.bf16.gmra.mxu0 %v1957
      %v2081 = vpop.f32.mrf.mxu0
      %v2082 = vadd.f32 0.0, %v2081
      %v2083 = vpop.f32.mrf.mxu0
      %v2084 = vpop.f32.mrf.mxu0
      %v2085 = vadd.f32 0.0, %v2084
      %v2086 = vpop.f32.mrf.mxu0
      %2087 = vmatprep.mubr.bf16.mxu0 0
      %2088 = vmatmul.mubr.bf16.gmra.mxu0 %v1960
      %v2089 = vpop.f32.mrf.mxu0
      %v2090 = vadd.f32 0.0, %v2089
      %v2091 = vpop.f32.mrf.mxu0
      %v2092 = vpop.f32.mrf.mxu0
      %v2093 = vadd.f32 0.0, %v2092
      %v2094 = vpop.f32.mrf.mxu0
      %2095 = vmatprep.mubr.bf16.mxu0 0
      %2096 = vmatmul.mubr.bf16.gmra.mxu0 %v1963
      %v2097 = vpop.f32.mrf.mxu0
      %v2098 = vadd.f32 0.0, %v2097
      %v2099 = vpop.f32.mrf.mxu0
      %v2100 = vpop.f32.mrf.mxu0
      %v2101 = vadd.f32 0.0, %v2100
      %v2102 = vpop.f32.mrf.mxu0
      %2103 = vmatprep.mubr.bf16.mxu0 0
      %2104 = vmatmul.mubr.bf16.gmra.mxu0 %v1966
      %v2105 = vpop.f32.mrf.mxu0
      %v2106 = vadd.f32 0.0, %v2105
      %v2107 = vpop.f32.mrf.mxu0
      %v2108 = vpop.f32.mrf.mxu0
      %v2109 = vadd.f32 0.0, %v2108
      %v2110 = vpop.f32.mrf.mxu0
      %2111 = vmatprep.mubr.bf16.mxu0 0
      %2112 = vmatmul.mubr.bf16.gmra.mxu0 %v1969
      %v2113 = vpop.f32.mrf.mxu0
      %v2114 = vadd.f32 0.0, %v2113
      %v2115 = vpop.f32.mrf.mxu0
      %v2116 = vpop.f32.mrf.mxu0
      %v2117 = vadd.f32 0.0, %v2116
      %v2118 = vpop.f32.mrf.mxu0
      %2119 = vmatprep.mubr.bf16.mxu0 0
      %2120 = vmatmul.mubr.bf16.gmra.mxu0 %v1972
      %v2121 = vpop.f32.mrf.mxu0
      %v2122 = vadd.f32 0.0, %v2121
      %v2123 = vpop.f32.mrf.mxu0
      %v2124 = vpop.f32.mrf.mxu0
      %v2125 = vadd.f32 0.0, %v2124
      %v2126 = vpop.f32.mrf.mxu0
      %2127 = vmatprep.mubr.bf16.mxu0 0
      %2128 = vmatmul.mubr.bf16.gmra.mxu0 %v1975
      %v2129 = vpop.f32.mrf.mxu0
      %v2130 = vadd.f32 0.0, %v2129
      %v2131 = vpop.f32.mrf.mxu0
      %v2132 = vpop.f32.mrf.mxu0
      %v2133 = vadd.f32 0.0, %v2132
      %v2134 = vpop.f32.mrf.mxu0
      %2135 = vmatprep.mubr.bf16.mxu0 0
      %2136 = vmatmul.mubr.bf16.gmra.mxu0 %v1978
      %v2137 = vpop.f32.mrf.mxu0
      %v2138 = vadd.f32 0.0, %v2137
      %v2139 = vpop.f32.mrf.mxu0
      %v2140 = vpop.f32.mrf.mxu0
      %v2141 = vadd.f32 0.0, %v2140
      %v2142 = vpop.f32.mrf.mxu0
      %2143 = vdwg.mxu0
      %v2144 = vadd.f32 %v1593, %v2018
      %v2145 = vadd.f32 %v1596, %v2021
      %v2146 = vadd.f32 %v1601, %v2026
      %v2147 = vadd.f32 %v1604, %v2029
      %v2148 = vadd.f32 %v1609, %v2034
      %v2149 = vadd.f32 %v1612, %v2037
      %v2150 = vadd.f32 %v1617, %v2042
      %v2151 = vadd.f32 %v1620, %v2045
      %v2152 = vadd.f32 %v1625, %v2050
      %v2153 = vadd.f32 %v1628, %v2053
      %v2154 = vadd.f32 %v1633, %v2058
      %v2155 = vadd.f32 %v1636, %v2061
      %v2156 = vadd.f32 %v1641, %v2066
      %v2157 = vadd.f32 %v1644, %v2069
      %v2158 = vadd.f32 %v1649, %v2074
      %v2159 = vadd.f32 %v1652, %v2077
      %v2160 = vadd.f32 %v1657, %v2082
      %v2161 = vadd.f32 %v1660, %v2085
      %v2162 = vadd.f32 %v1665, %v2090
      %v2163 = vadd.f32 %v1668, %v2093
      %v2164 = vadd.f32 %v1673, %v2098
      %v2165 = vadd.f32 %v1676, %v2101
      %v2166 = vadd.f32 %v1681, %v2106
      %v2167 = vadd.f32 %v1684, %v2109
      %v2168 = vadd.f32 %v1689, %v2114
      %v2169 = vadd.f32 %v1692, %v2117
      %v2170 = vadd.f32 %v1697, %v2122
      %v2171 = vadd.f32 %v1700, %v2125
      %v2172 = vadd.f32 %v1705, %v2130
      %v2173 = vadd.f32 %v1708, %v2133
      %v2174 = vadd.f32 %v1713, %v2138
      %v2175 = vadd.f32 %v1716, %v2141
      %s2176 = sadd.s32 %s723, 1
      %s2177 = smul.u32 %s2176, 3
      %s2178 = smul.addr %s2177, 4
      %s2179 = scalar_lea.vmem [#allocation2], %s2178
      %v2180 = vld [vmem:[%s2179] sm:$0xf]
      %v2181 = vld [vmem:[%s2179 + $0x4] sm:$0xf]
      %v2182 = vld [vmem:[%s2179 + $0xc] sm:$0xf]
      %v2183 = vld [vmem:[%s2179 + $0x10] sm:$0xf]
      %v2184 = vld [vmem:[%s2179 + $0x18] sm:$0xf]
      %v2185 = vld [vmem:[%s2179 + $0x1c] sm:$0xf]
      %v2186 = vld [vmem:[%s2179 + $0x24] sm:$0xf]
      %v2187 = vld [vmem:[%s2179 + $0x28] sm:$0xf]
      %v2188 = vld [vmem:[%s2179 + $0x30] sm:$0xf]
      %v2189 = vld [vmem:[%s2179 + $0x34] sm:$0xf]
      %v2190 = vld [vmem:[%s2179 + $0x3c] sm:$0xf]
      %v2191 = vld [vmem:[%s2179 + $0x40] sm:$0xf]
      %v2192 = vld [vmem:[%s2179 + $0x48] sm:$0xf]
      %v2193 = vld [vmem:[%s2179 + $0x4c] sm:$0xf]
      %v2194 = vld [vmem:[%s2179 + $0x54] sm:$0xf]
      %v2195 = vld [vmem:[%s2179 + $0x58] sm:$0xf]
      %v2196 = vld [vmem:[%s2179 + $0x60] sm:$0xf]
      %v2197 = vld [vmem:[%s2179 + $0x64] sm:$0xf]
      %v2198 = vld [vmem:[%s2179 + $0x6c] sm:$0xf]
      %v2199 = vld [vmem:[%s2179 + $0x70] sm:$0xf]
      %v2200 = vld [vmem:[%s2179 + $0x78] sm:$0xf]
      %v2201 = vld [vmem:[%s2179 + $0x7c] sm:$0xf]
      %v2202 = vld [vmem:[%s2179 + $0x84] sm:$0xf]
      %v2203 = vld [vmem:[%s2179 + $0x88] sm:$0xf]
      %v2204 = vld [vmem:[%s2179 + $0x90] sm:$0xf]
      %v2205 = vld [vmem:[%s2179 + $0x94] sm:$0xf]
      %v2206 = vld [vmem:[%s2179 + $0x9c] sm:$0xf]
      %v2207 = vld [vmem:[%s2179 + $0xa0] sm:$0xf]
      %v2208 = vld [vmem:[%s2179 + $0xa8] sm:$0xf]
      %v2209 = vld [vmem:[%s2179 + $0xac] sm:$0xf]
      %v2210 = vld [vmem:[%s2179 + $0xb4] sm:$0xf]
      %v2211 = vld [vmem:[%s2179 + $0xb8] sm:$0xf]
      %s2212 = scalar_lea.vmem %s1, 12
      %v2213 = vld [vmem:[%s2212] sm:$0xf]
      %v2246 = vunpack.c.l.b16 %v2180
      %v2247 = vunpack.c.l.b16 %v2181
      %v2248 = vunpack.c.l.b16 %v2182
      %v2249 = vunpack.c.l.b16 %v2183
      %v2250 = vunpack.c.l.b16 %v2184
      %v2251 = vunpack.c.l.b16 %v2185
      %v2252 = vunpack.c.l.b16 %v2186
      %v2253 = vunpack.c.l.b16 %v2187
      %v2254 = vunpack.c.l.b16 %v2188
      %v2255 = vunpack.c.l.b16 %v2189
      %v2256 = vunpack.c.l.b16 %v2190
      %v2257 = vunpack.c.l.b16 %v2191
      %v2258 = vunpack.c.l.b16 %v2192
      %v2259 = vunpack.c.l.b16 %v2193
      %v2260 = vunpack.c.l.b16 %v2194
      %v2261 = vunpack.c.l.b16 %v2195
      %v2262 = vunpack.c.l.b16 %v2196
      %v2263 = vunpack.c.l.b16 %v2197
      %v2264 = vunpack.c.l.b16 %v2198
      %v2265 = vunpack.c.l.b16 %v2199
      %v2266 = vunpack.c.l.b16 %v2200
      %v2267 = vunpack.c.l.b16 %v2201
      %v2268 = vunpack.c.l.b16 %v2202
      %v2269 = vunpack.c.l.b16 %v2203
      %v2270 = vunpack.c.l.b16 %v2204
      %v2271 = vunpack.c.l.b16 %v2205
      %v2272 = vunpack.c.l.b16 %v2206
      %v2273 = vunpack.c.l.b16 %v2207
      %v2274 = vunpack.c.l.b16 %v2208
      %v2275 = vunpack.c.l.b16 %v2209
      %v2276 = vunpack.c.l.b16 %v2210
      %v2277 = vunpack.c.l.b16 %v2211
      %v2278 = vpack.c.b16 %v2247, %v2246
      %v2279 = vpack.c.b16 %v2249, %v2248
      %v2280 = vpack.c.b16 %v2251, %v2250
      %v2281 = vpack.c.b16 %v2253, %v2252
      %v2282 = vpack.c.b16 %v2255, %v2254
      %v2283 = vpack.c.b16 %v2257, %v2256
      %v2284 = vpack.c.b16 %v2259, %v2258
      %v2285 = vpack.c.b16 %v2261, %v2260
      %v2286 = vpack.c.b16 %v2263, %v2262
      %v2287 = vpack.c.b16 %v2265, %v2264
      %v2288 = vpack.c.b16 %v2267, %v2266
      %v2289 = vpack.c.b16 %v2269, %v2268
      %v2290 = vpack.c.b16 %v2271, %v2270
      %v2291 = vpack.c.b16 %v2273, %v2272
      %v2292 = vpack.c.b16 %v2275, %v2274
      %v2293 = vpack.c.b16 %v2277, %v2276
      %v2295 = vsel %vm1213, %v2278, 0
      %v2298 = vsel %vm1213, %v2279, 0
      %v2301 = vsel %vm1213, %v2280, 0
      %v2304 = vsel %vm1213, %v2281, 0
      %v2307 = vsel %vm1213, %v2282, 0
      %v2310 = vsel %vm1213, %v2283, 0
      %v2313 = vsel %vm1213, %v2284, 0
      %v2316 = vsel %vm1213, %v2285, 0
      %v2319 = vsel %vm1213, %v2286, 0
      %v2322 = vsel %vm1213, %v2287, 0
      %v2325 = vsel %vm1213, %v2288, 0
      %v2328 = vsel %vm1213, %v2289, 0
      %v2331 = vsel %vm1213, %v2290, 0
      %v2334 = vsel %vm1213, %v2291, 0
      %v2337 = vsel %vm1213, %v2292, 0
      %v2340 = vsel %vm1213, %v2293, 0
      %v2343 = vsel %vm1262, %v2213, 0
      %2345 = vmatprep.subr.bf16.mxu0 0
      %2346 = vmatpush1.bf16.msra.mxu0 0
      %2347 = vmatprep.subr.bf16.mxu0 0
      %2348 = vmatpush1.bf16.msra.mxu0 0
      %2349 = vmatprep.subr.bf16.mxu0 0
      %2350 = vmatpush1.bf16.msra.mxu0 0
      %2351 = vmatprep.subr.bf16.mxu0 0
      %2352 = vmatpush1.bf16.msra.mxu0 0
      %2353 = vmatprep.subr.bf16.mxu0 0
      %2354 = vmatpush1.bf16.msra.mxu0 0
      %2355 = vmatprep.subr.bf16.mxu0 0
      %2356 = vmatpush1.bf16.msra.mxu0 0
      %2357 = vmatprep.subr.bf16.mxu0 0
      %2358 = vmatpush1.bf16.msra.mxu0 0
      %2359 = vmatprep.subr.bf16.mxu0 0
      %2360 = vmatpush1.bf16.msra.mxu0 %v2343
      %2361 = vmatprep.subr.bf16.mxu0 0
      %2362 = vmatpush2.bf16.msra.mxu0 0
      %2363 = vmatprep.subr.bf16.mxu0 0
      %2364 = vmatpush2.bf16.msra.mxu0 0
      %2365 = vmatprep.subr.bf16.mxu0 0
      %2366 = vmatpush2.bf16.msra.mxu0 0
      %2367 = vmatprep.subr.bf16.mxu0 0
      %2368 = vmatpush2.bf16.msra.mxu0 0
      %2369 = vmatprep.subr.bf16.mxu0 0
      %2370 = vmatpush2.bf16.msra.mxu0 0
      %2371 = vmatprep.subr.bf16.mxu0 0
      %2372 = vmatpush2.bf16.msra.mxu0 0
      %2373 = vmatprep.subr.bf16.mxu0 0
      %2374 = vmatpush2.bf16.msra.mxu0 0
      %2375 = vmatprep.subr.bf16.mxu0 0
      %2376 = vmatpush2.bf16.msra.mxu0 0
      %2377 = vmatprep.mubr.bf16.mxu0 0
      %2378 = vmatmul.mubr.bf16.gmra.mxu0 %v2295
      %v2379 = vpop.f32.mrf.mxu0
      %v2380 = vadd.f32 0.0, %v2379
      %v2381 = vpop.f32.mrf.mxu0
      %v2382 = vpop.f32.mrf.mxu0
      %v2383 = vadd.f32 0.0, %v2382
      %v2384 = vpop.f32.mrf.mxu0
      %2385 = vmatprep.mubr.bf16.mxu0 0
      %2386 = vmatmul.mubr.bf16.gmra.mxu0 %v2298
      %v2387 = vpop.f32.mrf.mxu0
      %v2388 = vadd.f32 0.0, %v2387
      %v2389 = vpop.f32.mrf.mxu0
      %v2390 = vpop.f32.mrf.mxu0
      %v2391 = vadd.f32 0.0, %v2390
      %v2392 = vpop.f32.mrf.mxu0
      %2393 = vmatprep.mubr.bf16.mxu0 0
      %2394 = vmatmul.mubr.bf16.gmra.mxu0 %v2301
      %v2395 = vpop.f32.mrf.mxu0
      %v2396 = vadd.f32 0.0, %v2395
      %v2397 = vpop.f32.mrf.mxu0
      %v2398 = vpop.f32.mrf.mxu0
      %v2399 = vadd.f32 0.0, %v2398
      %v2400 = vpop.f32.mrf.mxu0
      %2401 = vmatprep.mubr.bf16.mxu0 0
      %2402 = vmatmul.mubr.bf16.gmra.mxu0 %v2304
      %v2403 = vpop.f32.mrf.mxu0
      %v2404 = vadd.f32 0.0, %v2403
      %v2405 = vpop.f32.mrf.mxu0
      %v2406 = vpop.f32.mrf.mxu0
      %v2407 = vadd.f32 0.0, %v2406
      %v2408 = vpop.f32.mrf.mxu0
      %2409 = vmatprep.mubr.bf16.mxu0 0
      %2410 = vmatmul.mubr.bf16.gmra.mxu0 %v2307
      %v2411 = vpop.f32.mrf.mxu0
      %v2412 = vadd.f32 0.0, %v2411
      %v2413 = vpop.f32.mrf.mxu0
      %v2414 = vpop.f32.mrf.mxu0
      %v2415 = vadd.f32 0.0, %v2414
      %v2416 = vpop.f32.mrf.mxu0
      %2417 = vmatprep.mubr.bf16.mxu0 0
      %2418 = vmatmul.mubr.bf16.gmra.mxu0 %v2310
      %v2419 = vpop.f32.mrf.mxu0
      %v2420 = vadd.f32 0.0, %v2419
      %v2421 = vpop.f32.mrf.mxu0
      %v2422 = vpop.f32.mrf.mxu0
      %v2423 = vadd.f32 0.0, %v2422
      %v2424 = vpop.f32.mrf.mxu0
      %2425 = vmatprep.mubr.bf16.mxu0 0
      %2426 = vmatmul.mubr.bf16.gmra.mxu0 %v2313
      %v2427 = vpop.f32.mrf.mxu0
      %v2428 = vadd.f32 0.0, %v2427
      %v2429 = vpop.f32.mrf.mxu0
      %v2430 = vpop.f32.mrf.mxu0
      %v2431 = vadd.f32 0.0, %v2430
      %v2432 = vpop.f32.mrf.mxu0
      %2433 = vmatprep.mubr.bf16.mxu0 0
      %2434 = vmatmul.mubr.bf16.gmra.mxu0 %v2316
      %v2435 = vpop.f32.mrf.mxu0
      %v2436 = vadd.f32 0.0, %v2435
      %v2437 = vpop.f32.mrf.mxu0
      %v2438 = vpop.f32.mrf.mxu0
      %v2439 = vadd.f32 0.0, %v2438
      %v2440 = vpop.f32.mrf.mxu0
      %2441 = vmatprep.mubr.bf16.mxu0 0
      %2442 = vmatmul.mubr.bf16.gmra.mxu0 %v2319
      %v2443 = vpop.f32.mrf.mxu0
      %v2444 = vadd.f32 0.0, %v2443
      %v2445 = vpop.f32.mrf.mxu0
      %v2446 = vpop.f32.mrf.mxu0
      %v2447 = vadd.f32 0.0, %v2446
      %v2448 = vpop.f32.mrf.mxu0
      %2449 = vmatprep.mubr.bf16.mxu0 0
      %2450 = vmatmul.mubr.bf16.gmra.mxu0 %v2322
      %v2451 = vpop.f32.mrf.mxu0
      %v2452 = vadd.f32 0.0, %v2451
      %v2453 = vpop.f32.mrf.mxu0
      %v2454 = vpop.f32.mrf.mxu0
      %v2455 = vadd.f32 0.0, %v2454
      %v2456 = vpop.f32.mrf.mxu0
      %2457 = vmatprep.mubr.bf16.mxu0 0
      %2458 = vmatmul.mubr.bf16.gmra.mxu0 %v2325
      %v2459 = vpop.f32.mrf.mxu0
      %v2460 = vadd.f32 0.0, %v2459
      %v2461 = vpop.f32.mrf.mxu0
      %v2462 = vpop.f32.mrf.mxu0
      %v2463 = vadd.f32 0.0, %v2462
      %v2464 = vpop.f32.mrf.mxu0
      %2465 = vmatprep.mubr.bf16.mxu0 0
      %2466 = vmatmul.mubr.bf16.gmra.mxu0 %v2328
      %v2467 = vpop.f32.mrf.mxu0
      %v2468 = vadd.f32 0.0, %v2467
      %v2469 = vpop.f32.mrf.mxu0
      %v2470 = vpop.f32.mrf.mxu0
      %v2471 = vadd.f32 0.0, %v2470
      %v2472 = vpop.f32.mrf.mxu0
      %2473 = vmatprep.mubr.bf16.mxu0 0
      %2474 = vmatmul.mubr.bf16.gmra.mxu0 %v2331
      %v2475 = vpop.f32.mrf.mxu0
      %v2476 = vadd.f32 0.0, %v2475
      %v2477 = vpop.f32.mrf.mxu0
      %v2478 = vpop.f32.mrf.mxu0
      %v2479 = vadd.f32 0.0, %v2478
      %v2480 = vpop.f32.mrf.mxu0
      %2481 = vmatprep.mubr.bf16.mxu0 0
      %2482 = vmatmul.mubr.bf16.gmra.mxu0 %v2334
      %v2483 = vpop.f32.mrf.mxu0
      %v2484 = vadd.f32 0.0, %v2483
      %v2485 = vpop.f32.mrf.mxu0
      %v2486 = vpop.f32.mrf.mxu0
      %v2487 = vadd.f32 0.0, %v2486
      %v2488 = vpop.f32.mrf.mxu0
      %2489 = vmatprep.mubr.bf16.mxu0 0
      %2490 = vmatmul.mubr.bf16.gmra.mxu0 %v2337
      %v2491 = vpop.f32.mrf.mxu0
      %v2492 = vadd.f32 0.0, %v2491
      %v2493 = vpop.f32.mrf.mxu0
      %v2494 = vpop.f32.mrf.mxu0
      %v2495 = vadd.f32 0.0, %v2494
      %v2496 = vpop.f32.mrf.mxu0
      %2497 = vmatprep.mubr.bf16.mxu0 0
      %2498 = vmatmul.mubr.bf16.gmra.mxu0 %v2340
      %v2499 = vpop.f32.mrf.mxu0
      %v2500 = vadd.f32 0.0, %v2499
      %v2501 = vpop.f32.mrf.mxu0
      %v2502 = vpop.f32.mrf.mxu0
      %v2503 = vadd.f32 0.0, %v2502
      %v2504 = vpop.f32.mrf.mxu0
      %2505 = vdwg.mxu0
      %v2506 = vadd.f32 %v2144, %v2380
      %v2507 = vadd.f32 %v2145, %v2383
      %v2508 = vadd.f32 %v2146, %v2388
      %v2509 = vadd.f32 %v2147, %v2391
      %v2510 = vadd.f32 %v2148, %v2396
      %v2511 = vadd.f32 %v2149, %v2399
      %v2512 = vadd.f32 %v2150, %v2404
      %v2513 = vadd.f32 %v2151, %v2407
      %v2514 = vadd.f32 %v2152, %v2412
      %v2515 = vadd.f32 %v2153, %v2415
      %v2516 = vadd.f32 %v2154, %v2420
      %v2517 = vadd.f32 %v2155, %v2423
      %v2518 = vadd.f32 %v2156, %v2428
      %v2519 = vadd.f32 %v2157, %v2431
      %v2520 = vadd.f32 %v2158, %v2436
      %v2521 = vadd.f32 %v2159, %v2439
      %v2522 = vadd.f32 %v2160, %v2444
      %v2523 = vadd.f32 %v2161, %v2447
      %v2524 = vadd.f32 %v2162, %v2452
      %v2525 = vadd.f32 %v2163, %v2455
      %v2526 = vadd.f32 %v2164, %v2460
      %v2527 = vadd.f32 %v2165, %v2463
      %v2528 = vadd.f32 %v2166, %v2468
      %v2529 = vadd.f32 %v2167, %v2471
      %v2530 = vadd.f32 %v2168, %v2476
      %v2531 = vadd.f32 %v2169, %v2479
      %v2532 = vadd.f32 %v2170, %v2484
      %v2533 = vadd.f32 %v2171, %v2487
      %v2534 = vadd.f32 %v2172, %v2492
      %v2535 = vadd.f32 %v2173, %v2495
      %v2536 = vadd.f32 %v2174, %v2500
      %v2537 = vadd.f32 %v2175, %v2503
      %v2538 = vld [vmem:[%s2179] sm:$0xf]
      %v2539 = vld [vmem:[%s2179 + $0x4] sm:$0xf]
      %v2540 = vld [vmem:[%s2179 + $0x8] sm:$0x1]
      %v2541 = vld [vmem:[%s2179 + $0xc] sm:$0xf]
      %v2542 = vld [vmem:[%s2179 + $0x10] sm:$0xf]
      %v2543 = vld [vmem:[%s2179 + $0x14] sm:$0x1]
      %v2544 = vld [vmem:[%s2179 + $0x18] sm:$0xf]
      %v2545 = vld [vmem:[%s2179 + $0x1c] sm:$0xf]
      %v2546 = vld [vmem:[%s2179 + $0x20] sm:$0x1]
      %v2547 = vld [vmem:[%s2179 + $0x24] sm:$0xf]
      %v2548 = vld [vmem:[%s2179 + $0x28] sm:$0xf]
      %v2549 = vld [vmem:[%s2179 + $0x2c] sm:$0x1]
      %v2550 = vld [vmem:[%s2179 + $0x30] sm:$0xf]
      %v2551 = vld [vmem:[%s2179 + $0x34] sm:$0xf]
      %v2552 = vld [vmem:[%s2179 + $0x38] sm:$0x1]
      %v2553 = vld [vmem:[%s2179 + $0x3c] sm:$0xf]
      %v2554 = vld [vmem:[%s2179 + $0x40] sm:$0xf]
      %v2555 = vld [vmem:[%s2179 + $0x44] sm:$0x1]
      %v2556 = vld [vmem:[%s2179 + $0x48] sm:$0xf]
      %v2557 = vld [vmem:[%s2179 + $0x4c] sm:$0xf]
      %v2558 = vld [vmem:[%s2179 + $0x50] sm:$0x1]
      %v2559 = vld [vmem:[%s2179 + $0x54] sm:$0xf]
      %v2560 = vld [vmem:[%s2179 + $0x58] sm:$0xf]
      %v2561 = vld [vmem:[%s2179 + $0x5c] sm:$0x1]
      %v2562 = vld [vmem:[%s2179 + $0x60] sm:$0xf]
      %v2563 = vld [vmem:[%s2179 + $0x64] sm:$0xf]
      %v2564 = vld [vmem:[%s2179 + $0x68] sm:$0x1]
      %v2565 = vld [vmem:[%s2179 + $0x6c] sm:$0xf]
      %v2566 = vld [vmem:[%s2179 + $0x70] sm:$0xf]
      %v2567 = vld [vmem:[%s2179 + $0x74] sm:$0x1]
      %v2568 = vld [vmem:[%s2179 + $0x78] sm:$0xf]
      %v2569 = vld [vmem:[%s2179 + $0x7c] sm:$0xf]
      %v2570 = vld [vmem:[%s2179 + $0x80] sm:$0x1]
      %v2571 = vld [vmem:[%s2179 + $0x84] sm:$0xf]
      %v2572 = vld [vmem:[%s2179 + $0x88] sm:$0xf]
      %v2573 = vld [vmem:[%s2179 + $0x8c] sm:$0x1]
      %v2574 = vld [vmem:[%s2179 + $0x90] sm:$0xf]
      %v2575 = vld [vmem:[%s2179 + $0x94] sm:$0xf]
      %v2576 = vld [vmem:[%s2179 + $0x98] sm:$0x1]
      %v2577 = vld [vmem:[%s2179 + $0x9c] sm:$0xf]
      %v2578 = vld [vmem:[%s2179 + $0xa0] sm:$0xf]
      %v2579 = vld [vmem:[%s2179 + $0xa4] sm:$0x1]
      %v2580 = vld [vmem:[%s2179 + $0xa8] sm:$0xf]
      %v2581 = vld [vmem:[%s2179 + $0xac] sm:$0xf]
      %v2582 = vld [vmem:[%s2179 + $0xb0] sm:$0x1]
      %v2583 = vld [vmem:[%s2179 + $0xb4] sm:$0xf]
      %v2584 = vld [vmem:[%s2179 + $0xb8] sm:$0xf]
      %v2585 = vld [vmem:[%s2179 + $0xbc] sm:$0x1]
      %v2587 = vshrl.u32 %v2538, 16
      %v2589 = vrot.slane %v2587, 4
      %v2590 = vshll.u32 %v2538, 16
      %v2592 = vrot.slane %v2590, 5
      %v2593 = vor.u32 %v2589, %v2592
      %v2594 = vrot.slane %v2593, 4
      %v2596 = vshll.u32 %v2539, 16
      %v2598 = vrot.slane %v2596, 5
      %v2599 = vsel %vm778, %v2594, %v2598
      %v2600 = vshrl.u32 %v2539, 16
      %v2602 = vrot.slane %v2600, 4
      %v2603 = vor.u32 %v2602, %v2598
      %v2604 = vrot.slane %v2603, 4
      %v2606 = vshll.u32 %v2540, 16
      %v2608 = vrot.slane %v2606, 5
      %v2609 = vsel %vm778, %v2604, %v2608
      %v2611 = vshrl.u32 %v2541, 16
      %v2613 = vrot.slane %v2611, 4
      %v2614 = vshll.u32 %v2541, 16
      %v2616 = vrot.slane %v2614, 5
      %v2617 = vor.u32 %v2613, %v2616
      %v2618 = vrot.slane %v2617, 4
      %v2620 = vshll.u32 %v2542, 16
      %v2622 = vrot.slane %v2620, 5
      %v2623 = vsel %vm778, %v2618, %v2622
      %v2624 = vshrl.u32 %v2542, 16
      %v2626 = vrot.slane %v2624, 4
      %v2627 = vor.u32 %v2626, %v2622
      %v2628 = vrot.slane %v2627, 4
      %v2630 = vshll.u32 %v2543, 16
      %v2632 = vrot.slane %v2630, 5
      %v2633 = vsel %vm778, %v2628, %v2632
      %v2635 = vshrl.u32 %v2544, 16
      %v2637 = vrot.slane %v2635, 4
      %v2638 = vshll.u32 %v2544, 16
      %v2640 = vrot.slane %v2638, 5
      %v2641 = vor.u32 %v2637, %v2640
      %v2642 = vrot.slane %v2641, 4
      %v2644 = vshll.u32 %v2545, 16
      %v2646 = vrot.slane %v2644, 5
      %v2647 = vsel %vm778, %v2642, %v2646
      %v2648 = vshrl.u32 %v2545, 16
      %v2650 = vrot.slane %v2648, 4
      %v2651 = vor.u32 %v2650, %v2646
      %v2652 = vrot.slane %v2651, 4
      %v2654 = vshll.u32 %v2546, 16
      %v2656 = vrot.slane %v2654, 5
      %v2657 = vsel %vm778, %v2652, %v2656
      %v2659 = vshrl.u32 %v2547, 16
      %v2661 = vrot.slane %v2659, 4
      %v2662 = vshll.u32 %v2547, 16
      %v2664 = vrot.slane %v2662, 5
      %v2665 = vor.u32 %v2661, %v2664
      %v2666 = vrot.slane %v2665, 4
      %v2668 = vshll.u32 %v2548, 16
      %v2670 = vrot.slane %v2668, 5
      %v2671 = vsel %vm778, %v2666, %v2670
      %v2672 = vshrl.u32 %v2548, 16
      %v2674 = vrot.slane %v2672, 4
      %v2675 = vor.u32 %v2674, %v2670
      %v2676 = vrot.slane %v2675, 4
      %v2678 = vshll.u32 %v2549, 16
      %v2680 = vrot.slane %v2678, 5
      %v2681 = vsel %vm778, %v2676, %v2680
      %v2683 = vshrl.u32 %v2550, 16
      %v2685 = vrot.slane %v2683, 4
      %v2686 = vshll.u32 %v2550, 16
      %v2688 = vrot.slane %v2686, 5
      %v2689 = vor.u32 %v2685, %v2688
      %v2690 = vrot.slane %v2689, 4
      %v2692 = vshll.u32 %v2551, 16
      %v2694 = vrot.slane %v2692, 5
      %v2695 = vsel %vm778, %v2690, %v2694
      %v2696 = vshrl.u32 %v2551, 16
      %v2698 = vrot.slane %v2696, 4
      %v2699 = vor.u32 %v2698, %v2694
      %v2700 = vrot.slane %v2699, 4
      %v2702 = vshll.u32 %v2552, 16
      %v2704 = vrot.slane %v2702, 5
      %v2705 = vsel %vm778, %v2700, %v2704
      %v2707 = vshrl.u32 %v2553, 16
      %v2709 = vrot.slane %v2707, 4
      %v2710 = vshll.u32 %v2553, 16
      %v2712 = vrot.slane %v2710, 5
      %v2713 = vor.u32 %v2709, %v2712
      %v2714 = vrot.slane %v2713, 4
      %v2716 = vshll.u32 %v2554, 16
      %v2718 = vrot.slane %v2716, 5
      %v2719 = vsel %vm778, %v2714, %v2718
      %v2720 = vshrl.u32 %v2554, 16
      %v2722 = vrot.slane %v2720, 4
      %v2723 = vor.u32 %v2722, %v2718
      %v2724 = vrot.slane %v2723, 4
      %v2726 = vshll.u32 %v2555, 16
      %v2728 = vrot.slane %v2726, 5
      %v2729 = vsel %vm778, %v2724, %v2728
      %v2731 = vshrl.u32 %v2556, 16
      %v2733 = vrot.slane %v2731, 4
      %v2734 = vshll.u32 %v2556, 16
      %v2736 = vrot.slane %v2734, 5
      %v2737 = vor.u32 %v2733, %v2736
      %v2738 = vrot.slane %v2737, 4
      %v2740 = vshll.u32 %v2557, 16
      %v2742 = vrot.slane %v2740, 5
      %v2743 = vsel %vm778, %v2738, %v2742
      %v2744 = vshrl.u32 %v2557, 16
      %v2746 = vrot.slane %v2744, 4
      %v2747 = vor.u32 %v2746, %v2742
      %v2748 = vrot.slane %v2747, 4
      %v2750 = vshll.u32 %v2558, 16
      %v2752 = vrot.slane %v2750, 5
      %v2753 = vsel %vm778, %v2748, %v2752
      %v2755 = vshrl.u32 %v2559, 16
      %v2757 = vrot.slane %v2755, 4
      %v2758 = vshll.u32 %v2559, 16
      %v2760 = vrot.slane %v2758, 5
      %v2761 = vor.u32 %v2757, %v2760
      %v2762 = vrot.slane %v2761, 4
      %v2764 = vshll.u32 %v2560, 16
      %v2766 = vrot.slane %v2764, 5
      %v2767 = vsel %vm778, %v2762, %v2766
      %v2768 = vshrl.u32 %v2560, 16
      %v2770 = vrot.slane %v2768, 4
      %v2771 = vor.u32 %v2770, %v2766
      %v2772 = vrot.slane %v2771, 4
      %v2774 = vshll.u32 %v2561, 16
      %v2776 = vrot.slane %v2774, 5
      %v2777 = vsel %vm778, %v2772, %v2776
      %v2779 = vshrl.u32 %v2562, 16
      %v2781 = vrot.slane %v2779, 4
      %v2782 = vshll.u32 %v2562, 16
      %v2784 = vrot.slane %v2782, 5
      %v2785 = vor.u32 %v2781, %v2784
      %v2786 = vrot.slane %v2785, 4
      %v2788 = vshll.u32 %v2563, 16
      %v2790 = vrot.slane %v2788, 5
      %v2791 = vsel %vm778, %v2786, %v2790
      %v2792 = vshrl.u32 %v2563, 16
      %v2794 = vrot.slane %v2792, 4
      %v2795 = vor.u32 %v2794, %v2790
      %v2796 = vrot.slane %v2795, 4
      %v2798 = vshll.u32 %v2564, 16
      %v2800 = vrot.slane %v2798, 5
      %v2801 = vsel %vm778, %v2796, %v2800
      %v2803 = vshrl.u32 %v2565, 16
      %v2805 = vrot.slane %v2803, 4
      %v2806 = vshll.u32 %v2565, 16
      %v2808 = vrot.slane %v2806, 5
      %v2809 = vor.u32 %v2805, %v2808
      %v2810 = vrot.slane %v2809, 4
      %v2812 = vshll.u32 %v2566, 16
      %v2814 = vrot.slane %v2812, 5
      %v2815 = vsel %vm778, %v2810, %v2814
      %v2816 = vshrl.u32 %v2566, 16
      %v2818 = vrot.slane %v2816, 4
      %v2819 = vor.u32 %v2818, %v2814
      %v2820 = vrot.slane %v2819, 4
      %v2822 = vshll.u32 %v2567, 16
      %v2824 = vrot.slane %v2822, 5
      %v2825 = vsel %vm778, %v2820, %v2824
      %v2827 = vshrl.u32 %v2568, 16
      %v2829 = vrot.slane %v2827, 4
      %v2830 = vshll.u32 %v2568, 16
      %v2832 = vrot.slane %v2830, 5
      %v2833 = vor.u32 %v2829, %v2832
      %v2834 = vrot.slane %v2833, 4
      %v2836 = vshll.u32 %v2569, 16
      %v2838 = vrot.slane %v2836, 5
      %v2839 = vsel %vm778, %v2834, %v2838
      %v2840 = vshrl.u32 %v2569, 16
      %v2842 = vrot.slane %v2840, 4
      %v2843 = vor.u32 %v2842, %v2838
      %v2844 = vrot.slane %v2843, 4
      %v2846 = vshll.u32 %v2570, 16
      %v2848 = vrot.slane %v2846, 5
      %v2849 = vsel %vm778, %v2844, %v2848
      %v2851 = vshrl.u32 %v2571, 16
      %v2853 = vrot.slane %v2851, 4
      %v2854 = vshll.u32 %v2571, 16
      %v2856 = vrot.slane %v2854, 5
      %v2857 = vor.u32 %v2853, %v2856
      %v2858 = vrot.slane %v2857, 4
      %v2860 = vshll.u32 %v2572, 16
      %v2862 = vrot.slane %v2860, 5
      %v2863 = vsel %vm778, %v2858, %v2862
      %v2864 = vshrl.u32 %v2572, 16
      %v2866 = vrot.slane %v2864, 4
      %v2867 = vor.u32 %v2866, %v2862
      %v2868 = vrot.slane %v2867, 4
      %v2870 = vshll.u32 %v2573, 16
      %v2872 = vrot.slane %v2870, 5
      %v2873 = vsel %vm778, %v2868, %v2872
      %v2875 = vshrl.u32 %v2574, 16
      %v2877 = vrot.slane %v2875, 4
      %v2878 = vshll.u32 %v2574, 16
      %v2880 = vrot.slane %v2878, 5
      %v2881 = vor.u32 %v2877, %v2880
      %v2882 = vrot.slane %v2881, 4
      %v2884 = vshll.u32 %v2575, 16
      %v2886 = vrot.slane %v2884, 5
      %v2887 = vsel %vm778, %v2882, %v2886
      %v2888 = vshrl.u32 %v2575, 16
      %v2890 = vrot.slane %v2888, 4
      %v2891 = vor.u32 %v2890, %v2886
      %v2892 = vrot.slane %v2891, 4
      %v2894 = vshll.u32 %v2576, 16
      %v2896 = vrot.slane %v2894, 5
      %v2897 = vsel %vm778, %v2892, %v2896
      %v2899 = vshrl.u32 %v2577, 16
      %v2901 = vrot.slane %v2899, 4
      %v2902 = vshll.u32 %v2577, 16
      %v2904 = vrot.slane %v2902, 5
      %v2905 = vor.u32 %v2901, %v2904
      %v2906 = vrot.slane %v2905, 4
      %v2908 = vshll.u32 %v2578, 16
      %v2910 = vrot.slane %v2908, 5
      %v2911 = vsel %vm778, %v2906, %v2910
      %v2912 = vshrl.u32 %v2578, 16
      %v2914 = vrot.slane %v2912, 4
      %v2915 = vor.u32 %v2914, %v2910
      %v2916 = vrot.slane %v2915, 4
      %v2918 = vshll.u32 %v2579, 16
      %v2920 = vrot.slane %v2918, 5
      %v2921 = vsel %vm778, %v2916, %v2920
      %v2923 = vshrl.u32 %v2580, 16
      %v2925 = vrot.slane %v2923, 4
      %v2926 = vshll.u32 %v2580, 16
      %v2928 = vrot.slane %v2926, 5
      %v2929 = vor.u32 %v2925, %v2928
      %v2930 = vrot.slane %v2929, 4
      %v2932 = vshll.u32 %v2581, 16
      %v2934 = vrot.slane %v2932, 5
      %v2935 = vsel %vm778, %v2930, %v2934
      %v2936 = vshrl.u32 %v2581, 16
      %v2938 = vrot.slane %v2936, 4
      %v2939 = vor.u32 %v2938, %v2934
      %v2940 = vrot.slane %v2939, 4
      %v2942 = vshll.u32 %v2582, 16
      %v2944 = vrot.slane %v2942, 5
      %v2945 = vsel %vm778, %v2940, %v2944
      %v2947 = vshrl.u32 %v2583, 16
      %v2949 = vrot.slane %v2947, 4
      %v2950 = vshll.u32 %v2583, 16
      %v2952 = vrot.slane %v2950, 5
      %v2953 = vor.u32 %v2949, %v2952
      %v2954 = vrot.slane %v2953, 4
      %v2956 = vshll.u32 %v2584, 16
      %v2958 = vrot.slane %v2956, 5
      %v2959 = vsel %vm778, %v2954, %v2958
      %v2960 = vshrl.u32 %v2584, 16
      %v2962 = vrot.slane %v2960, 4
      %v2963 = vor.u32 %v2962, %v2958
      %v2964 = vrot.slane %v2963, 4
      %v2966 = vshll.u32 %v2585, 16
      %v2968 = vrot.slane %v2966, 5
      %v2969 = vsel %vm778, %v2964, %v2968
      %s2970 = scalar_lea.vmem %s1, 16
      %v2971 = vld [vmem:[%s2970] sm:$0xf]
      %v2972 = vunpack.c.l.b16 %v2599
      %v2973 = vunpack.c.l.b16 %v2609
      %v2974 = vunpack.c.l.b16 %v2623
      %v2975 = vunpack.c.l.b16 %v2633
      %v2976 = vunpack.c.l.b16 %v2647
      %v2977 = vunpack.c.l.b16 %v2657
      %v2978 = vunpack.c.l.b16 %v2671
      %v2979 = vunpack.c.l.b16 %v2681
      %v2980 = vunpack.c.l.b16 %v2695
      %v2981 = vunpack.c.l.b16 %v2705
      %v2982 = vunpack.c.l.b16 %v2719
      %v2983 = vunpack.c.l.b16 %v2729
      %v2984 = vunpack.c.l.b16 %v2743
      %v2985 = vunpack.c.l.b16 %v2753
      %v2986 = vunpack.c.l.b16 %v2767
      %v2987 = vunpack.c.l.b16 %v2777
      %v2988 = vunpack.c.l.b16 %v2791
      %v2989 = vunpack.c.l.b16 %v2801
      %v2990 = vunpack.c.l.b16 %v2815
      %v2991 = vunpack.c.l.b16 %v2825
      %v2992 = vunpack.c.l.b16 %v2839
      %v2993 = vunpack.c.l.b16 %v2849
      %v2994 = vunpack.c.l.b16 %v2863
      %v2995 = vunpack.c.l.b16 %v2873
      %v2996 = vunpack.c.l.b16 %v2887
      %v2997 = vunpack.c.l.b16 %v2897
      %v2998 = vunpack.c.l.b16 %v2911
      %v2999 = vunpack.c.l.b16 %v2921
      %v3000 = vunpack.c.l.b16 %v2935
      %v3001 = vunpack.c.l.b16 %v2945
      %v3002 = vunpack.c.l.b16 %v2959
      %v3003 = vunpack.c.l.b16 %v2969
      %v3004 = vpack.c.b16 %v2973, %v2972
      %v3005 = vpack.c.b16 %v2975, %v2974
      %v3006 = vpack.c.b16 %v2977, %v2976
      %v3007 = vpack.c.b16 %v2979, %v2978
      %v3008 = vpack.c.b16 %v2981, %v2980
      %v3009 = vpack.c.b16 %v2983, %v2982
      %v3010 = vpack.c.b16 %v2985, %v2984
      %v3011 = vpack.c.b16 %v2987, %v2986
      %v3012 = vpack.c.b16 %v2989, %v2988
      %v3013 = vpack.c.b16 %v2991, %v2990
      %v3014 = vpack.c.b16 %v2993, %v2992
      %v3015 = vpack.c.b16 %v2995, %v2994
      %v3016 = vpack.c.b16 %v2997, %v2996
      %v3017 = vpack.c.b16 %v2999, %v2998
      %v3018 = vpack.c.b16 %v3001, %v3000
      %v3019 = vpack.c.b16 %v3003, %v3002
      %v3021 = vsel %vm1213, %v3004, 0
      %v3024 = vsel %vm1213, %v3005, 0
      %v3027 = vsel %vm1213, %v3006, 0
      %v3030 = vsel %vm1213, %v3007, 0
      %v3033 = vsel %vm1213, %v3008, 0
      %v3036 = vsel %vm1213, %v3009, 0
      %v3039 = vsel %vm1213, %v3010, 0
      %v3042 = vsel %vm1213, %v3011, 0
      %v3045 = vsel %vm1213, %v3012, 0
      %v3048 = vsel %vm1213, %v3013, 0
      %v3051 = vsel %vm1213, %v3014, 0
      %v3054 = vsel %vm1213, %v3015, 0
      %v3057 = vsel %vm1213, %v3016, 0
      %v3060 = vsel %vm1213, %v3017, 0
      %v3063 = vsel %vm1213, %v3018, 0
      %v3066 = vsel %vm1213, %v3019, 0
      %v3069 = vsel %vm1262, %v2971, 0
      %3071 = vmatprep.subr.bf16.mxu0 0
      %3072 = vmatpush1.bf16.msra.mxu0 0
      %3073 = vmatprep.subr.bf16.mxu0 0
      %3074 = vmatpush1.bf16.msra.mxu0 0
      %3075 = vmatprep.subr.bf16.mxu0 0
      %3076 = vmatpush1.bf16.msra.mxu0 0
      %3077 = vmatprep.subr.bf16.mxu0 0
      %3078 = vmatpush1.bf16.msra.mxu0 0
      %3079 = vmatprep.subr.bf16.mxu0 0
      %3080 = vmatpush1.bf16.msra.mxu0 0
      %3081 = vmatprep.subr.bf16.mxu0 0
      %3082 = vmatpush1.bf16.msra.mxu0 0
      %3083 = vmatprep.subr.bf16.mxu0 0
      %3084 = vmatpush1.bf16.msra.mxu0 0
      %3085 = vmatprep.subr.bf16.mxu0 0
      %3086 = vmatpush1.bf16.msra.mxu0 %v3069
      %3087 = vmatprep.subr.bf16.mxu0 0
      %3088 = vmatpush2.bf16.msra.mxu0 0
      %3089 = vmatprep.subr.bf16.mxu0 0
      %3090 = vmatpush2.bf16.msra.mxu0 0
      %3091 = vmatprep.subr.bf16.mxu0 0
      %3092 = vmatpush2.bf16.msra.mxu0 0
      %3093 = vmatprep.subr.bf16.mxu0 0
      %3094 = vmatpush2.bf16.msra.mxu0 0
      %3095 = vmatprep.subr.bf16.mxu0 0
      %3096 = vmatpush2.bf16.msra.mxu0 0
      %3097 = vmatprep.subr.bf16.mxu0 0
      %3098 = vmatpush2.bf16.msra.mxu0 0
      %3099 = vmatprep.subr.bf16.mxu0 0
      %3100 = vmatpush2.bf16.msra.mxu0 0
      %3101 = vmatprep.subr.bf16.mxu0 0
      %3102 = vmatpush2.bf16.msra.mxu0 0
      %3103 = vmatprep.mubr.bf16.mxu0 0
      %3104 = vmatmul.mubr.bf16.gmra.mxu0 %v3021
      %v3105 = vpop.f32.mrf.mxu0
      %v3106 = vadd.f32 0.0, %v3105
      %v3107 = vpop.f32.mrf.mxu0
      %v3108 = vpop.f32.mrf.mxu0
      %v3109 = vadd.f32 0.0, %v3108
      %v3110 = vpop.f32.mrf.mxu0
      %3111 = vmatprep.mubr.bf16.mxu0 0
      %3112 = vmatmul.mubr.bf16.gmra.mxu0 %v3024
      %v3113 = vpop.f32.mrf.mxu0
      %v3114 = vadd.f32 0.0, %v3113
      %v3115 = vpop.f32.mrf.mxu0
      %v3116 = vpop.f32.mrf.mxu0
      %v3117 = vadd.f32 0.0, %v3116
      %v3118 = vpop.f32.mrf.mxu0
      %3119 = vmatprep.mubr.bf16.mxu0 0
      %3120 = vmatmul.mubr.bf16.gmra.mxu0 %v3027
      %v3121 = vpop.f32.mrf.mxu0
      %v3122 = vadd.f32 0.0, %v3121
      %v3123 = vpop.f32.mrf.mxu0
      %v3124 = vpop.f32.mrf.mxu0
      %v3125 = vadd.f32 0.0, %v3124
      %v3126 = vpop.f32.mrf.mxu0
      %3127 = vmatprep.mubr.bf16.mxu0 0
      %3128 = vmatmul.mubr.bf16.gmra.mxu0 %v3030
      %v3129 = vpop.f32.mrf.mxu0
      %v3130 = vadd.f32 0.0, %v3129
      %v3131 = vpop.f32.mrf.mxu0
      %v3132 = vpop.f32.mrf.mxu0
      %v3133 = vadd.f32 0.0, %v3132
      %v3134 = vpop.f32.mrf.mxu0
      %3135 = vmatprep.mubr.bf16.mxu0 0
      %3136 = vmatmul.mubr.bf16.gmra.mxu0 %v3033
      %v3137 = vpop.f32.mrf.mxu0
      %v3138 = vadd.f32 0.0, %v3137
      %v3139 = vpop.f32.mrf.mxu0
      %v3140 = vpop.f32.mrf.mxu0
      %v3141 = vadd.f32 0.0, %v3140
      %v3142 = vpop.f32.mrf.mxu0
      %3143 = vmatprep.mubr.bf16.mxu0 0
      %3144 = vmatmul.mubr.bf16.gmra.mxu0 %v3036
      %v3145 = vpop.f32.mrf.mxu0
      %v3146 = vadd.f32 0.0, %v3145
      %v3147 = vpop.f32.mrf.mxu0
      %v3148 = vpop.f32.mrf.mxu0
      %v3149 = vadd.f32 0.0, %v3148
      %v3150 = vpop.f32.mrf.mxu0
      %3151 = vmatprep.mubr.bf16.mxu0 0
      %3152 = vmatmul.mubr.bf16.gmra.mxu0 %v3039
      %v3153 = vpop.f32.mrf.mxu0
      %v3154 = vadd.f32 0.0, %v3153
      %v3155 = vpop.f32.mrf.mxu0
      %v3156 = vpop.f32.mrf.mxu0
      %v3157 = vadd.f32 0.0, %v3156
      %v3158 = vpop.f32.mrf.mxu0
      %3159 = vmatprep.mubr.bf16.mxu0 0
      %3160 = vmatmul.mubr.bf16.gmra.mxu0 %v3042
      %v3161 = vpop.f32.mrf.mxu0
      %v3162 = vadd.f32 0.0, %v3161
      %v3163 = vpop.f32.mrf.mxu0
      %v3164 = vpop.f32.mrf.mxu0
      %v3165 = vadd.f32 0.0, %v3164
      %v3166 = vpop.f32.mrf.mxu0
      %3167 = vmatprep.mubr.bf16.mxu0 0
      %3168 = vmatmul.mubr.bf16.gmra.mxu0 %v3045
      %v3169 = vpop.f32.mrf.mxu0
      %v3170 = vadd.f32 0.0, %v3169
      %v3171 = vpop.f32.mrf.mxu0
      %v3172 = vpop.f32.mrf.mxu0
      %v3173 = vadd.f32 0.0, %v3172
      %v3174 = vpop.f32.mrf.mxu0
      %3175 = vmatprep.mubr.bf16.mxu0 0
      %3176 = vmatmul.mubr.bf16.gmra.mxu0 %v3048
      %v3177 = vpop.f32.mrf.mxu0
      %v3178 = vadd.f32 0.0, %v3177
      %v3179 = vpop.f32.mrf.mxu0
      %v3180 = vpop.f32.mrf.mxu0
      %v3181 = vadd.f32 0.0, %v3180
      %v3182 = vpop.f32.mrf.mxu0
      %3183 = vmatprep.mubr.bf16.mxu0 0
      %3184 = vmatmul.mubr.bf16.gmra.mxu0 %v3051
      %v3185 = vpop.f32.mrf.mxu0
      %v3186 = vadd.f32 0.0, %v3185
      %v3187 = vpop.f32.mrf.mxu0
      %v3188 = vpop.f32.mrf.mxu0
      %v3189 = vadd.f32 0.0, %v3188
      %v3190 = vpop.f32.mrf.mxu0
      %3191 = vmatprep.mubr.bf16.mxu0 0
      %3192 = vmatmul.mubr.bf16.gmra.mxu0 %v3054
      %v3193 = vpop.f32.mrf.mxu0
      %v3194 = vadd.f32 0.0, %v3193
      %v3195 = vpop.f32.mrf.mxu0
      %v3196 = vpop.f32.mrf.mxu0
      %v3197 = vadd.f32 0.0, %v3196
      %v3198 = vpop.f32.mrf.mxu0
      %3199 = vmatprep.mubr.bf16.mxu0 0
      %3200 = vmatmul.mubr.bf16.gmra.mxu0 %v3057
      %v3201 = vpop.f32.mrf.mxu0
      %v3202 = vadd.f32 0.0, %v3201
      %v3203 = vpop.f32.mrf.mxu0
      %v3204 = vpop.f32.mrf.mxu0
      %v3205 = vadd.f32 0.0, %v3204
      %v3206 = vpop.f32.mrf.mxu0
      %3207 = vmatprep.mubr.bf16.mxu0 0
      %3208 = vmatmul.mubr.bf16.gmra.mxu0 %v3060
      %v3209 = vpop.f32.mrf.mxu0
      %v3210 = vadd.f32 0.0, %v3209
      %v3211 = vpop.f32.mrf.mxu0
      %v3212 = vpop.f32.mrf.mxu0
      %v3213 = vadd.f32 0.0, %v3212
      %v3214 = vpop.f32.mrf.mxu0
      %3215 = vmatprep.mubr.bf16.mxu0 0
      %3216 = vmatmul.mubr.bf16.gmra.mxu0 %v3063
      %v3217 = vpop.f32.mrf.mxu0
      %v3218 = vadd.f32 0.0, %v3217
      %v3219 = vpop.f32.mrf.mxu0
      %v3220 = vpop.f32.mrf.mxu0
      %v3221 = vadd.f32 0.0, %v3220
      %v3222 = vpop.f32.mrf.mxu0
      %3223 = vmatprep.mubr.bf16.mxu0 0
      %3224 = vmatmul.mubr.bf16.gmra.mxu0 %v3066
      %v3225 = vpop.f32.mrf.mxu0
      %v3226 = vadd.f32 0.0, %v3225
      %v3227 = vpop.f32.mrf.mxu0
      %v3228 = vpop.f32.mrf.mxu0
      %v3229 = vadd.f32 0.0, %v3228
      %v3230 = vpop.f32.mrf.mxu0
      %3231 = vdwg.mxu0
      %v3232 = vadd.f32 %v2506, %v3106
      %v3233 = vadd.f32 %v2507, %v3109
      %v3234 = vadd.f32 %v2508, %v3114
      %v3235 = vadd.f32 %v2509, %v3117
      %v3236 = vadd.f32 %v2510, %v3122
      %v3237 = vadd.f32 %v2511, %v3125
      %v3238 = vadd.f32 %v2512, %v3130
      %v3239 = vadd.f32 %v2513, %v3133
      %v3240 = vadd.f32 %v2514, %v3138
      %v3241 = vadd.f32 %v2515, %v3141
      %v3242 = vadd.f32 %v2516, %v3146
      %v3243 = vadd.f32 %v2517, %v3149
      %v3244 = vadd.f32 %v2518, %v3154
      %v3245 = vadd.f32 %v2519, %v3157
      %v3246 = vadd.f32 %v2520, %v3162
      %v3247 = vadd.f32 %v2521, %v3165
      %v3248 = vadd.f32 %v2522, %v3170
      %v3249 = vadd.f32 %v2523, %v3173
      %v3250 = vadd.f32 %v2524, %v3178
      %v3251 = vadd.f32 %v2525, %v3181
      %v3252 = vadd.f32 %v2526, %v3186
      %v3253 = vadd.f32 %v2527, %v3189
      %v3254 = vadd.f32 %v2528, %v3194
      %v3255 = vadd.f32 %v2529, %v3197
      %v3256 = vadd.f32 %v2530, %v3202
      %v3257 = vadd.f32 %v2531, %v3205
      %v3258 = vadd.f32 %v2532, %v3210
      %v3259 = vadd.f32 %v2533, %v3213
      %v3260 = vadd.f32 %v2534, %v3218
      %v3261 = vadd.f32 %v2535, %v3221
      %v3262 = vadd.f32 %v2536, %v3226
      %v3263 = vadd.f32 %v2537, %v3229
      %v3264 = vld [vmem:[%s2179] sm:$0xe]
      %v3265 = vld [vmem:[%s2179 + $0xc] sm:$0xe]
      %v3266 = vld [vmem:[%s2179 + $0x18] sm:$0xe]
      %v3267 = vld [vmem:[%s2179 + $0x24] sm:$0xe]
      %v3268 = vld [vmem:[%s2179 + $0x30] sm:$0xe]
      %v3269 = vld [vmem:[%s2179 + $0x3c] sm:$0xe]
      %v3270 = vld [vmem:[%s2179 + $0x48] sm:$0xe]
      %v3271 = vld [vmem:[%s2179 + $0x54] sm:$0xe]
      %v3272 = vld [vmem:[%s2179 + $0x60] sm:$0xe]
      %v3273 = vld [vmem:[%s2179 + $0x6c] sm:$0xe]
      %v3274 = vld [vmem:[%s2179 + $0x78] sm:$0xe]
      %v3275 = vld [vmem:[%s2179 + $0x84] sm:$0xe]
      %v3276 = vld [vmem:[%s2179 + $0x90] sm:$0xe]
      %v3277 = vld [vmem:[%s2179 + $0x9c] sm:$0xe]
      %v3278 = vld [vmem:[%s2179 + $0xa8] sm:$0xe]
      %v3279 = vld [vmem:[%s2179 + $0xb4] sm:$0xe]
      %v3328 = vrot.slane %v3264, 5
      %v3329 = vrot.slane %v3328, 4
      %v3330 = vrot.slane %v2539, 5
      %v3331 = vsel %vm1769, %v3329, %v3330
      %v3332 = vrot.slane %v3330, 4
      %v3333 = vrot.slane %v2540, 5
      %v3334 = vsel %vm1769, %v3332, %v3333
      %v3335 = vrot.slane %v3265, 5
      %v3336 = vrot.slane %v3335, 4
      %v3337 = vrot.slane %v2542, 5
      %v3338 = vsel %vm1769, %v3336, %v3337
      %v3339 = vrot.slane %v3337, 4
      %v3340 = vrot.slane %v2543, 5
      %v3341 = vsel %vm1769, %v3339, %v3340
      %v3342 = vrot.slane %v3266, 5
      %v3343 = vrot.slane %v3342, 4
      %v3344 = vrot.slane %v2545, 5
      %v3345 = vsel %vm1769, %v3343, %v3344
      %v3346 = vrot.slane %v3344, 4
      %v3347 = vrot.slane %v2546, 5
      %v3348 = vsel %vm1769, %v3346, %v3347
      %v3349 = vrot.slane %v3267, 5
      %v3350 = vrot.slane %v3349, 4
      %v3351 = vrot.slane %v2548, 5
      %v3352 = vsel %vm1769, %v3350, %v3351
      %v3353 = vrot.slane %v3351, 4
      %v3354 = vrot.slane %v2549, 5
      %v3355 = vsel %vm1769, %v3353, %v3354
      %v3356 = vrot.slane %v3268, 5
      %v3357 = vrot.slane %v3356, 4
      %v3358 = vrot.slane %v2551, 5
      %v3359 = vsel %vm1769, %v3357, %v3358
      %v3360 = vrot.slane %v3358, 4
      %v3361 = vrot.slane %v2552, 5
      %v3362 = vsel %vm1769, %v3360, %v3361
      %v3363 = vrot.slane %v3269, 5
      %v3364 = vrot.slane %v3363, 4
      %v3365 = vrot.slane %v2554, 5
      %v3366 = vsel %vm1769, %v3364, %v3365
      %v3367 = vrot.slane %v3365, 4
      %v3368 = vrot.slane %v2555, 5
      %v3369 = vsel %vm1769, %v3367, %v3368
      %v3370 = vrot.slane %v3270, 5
      %v3371 = vrot.slane %v3370, 4
      %v3372 = vrot.slane %v2557, 5
      %v3373 = vsel %vm1769, %v3371, %v3372
      %v3374 = vrot.slane %v3372, 4
      %v3375 = vrot.slane %v2558, 5
      %v3376 = vsel %vm1769, %v3374, %v3375
      %v3377 = vrot.slane %v3271, 5
      %v3378 = vrot.slane %v3377, 4
      %v3379 = vrot.slane %v2560, 5
      %v3380 = vsel %vm1769, %v3378, %v3379
      %v3381 = vrot.slane %v3379, 4
      %v3382 = vrot.slane %v2561, 5
      %v3383 = vsel %vm1769, %v3381, %v3382
      %v3384 = vrot.slane %v3272, 5
      %v3385 = vrot.slane %v3384, 4
      %v3386 = vrot.slane %v2563, 5
      %v3387 = vsel %vm1769, %v3385, %v3386
      %v3388 = vrot.slane %v3386, 4
      %v3389 = vrot.slane %v2564, 5
      %v3390 = vsel %vm1769, %v3388, %v3389
      %v3391 = vrot.slane %v3273, 5
      %v3392 = vrot.slane %v3391, 4
      %v3393 = vrot.slane %v2566, 5
      %v3394 = vsel %vm1769, %v3392, %v3393
      %v3395 = vrot.slane %v3393, 4
      %v3396 = vrot.slane %v2567, 5
      %v3397 = vsel %vm1769, %v3395, %v3396
      %v3398 = vrot.slane %v3274, 5
      %v3399 = vrot.slane %v3398, 4
      %v3400 = vrot.slane %v2569, 5
      %v3401 = vsel %vm1769, %v3399, %v3400
      %v3402 = vrot.slane %v3400, 4
      %v3403 = vrot.slane %v2570, 5
      %v3404 = vsel %vm1769, %v3402, %v3403
      %v3405 = vrot.slane %v3275, 5
      %v3406 = vrot.slane %v3405, 4
      %v3407 = vrot.slane %v2572, 5
      %v3408 = vsel %vm1769, %v3406, %v3407
      %v3409 = vrot.slane %v3407, 4
      %v3410 = vrot.slane %v2573, 5
      %v3411 = vsel %vm1769, %v3409, %v3410
      %v3412 = vrot.slane %v3276, 5
      %v3413 = vrot.slane %v3412, 4
      %v3414 = vrot.slane %v2575, 5
      %v3415 = vsel %vm1769, %v3413, %v3414
      %v3416 = vrot.slane %v3414, 4
      %v3417 = vrot.slane %v2576, 5
      %v3418 = vsel %vm1769, %v3416, %v3417
      %v3419 = vrot.slane %v3277, 5
      %v3420 = vrot.slane %v3419, 4
      %v3421 = vrot.slane %v2578, 5
      %v3422 = vsel %vm1769, %v3420, %v3421
      %v3423 = vrot.slane %v3421, 4
      %v3424 = vrot.slane %v2579, 5
      %v3425 = vsel %vm1769, %v3423, %v3424
      %v3426 = vrot.slane %v3278, 5
      %v3427 = vrot.slane %v3426, 4
      %v3428 = vrot.slane %v2581, 5
      %v3429 = vsel %vm1769, %v3427, %v3428
      %v3430 = vrot.slane %v3428, 4
      %v3431 = vrot.slane %v2582, 5
      %v3432 = vsel %vm1769, %v3430, %v3431
      %v3433 = vrot.slane %v3279, 5
      %v3434 = vrot.slane %v3433, 4
      %v3435 = vrot.slane %v2584, 5
      %v3436 = vsel %vm1769, %v3434, %v3435
      %v3437 = vrot.slane %v3435, 4
      %v3438 = vrot.slane %v2585, 5
      %v3439 = vsel %vm1769, %v3437, %v3438
      %s3440 = scalar_lea.vmem %s1, 20
      %v3441 = vld [vmem:[%s3440] sm:$0xf]
      %v3442 = vunpack.c.l.b16 %v3331
      %v3443 = vunpack.c.l.b16 %v3334
      %v3444 = vunpack.c.l.b16 %v3338
      %v3445 = vunpack.c.l.b16 %v3341
      %v3446 = vunpack.c.l.b16 %v3345
      %v3447 = vunpack.c.l.b16 %v3348
      %v3448 = vunpack.c.l.b16 %v3352
      %v3449 = vunpack.c.l.b16 %v3355
      %v3450 = vunpack.c.l.b16 %v3359
      %v3451 = vunpack.c.l.b16 %v3362
      %v3452 = vunpack.c.l.b16 %v3366
      %v3453 = vunpack.c.l.b16 %v3369
      %v3454 = vunpack.c.l.b16 %v3373
      %v3455 = vunpack.c.l.b16 %v3376
      %v3456 = vunpack.c.l.b16 %v3380
      %v3457 = vunpack.c.l.b16 %v3383
      %v3458 = vunpack.c.l.b16 %v3387
      %v3459 = vunpack.c.l.b16 %v3390
      %v3460 = vunpack.c.l.b16 %v3394
      %v3461 = vunpack.c.l.b16 %v3397
      %v3462 = vunpack.c.l.b16 %v3401
      %v3463 = vunpack.c.l.b16 %v3404
      %v3464 = vunpack.c.l.b16 %v3408
      %v3465 = vunpack.c.l.b16 %v3411
      %v3466 = vunpack.c.l.b16 %v3415
      %v3467 = vunpack.c.l.b16 %v3418
      %v3468 = vunpack.c.l.b16 %v3422
      %v3469 = vunpack.c.l.b16 %v3425
      %v3470 = vunpack.c.l.b16 %v3429
      %v3471 = vunpack.c.l.b16 %v3432
      %v3472 = vunpack.c.l.b16 %v3436
      %v3473 = vunpack.c.l.b16 %v3439
      %v3474 = vpack.c.b16 %v3443, %v3442
      %v3475 = vpack.c.b16 %v3445, %v3444
      %v3476 = vpack.c.b16 %v3447, %v3446
      %v3477 = vpack.c.b16 %v3449, %v3448
      %v3478 = vpack.c.b16 %v3451, %v3450
      %v3479 = vpack.c.b16 %v3453, %v3452
      %v3480 = vpack.c.b16 %v3455, %v3454
      %v3481 = vpack.c.b16 %v3457, %v3456
      %v3482 = vpack.c.b16 %v3459, %v3458
      %v3483 = vpack.c.b16 %v3461, %v3460
      %v3484 = vpack.c.b16 %v3463, %v3462
      %v3485 = vpack.c.b16 %v3465, %v3464
      %v3486 = vpack.c.b16 %v3467, %v3466
      %v3487 = vpack.c.b16 %v3469, %v3468
      %v3488 = vpack.c.b16 %v3471, %v3470
      %v3489 = vpack.c.b16 %v3473, %v3472
      %v3491 = vsel %vm1213, %v3474, 0
      %v3494 = vsel %vm1213, %v3475, 0
      %v3497 = vsel %vm1213, %v3476, 0
      %v3500 = vsel %vm1213, %v3477, 0
      %v3503 = vsel %vm1213, %v3478, 0
      %v3506 = vsel %vm1213, %v3479, 0
      %v3509 = vsel %vm1213, %v3480, 0
      %v3512 = vsel %vm1213, %v3481, 0
      %v3515 = vsel %vm1213, %v3482, 0
      %v3518 = vsel %vm1213, %v3483, 0
      %v3521 = vsel %vm1213, %v3484, 0
      %v3524 = vsel %vm1213, %v3485, 0
      %v3527 = vsel %vm1213, %v3486, 0
      %v3530 = vsel %vm1213, %v3487, 0
      %v3533 = vsel %vm1213, %v3488, 0
      %v3536 = vsel %vm1213, %v3489, 0
      %v3539 = vsel %vm1262, %v3441, 0
      %3541 = vmatprep.subr.bf16.mxu0 0
      %3542 = vmatpush1.bf16.msra.mxu0 0
      %3543 = vmatprep.subr.bf16.mxu0 0
      %3544 = vmatpush1.bf16.msra.mxu0 0
      %3545 = vmatprep.subr.bf16.mxu0 0
      %3546 = vmatpush1.bf16.msra.mxu0 0
      %3547 = vmatprep.subr.bf16.mxu0 0
      %3548 = vmatpush1.bf16.msra.mxu0 0
      %3549 = vmatprep.subr.bf16.mxu0 0
      %3550 = vmatpush1.bf16.msra.mxu0 0
      %3551 = vmatprep.subr.bf16.mxu0 0
      %3552 = vmatpush1.bf16.msra.mxu0 0
      %3553 = vmatprep.subr.bf16.mxu0 0
      %3554 = vmatpush1.bf16.msra.mxu0 0
      %3555 = vmatprep.subr.bf16.mxu0 0
      %3556 = vmatpush1.bf16.msra.mxu0 %v3539
      %3557 = vmatprep.subr.bf16.mxu0 0
      %3558 = vmatpush2.bf16.msra.mxu0 0
      %3559 = vmatprep.subr.bf16.mxu0 0
      %3560 = vmatpush2.bf16.msra.mxu0 0
      %3561 = vmatprep.subr.bf16.mxu0 0
      %3562 = vmatpush2.bf16.msra.mxu0 0
      %3563 = vmatprep.subr.bf16.mxu0 0
      %3564 = vmatpush2.bf16.msra.mxu0 0
      %3565 = vmatprep.subr.bf16.mxu0 0
      %3566 = vmatpush2.bf16.msra.mxu0 0
      %3567 = vmatprep.subr.bf16.mxu0 0
      %3568 = vmatpush2.bf16.msra.mxu0 0
      %3569 = vmatprep.subr.bf16.mxu0 0
      %3570 = vmatpush2.bf16.msra.mxu0 0
      %3571 = vmatprep.subr.bf16.mxu0 0
      %3572 = vmatpush2.bf16.msra.mxu0 0
      %3573 = vmatprep.mubr.bf16.mxu0 0
      %3574 = vmatmul.mubr.bf16.gmra.mxu0 %v3491
      %v3575 = vpop.f32.mrf.mxu0
      %v3576 = vadd.f32 0.0, %v3575
      %v3577 = vpop.f32.mrf.mxu0
      %v3578 = vpop.f32.mrf.mxu0
      %v3579 = vadd.f32 0.0, %v3578
      %v3580 = vpop.f32.mrf.mxu0
      %3581 = vmatprep.mubr.bf16.mxu0 0
      %3582 = vmatmul.mubr.bf16.gmra.mxu0 %v3494
      %v3583 = vpop.f32.mrf.mxu0
      %v3584 = vadd.f32 0.0, %v3583
      %v3585 = vpop.f32.mrf.mxu0
      %v3586 = vpop.f32.mrf.mxu0
      %v3587 = vadd.f32 0.0, %v3586
      %v3588 = vpop.f32.mrf.mxu0
      %3589 = vmatprep.mubr.bf16.mxu0 0
      %3590 = vmatmul.mubr.bf16.gmra.mxu0 %v3497
      %v3591 = vpop.f32.mrf.mxu0
      %v3592 = vadd.f32 0.0, %v3591
      %v3593 = vpop.f32.mrf.mxu0
      %v3594 = vpop.f32.mrf.mxu0
      %v3595 = vadd.f32 0.0, %v3594
      %v3596 = vpop.f32.mrf.mxu0
      %3597 = vmatprep.mubr.bf16.mxu0 0
      %3598 = vmatmul.mubr.bf16.gmra.mxu0 %v3500
      %v3599 = vpop.f32.mrf.mxu0
      %v3600 = vadd.f32 0.0, %v3599
      %v3601 = vpop.f32.mrf.mxu0
      %v3602 = vpop.f32.mrf.mxu0
      %v3603 = vadd.f32 0.0, %v3602
      %v3604 = vpop.f32.mrf.mxu0
      %3605 = vmatprep.mubr.bf16.mxu0 0
      %3606 = vmatmul.mubr.bf16.gmra.mxu0 %v3503
      %v3607 = vpop.f32.mrf.mxu0
      %v3608 = vadd.f32 0.0, %v3607
      %v3609 = vpop.f32.mrf.mxu0
      %v3610 = vpop.f32.mrf.mxu0
      %v3611 = vadd.f32 0.0, %v3610
      %v3612 = vpop.f32.mrf.mxu0
      %3613 = vmatprep.mubr.bf16.mxu0 0
      %3614 = vmatmul.mubr.bf16.gmra.mxu0 %v3506
      %v3615 = vpop.f32.mrf.mxu0
      %v3616 = vadd.f32 0.0, %v3615
      %v3617 = vpop.f32.mrf.mxu0
      %v3618 = vpop.f32.mrf.mxu0
      %v3619 = vadd.f32 0.0, %v3618
      %v3620 = vpop.f32.mrf.mxu0
      %3621 = vmatprep.mubr.bf16.mxu0 0
      %3622 = vmatmul.mubr.bf16.gmra.mxu0 %v3509
      %v3623 = vpop.f32.mrf.mxu0
      %v3624 = vadd.f32 0.0, %v3623
      %v3625 = vpop.f32.mrf.mxu0
      %v3626 = vpop.f32.mrf.mxu0
      %v3627 = vadd.f32 0.0, %v3626
      %v3628 = vpop.f32.mrf.mxu0
      %3629 = vmatprep.mubr.bf16.mxu0 0
      %3630 = vmatmul.mubr.bf16.gmra.mxu0 %v3512
      %v3631 = vpop.f32.mrf.mxu0
      %v3632 = vadd.f32 0.0, %v3631
      %v3633 = vpop.f32.mrf.mxu0
      %v3634 = vpop.f32.mrf.mxu0
      %v3635 = vadd.f32 0.0, %v3634
      %v3636 = vpop.f32.mrf.mxu0
      %3637 = vmatprep.mubr.bf16.mxu0 0
      %3638 = vmatmul.mubr.bf16.gmra.mxu0 %v3515
      %v3639 = vpop.f32.mrf.mxu0
      %v3640 = vadd.f32 0.0, %v3639
      %v3641 = vpop.f32.mrf.mxu0
      %v3642 = vpop.f32.mrf.mxu0
      %v3643 = vadd.f32 0.0, %v3642
      %v3644 = vpop.f32.mrf.mxu0
      %3645 = vmatprep.mubr.bf16.mxu0 0
      %3646 = vmatmul.mubr.bf16.gmra.mxu0 %v3518
      %v3647 = vpop.f32.mrf.mxu0
      %v3648 = vadd.f32 0.0, %v3647
      %v3649 = vpop.f32.mrf.mxu0
      %v3650 = vpop.f32.mrf.mxu0
      %v3651 = vadd.f32 0.0, %v3650
      %v3652 = vpop.f32.mrf.mxu0
      %3653 = vmatprep.mubr.bf16.mxu0 0
      %3654 = vmatmul.mubr.bf16.gmra.mxu0 %v3521
      %v3655 = vpop.f32.mrf.mxu0
      %v3656 = vadd.f32 0.0, %v3655
      %v3657 = vpop.f32.mrf.mxu0
      %v3658 = vpop.f32.mrf.mxu0
      %v3659 = vadd.f32 0.0, %v3658
      %v3660 = vpop.f32.mrf.mxu0
      %3661 = vmatprep.mubr.bf16.mxu0 0
      %3662 = vmatmul.mubr.bf16.gmra.mxu0 %v3524
      %v3663 = vpop.f32.mrf.mxu0
      %v3664 = vadd.f32 0.0, %v3663
      %v3665 = vpop.f32.mrf.mxu0
      %v3666 = vpop.f32.mrf.mxu0
      %v3667 = vadd.f32 0.0, %v3666
      %v3668 = vpop.f32.mrf.mxu0
      %3669 = vmatprep.mubr.bf16.mxu0 0
      %3670 = vmatmul.mubr.bf16.gmra.mxu0 %v3527
      %v3671 = vpop.f32.mrf.mxu0
      %v3672 = vadd.f32 0.0, %v3671
      %v3673 = vpop.f32.mrf.mxu0
      %v3674 = vpop.f32.mrf.mxu0
      %v3675 = vadd.f32 0.0, %v3674
      %v3676 = vpop.f32.mrf.mxu0
      %3677 = vmatprep.mubr.bf16.mxu0 0
      %3678 = vmatmul.mubr.bf16.gmra.mxu0 %v3530
      %v3679 = vpop.f32.mrf.mxu0
      %v3680 = vadd.f32 0.0, %v3679
      %v3681 = vpop.f32.mrf.mxu0
      %v3682 = vpop.f32.mrf.mxu0
      %v3683 = vadd.f32 0.0, %v3682
      %v3684 = vpop.f32.mrf.mxu0
      %3685 = vmatprep.mubr.bf16.mxu0 0
      %3686 = vmatmul.mubr.bf16.gmra.mxu0 %v3533
      %v3687 = vpop.f32.mrf.mxu0
      %v3688 = vadd.f32 0.0, %v3687
      %v3689 = vpop.f32.mrf.mxu0
      %v3690 = vpop.f32.mrf.mxu0
      %v3691 = vadd.f32 0.0, %v3690
      %v3692 = vpop.f32.mrf.mxu0
      %3693 = vmatprep.mubr.bf16.mxu0 0
      %3694 = vmatmul.mubr.bf16.gmra.mxu0 %v3536
      %v3695 = vpop.f32.mrf.mxu0
      %v3696 = vadd.f32 0.0, %v3695
      %v3697 = vpop.f32.mrf.mxu0
      %v3698 = vpop.f32.mrf.mxu0
      %v3699 = vadd.f32 0.0, %v3698
      %v3700 = vpop.f32.mrf.mxu0
      %3701 = vdwg.mxu0
      %v3702 = vadd.f32 %v3232, %v3576
      %v3703 = vadd.f32 %v3233, %v3579
      %v3704 = vadd.f32 %v3234, %v3584
      %v3705 = vadd.f32 %v3235, %v3587
      %v3706 = vadd.f32 %v3236, %v3592
      %v3707 = vadd.f32 %v3237, %v3595
      %v3708 = vadd.f32 %v3238, %v3600
      %v3709 = vadd.f32 %v3239, %v3603
      %v3710 = vadd.f32 %v3240, %v3608
      %v3711 = vadd.f32 %v3241, %v3611
      %v3712 = vadd.f32 %v3242, %v3616
      %v3713 = vadd.f32 %v3243, %v3619
      %v3714 = vadd.f32 %v3244, %v3624
      %v3715 = vadd.f32 %v3245, %v3627
      %v3716 = vadd.f32 %v3246, %v3632
      %v3717 = vadd.f32 %v3247, %v3635
      %v3718 = vadd.f32 %v3248, %v3640
      %v3719 = vadd.f32 %v3249, %v3643
      %v3720 = vadd.f32 %v3250, %v3648
      %v3721 = vadd.f32 %v3251, %v3651
      %v3722 = vadd.f32 %v3252, %v3656
      %v3723 = vadd.f32 %v3253, %v3659
      %v3724 = vadd.f32 %v3254, %v3664
      %v3725 = vadd.f32 %v3255, %v3667
      %v3726 = vadd.f32 %v3256, %v3672
      %v3727 = vadd.f32 %v3257, %v3675
      %v3728 = vadd.f32 %v3258, %v3680
      %v3729 = vadd.f32 %v3259, %v3683
      %v3730 = vadd.f32 %v3260, %v3688
      %v3731 = vadd.f32 %v3261, %v3691
      %v3732 = vadd.f32 %v3262, %v3696
      %v3733 = vadd.f32 %v3263, %v3699
      %s3734 = sadd.s32 %s723, 2
      %s3735 = smul.u32 %s3734, 3
      %s3736 = smul.addr %s3735, 4
      %s3737 = scalar_lea.vmem [#allocation2], %s3736
      %v3738 = vld [vmem:[%s3737] sm:$0xf]
      %v3739 = vld [vmem:[%s3737 + $0x4] sm:$0xf]
      %v3740 = vld [vmem:[%s3737 + $0xc] sm:$0xf]
      %v3741 = vld [vmem:[%s3737 + $0x10] sm:$0xf]
      %v3742 = vld [vmem:[%s3737 + $0x18] sm:$0xf]
      %v3743 = vld [vmem:[%s3737 + $0x1c] sm:$0xf]
      %v3744 = vld [vmem:[%s3737 + $0x24] sm:$0xf]
      %v3745 = vld [vmem:[%s3737 + $0x28] sm:$0xf]
      %v3746 = vld [vmem:[%s3737 + $0x30] sm:$0xf]
      %v3747 = vld [vmem:[%s3737 + $0x34] sm:$0xf]
      %v3748 = vld [vmem:[%s3737 + $0x3c] sm:$0xf]
      %v3749 = vld [vmem:[%s3737 + $0x40] sm:$0xf]
      %v3750 = vld [vmem:[%s3737 + $0x48] sm:$0xf]
      %v3751 = vld [vmem:[%s3737 + $0x4c] sm:$0xf]
      %v3752 = vld [vmem:[%s3737 + $0x54] sm:$0xf]
      %v3753 = vld [vmem:[%s3737 + $0x58] sm:$0xf]
      %v3754 = vld [vmem:[%s3737 + $0x60] sm:$0xf]
      %v3755 = vld [vmem:[%s3737 + $0x64] sm:$0xf]
      %v3756 = vld [vmem:[%s3737 + $0x6c] sm:$0xf]
      %v3757 = vld [vmem:[%s3737 + $0x70] sm:$0xf]
      %v3758 = vld [vmem:[%s3737 + $0x78] sm:$0xf]
      %v3759 = vld [vmem:[%s3737 + $0x7c] sm:$0xf]
      %v3760 = vld [vmem:[%s3737 + $0x84] sm:$0xf]
      %v3761 = vld [vmem:[%s3737 + $0x88] sm:$0xf]
      %v3762 = vld [vmem:[%s3737 + $0x90] sm:$0xf]
      %v3763 = vld [vmem:[%s3737 + $0x94] sm:$0xf]
      %v3764 = vld [vmem:[%s3737 + $0x9c] sm:$0xf]
      %v3765 = vld [vmem:[%s3737 + $0xa0] sm:$0xf]
      %v3766 = vld [vmem:[%s3737 + $0xa8] sm:$0xf]
      %v3767 = vld [vmem:[%s3737 + $0xac] sm:$0xf]
      %v3768 = vld [vmem:[%s3737 + $0xb4] sm:$0xf]
      %v3769 = vld [vmem:[%s3737 + $0xb8] sm:$0xf]
      %s3770 = scalar_lea.vmem %s1, 24
      %v3771 = vld [vmem:[%s3770] sm:$0xf]
      %v3804 = vunpack.c.l.b16 %v3738
      %v3805 = vunpack.c.l.b16 %v3739
      %v3806 = vunpack.c.l.b16 %v3740
      %v3807 = vunpack.c.l.b16 %v3741
      %v3808 = vunpack.c.l.b16 %v3742
      %v3809 = vunpack.c.l.b16 %v3743
      %v3810 = vunpack.c.l.b16 %v3744
      %v3811 = vunpack.c.l.b16 %v3745
      %v3812 = vunpack.c.l.b16 %v3746
      %v3813 = vunpack.c.l.b16 %v3747
      %v3814 = vunpack.c.l.b16 %v3748
      %v3815 = vunpack.c.l.b16 %v3749
      %v3816 = vunpack.c.l.b16 %v3750
      %v3817 = vunpack.c.l.b16 %v3751
      %v3818 = vunpack.c.l.b16 %v3752
      %v3819 = vunpack.c.l.b16 %v3753
      %v3820 = vunpack.c.l.b16 %v3754
      %v3821 = vunpack.c.l.b16 %v3755
      %v3822 = vunpack.c.l.b16 %v3756
      %v3823 = vunpack.c.l.b16 %v3757
      %v3824 = vunpack.c.l.b16 %v3758
      %v3825 = vunpack.c.l.b16 %v3759
      %v3826 = vunpack.c.l.b16 %v3760
      %v3827 = vunpack.c.l.b16 %v3761
      %v3828 = vunpack.c.l.b16 %v3762
      %v3829 = vunpack.c.l.b16 %v3763
      %v3830 = vunpack.c.l.b16 %v3764
      %v3831 = vunpack.c.l.b16 %v3765
      %v3832 = vunpack.c.l.b16 %v3766
      %v3833 = vunpack.c.l.b16 %v3767
      %v3834 = vunpack.c.l.b16 %v3768
      %v3835 = vunpack.c.l.b16 %v3769
      %v3836 = vpack.c.b16 %v3805, %v3804
      %v3837 = vpack.c.b16 %v3807, %v3806
      %v3838 = vpack.c.b16 %v3809, %v3808
      %v3839 = vpack.c.b16 %v3811, %v3810
      %v3840 = vpack.c.b16 %v3813, %v3812
      %v3841 = vpack.c.b16 %v3815, %v3814
      %v3842 = vpack.c.b16 %v3817, %v3816
      %v3843 = vpack.c.b16 %v3819, %v3818
      %v3844 = vpack.c.b16 %v3821, %v3820
      %v3845 = vpack.c.b16 %v3823, %v3822
      %v3846 = vpack.c.b16 %v3825, %v3824
      %v3847 = vpack.c.b16 %v3827, %v3826
      %v3848 = vpack.c.b16 %v3829, %v3828
      %v3849 = vpack.c.b16 %v3831, %v3830
      %v3850 = vpack.c.b16 %v3833, %v3832
      %v3851 = vpack.c.b16 %v3835, %v3834
      %v3853 = vsel %vm1213, %v3836, 0
      %v3856 = vsel %vm1213, %v3837, 0
      %v3859 = vsel %vm1213, %v3838, 0
      %v3862 = vsel %vm1213, %v3839, 0
      %v3865 = vsel %vm1213, %v3840, 0
      %v3868 = vsel %vm1213, %v3841, 0
      %v3871 = vsel %vm1213, %v3842, 0
      %v3874 = vsel %vm1213, %v3843, 0
      %v3877 = vsel %vm1213, %v3844, 0
      %v3880 = vsel %vm1213, %v3845, 0
      %v3883 = vsel %vm1213, %v3846, 0
      %v3886 = vsel %vm1213, %v3847, 0
      %v3889 = vsel %vm1213, %v3848, 0
      %v3892 = vsel %vm1213, %v3849, 0
      %v3895 = vsel %vm1213, %v3850, 0
      %v3898 = vsel %vm1213, %v3851, 0
      %v3901 = vsel %vm1262, %v3771, 0
      %3903 = vmatprep.subr.bf16.mxu0 0
      %3904 = vmatpush1.bf16.msra.mxu0 0
      %3905 = vmatprep.subr.bf16.mxu0 0
      %3906 = vmatpush1.bf16.msra.mxu0 0
      %3907 = vmatprep.subr.bf16.mxu0 0
      %3908 = vmatpush1.bf16.msra.mxu0 0
      %3909 = vmatprep.subr.bf16.mxu0 0
      %3910 = vmatpush1.bf16.msra.mxu0 0
      %3911 = vmatprep.subr.bf16.mxu0 0
      %3912 = vmatpush1.bf16.msra.mxu0 0
      %3913 = vmatprep.subr.bf16.mxu0 0
      %3914 = vmatpush1.bf16.msra.mxu0 0
      %3915 = vmatprep.subr.bf16.mxu0 0
      %3916 = vmatpush1.bf16.msra.mxu0 0
      %3917 = vmatprep.subr.bf16.mxu0 0
      %3918 = vmatpush1.bf16.msra.mxu0 %v3901
      %3919 = vmatprep.subr.bf16.mxu0 0
      %3920 = vmatpush2.bf16.msra.mxu0 0
      %3921 = vmatprep.subr.bf16.mxu0 0
      %3922 = vmatpush2.bf16.msra.mxu0 0
      %3923 = vmatprep.subr.bf16.mxu0 0
      %3924 = vmatpush2.bf16.msra.mxu0 0
      %3925 = vmatprep.subr.bf16.mxu0 0
      %3926 = vmatpush2.bf16.msra.mxu0 0
      %3927 = vmatprep.subr.bf16.mxu0 0
      %3928 = vmatpush2.bf16.msra.mxu0 0
      %3929 = vmatprep.subr.bf16.mxu0 0
      %3930 = vmatpush2.bf16.msra.mxu0 0
      %3931 = vmatprep.subr.bf16.mxu0 0
      %3932 = vmatpush2.bf16.msra.mxu0 0
      %3933 = vmatprep.subr.bf16.mxu0 0
      %3934 = vmatpush2.bf16.msra.mxu0 0
      %3935 = vmatprep.mubr.bf16.mxu0 0
      %3936 = vmatmul.mubr.bf16.gmra.mxu0 %v3853
      %v3937 = vpop.f32.mrf.mxu0
      %v3938 = vadd.f32 0.0, %v3937
      %v3939 = vpop.f32.mrf.mxu0
      %v3940 = vpop.f32.mrf.mxu0
      %v3941 = vadd.f32 0.0, %v3940
      %v3942 = vpop.f32.mrf.mxu0
      %3943 = vmatprep.mubr.bf16.mxu0 0
      %3944 = vmatmul.mubr.bf16.gmra.mxu0 %v3856
      %v3945 = vpop.f32.mrf.mxu0
      %v3946 = vadd.f32 0.0, %v3945
      %v3947 = vpop.f32.mrf.mxu0
      %v3948 = vpop.f32.mrf.mxu0
      %v3949 = vadd.f32 0.0, %v3948
      %v3950 = vpop.f32.mrf.mxu0
      %3951 = vmatprep.mubr.bf16.mxu0 0
      %3952 = vmatmul.mubr.bf16.gmra.mxu0 %v3859
      %v3953 = vpop.f32.mrf.mxu0
      %v3954 = vadd.f32 0.0, %v3953
      %v3955 = vpop.f32.mrf.mxu0
      %v3956 = vpop.f32.mrf.mxu0
      %v3957 = vadd.f32 0.0, %v3956
      %v3958 = vpop.f32.mrf.mxu0
      %3959 = vmatprep.mubr.bf16.mxu0 0
      %3960 = vmatmul.mubr.bf16.gmra.mxu0 %v3862
      %v3961 = vpop.f32.mrf.mxu0
      %v3962 = vadd.f32 0.0, %v3961
      %v3963 = vpop.f32.mrf.mxu0
      %v3964 = vpop.f32.mrf.mxu0
      %v3965 = vadd.f32 0.0, %v3964
      %v3966 = vpop.f32.mrf.mxu0
      %3967 = vmatprep.mubr.bf16.mxu0 0
      %3968 = vmatmul.mubr.bf16.gmra.mxu0 %v3865
      %v3969 = vpop.f32.mrf.mxu0
      %v3970 = vadd.f32 0.0, %v3969
      %v3971 = vpop.f32.mrf.mxu0
      %v3972 = vpop.f32.mrf.mxu0
      %v3973 = vadd.f32 0.0, %v3972
      %v3974 = vpop.f32.mrf.mxu0
      %3975 = vmatprep.mubr.bf16.mxu0 0
      %3976 = vmatmul.mubr.bf16.gmra.mxu0 %v3868
      %v3977 = vpop.f32.mrf.mxu0
      %v3978 = vadd.f32 0.0, %v3977
      %v3979 = vpop.f32.mrf.mxu0
      %v3980 = vpop.f32.mrf.mxu0
      %v3981 = vadd.f32 0.0, %v3980
      %v3982 = vpop.f32.mrf.mxu0
      %3983 = vmatprep.mubr.bf16.mxu0 0
      %3984 = vmatmul.mubr.bf16.gmra.mxu0 %v3871
      %v3985 = vpop.f32.mrf.mxu0
      %v3986 = vadd.f32 0.0, %v3985
      %v3987 = vpop.f32.mrf.mxu0
      %v3988 = vpop.f32.mrf.mxu0
      %v3989 = vadd.f32 0.0, %v3988
      %v3990 = vpop.f32.mrf.mxu0
      %3991 = vmatprep.mubr.bf16.mxu0 0
      %3992 = vmatmul.mubr.bf16.gmra.mxu0 %v3874
      %v3993 = vpop.f32.mrf.mxu0
      %v3994 = vadd.f32 0.0, %v3993
      %v3995 = vpop.f32.mrf.mxu0
      %v3996 = vpop.f32.mrf.mxu0
      %v3997 = vadd.f32 0.0, %v3996
      %v3998 = vpop.f32.mrf.mxu0
      %3999 = vmatprep.mubr.bf16.mxu0 0
      %4000 = vmatmul.mubr.bf16.gmra.mxu0 %v3877
      %v4001 = vpop.f32.mrf.mxu0
      %v4002 = vadd.f32 0.0, %v4001
      %v4003 = vpop.f32.mrf.mxu0
      %v4004 = vpop.f32.mrf.mxu0
      %v4005 = vadd.f32 0.0, %v4004
      %v4006 = vpop.f32.mrf.mxu0
      %4007 = vmatprep.mubr.bf16.mxu0 0
      %4008 = vmatmul.mubr.bf16.gmra.mxu0 %v3880
      %v4009 = vpop.f32.mrf.mxu0
      %v4010 = vadd.f32 0.0, %v4009
      %v4011 = vpop.f32.mrf.mxu0
      %v4012 = vpop.f32.mrf.mxu0
      %v4013 = vadd.f32 0.0, %v4012
      %v4014 = vpop.f32.mrf.mxu0
      %4015 = vmatprep.mubr.bf16.mxu0 0
      %4016 = vmatmul.mubr.bf16.gmra.mxu0 %v3883
      %v4017 = vpop.f32.mrf.mxu0
      %v4018 = vadd.f32 0.0, %v4017
      %v4019 = vpop.f32.mrf.mxu0
      %v4020 = vpop.f32.mrf.mxu0
      %v4021 = vadd.f32 0.0, %v4020
      %v4022 = vpop.f32.mrf.mxu0
      %4023 = vmatprep.mubr.bf16.mxu0 0
      %4024 = vmatmul.mubr.bf16.gmra.mxu0 %v3886
      %v4025 = vpop.f32.mrf.mxu0
      %v4026 = vadd.f32 0.0, %v4025
      %v4027 = vpop.f32.mrf.mxu0
      %v4028 = vpop.f32.mrf.mxu0
      %v4029 = vadd.f32 0.0, %v4028
      %v4030 = vpop.f32.mrf.mxu0
      %4031 = vmatprep.mubr.bf16.mxu0 0
      %4032 = vmatmul.mubr.bf16.gmra.mxu0 %v3889
      %v4033 = vpop.f32.mrf.mxu0
      %v4034 = vadd.f32 0.0, %v4033
      %v4035 = vpop.f32.mrf.mxu0
      %v4036 = vpop.f32.mrf.mxu0
      %v4037 = vadd.f32 0.0, %v4036
      %v4038 = vpop.f32.mrf.mxu0
      %4039 = vmatprep.mubr.bf16.mxu0 0
      %4040 = vmatmul.mubr.bf16.gmra.mxu0 %v3892
      %v4041 = vpop.f32.mrf.mxu0
      %v4042 = vadd.f32 0.0, %v4041
      %v4043 = vpop.f32.mrf.mxu0
      %v4044 = vpop.f32.mrf.mxu0
      %v4045 = vadd.f32 0.0, %v4044
      %v4046 = vpop.f32.mrf.mxu0
      %4047 = vmatprep.mubr.bf16.mxu0 0
      %4048 = vmatmul.mubr.bf16.gmra.mxu0 %v3895
      %v4049 = vpop.f32.mrf.mxu0
      %v4050 = vadd.f32 0.0, %v4049
      %v4051 = vpop.f32.mrf.mxu0
      %v4052 = vpop.f32.mrf.mxu0
      %v4053 = vadd.f32 0.0, %v4052
      %v4054 = vpop.f32.mrf.mxu0
      %4055 = vmatprep.mubr.bf16.mxu0 0
      %4056 = vmatmul.mubr.bf16.gmra.mxu0 %v3898
      %v4057 = vpop.f32.mrf.mxu0
      %v4058 = vadd.f32 0.0, %v4057
      %v4059 = vpop.f32.mrf.mxu0
      %v4060 = vpop.f32.mrf.mxu0
      %v4061 = vadd.f32 0.0, %v4060
      %v4062 = vpop.f32.mrf.mxu0
      %4063 = vdwg.mxu0
      %v4064 = vadd.f32 %v3702, %v3938
      %v4065 = vadd.f32 %v3703, %v3941
      %v4066 = vadd.f32 %v3704, %v3946
      %v4067 = vadd.f32 %v3705, %v3949
      %v4068 = vadd.f32 %v3706, %v3954
      %v4069 = vadd.f32 %v3707, %v3957
      %v4070 = vadd.f32 %v3708, %v3962
      %v4071 = vadd.f32 %v3709, %v3965
      %v4072 = vadd.f32 %v3710, %v3970
      %v4073 = vadd.f32 %v3711, %v3973
      %v4074 = vadd.f32 %v3712, %v3978
      %v4075 = vadd.f32 %v3713, %v3981
      %v4076 = vadd.f32 %v3714, %v3986
      %v4077 = vadd.f32 %v3715, %v3989
      %v4078 = vadd.f32 %v3716, %v3994
      %v4079 = vadd.f32 %v3717, %v3997
      %v4080 = vadd.f32 %v3718, %v4002
      %v4081 = vadd.f32 %v3719, %v4005
      %v4082 = vadd.f32 %v3720, %v4010
      %v4083 = vadd.f32 %v3721, %v4013
      %v4084 = vadd.f32 %v3722, %v4018
      %v4085 = vadd.f32 %v3723, %v4021
      %v4086 = vadd.f32 %v3724, %v4026
      %v4087 = vadd.f32 %v3725, %v4029
      %v4088 = vadd.f32 %v3726, %v4034
      %v4089 = vadd.f32 %v3727, %v4037
      %v4090 = vadd.f32 %v3728, %v4042
      %v4091 = vadd.f32 %v3729, %v4045
      %v4092 = vadd.f32 %v3730, %v4050
      %v4093 = vadd.f32 %v3731, %v4053
      %v4094 = vadd.f32 %v3732, %v4058
      %v4095 = vadd.f32 %v3733, %v4061
      %v4096 = vld [vmem:[%s3737] sm:$0xf]
      %v4097 = vld [vmem:[%s3737 + $0x4] sm:$0xf]
      %v4098 = vld [vmem:[%s3737 + $0x8] sm:$0x1]
      %v4099 = vld [vmem:[%s3737 + $0xc] sm:$0xf]
      %v4100 = vld [vmem:[%s3737 + $0x10] sm:$0xf]
      %v4101 = vld [vmem:[%s3737 + $0x14] sm:$0x1]
      %v4102 = vld [vmem:[%s3737 + $0x18] sm:$0xf]
      %v4103 = vld [vmem:[%s3737 + $0x1c] sm:$0xf]
      %v4104 = vld [vmem:[%s3737 + $0x20] sm:$0x1]
      %v4105 = vld [vmem:[%s3737 + $0x24] sm:$0xf]
      %v4106 = vld [vmem:[%s3737 + $0x28] sm:$0xf]
      %v4107 = vld [vmem:[%s3737 + $0x2c] sm:$0x1]
      %v4108 = vld [vmem:[%s3737 + $0x30] sm:$0xf]
      %v4109 = vld [vmem:[%s3737 + $0x34] sm:$0xf]
      %v4110 = vld [vmem:[%s3737 + $0x38] sm:$0x1]
      %v4111 = vld [vmem:[%s3737 + $0x3c] sm:$0xf]
      %v4112 = vld [vmem:[%s3737 + $0x40] sm:$0xf]
      %v4113 = vld [vmem:[%s3737 + $0x44] sm:$0x1]
      %v4114 = vld [vmem:[%s3737 + $0x48] sm:$0xf]
      %v4115 = vld [vmem:[%s3737 + $0x4c] sm:$0xf]
      %v4116 = vld [vmem:[%s3737 + $0x50] sm:$0x1]
      %v4117 = vld [vmem:[%s3737 + $0x54] sm:$0xf]
      %v4118 = vld [vmem:[%s3737 + $0x58] sm:$0xf]
      %v4119 = vld [vmem:[%s3737 + $0x5c] sm:$0x1]
      %v4120 = vld [vmem:[%s3737 + $0x60] sm:$0xf]
      %v4121 = vld [vmem:[%s3737 + $0x64] sm:$0xf]
      %v4122 = vld [vmem:[%s3737 + $0x68] sm:$0x1]
      %v4123 = vld [vmem:[%s3737 + $0x6c] sm:$0xf]
      %v4124 = vld [vmem:[%s3737 + $0x70] sm:$0xf]
      %v4125 = vld [vmem:[%s3737 + $0x74] sm:$0x1]
      %v4126 = vld [vmem:[%s3737 + $0x78] sm:$0xf]
      %v4127 = vld [vmem:[%s3737 + $0x7c] sm:$0xf]
      %v4128 = vld [vmem:[%s3737 + $0x80] sm:$0x1]
      %v4129 = vld [vmem:[%s3737 + $0x84] sm:$0xf]
      %v4130 = vld [vmem:[%s3737 + $0x88] sm:$0xf]
      %v4131 = vld [vmem:[%s3737 + $0x8c] sm:$0x1]
      %v4132 = vld [vmem:[%s3737 + $0x90] sm:$0xf]
      %v4133 = vld [vmem:[%s3737 + $0x94] sm:$0xf]
      %v4134 = vld [vmem:[%s3737 + $0x98] sm:$0x1]
      %v4135 = vld [vmem:[%s3737 + $0x9c] sm:$0xf]
      %v4136 = vld [vmem:[%s3737 + $0xa0] sm:$0xf]
      %v4137 = vld [vmem:[%s3737 + $0xa4] sm:$0x1]
      %v4138 = vld [vmem:[%s3737 + $0xa8] sm:$0xf]
      %v4139 = vld [vmem:[%s3737 + $0xac] sm:$0xf]
      %v4140 = vld [vmem:[%s3737 + $0xb0] sm:$0x1]
      %v4141 = vld [vmem:[%s3737 + $0xb4] sm:$0xf]
      %v4142 = vld [vmem:[%s3737 + $0xb8] sm:$0xf]
      %v4143 = vld [vmem:[%s3737 + $0xbc] sm:$0x1]
      %v4145 = vshrl.u32 %v4096, 16
      %v4147 = vrot.slane %v4145, 4
      %v4148 = vshll.u32 %v4096, 16
      %v4150 = vrot.slane %v4148, 5
      %v4151 = vor.u32 %v4147, %v4150
      %v4152 = vrot.slane %v4151, 4
      %v4154 = vshll.u32 %v4097, 16
      %v4156 = vrot.slane %v4154, 5
      %v4157 = vsel %vm778, %v4152, %v4156
      %v4158 = vshrl.u32 %v4097, 16
      %v4160 = vrot.slane %v4158, 4
      %v4161 = vor.u32 %v4160, %v4156
      %v4162 = vrot.slane %v4161, 4
      %v4164 = vshll.u32 %v4098, 16
      %v4166 = vrot.slane %v4164, 5
      %v4167 = vsel %vm778, %v4162, %v4166
      %v4169 = vshrl.u32 %v4099, 16
      %v4171 = vrot.slane %v4169, 4
      %v4172 = vshll.u32 %v4099, 16
      %v4174 = vrot.slane %v4172, 5
      %v4175 = vor.u32 %v4171, %v4174
      %v4176 = vrot.slane %v4175, 4
      %v4178 = vshll.u32 %v4100, 16
      %v4180 = vrot.slane %v4178, 5
      %v4181 = vsel %vm778, %v4176, %v4180
      %v4182 = vshrl.u32 %v4100, 16
      %v4184 = vrot.slane %v4182, 4
      %v4185 = vor.u32 %v4184, %v4180
      %v4186 = vrot.slane %v4185, 4
      %v4188 = vshll.u32 %v4101, 16
      %v4190 = vrot.slane %v4188, 5
      %v4191 = vsel %vm778, %v4186, %v4190
      %v4193 = vshrl.u32 %v4102, 16
      %v4195 = vrot.slane %v4193, 4
      %v4196 = vshll.u32 %v4102, 16
      %v4198 = vrot.slane %v4196, 5
      %v4199 = vor.u32 %v4195, %v4198
      %v4200 = vrot.slane %v4199, 4
      %v4202 = vshll.u32 %v4103, 16
      %v4204 = vrot.slane %v4202, 5
      %v4205 = vsel %vm778, %v4200, %v4204
      %v4206 = vshrl.u32 %v4103, 16
      %v4208 = vrot.slane %v4206, 4
      %v4209 = vor.u32 %v4208, %v4204
      %v4210 = vrot.slane %v4209, 4
      %v4212 = vshll.u32 %v4104, 16
      %v4214 = vrot.slane %v4212, 5
      %v4215 = vsel %vm778, %v4210, %v4214
      %v4217 = vshrl.u32 %v4105, 16
      %v4219 = vrot.slane %v4217, 4
      %v4220 = vshll.u32 %v4105, 16
      %v4222 = vrot.slane %v4220, 5
      %v4223 = vor.u32 %v4219, %v4222
      %v4224 = vrot.slane %v4223, 4
      %v4226 = vshll.u32 %v4106, 16
      %v4228 = vrot.slane %v4226, 5
      %v4229 = vsel %vm778, %v4224, %v4228
      %v4230 = vshrl.u32 %v4106, 16
      %v4232 = vrot.slane %v4230, 4
      %v4233 = vor.u32 %v4232, %v4228
      %v4234 = vrot.slane %v4233, 4
      %v4236 = vshll.u32 %v4107, 16
      %v4238 = vrot.slane %v4236, 5
      %v4239 = vsel %vm778, %v4234, %v4238
      %v4241 = vshrl.u32 %v4108, 16
      %v4243 = vrot.slane %v4241, 4
      %v4244 = vshll.u32 %v4108, 16
      %v4246 = vrot.slane %v4244, 5
      %v4247 = vor.u32 %v4243, %v4246
      %v4248 = vrot.slane %v4247, 4
      %v4250 = vshll.u32 %v4109, 16
      %v4252 = vrot.slane %v4250, 5
      %v4253 = vsel %vm778, %v4248, %v4252
      %v4254 = vshrl.u32 %v4109, 16
      %v4256 = vrot.slane %v4254, 4
      %v4257 = vor.u32 %v4256, %v4252
      %v4258 = vrot.slane %v4257, 4
      %v4260 = vshll.u32 %v4110, 16
      %v4262 = vrot.slane %v4260, 5
      %v4263 = vsel %vm778, %v4258, %v4262
      %v4265 = vshrl.u32 %v4111, 16
      %v4267 = vrot.slane %v4265, 4
      %v4268 = vshll.u32 %v4111, 16
      %v4270 = vrot.slane %v4268, 5
      %v4271 = vor.u32 %v4267, %v4270
      %v4272 = vrot.slane %v4271, 4
      %v4274 = vshll.u32 %v4112, 16
      %v4276 = vrot.slane %v4274, 5
      %v4277 = vsel %vm778, %v4272, %v4276
      %v4278 = vshrl.u32 %v4112, 16
      %v4280 = vrot.slane %v4278, 4
      %v4281 = vor.u32 %v4280, %v4276
      %v4282 = vrot.slane %v4281, 4
      %v4284 = vshll.u32 %v4113, 16
      %v4286 = vrot.slane %v4284, 5
      %v4287 = vsel %vm778, %v4282, %v4286
      %v4289 = vshrl.u32 %v4114, 16
      %v4291 = vrot.slane %v4289, 4
      %v4292 = vshll.u32 %v4114, 16
      %v4294 = vrot.slane %v4292, 5
      %v4295 = vor.u32 %v4291, %v4294
      %v4296 = vrot.slane %v4295, 4
      %v4298 = vshll.u32 %v4115, 16
      %v4300 = vrot.slane %v4298, 5
      %v4301 = vsel %vm778, %v4296, %v4300
      %v4302 = vshrl.u32 %v4115, 16
      %v4304 = vrot.slane %v4302, 4
      %v4305 = vor.u32 %v4304, %v4300
      %v4306 = vrot.slane %v4305, 4
      %v4308 = vshll.u32 %v4116, 16
      %v4310 = vrot.slane %v4308, 5
      %v4311 = vsel %vm778, %v4306, %v4310
      %v4313 = vshrl.u32 %v4117, 16
      %v4315 = vrot.slane %v4313, 4
      %v4316 = vshll.u32 %v4117, 16
      %v4318 = vrot.slane %v4316, 5
      %v4319 = vor.u32 %v4315, %v4318
      %v4320 = vrot.slane %v4319, 4
      %v4322 = vshll.u32 %v4118, 16
      %v4324 = vrot.slane %v4322, 5
      %v4325 = vsel %vm778, %v4320, %v4324
      %v4326 = vshrl.u32 %v4118, 16
      %v4328 = vrot.slane %v4326, 4
      %v4329 = vor.u32 %v4328, %v4324
      %v4330 = vrot.slane %v4329, 4
      %v4332 = vshll.u32 %v4119, 16
      %v4334 = vrot.slane %v4332, 5
      %v4335 = vsel %vm778, %v4330, %v4334
      %v4337 = vshrl.u32 %v4120, 16
      %v4339 = vrot.slane %v4337, 4
      %v4340 = vshll.u32 %v4120, 16
      %v4342 = vrot.slane %v4340, 5
      %v4343 = vor.u32 %v4339, %v4342
      %v4344 = vrot.slane %v4343, 4
      %v4346 = vshll.u32 %v4121, 16
      %v4348 = vrot.slane %v4346, 5
      %v4349 = vsel %vm778, %v4344, %v4348
      %v4350 = vshrl.u32 %v4121, 16
      %v4352 = vrot.slane %v4350, 4
      %v4353 = vor.u32 %v4352, %v4348
      %v4354 = vrot.slane %v4353, 4
      %v4356 = vshll.u32 %v4122, 16
      %v4358 = vrot.slane %v4356, 5
      %v4359 = vsel %vm778, %v4354, %v4358
      %v4361 = vshrl.u32 %v4123, 16
      %v4363 = vrot.slane %v4361, 4
      %v4364 = vshll.u32 %v4123, 16
      %v4366 = vrot.slane %v4364, 5
      %v4367 = vor.u32 %v4363, %v4366
      %v4368 = vrot.slane %v4367, 4
      %v4370 = vshll.u32 %v4124, 16
      %v4372 = vrot.slane %v4370, 5
      %v4373 = vsel %vm778, %v4368, %v4372
      %v4374 = vshrl.u32 %v4124, 16
      %v4376 = vrot.slane %v4374, 4
      %v4377 = vor.u32 %v4376, %v4372
      %v4378 = vrot.slane %v4377, 4
      %v4380 = vshll.u32 %v4125, 16
      %v4382 = vrot.slane %v4380, 5
      %v4383 = vsel %vm778, %v4378, %v4382
      %v4385 = vshrl.u32 %v4126, 16
      %v4387 = vrot.slane %v4385, 4
      %v4388 = vshll.u32 %v4126, 16
      %v4390 = vrot.slane %v4388, 5
      %v4391 = vor.u32 %v4387, %v4390
      %v4392 = vrot.slane %v4391, 4
      %v4394 = vshll.u32 %v4127, 16
      %v4396 = vrot.slane %v4394, 5
      %v4397 = vsel %vm778, %v4392, %v4396
      %v4398 = vshrl.u32 %v4127, 16
      %v4400 = vrot.slane %v4398, 4
      %v4401 = vor.u32 %v4400, %v4396
      %v4402 = vrot.slane %v4401, 4
      %v4404 = vshll.u32 %v4128, 16
      %v4406 = vrot.slane %v4404, 5
      %v4407 = vsel %vm778, %v4402, %v4406
      %v4409 = vshrl.u32 %v4129, 16
      %v4411 = vrot.slane %v4409, 4
      %v4412 = vshll.u32 %v4129, 16
      %v4414 = vrot.slane %v4412, 5
      %v4415 = vor.u32 %v4411, %v4414
      %v4416 = vrot.slane %v4415, 4
      %v4418 = vshll.u32 %v4130, 16
      %v4420 = vrot.slane %v4418, 5
      %v4421 = vsel %vm778, %v4416, %v4420
      %v4422 = vshrl.u32 %v4130, 16
      %v4424 = vrot.slane %v4422, 4
      %v4425 = vor.u32 %v4424, %v4420
      %v4426 = vrot.slane %v4425, 4
      %v4428 = vshll.u32 %v4131, 16
      %v4430 = vrot.slane %v4428, 5
      %v4431 = vsel %vm778, %v4426, %v4430
      %v4433 = vshrl.u32 %v4132, 16
      %v4435 = vrot.slane %v4433, 4
      %v4436 = vshll.u32 %v4132, 16
      %v4438 = vrot.slane %v4436, 5
      %v4439 = vor.u32 %v4435, %v4438
      %v4440 = vrot.slane %v4439, 4
      %v4442 = vshll.u32 %v4133, 16
      %v4444 = vrot.slane %v4442, 5
      %v4445 = vsel %vm778, %v4440, %v4444
      %v4446 = vshrl.u32 %v4133, 16
      %v4448 = vrot.slane %v4446, 4
      %v4449 = vor.u32 %v4448, %v4444
      %v4450 = vrot.slane %v4449, 4
      %v4452 = vshll.u32 %v4134, 16
      %v4454 = vrot.slane %v4452, 5
      %v4455 = vsel %vm778, %v4450, %v4454
      %v4457 = vshrl.u32 %v4135, 16
      %v4459 = vrot.slane %v4457, 4
      %v4460 = vshll.u32 %v4135, 16
      %v4462 = vrot.slane %v4460, 5
      %v4463 = vor.u32 %v4459, %v4462
      %v4464 = vrot.slane %v4463, 4
      %v4466 = vshll.u32 %v4136, 16
      %v4468 = vrot.slane %v4466, 5
      %v4469 = vsel %vm778, %v4464, %v4468
      %v4470 = vshrl.u32 %v4136, 16
      %v4472 = vrot.slane %v4470, 4
      %v4473 = vor.u32 %v4472, %v4468
      %v4474 = vrot.slane %v4473, 4
      %v4476 = vshll.u32 %v4137, 16
      %v4478 = vrot.slane %v4476, 5
      %v4479 = vsel %vm778, %v4474, %v4478
      %v4481 = vshrl.u32 %v4138, 16
      %v4483 = vrot.slane %v4481, 4
      %v4484 = vshll.u32 %v4138, 16
      %v4486 = vrot.slane %v4484, 5
      %v4487 = vor.u32 %v4483, %v4486
      %v4488 = vrot.slane %v4487, 4
      %v4490 = vshll.u32 %v4139, 16
      %v4492 = vrot.slane %v4490, 5
      %v4493 = vsel %vm778, %v4488, %v4492
      %v4494 = vshrl.u32 %v4139, 16
      %v4496 = vrot.slane %v4494, 4
      %v4497 = vor.u32 %v4496, %v4492
      %v4498 = vrot.slane %v4497, 4
      %v4500 = vshll.u32 %v4140, 16
      %v4502 = vrot.slane %v4500, 5
      %v4503 = vsel %vm778, %v4498, %v4502
      %v4505 = vshrl.u32 %v4141, 16
      %v4507 = vrot.slane %v4505, 4
      %v4508 = vshll.u32 %v4141, 16
      %v4510 = vrot.slane %v4508, 5
      %v4511 = vor.u32 %v4507, %v4510
      %v4512 = vrot.slane %v4511, 4
      %v4514 = vshll.u32 %v4142, 16
      %v4516 = vrot.slane %v4514, 5
      %v4517 = vsel %vm778, %v4512, %v4516
      %v4518 = vshrl.u32 %v4142, 16
      %v4520 = vrot.slane %v4518, 4
      %v4521 = vor.u32 %v4520, %v4516
      %v4522 = vrot.slane %v4521, 4
      %v4524 = vshll.u32 %v4143, 16
      %v4526 = vrot.slane %v4524, 5
      %v4527 = vsel %vm778, %v4522, %v4526
      %s4528 = scalar_lea.vmem %s1, 28
      %v4529 = vld [vmem:[%s4528] sm:$0xf]
      %v4530 = vunpack.c.l.b16 %v4157
      %v4531 = vunpack.c.l.b16 %v4167
      %v4532 = vunpack.c.l.b16 %v4181
      %v4533 = vunpack.c.l.b16 %v4191
      %v4534 = vunpack.c.l.b16 %v4205
      %v4535 = vunpack.c.l.b16 %v4215
      %v4536 = vunpack.c.l.b16 %v4229
      %v4537 = vunpack.c.l.b16 %v4239
      %v4538 = vunpack.c.l.b16 %v4253
      %v4539 = vunpack.c.l.b16 %v4263
      %v4540 = vunpack.c.l.b16 %v4277
      %v4541 = vunpack.c.l.b16 %v4287
      %v4542 = vunpack.c.l.b16 %v4301
      %v4543 = vunpack.c.l.b16 %v4311
      %v4544 = vunpack.c.l.b16 %v4325
      %v4545 = vunpack.c.l.b16 %v4335
      %v4546 = vunpack.c.l.b16 %v4349
      %v4547 = vunpack.c.l.b16 %v4359
      %v4548 = vunpack.c.l.b16 %v4373
      %v4549 = vunpack.c.l.b16 %v4383
      %v4550 = vunpack.c.l.b16 %v4397
      %v4551 = vunpack.c.l.b16 %v4407
      %v4552 = vunpack.c.l.b16 %v4421
      %v4553 = vunpack.c.l.b16 %v4431
      %v4554 = vunpack.c.l.b16 %v4445
      %v4555 = vunpack.c.l.b16 %v4455
      %v4556 = vunpack.c.l.b16 %v4469
      %v4557 = vunpack.c.l.b16 %v4479
      %v4558 = vunpack.c.l.b16 %v4493
      %v4559 = vunpack.c.l.b16 %v4503
      %v4560 = vunpack.c.l.b16 %v4517
      %v4561 = vunpack.c.l.b16 %v4527
      %v4562 = vpack.c.b16 %v4531, %v4530
      %v4563 = vpack.c.b16 %v4533, %v4532
      %v4564 = vpack.c.b16 %v4535, %v4534
      %v4565 = vpack.c.b16 %v4537, %v4536
      %v4566 = vpack.c.b16 %v4539, %v4538
      %v4567 = vpack.c.b16 %v4541, %v4540
      %v4568 = vpack.c.b16 %v4543, %v4542
      %v4569 = vpack.c.b16 %v4545, %v4544
      %v4570 = vpack.c.b16 %v4547, %v4546
      %v4571 = vpack.c.b16 %v4549, %v4548
      %v4572 = vpack.c.b16 %v4551, %v4550
      %v4573 = vpack.c.b16 %v4553, %v4552
      %v4574 = vpack.c.b16 %v4555, %v4554
      %v4575 = vpack.c.b16 %v4557, %v4556
      %v4576 = vpack.c.b16 %v4559, %v4558
      %v4577 = vpack.c.b16 %v4561, %v4560
      %v4579 = vsel %vm1213, %v4562, 0
      %v4582 = vsel %vm1213, %v4563, 0
      %v4585 = vsel %vm1213, %v4564, 0
      %v4588 = vsel %vm1213, %v4565, 0
      %v4591 = vsel %vm1213, %v4566, 0
      %v4594 = vsel %vm1213, %v4567, 0
      %v4597 = vsel %vm1213, %v4568, 0
      %v4600 = vsel %vm1213, %v4569, 0
      %v4603 = vsel %vm1213, %v4570, 0
      %v4606 = vsel %vm1213, %v4571, 0
      %v4609 = vsel %vm1213, %v4572, 0
      %v4612 = vsel %vm1213, %v4573, 0
      %v4615 = vsel %vm1213, %v4574, 0
      %v4618 = vsel %vm1213, %v4575, 0
      %v4621 = vsel %vm1213, %v4576, 0
      %v4624 = vsel %vm1213, %v4577, 0
      %v4627 = vsel %vm1262, %v4529, 0
      %4629 = vmatprep.subr.bf16.mxu0 0
      %4630 = vmatpush1.bf16.msra.mxu0 0
      %4631 = vmatprep.subr.bf16.mxu0 0
      %4632 = vmatpush1.bf16.msra.mxu0 0
      %4633 = vmatprep.subr.bf16.mxu0 0
      %4634 = vmatpush1.bf16.msra.mxu0 0
      %4635 = vmatprep.subr.bf16.mxu0 0
      %4636 = vmatpush1.bf16.msra.mxu0 0
      %4637 = vmatprep.subr.bf16.mxu0 0
      %4638 = vmatpush1.bf16.msra.mxu0 0
      %4639 = vmatprep.subr.bf16.mxu0 0
      %4640 = vmatpush1.bf16.msra.mxu0 0
      %4641 = vmatprep.subr.bf16.mxu0 0
      %4642 = vmatpush1.bf16.msra.mxu0 0
      %4643 = vmatprep.subr.bf16.mxu0 0
      %4644 = vmatpush1.bf16.msra.mxu0 %v4627
      %4645 = vmatprep.subr.bf16.mxu0 0
      %4646 = vmatpush2.bf16.msra.mxu0 0
      %4647 = vmatprep.subr.bf16.mxu0 0
      %4648 = vmatpush2.bf16.msra.mxu0 0
      %4649 = vmatprep.subr.bf16.mxu0 0
      %4650 = vmatpush2.bf16.msra.mxu0 0
      %4651 = vmatprep.subr.bf16.mxu0 0
      %4652 = vmatpush2.bf16.msra.mxu0 0
      %4653 = vmatprep.subr.bf16.mxu0 0
      %4654 = vmatpush2.bf16.msra.mxu0 0
      %4655 = vmatprep.subr.bf16.mxu0 0
      %4656 = vmatpush2.bf16.msra.mxu0 0
      %4657 = vmatprep.subr.bf16.mxu0 0
      %4658 = vmatpush2.bf16.msra.mxu0 0
      %4659 = vmatprep.subr.bf16.mxu0 0
      %4660 = vmatpush2.bf16.msra.mxu0 0
      %4661 = vmatprep.mubr.bf16.mxu0 0
      %4662 = vmatmul.mubr.bf16.gmra.mxu0 %v4579
      %v4663 = vpop.f32.mrf.mxu0
      %v4664 = vadd.f32 0.0, %v4663
      %v4665 = vpop.f32.mrf.mxu0
      %v4666 = vpop.f32.mrf.mxu0
      %v4667 = vadd.f32 0.0, %v4666
      %v4668 = vpop.f32.mrf.mxu0
      %4669 = vmatprep.mubr.bf16.mxu0 0
      %4670 = vmatmul.mubr.bf16.gmra.mxu0 %v4582
      %v4671 = vpop.f32.mrf.mxu0
      %v4672 = vadd.f32 0.0, %v4671
      %v4673 = vpop.f32.mrf.mxu0
      %v4674 = vpop.f32.mrf.mxu0
      %v4675 = vadd.f32 0.0, %v4674
      %v4676 = vpop.f32.mrf.mxu0
      %4677 = vmatprep.mubr.bf16.mxu0 0
      %4678 = vmatmul.mubr.bf16.gmra.mxu0 %v4585
      %v4679 = vpop.f32.mrf.mxu0
      %v4680 = vadd.f32 0.0, %v4679
      %v4681 = vpop.f32.mrf.mxu0
      %v4682 = vpop.f32.mrf.mxu0
      %v4683 = vadd.f32 0.0, %v4682
      %v4684 = vpop.f32.mrf.mxu0
      %4685 = vmatprep.mubr.bf16.mxu0 0
      %4686 = vmatmul.mubr.bf16.gmra.mxu0 %v4588
      %v4687 = vpop.f32.mrf.mxu0
      %v4688 = vadd.f32 0.0, %v4687
      %v4689 = vpop.f32.mrf.mxu0
      %v4690 = vpop.f32.mrf.mxu0
      %v4691 = vadd.f32 0.0, %v4690
      %v4692 = vpop.f32.mrf.mxu0
      %4693 = vmatprep.mubr.bf16.mxu0 0
      %4694 = vmatmul.mubr.bf16.gmra.mxu0 %v4591
      %v4695 = vpop.f32.mrf.mxu0
      %v4696 = vadd.f32 0.0, %v4695
      %v4697 = vpop.f32.mrf.mxu0
      %v4698 = vpop.f32.mrf.mxu0
      %v4699 = vadd.f32 0.0, %v4698
      %v4700 = vpop.f32.mrf.mxu0
      %4701 = vmatprep.mubr.bf16.mxu0 0
      %4702 = vmatmul.mubr.bf16.gmra.mxu0 %v4594
      %v4703 = vpop.f32.mrf.mxu0
      %v4704 = vadd.f32 0.0, %v4703
      %v4705 = vpop.f32.mrf.mxu0
      %v4706 = vpop.f32.mrf.mxu0
      %v4707 = vadd.f32 0.0, %v4706
      %v4708 = vpop.f32.mrf.mxu0
      %4709 = vmatprep.mubr.bf16.mxu0 0
      %4710 = vmatmul.mubr.bf16.gmra.mxu0 %v4597
      %v4711 = vpop.f32.mrf.mxu0
      %v4712 = vadd.f32 0.0, %v4711
      %v4713 = vpop.f32.mrf.mxu0
      %v4714 = vpop.f32.mrf.mxu0
      %v4715 = vadd.f32 0.0, %v4714
      %v4716 = vpop.f32.mrf.mxu0
      %4717 = vmatprep.mubr.bf16.mxu0 0
      %4718 = vmatmul.mubr.bf16.gmra.mxu0 %v4600
      %v4719 = vpop.f32.mrf.mxu0
      %v4720 = vadd.f32 0.0, %v4719
      %v4721 = vpop.f32.mrf.mxu0
      %v4722 = vpop.f32.mrf.mxu0
      %v4723 = vadd.f32 0.0, %v4722
      %v4724 = vpop.f32.mrf.mxu0
      %4725 = vmatprep.mubr.bf16.mxu0 0
      %4726 = vmatmul.mubr.bf16.gmra.mxu0 %v4603
      %v4727 = vpop.f32.mrf.mxu0
      %v4728 = vadd.f32 0.0, %v4727
      %v4729 = vpop.f32.mrf.mxu0
      %v4730 = vpop.f32.mrf.mxu0
      %v4731 = vadd.f32 0.0, %v4730
      %v4732 = vpop.f32.mrf.mxu0
      %4733 = vmatprep.mubr.bf16.mxu0 0
      %4734 = vmatmul.mubr.bf16.gmra.mxu0 %v4606
      %v4735 = vpop.f32.mrf.mxu0
      %v4736 = vadd.f32 0.0, %v4735
      %v4737 = vpop.f32.mrf.mxu0
      %v4738 = vpop.f32.mrf.mxu0
      %v4739 = vadd.f32 0.0, %v4738
      %v4740 = vpop.f32.mrf.mxu0
      %4741 = vmatprep.mubr.bf16.mxu0 0
      %4742 = vmatmul.mubr.bf16.gmra.mxu0 %v4609
      %v4743 = vpop.f32.mrf.mxu0
      %v4744 = vadd.f32 0.0, %v4743
      %v4745 = vpop.f32.mrf.mxu0
      %v4746 = vpop.f32.mrf.mxu0
      %v4747 = vadd.f32 0.0, %v4746
      %v4748 = vpop.f32.mrf.mxu0
      %4749 = vmatprep.mubr.bf16.mxu0 0
      %4750 = vmatmul.mubr.bf16.gmra.mxu0 %v4612
      %v4751 = vpop.f32.mrf.mxu0
      %v4752 = vadd.f32 0.0, %v4751
      %v4753 = vpop.f32.mrf.mxu0
      %v4754 = vpop.f32.mrf.mxu0
      %v4755 = vadd.f32 0.0, %v4754
      %v4756 = vpop.f32.mrf.mxu0
      %4757 = vmatprep.mubr.bf16.mxu0 0
      %4758 = vmatmul.mubr.bf16.gmra.mxu0 %v4615
      %v4759 = vpop.f32.mrf.mxu0
      %v4760 = vadd.f32 0.0, %v4759
      %v4761 = vpop.f32.mrf.mxu0
      %v4762 = vpop.f32.mrf.mxu0
      %v4763 = vadd.f32 0.0, %v4762
      %v4764 = vpop.f32.mrf.mxu0
      %4765 = vmatprep.mubr.bf16.mxu0 0
      %4766 = vmatmul.mubr.bf16.gmra.mxu0 %v4618
      %v4767 = vpop.f32.mrf.mxu0
      %v4768 = vadd.f32 0.0, %v4767
      %v4769 = vpop.f32.mrf.mxu0
      %v4770 = vpop.f32.mrf.mxu0
      %v4771 = vadd.f32 0.0, %v4770
      %v4772 = vpop.f32.mrf.mxu0
      %4773 = vmatprep.mubr.bf16.mxu0 0
      %4774 = vmatmul.mubr.bf16.gmra.mxu0 %v4621
      %v4775 = vpop.f32.mrf.mxu0
      %v4776 = vadd.f32 0.0, %v4775
      %v4777 = vpop.f32.mrf.mxu0
      %v4778 = vpop.f32.mrf.mxu0
      %v4779 = vadd.f32 0.0, %v4778
      %v4780 = vpop.f32.mrf.mxu0
      %4781 = vmatprep.mubr.bf16.mxu0 0
      %4782 = vmatmul.mubr.bf16.gmra.mxu0 %v4624
      %v4783 = vpop.f32.mrf.mxu0
      %v4784 = vadd.f32 0.0, %v4783
      %v4785 = vpop.f32.mrf.mxu0
      %v4786 = vpop.f32.mrf.mxu0
      %v4787 = vadd.f32 0.0, %v4786
      %v4788 = vpop.f32.mrf.mxu0
      %4789 = vdwg.mxu0
      %v4790 = vadd.f32 %v4064, %v4664
      %v4791 = vadd.f32 %v4065, %v4667
      %v4792 = vadd.f32 %v4066, %v4672
      %v4793 = vadd.f32 %v4067, %v4675
      %v4794 = vadd.f32 %v4068, %v4680
      %v4795 = vadd.f32 %v4069, %v4683
      %v4796 = vadd.f32 %v4070, %v4688
      %v4797 = vadd.f32 %v4071, %v4691
      %v4798 = vadd.f32 %v4072, %v4696
      %v4799 = vadd.f32 %v4073, %v4699
      %v4800 = vadd.f32 %v4074, %v4704
      %v4801 = vadd.f32 %v4075, %v4707
      %v4802 = vadd.f32 %v4076, %v4712
      %v4803 = vadd.f32 %v4077, %v4715
      %v4804 = vadd.f32 %v4078, %v4720
      %v4805 = vadd.f32 %v4079, %v4723
      %v4806 = vadd.f32 %v4080, %v4728
      %v4807 = vadd.f32 %v4081, %v4731
      %v4808 = vadd.f32 %v4082, %v4736
      %v4809 = vadd.f32 %v4083, %v4739
      %v4810 = vadd.f32 %v4084, %v4744
      %v4811 = vadd.f32 %v4085, %v4747
      %v4812 = vadd.f32 %v4086, %v4752
      %v4813 = vadd.f32 %v4087, %v4755
      %v4814 = vadd.f32 %v4088, %v4760
      %v4815 = vadd.f32 %v4089, %v4763
      %v4816 = vadd.f32 %v4090, %v4768
      %v4817 = vadd.f32 %v4091, %v4771
      %v4818 = vadd.f32 %v4092, %v4776
      %v4819 = vadd.f32 %v4093, %v4779
      %v4820 = vadd.f32 %v4094, %v4784
      %v4821 = vadd.f32 %v4095, %v4787
      %v4822 = vld [vmem:[%s3737] sm:$0xe]
      %v4823 = vld [vmem:[%s3737 + $0xc] sm:$0xe]
      %v4824 = vld [vmem:[%s3737 + $0x18] sm:$0xe]
      %v4825 = vld [vmem:[%s3737 + $0x24] sm:$0xe]
      %v4826 = vld [vmem:[%s3737 + $0x30] sm:$0xe]
      %v4827 = vld [vmem:[%s3737 + $0x3c] sm:$0xe]
      %v4828 = vld [vmem:[%s3737 + $0x48] sm:$0xe]
      %v4829 = vld [vmem:[%s3737 + $0x54] sm:$0xe]
      %v4830 = vld [vmem:[%s3737 + $0x60] sm:$0xe]
      %v4831 = vld [vmem:[%s3737 + $0x6c] sm:$0xe]
      %v4832 = vld [vmem:[%s3737 + $0x78] sm:$0xe]
      %v4833 = vld [vmem:[%s3737 + $0x84] sm:$0xe]
      %v4834 = vld [vmem:[%s3737 + $0x90] sm:$0xe]
      %v4835 = vld [vmem:[%s3737 + $0x9c] sm:$0xe]
      %v4836 = vld [vmem:[%s3737 + $0xa8] sm:$0xe]
      %v4837 = vld [vmem:[%s3737 + $0xb4] sm:$0xe]
      %v4886 = vrot.slane %v4822, 5
      %v4887 = vrot.slane %v4886, 4
      %v4888 = vrot.slane %v4097, 5
      %v4889 = vsel %vm1769, %v4887, %v4888
      %v4890 = vrot.slane %v4888, 4
      %v4891 = vrot.slane %v4098, 5
      %v4892 = vsel %vm1769, %v4890, %v4891
      %v4893 = vrot.slane %v4823, 5
      %v4894 = vrot.slane %v4893, 4
      %v4895 = vrot.slane %v4100, 5
      %v4896 = vsel %vm1769, %v4894, %v4895
      %v4897 = vrot.slane %v4895, 4
      %v4898 = vrot.slane %v4101, 5
      %v4899 = vsel %vm1769, %v4897, %v4898
      %v4900 = vrot.slane %v4824, 5
      %v4901 = vrot.slane %v4900, 4
      %v4902 = vrot.slane %v4103, 5
      %v4903 = vsel %vm1769, %v4901, %v4902
      %v4904 = vrot.slane %v4902, 4
      %v4905 = vrot.slane %v4104, 5
      %v4906 = vsel %vm1769, %v4904, %v4905
      %v4907 = vrot.slane %v4825, 5
      %v4908 = vrot.slane %v4907, 4
      %v4909 = vrot.slane %v4106, 5
      %v4910 = vsel %vm1769, %v4908, %v4909
      %v4911 = vrot.slane %v4909, 4
      %v4912 = vrot.slane %v4107, 5
      %v4913 = vsel %vm1769, %v4911, %v4912
      %v4914 = vrot.slane %v4826, 5
      %v4915 = vrot.slane %v4914, 4
      %v4916 = vrot.slane %v4109, 5
      %v4917 = vsel %vm1769, %v4915, %v4916
      %v4918 = vrot.slane %v4916, 4
      %v4919 = vrot.slane %v4110, 5
      %v4920 = vsel %vm1769, %v4918, %v4919
      %v4921 = vrot.slane %v4827, 5
      %v4922 = vrot.slane %v4921, 4
      %v4923 = vrot.slane %v4112, 5
      %v4924 = vsel %vm1769, %v4922, %v4923
      %v4925 = vrot.slane %v4923, 4
      %v4926 = vrot.slane %v4113, 5
      %v4927 = vsel %vm1769, %v4925, %v4926
      %v4928 = vrot.slane %v4828, 5
      %v4929 = vrot.slane %v4928, 4
      %v4930 = vrot.slane %v4115, 5
      %v4931 = vsel %vm1769, %v4929, %v4930
      %v4932 = vrot.slane %v4930, 4
      %v4933 = vrot.slane %v4116, 5
      %v4934 = vsel %vm1769, %v4932, %v4933
      %v4935 = vrot.slane %v4829, 5
      %v4936 = vrot.slane %v4935, 4
      %v4937 = vrot.slane %v4118, 5
      %v4938 = vsel %vm1769, %v4936, %v4937
      %v4939 = vrot.slane %v4937, 4
      %v4940 = vrot.slane %v4119, 5
      %v4941 = vsel %vm1769, %v4939, %v4940
      %v4942 = vrot.slane %v4830, 5
      %v4943 = vrot.slane %v4942, 4
      %v4944 = vrot.slane %v4121, 5
      %v4945 = vsel %vm1769, %v4943, %v4944
      %v4946 = vrot.slane %v4944, 4
      %v4947 = vrot.slane %v4122, 5
      %v4948 = vsel %vm1769, %v4946, %v4947
      %v4949 = vrot.slane %v4831, 5
      %v4950 = vrot.slane %v4949, 4
      %v4951 = vrot.slane %v4124, 5
      %v4952 = vsel %vm1769, %v4950, %v4951
      %v4953 = vrot.slane %v4951, 4
      %v4954 = vrot.slane %v4125, 5
      %v4955 = vsel %vm1769, %v4953, %v4954
      %v4956 = vrot.slane %v4832, 5
      %v4957 = vrot.slane %v4956, 4
      %v4958 = vrot.slane %v4127, 5
      %v4959 = vsel %vm1769, %v4957, %v4958
      %v4960 = vrot.slane %v4958, 4
      %v4961 = vrot.slane %v4128, 5
      %v4962 = vsel %vm1769, %v4960, %v4961
      %v4963 = vrot.slane %v4833, 5
      %v4964 = vrot.slane %v4963, 4
      %v4965 = vrot.slane %v4130, 5
      %v4966 = vsel %vm1769, %v4964, %v4965
      %v4967 = vrot.slane %v4965, 4
      %v4968 = vrot.slane %v4131, 5
      %v4969 = vsel %vm1769, %v4967, %v4968
      %v4970 = vrot.slane %v4834, 5
      %v4971 = vrot.slane %v4970, 4
      %v4972 = vrot.slane %v4133, 5
      %v4973 = vsel %vm1769, %v4971, %v4972
      %v4974 = vrot.slane %v4972, 4
      %v4975 = vrot.slane %v4134, 5
      %v4976 = vsel %vm1769, %v4974, %v4975
      %v4977 = vrot.slane %v4835, 5
      %v4978 = vrot.slane %v4977, 4
      %v4979 = vrot.slane %v4136, 5
      %v4980 = vsel %vm1769, %v4978, %v4979
      %v4981 = vrot.slane %v4979, 4
      %v4982 = vrot.slane %v4137, 5
      %v4983 = vsel %vm1769, %v4981, %v4982
      %v4984 = vrot.slane %v4836, 5
      %v4985 = vrot.slane %v4984, 4
      %v4986 = vrot.slane %v4139, 5
      %v4987 = vsel %vm1769, %v4985, %v4986
      %v4988 = vrot.slane %v4986, 4
      %v4989 = vrot.slane %v4140, 5
      %v4990 = vsel %vm1769, %v4988, %v4989
      %v4991 = vrot.slane %v4837, 5
      %v4992 = vrot.slane %v4991, 4
      %v4993 = vrot.slane %v4142, 5
      %v4994 = vsel %vm1769, %v4992, %v4993
      %v4995 = vrot.slane %v4993, 4
      %v4996 = vrot.slane %v4143, 5
      %v4997 = vsel %vm1769, %v4995, %v4996
      %s4998 = scalar_lea.vmem %s1, 32
      %v4999 = vld [vmem:[%s4998] sm:$0xf]
      %v5000 = vunpack.c.l.b16 %v4889
      %v5001 = vunpack.c.l.b16 %v4892
      %v5002 = vunpack.c.l.b16 %v4896
      %v5003 = vunpack.c.l.b16 %v4899
      %v5004 = vunpack.c.l.b16 %v4903
      %v5005 = vunpack.c.l.b16 %v4906
      %v5006 = vunpack.c.l.b16 %v4910
      %v5007 = vunpack.c.l.b16 %v4913
      %v5008 = vunpack.c.l.b16 %v4917
      %v5009 = vunpack.c.l.b16 %v4920
      %v5010 = vunpack.c.l.b16 %v4924
      %v5011 = vunpack.c.l.b16 %v4927
      %v5012 = vunpack.c.l.b16 %v4931
      %v5013 = vunpack.c.l.b16 %v4934
      %v5014 = vunpack.c.l.b16 %v4938
      %v5015 = vunpack.c.l.b16 %v4941
      %v5016 = vunpack.c.l.b16 %v4945
      %v5017 = vunpack.c.l.b16 %v4948
      %v5018 = vunpack.c.l.b16 %v4952
      %v5019 = vunpack.c.l.b16 %v4955
      %v5020 = vunpack.c.l.b16 %v4959
      %v5021 = vunpack.c.l.b16 %v4962
      %v5022 = vunpack.c.l.b16 %v4966
      %v5023 = vunpack.c.l.b16 %v4969
      %v5024 = vunpack.c.l.b16 %v4973
      %v5025 = vunpack.c.l.b16 %v4976
      %v5026 = vunpack.c.l.b16 %v4980
      %v5027 = vunpack.c.l.b16 %v4983
      %v5028 = vunpack.c.l.b16 %v4987
      %v5029 = vunpack.c.l.b16 %v4990
      %v5030 = vunpack.c.l.b16 %v4994
      %v5031 = vunpack.c.l.b16 %v4997
      %v5032 = vpack.c.b16 %v5001, %v5000
      %v5033 = vpack.c.b16 %v5003, %v5002
      %v5034 = vpack.c.b16 %v5005, %v5004
      %v5035 = vpack.c.b16 %v5007, %v5006
      %v5036 = vpack.c.b16 %v5009, %v5008
      %v5037 = vpack.c.b16 %v5011, %v5010
      %v5038 = vpack.c.b16 %v5013, %v5012
      %v5039 = vpack.c.b16 %v5015, %v5014
      %v5040 = vpack.c.b16 %v5017, %v5016
      %v5041 = vpack.c.b16 %v5019, %v5018
      %v5042 = vpack.c.b16 %v5021, %v5020
      %v5043 = vpack.c.b16 %v5023, %v5022
      %v5044 = vpack.c.b16 %v5025, %v5024
      %v5045 = vpack.c.b16 %v5027, %v5026
      %v5046 = vpack.c.b16 %v5029, %v5028
      %v5047 = vpack.c.b16 %v5031, %v5030
      %v5049 = vsel %vm1213, %v5032, 0
      %v5052 = vsel %vm1213, %v5033, 0
      %v5055 = vsel %vm1213, %v5034, 0
      %v5058 = vsel %vm1213, %v5035, 0
      %v5061 = vsel %vm1213, %v5036, 0
      %v5064 = vsel %vm1213, %v5037, 0
      %v5067 = vsel %vm1213, %v5038, 0
      %v5070 = vsel %vm1213, %v5039, 0
      %v5073 = vsel %vm1213, %v5040, 0
      %v5076 = vsel %vm1213, %v5041, 0
      %v5079 = vsel %vm1213, %v5042, 0
      %v5082 = vsel %vm1213, %v5043, 0
      %v5085 = vsel %vm1213, %v5044, 0
      %v5088 = vsel %vm1213, %v5045, 0
      %v5091 = vsel %vm1213, %v5046, 0
      %v5094 = vsel %vm1213, %v5047, 0
      %v5097 = vsel %vm1262, %v4999, 0
      %5099 = vmatprep.subr.bf16.mxu0 0
      %5100 = vmatpush1.bf16.msra.mxu0 0
      %5101 = vmatprep.subr.bf16.mxu0 0
      %5102 = vmatpush1.bf16.msra.mxu0 0
      %5103 = vmatprep.subr.bf16.mxu0 0
      %5104 = vmatpush1.bf16.msra.mxu0 0
      %5105 = vmatprep.subr.bf16.mxu0 0
      %5106 = vmatpush1.bf16.msra.mxu0 0
      %5107 = vmatprep.subr.bf16.mxu0 0
      %5108 = vmatpush1.bf16.msra.mxu0 0
      %5109 = vmatprep.subr.bf16.mxu0 0
      %5110 = vmatpush1.bf16.msra.mxu0 0
      %5111 = vmatprep.subr.bf16.mxu0 0
      %5112 = vmatpush1.bf16.msra.mxu0 0
      %5113 = vmatprep.subr.bf16.mxu0 0
      %5114 = vmatpush1.bf16.msra.mxu0 %v5097
      %5115 = vmatprep.subr.bf16.mxu0 0
      %5116 = vmatpush2.bf16.msra.mxu0 0
      %5117 = vmatprep.subr.bf16.mxu0 0
      %5118 = vmatpush2.bf16.msra.mxu0 0
      %5119 = vmatprep.subr.bf16.mxu0 0
      %5120 = vmatpush2.bf16.msra.mxu0 0
      %5121 = vmatprep.subr.bf16.mxu0 0
      %5122 = vmatpush2.bf16.msra.mxu0 0
      %5123 = vmatprep.subr.bf16.mxu0 0
      %5124 = vmatpush2.bf16.msra.mxu0 0
      %5125 = vmatprep.subr.bf16.mxu0 0
      %5126 = vmatpush2.bf16.msra.mxu0 0
      %5127 = vmatprep.subr.bf16.mxu0 0
      %5128 = vmatpush2.bf16.msra.mxu0 0
      %5129 = vmatprep.subr.bf16.mxu0 0
      %5130 = vmatpush2.bf16.msra.mxu0 0
      %5131 = vmatprep.mubr.bf16.mxu0 0
      %5132 = vmatmul.mubr.bf16.gmra.mxu0 %v5049
      %v5133 = vpop.f32.mrf.mxu0
      %v5134 = vadd.f32 0.0, %v5133
      %v5135 = vpop.f32.mrf.mxu0
      %v5136 = vpop.f32.mrf.mxu0
      %v5137 = vadd.f32 0.0, %v5136
      %v5138 = vpop.f32.mrf.mxu0
      %5139 = vmatprep.mubr.bf16.mxu0 0
      %5140 = vmatmul.mubr.bf16.gmra.mxu0 %v5052
      %v5141 = vpop.f32.mrf.mxu0
      %v5142 = vadd.f32 0.0, %v5141
      %v5143 = vpop.f32.mrf.mxu0
      %v5144 = vpop.f32.mrf.mxu0
      %v5145 = vadd.f32 0.0, %v5144
      %v5146 = vpop.f32.mrf.mxu0
      %5147 = vmatprep.mubr.bf16.mxu0 0
      %5148 = vmatmul.mubr.bf16.gmra.mxu0 %v5055
      %v5149 = vpop.f32.mrf.mxu0
      %v5150 = vadd.f32 0.0, %v5149
      %v5151 = vpop.f32.mrf.mxu0
      %v5152 = vpop.f32.mrf.mxu0
      %v5153 = vadd.f32 0.0, %v5152
      %v5154 = vpop.f32.mrf.mxu0
      %5155 = vmatprep.mubr.bf16.mxu0 0
      %5156 = vmatmul.mubr.bf16.gmra.mxu0 %v5058
      %v5157 = vpop.f32.mrf.mxu0
      %v5158 = vadd.f32 0.0, %v5157
      %v5159 = vpop.f32.mrf.mxu0
      %v5160 = vpop.f32.mrf.mxu0
      %v5161 = vadd.f32 0.0, %v5160
      %v5162 = vpop.f32.mrf.mxu0
      %5163 = vmatprep.mubr.bf16.mxu0 0
      %5164 = vmatmul.mubr.bf16.gmra.mxu0 %v5061
      %v5165 = vpop.f32.mrf.mxu0
      %v5166 = vadd.f32 0.0, %v5165
      %v5167 = vpop.f32.mrf.mxu0
      %v5168 = vpop.f32.mrf.mxu0
      %v5169 = vadd.f32 0.0, %v5168
      %v5170 = vpop.f32.mrf.mxu0
      %5171 = vmatprep.mubr.bf16.mxu0 0
      %5172 = vmatmul.mubr.bf16.gmra.mxu0 %v5064
      %v5173 = vpop.f32.mrf.mxu0
      %v5174 = vadd.f32 0.0, %v5173
      %v5175 = vpop.f32.mrf.mxu0
      %v5176 = vpop.f32.mrf.mxu0
      %v5177 = vadd.f32 0.0, %v5176
      %v5178 = vpop.f32.mrf.mxu0
      %5179 = vmatprep.mubr.bf16.mxu0 0
      %5180 = vmatmul.mubr.bf16.gmra.mxu0 %v5067
      %v5181 = vpop.f32.mrf.mxu0
      %v5182 = vadd.f32 0.0, %v5181
      %v5183 = vpop.f32.mrf.mxu0
      %v5184 = vpop.f32.mrf.mxu0
      %v5185 = vadd.f32 0.0, %v5184
      %v5186 = vpop.f32.mrf.mxu0
      %5187 = vmatprep.mubr.bf16.mxu0 0
      %5188 = vmatmul.mubr.bf16.gmra.mxu0 %v5070
      %v5189 = vpop.f32.mrf.mxu0
      %v5190 = vadd.f32 0.0, %v5189
      %v5191 = vpop.f32.mrf.mxu0
      %v5192 = vpop.f32.mrf.mxu0
      %v5193 = vadd.f32 0.0, %v5192
      %v5194 = vpop.f32.mrf.mxu0
      %5195 = vmatprep.mubr.bf16.mxu0 0
      %5196 = vmatmul.mubr.bf16.gmra.mxu0 %v5073
      %v5197 = vpop.f32.mrf.mxu0
      %v5198 = vadd.f32 0.0, %v5197
      %v5199 = vpop.f32.mrf.mxu0
      %v5200 = vpop.f32.mrf.mxu0
      %v5201 = vadd.f32 0.0, %v5200
      %v5202 = vpop.f32.mrf.mxu0
      %5203 = vmatprep.mubr.bf16.mxu0 0
      %5204 = vmatmul.mubr.bf16.gmra.mxu0 %v5076
      %v5205 = vpop.f32.mrf.mxu0
      %v5206 = vadd.f32 0.0, %v5205
      %v5207 = vpop.f32.mrf.mxu0
      %v5208 = vpop.f32.mrf.mxu0
      %v5209 = vadd.f32 0.0, %v5208
      %v5210 = vpop.f32.mrf.mxu0
      %5211 = vmatprep.mubr.bf16.mxu0 0
      %5212 = vmatmul.mubr.bf16.gmra.mxu0 %v5079
      %v5213 = vpop.f32.mrf.mxu0
      %v5214 = vadd.f32 0.0, %v5213
      %v5215 = vpop.f32.mrf.mxu0
      %v5216 = vpop.f32.mrf.mxu0
      %v5217 = vadd.f32 0.0, %v5216
      %v5218 = vpop.f32.mrf.mxu0
      %5219 = vmatprep.mubr.bf16.mxu0 0
      %5220 = vmatmul.mubr.bf16.gmra.mxu0 %v5082
      %v5221 = vpop.f32.mrf.mxu0
      %v5222 = vadd.f32 0.0, %v5221
      %v5223 = vpop.f32.mrf.mxu0
      %v5224 = vpop.f32.mrf.mxu0
      %v5225 = vadd.f32 0.0, %v5224
      %v5226 = vpop.f32.mrf.mxu0
      %5227 = vmatprep.mubr.bf16.mxu0 0
      %5228 = vmatmul.mubr.bf16.gmra.mxu0 %v5085
      %v5229 = vpop.f32.mrf.mxu0
      %v5230 = vadd.f32 0.0, %v5229
      %v5231 = vpop.f32.mrf.mxu0
      %v5232 = vpop.f32.mrf.mxu0
      %v5233 = vadd.f32 0.0, %v5232
      %v5234 = vpop.f32.mrf.mxu0
      %5235 = vmatprep.mubr.bf16.mxu0 0
      %5236 = vmatmul.mubr.bf16.gmra.mxu0 %v5088
      %v5237 = vpop.f32.mrf.mxu0
      %v5238 = vadd.f32 0.0, %v5237
      %v5239 = vpop.f32.mrf.mxu0
      %v5240 = vpop.f32.mrf.mxu0
      %v5241 = vadd.f32 0.0, %v5240
      %v5242 = vpop.f32.mrf.mxu0
      %5243 = vmatprep.mubr.bf16.mxu0 0
      %5244 = vmatmul.mubr.bf16.gmra.mxu0 %v5091
      %v5245 = vpop.f32.mrf.mxu0
      %v5246 = vadd.f32 0.0, %v5245
      %v5247 = vpop.f32.mrf.mxu0
      %v5248 = vpop.f32.mrf.mxu0
      %v5249 = vadd.f32 0.0, %v5248
      %v5250 = vpop.f32.mrf.mxu0
      %5251 = vmatprep.mubr.bf16.mxu0 0
      %5252 = vmatmul.mubr.bf16.gmra.mxu0 %v5094
      %v5253 = vpop.f32.mrf.mxu0
      %v5254 = vadd.f32 0.0, %v5253
      %v5255 = vpop.f32.mrf.mxu0
      %v5256 = vpop.f32.mrf.mxu0
      %v5257 = vadd.f32 0.0, %v5256
      %v5258 = vpop.f32.mrf.mxu0
      %5259 = vdwg.mxu0
      %v5260 = vadd.f32 %v4790, %v5134
      %v5261 = vadd.f32 %v4791, %v5137
      %v5262 = vadd.f32 %v4792, %v5142
      %v5263 = vadd.f32 %v4793, %v5145
      %v5264 = vadd.f32 %v4794, %v5150
      %v5265 = vadd.f32 %v4795, %v5153
      %v5266 = vadd.f32 %v4796, %v5158
      %v5267 = vadd.f32 %v4797, %v5161
      %v5268 = vadd.f32 %v4798, %v5166
      %v5269 = vadd.f32 %v4799, %v5169
      %v5270 = vadd.f32 %v4800, %v5174
      %v5271 = vadd.f32 %v4801, %v5177
      %v5272 = vadd.f32 %v4802, %v5182
      %v5273 = vadd.f32 %v4803, %v5185
      %v5274 = vadd.f32 %v4804, %v5190
      %v5275 = vadd.f32 %v4805, %v5193
      %v5276 = vadd.f32 %v4806, %v5198
      %v5277 = vadd.f32 %v4807, %v5201
      %v5278 = vadd.f32 %v4808, %v5206
      %v5279 = vadd.f32 %v4809, %v5209
      %v5280 = vadd.f32 %v4810, %v5214
      %v5281 = vadd.f32 %v4811, %v5217
      %v5282 = vadd.f32 %v4812, %v5222
      %v5283 = vadd.f32 %v4813, %v5225
      %v5284 = vadd.f32 %v4814, %v5230
      %v5285 = vadd.f32 %v4815, %v5233
      %v5286 = vadd.f32 %v4816, %v5238
      %v5287 = vadd.f32 %v4817, %v5241
      %v5288 = vadd.f32 %v4818, %v5246
      %v5289 = vadd.f32 %v4819, %v5249
      %v5290 = vadd.f32 %v4820, %v5254
      %v5291 = vadd.f32 %v4821, %v5257
      %v5292 = vld [vmem:[%s2] sm:$0x1]
      %v5294 = vlaneseq
      %v5295 = vshrl.u32 %v5294, 7
      %v5296 = vsub.s32 0, %v5295
      %v5297 = vrot.slane %v5292, %v5296
      %v5299 = vadd.f32 %v5260, %v5297
      %v5300 = vadd.f32 %v5261, %v5297
      %v5301 = vadd.f32 %v5262, %v5297
      %v5302 = vadd.f32 %v5263, %v5297
      %v5303 = vadd.f32 %v5264, %v5297
      %v5304 = vadd.f32 %v5265, %v5297
      %v5305 = vadd.f32 %v5266, %v5297
      %v5306 = vadd.f32 %v5267, %v5297
      %v5307 = vadd.f32 %v5268, %v5297
      %v5308 = vadd.f32 %v5269, %v5297
      %v5309 = vadd.f32 %v5270, %v5297
      %v5310 = vadd.f32 %v5271, %v5297
      %v5311 = vadd.f32 %v5272, %v5297
      %v5312 = vadd.f32 %v5273, %v5297
      %v5313 = vadd.f32 %v5274, %v5297
      %v5314 = vadd.f32 %v5275, %v5297
      %v5315 = vadd.f32 %v5276, %v5297
      %v5316 = vadd.f32 %v5277, %v5297
      %v5317 = vadd.f32 %v5278, %v5297
      %v5318 = vadd.f32 %v5279, %v5297
      %v5319 = vadd.f32 %v5280, %v5297
      %v5320 = vadd.f32 %v5281, %v5297
      %v5321 = vadd.f32 %v5282, %v5297
      %v5322 = vadd.f32 %v5283, %v5297
      %v5323 = vadd.f32 %v5284, %v5297
      %v5324 = vadd.f32 %v5285, %v5297
      %v5325 = vadd.f32 %v5286, %v5297
      %v5326 = vadd.f32 %v5287, %v5297
      %v5327 = vadd.f32 %v5288, %v5297
      %v5328 = vadd.f32 %v5289, %v5297
      %v5329 = vadd.f32 %v5290, %v5297
      %v5330 = vadd.f32 %v5291, %v5297
      %v5331 = vmax.f32 %v5299, 0.0
      %v5332 = vmax.f32 %v5300, 0.0
      %v5333 = vmax.f32 %v5301, 0.0
      %v5334 = vmax.f32 %v5302, 0.0
      %v5335 = vmax.f32 %v5303, 0.0
      %v5336 = vmax.f32 %v5304, 0.0
      %v5337 = vmax.f32 %v5305, 0.0
      %v5338 = vmax.f32 %v5306, 0.0
      %v5339 = vmax.f32 %v5307, 0.0
      %v5340 = vmax.f32 %v5308, 0.0
      %v5341 = vmax.f32 %v5309, 0.0
      %v5342 = vmax.f32 %v5310, 0.0
      %v5343 = vmax.f32 %v5311, 0.0
      %v5344 = vmax.f32 %v5312, 0.0
      %v5345 = vmax.f32 %v5313, 0.0
      %v5346 = vmax.f32 %v5314, 0.0
      %v5347 = vmax.f32 %v5315, 0.0
      %v5348 = vmax.f32 %v5316, 0.0
      %v5349 = vmax.f32 %v5317, 0.0
      %v5350 = vmax.f32 %v5318, 0.0
      %v5351 = vmax.f32 %v5319, 0.0
      %v5352 = vmax.f32 %v5320, 0.0
      %v5353 = vmax.f32 %v5321, 0.0
      %v5354 = vmax.f32 %v5322, 0.0
      %v5355 = vmax.f32 %v5323, 0.0
      %v5356 = vmax.f32 %v5324, 0.0
      %v5357 = vmax.f32 %v5325, 0.0
      %v5358 = vmax.f32 %v5326, 0.0
      %v5359 = vmax.f32 %v5327, 0.0
      %v5360 = vmax.f32 %v5328, 0.0
      %v5361 = vmax.f32 %v5329, 0.0
      %v5362 = vmax.f32 %v5330, 0.0
      %v5363 = vpack.c.bf16 %v5332, %v5331
      %v5364 = vpack.c.bf16 %v5334, %v5333
      %v5365 = vpack.c.bf16 %v5336, %v5335
      %v5366 = vpack.c.bf16 %v5338, %v5337
      %v5367 = vpack.c.bf16 %v5340, %v5339
      %v5368 = vpack.c.bf16 %v5342, %v5341
      %v5369 = vpack.c.bf16 %v5344, %v5343
      %v5370 = vpack.c.bf16 %v5346, %v5345
      %v5371 = vpack.c.bf16 %v5348, %v5347
      %v5372 = vpack.c.bf16 %v5350, %v5349
      %v5373 = vpack.c.bf16 %v5352, %v5351
      %v5374 = vpack.c.bf16 %v5354, %v5353
      %v5375 = vpack.c.bf16 %v5356, %v5355
      %v5376 = vpack.c.bf16 %v5358, %v5357
      %v5377 = vpack.c.bf16 %v5360, %v5359
      %v5378 = vpack.c.bf16 %v5362, %v5361
      %v5395 = vunpack.c.l.b16 %v5363
      %v5396 = vunpack.c.h.b16 %v5363
      %v5397 = vunpack.c.l.b16 %v5364
      %v5398 = vunpack.c.h.b16 %v5364
      %v5399 = vunpack.c.l.b16 %v5365
      %v5400 = vunpack.c.h.b16 %v5365
      %v5401 = vunpack.c.l.b16 %v5366
      %v5402 = vunpack.c.h.b16 %v5366
      %v5403 = vunpack.c.l.b16 %v5367
      %v5404 = vunpack.c.h.b16 %v5367
      %v5405 = vunpack.c.l.b16 %v5368
      %v5406 = vunpack.c.h.b16 %v5368
      %v5407 = vunpack.c.l.b16 %v5369
      %v5408 = vunpack.c.h.b16 %v5369
      %v5409 = vunpack.c.l.b16 %v5370
      %v5410 = vunpack.c.h.b16 %v5370
      %v5411 = vunpack.c.l.b16 %v5371
      %v5412 = vunpack.c.h.b16 %v5371
      %v5413 = vunpack.c.l.b16 %v5372
      %v5414 = vunpack.c.h.b16 %v5372
      %v5415 = vunpack.c.l.b16 %v5373
      %v5416 = vunpack.c.h.b16 %v5373
      %v5417 = vunpack.c.l.b16 %v5374
      %v5418 = vunpack.c.h.b16 %v5374
      %v5419 = vunpack.c.l.b16 %v5375
      %v5420 = vunpack.c.h.b16 %v5375
      %v5421 = vunpack.c.l.b16 %v5376
      %v5422 = vunpack.c.h.b16 %v5376
      %v5423 = vunpack.c.l.b16 %v5377
      %v5424 = vunpack.c.h.b16 %v5377
      %v5425 = vunpack.c.l.b16 %v5378
      %v5426 = vunpack.c.h.b16 %v5378
      %v5427 = vpack.c.b16 %v5395, %v5395
      %v5428 = vpack.c.b16 %v5396, %v5396
      %v5429 = vpack.c.b16 %v5397, %v5397
      %v5430 = vpack.c.b16 %v5398, %v5398
      %v5431 = vpack.c.b16 %v5399, %v5399
      %v5432 = vpack.c.b16 %v5400, %v5400
      %v5433 = vpack.c.b16 %v5401, %v5401
      %v5434 = vpack.c.b16 %v5402, %v5402
      %v5435 = vpack.c.b16 %v5403, %v5403
      %v5436 = vpack.c.b16 %v5404, %v5404
      %v5437 = vpack.c.b16 %v5405, %v5405
      %v5438 = vpack.c.b16 %v5406, %v5406
      %v5439 = vpack.c.b16 %v5407, %v5407
      %v5440 = vpack.c.b16 %v5408, %v5408
      %v5441 = vpack.c.b16 %v5409, %v5409
      %v5442 = vpack.c.b16 %v5410, %v5410
      %v5443 = vpack.c.b16 %v5411, %v5411
      %v5444 = vpack.c.b16 %v5412, %v5412
      %v5445 = vpack.c.b16 %v5413, %v5413
      %v5446 = vpack.c.b16 %v5414, %v5414
      %v5447 = vpack.c.b16 %v5415, %v5415
      %v5448 = vpack.c.b16 %v5416, %v5416
      %v5449 = vpack.c.b16 %v5417, %v5417
      %v5450 = vpack.c.b16 %v5418, %v5418
      %v5451 = vpack.c.b16 %v5419, %v5419
      %v5452 = vpack.c.b16 %v5420, %v5420
      %v5453 = vpack.c.b16 %v5421, %v5421
      %v5454 = vpack.c.b16 %v5422, %v5422
      %v5455 = vpack.c.b16 %v5423, %v5423
      %v5456 = vpack.c.b16 %v5424, %v5424
      %v5457 = vpack.c.b16 %v5425, %v5425
      %v5458 = vpack.c.b16 %v5426, %v5426
      %vm5491 = vcmask 60416
      %5492 = vst.msk [vmem:[%s186] sm:$0xf] %vm5491, %v5427
      %5493 = vst.msk [vmem:[%s186 + $0x4] sm:$0xf] %vm5491, %v5428
      %5494 = vst.msk [vmem:[%s186 + $0x8] sm:$0xf] %vm5491, %v5429
      %5495 = vst.msk [vmem:[%s186 + $0xc] sm:$0xf] %vm5491, %v5430
      %5496 = vst.msk [vmem:[%s186 + $0x10] sm:$0xf] %vm5491, %v5431
      %5497 = vst.msk [vmem:[%s186 + $0x14] sm:$0xf] %vm5491, %v5432
      %5498 = vst.msk [vmem:[%s186 + $0x18] sm:$0xf] %vm5491, %v5433
      %5499 = vst.msk [vmem:[%s186 + $0x1c] sm:$0xf] %vm5491, %v5434
      %5500 = vst.msk [vmem:[%s186 + $0x20] sm:$0xf] %vm5491, %v5435
      %5501 = vst.msk [vmem:[%s186 + $0x24] sm:$0xf] %vm5491, %v5436
      %5502 = vst.msk [vmem:[%s186 + $0x28] sm:$0xf] %vm5491, %v5437
      %5503 = vst.msk [vmem:[%s186 + $0x2c] sm:$0xf] %vm5491, %v5438
      %5504 = vst.msk [vmem:[%s186 + $0x30] sm:$0xf] %vm5491, %v5439
      %5505 = vst.msk [vmem:[%s186 + $0x34] sm:$0xf] %vm5491, %v5440
      %5506 = vst.msk [vmem:[%s186 + $0x38] sm:$0xf] %vm5491, %v5441
      %5507 = vst.msk [vmem:[%s186 + $0x3c] sm:$0xf] %vm5491, %v5442
      %5508 = vst.msk [vmem:[%s186 + $0x40] sm:$0xf] %vm5491, %v5443
      %5509 = vst.msk [vmem:[%s186 + $0x44] sm:$0xf] %vm5491, %v5444
      %5510 = vst.msk [vmem:[%s186 + $0x48] sm:$0xf] %vm5491, %v5445
      %5511 = vst.msk [vmem:[%s186 + $0x4c] sm:$0xf] %vm5491, %v5446
      %5512 = vst.msk [vmem:[%s186 + $0x50] sm:$0xf] %vm5491, %v5447
      %5513 = vst.msk [vmem:[%s186 + $0x54] sm:$0xf] %vm5491, %v5448
      %5514 = vst.msk [vmem:[%s186 + $0x58] sm:$0xf] %vm5491, %v5449
      %5515 = vst.msk [vmem:[%s186 + $0x5c] sm:$0xf] %vm5491, %v5450
      %5516 = vst.msk [vmem:[%s186 + $0x60] sm:$0xf] %vm5491, %v5451
      %5517 = vst.msk [vmem:[%s186 + $0x64] sm:$0xf] %vm5491, %v5452
      %5518 = vst.msk [vmem:[%s186 + $0x68] sm:$0xf] %vm5491, %v5453
      %5519 = vst.msk [vmem:[%s186 + $0x6c] sm:$0xf] %vm5491, %v5454
      %5520 = vst.msk [vmem:[%s186 + $0x70] sm:$0xf] %vm5491, %v5455
      %5521 = vst.msk [vmem:[%s186 + $0x74] sm:$0xf] %vm5491, %v5456
      %5522 = vst.msk [vmem:[%s186 + $0x78] sm:$0xf] %vm5491, %v5457
      %5523 = vst.msk [vmem:[%s186 + $0x7c] sm:$0xf] %vm5491, %v5458
      %s5524 = sadd.s32 %s18, %s19
      %s5525 = smul.u32 32, %s5524
      %p5526 = scmp.lt.s32.totalorder %s5525, 63
      %s5527 = scalar_select %p5526, %s5525, 63
      %s5528 = smul.addr %s5527, 4
      %s5529 = scalar_lea.vmem %s3, %s5528
      // Predicated region
      $region37: #{bottleneck_forward_nchw.4} parent=31 // pred_check
        %p5530 = pneg %p114
      $region38: #{bottleneck_forward_nchw.4} parent=31 // pred_check_branch
        %5532 = sbr.rel (%p5530) target = $region40
      $region39: #{bottleneck_forward_nchw.4} parent=31 // pred_region
        %s5533 = sadd.s32 %s18, %s19
        %s5534 = smul.u32 32, %s5533
      $region40: #{bottleneck_forward_nchw.4} parent=31 // pred_fallthru
        _
    $region32: #{bottleneck_forward_nchw.4} parent=5 // pred_fallthru
      _
    %p5535 = scmp.le.s32.totalorder 2, %s9
    // Predicated region
    $region41: #{bottleneck_forward_nchw.4} parent=5 // pred_check
      %p5536 = pneg %p5535
    $region42: #{bottleneck_forward_nchw.4} parent=5 // pred_check_branch
      %5538 = sbr.rel (%p5536) target = $region44
    $region43: #{bottleneck_forward_nchw.4} parent=5 // pred_region
      %s5539 = ssub.s32 %s9, 2
      // Predicated region
      $region45: #{bottleneck_forward_nchw.4} parent=43 // pred_check
        %p5540 = pneg %p120
      $region46: #{bottleneck_forward_nchw.4} parent=43 // pred_check_branch
        %5542 = sbr.rel (%p5540) target = $region48
      $region47: #{bottleneck_forward_nchw.4} parent=43 // pred_region
        %s5543 = sadd.s32 %s20, %s21
        %s5544 = smul.u32 32, %s5543
        %p5545 = scmp.lt.s32.totalorder %s5544, 63
        %s5546 = scalar_select %p5545, %s5544, 63
        %s5547 = smul.addr %s5546, 4
        %s5548 = scalar_lea.vmem %s3, %s5547
      $region48: #{bottleneck_forward_nchw.4} parent=43 // pred_fallthru
        _
    $region44: #{bottleneck_forward_nchw.4} parent=5 // pred_fallthru
      _
  $region6: #{bottleneck_forward_nchw.4} parent=0 // loop_footer
    %s13 = sadd.s32 1, %s9
  $region7: #{bottleneck_forward_nchw.4} parent=0 // loop_footer_branch
    %8 = sbr.rel target = $region3
  $region8: #{bottleneck_forward_nchw.4} parent=0 // loop_exit
    _

</llo_original>
